<compile_context>
chip_gen: v6e
topology: v6e:2x2x1
jax: 0.10.0
libtpu: 0.0.40
codegen_flags: <defaults>
</compile_context>

<pallas_src>
import jax
import jax.numpy as jnp
import numpy as np
from jax.experimental import pallas as pl
from jax.experimental.pallas import tpu as pltpu


_OH1, _OH2, _OH3 = 24, 11, 9            # conv1/conv2/conv3 output spatial dims
_C1, _C2, _C3 = 32, 64, 64              # output channels
_P3 = (_OH3 - 1) * _OH2 + _OH3          # 97: rows of the dilated conv3 frame


# ---------------------------------------------------------------------------
# Kernel A: conv1 = fused GEMM + bias + ReLU over pre-built im2col patches.
# One grid step per image (576 patch rows) -> exact split, v7x-balanced.
# ---------------------------------------------------------------------------
def _conv1_kernel(p_ref, w_ref, b_ref, o_ref):
    acc = jnp.dot(p_ref[...], w_ref[...], preferred_element_type=jnp.float32)
    o_ref[...] = jnp.maximum(acc + b_ref[...], 0.0).astype(o_ref.dtype)


def conv1_gemm(patches, w, b2d, rows_per_image):
    M, K = patches.shape
    N = w.shape[1]
    grid = M // rows_per_image                      # == batch, exact
    flops = 2 * M * K * N
    bytes_accessed = int(patches.size * 2 + w.size * 2 + b2d.size * 4 + M * N * 2)
    return pl.pallas_call(
        _conv1_kernel,
        out_shape=jax.ShapeDtypeStruct((M, N), jnp.bfloat16),
        grid=(grid,),
        in_specs=[
            pl.BlockSpec((rows_per_image, K), lambda i: (i, 0)),
            pl.BlockSpec((K, N), lambda i: (0, 0)),
            pl.BlockSpec((1, N), lambda i: (0, 0)),
        ],
        out_specs=pl.BlockSpec((rows_per_image, N), lambda i: (i, 0)),
        compiler_params=pltpu.CompilerParams(dimension_semantics=("parallel",)),
        cost_estimate=pl.CostEstimate(flops=flops, transcendentals=0,
                                      bytes_accessed=bytes_accessed),
    )(patches, w, b2d)


# ---------------------------------------------------------------------------
# Kernel B: conv2 + conv3 + flatten + fc1 + ReLU + fc2, one image per step.
# All intermediates (h2, h3, flattened fc1 input) stay in VMEM.
# ---------------------------------------------------------------------------
def _tail_kernel(p2_ref, w2_ref, b2_ref, w3_ref, b3_ref,
                 fw1_ref, fb1_ref, fw2_ref, fb2_ref,
                 o_ref, h2_s, h3_s, flat_s):
    # --- conv2: one GEMM over this image's (121, 512) im2col patches.
    a2 = jnp.dot(p2_ref[0], w2_ref[...], preferred_element_type=jnp.float32)
    h2_s[...] = jnp.maximum(a2 + b2_ref[...], 0.0).astype(h2_s.dtype)

    # --- conv3 (stride 1), dilated-frame accumulation: output (oh3, ow3) is
    #     kept at row p = oh3*11 + ow3 of a 97-row accumulator so each of the
    #     nine (kh, kw) terms is ONE contiguous slice + ONE 2-D matmul.
    acc3 = jnp.zeros((_P3, _C3), jnp.float32)
    for kh in range(3):
        for kw in range(3):
            off = kh * _OH2 + kw
            acc3 = acc3 + jnp.dot(h2_s[off:off + _P3, :],
                                  w3_ref[kh * 3 + kw],
                                  preferred_element_type=jnp.float32)
    h3_s[...] = jnp.maximum(acc3 + b3_ref[...], 0.0).astype(h3_s.dtype)

    # --- flatten the 81 valid rows into a lane-dense (1, 5184) fc1 input.
    #     (Static (1, 64) row copies only; 16 dilation-garbage rows skipped.)
    for oh in range(_OH3):
        for ow in range(_OH3):
            src = oh * _OH2 + ow
            dst = (oh * _OH3 + ow) * _C3
            flat_s[0:1, dst:dst + _C3] = h3_s[src:src + 1, :]

    # --- fc1 + ReLU + fc2 (hidden activation never leaves vregs).
    h = jnp.dot(flat_s[...], fw1_ref[...], preferred_element_type=jnp.float32)
    h = jnp.maximum(h + fb1_ref[...], 0.0)
    q = jnp.dot(h.astype(fw2_ref.dtype), fw2_ref[...],
                preferred_element_type=jnp.float32)
    o_ref[0] = (q + fb2_ref[...]).astype(o_ref.dtype)


def fused_tail(p2, w2, b2, w3, b3, fw1, fb1, fw2, fb2):
    B, rows2, K2 = p2.shape
    C = w2.shape[1]
    H = fw1.shape[1]
    A = fw2.shape[1]
    flops = B * 2 * (rows2 * K2 * C + 9 * _P3 * C * C + fw1.shape[0] * H + H * A)
    bytes_accessed = int(sum(a.size * a.dtype.itemsize for a in
                             (p2, w2, b2, w3, b3, fw1, fb1, fw2, fb2)) + B * A * 4)
    out = pl.pallas_call(
        _tail_kernel,
        out_shape=jax.ShapeDtypeStruct((B, 1, A), jnp.float32),
        grid=(B,),
        in_specs=[
            pl.BlockSpec((1, rows2, K2), lambda b: (b, 0, 0)),
            pl.BlockSpec((K2, C), lambda b: (0, 0)),
            pl.BlockSpec((1, C), lambda b: (0, 0)),
            pl.BlockSpec((9, C, C), lambda b: (0, 0, 0)),
            pl.BlockSpec((1, C), lambda b: (0, 0)),
            pl.BlockSpec(fw1.shape, lambda b: (0, 0)),
            pl.BlockSpec((1, H), lambda b: (0, 0)),
            pl.BlockSpec((H, A), lambda b: (0, 0)),
            pl.BlockSpec((1, A), lambda b: (0, 0)),
        ],
        out_specs=pl.BlockSpec((1, 1, A), lambda b: (b, 0, 0)),
        scratch_shapes=[
            pltpu.VMEM((rows2, C), jnp.bfloat16),     # h2 (conv2 output)
            pltpu.VMEM((_P3, C), jnp.bfloat16),       # h3 (dilated conv3 output)
            pltpu.VMEM((1, fw1.shape[0]), jnp.bfloat16),  # lane-dense fc1 input
        ],
        compiler_params=pltpu.CompilerParams(dimension_semantics=("parallel",)),
        cost_estimate=pl.CostEstimate(flops=flops, transcendentals=0,
                                      bytes_accessed=bytes_accessed),
    )(p2, w2, b2, w3, b3, fw1, fb1, fw2, fb2)
    return out.reshape(B, A)


# ---------------------------------------------------------------------------
# im2col glue (plain JAX).  conv1 patches are sliced directly from the NCHW
# input (W=100 stays on lanes), K ordered (c, kh, kw); conv2 patches from the
# NHWC conv1 activation, K ordered (kh, kw, c).
# ---------------------------------------------------------------------------
def _im2col_conv1_nchw(x_bf16):
    B = x_bf16.shape[0]
    cols = [x_bf16[:, c, kh:kh + 93:4, kw:kw + 93:4]      # each (B, 24, 24)
            for c in range(2) for kh in range(8) for kw in range(8)]
    p = jnp.stack(cols, axis=-1)                           # (B, 24, 24, 128)
    return p.reshape(B * _OH1 * _OH1, 128)


def _im2col_conv2_nhwc(h1):
    B = h1.shape[0]
    cols = [h1[:, kh:kh + 22:2, kw:kw + 22:2, :]           # each (B, 11, 11, 32)
            for kh in range(4) for kw in range(4)]
    p = jnp.stack(cols, axis=3)                            # (B, 11, 11, 16, 32)
    return p.reshape(B, _OH2 * _OH2, 16 * _C1)


# ---------------------------------------------------------------------------
# Parameter handling (PyTorch layout -> kernel-ready layout).
# ---------------------------------------------------------------------------
def _conv_out(h, k, s):
    return (h - k) // s + 1


def init_params(key, action_space_dim, hidden, in_hw=100):
    """PyTorch-layout parameters, mirroring DQN.init_weights."""
    ks = jax.random.split(key, 8)

    def xavier_normal(k, shape):
        oc, c, kh, kw = shape
        fan_in, fan_out = c * kh * kw, oc * kh * kw
        std = float(np.sqrt(2.0 / (fan_in + fan_out)))
        return std * jax.random.normal(k, shape, jnp.float32)

    def conv_bias(k, oc, fan_in):           # PyTorch default conv bias init
        bound = float(1.0 / np.sqrt(fan_in))
        return jax.random.uniform(k, (oc,), jnp.float32, -bound, bound)

    p = {}
    p["w1"] = xavier_normal(ks[0], (32, 2, 8, 8))
    p["b1"] = conv_bias(ks[1], 32, 2 * 8 * 8)
    p["w2"] = xavier_normal(ks[2], (64, 32, 4, 4))
    p["b2"] = conv_bias(ks[3], 64, 32 * 4 * 4)
    p["w3"] = xavier_normal(ks[4], (64, 64, 3, 3))
    p["b3"] = conv_bias(ks[5], 64, 64 * 3 * 3)

    # getConvDim equivalent (fc1 in-dim hard-wired to a 100x100 input).
    h = _conv_out(_conv_out(_conv_out(in_hw, 8, 4), 4, 2), 3, 1)
    conv_dim = 64 * h * h                   # 5184

    p["wfc1"] = jax.random.uniform(ks[6], (conv_dim, hidden), jnp.float32, 0.0, 0.1)
    p["bfc1"] = jnp.zeros((hidden,), jnp.float32)
    p["wfc2"] = jax.random.uniform(ks[7], (hidden, action_space_dim),
                                   jnp.float32, 0.0, 0.1)
    p["bfc2"] = jnp.zeros((action_space_dim,), jnp.float32)
    return p


def prepare_params(params, in_hw=100):
    bf16 = jnp.bfloat16
    p = {}
    # conv1: K rows in (c, kh, kw) order == PyTorch's natural per-filter flatten.
    p["cw1"] = params["w1"].reshape(_C1, 2 * 8 * 8).T.astype(bf16)
    p["cb1"] = params["b1"].reshape(1, -1).astype(jnp.float32)
    # conv2: K rows in (kh, kw, c_in) order -> (512, 64).
    p["cw2"] = params["w2"].transpose(2, 3, 1, 0).reshape(4 * 4 * _C1, _C2).astype(bf16)
    p["cb2"] = params["b2"].reshape(1, -1).astype(jnp.float32)
    # conv3: per-(kh, kw) (c_in, c_out) blocks -> (9, 64, 64).
    p["w3"] = params["w3"].transpose(2, 3, 1, 0).reshape(9, _C2, _C3).astype(bf16)
    p["cb3"] = params["b3"].reshape(1, -1).astype(jnp.float32)
    # fc1: PyTorch NCHW-flatten rows reordered to the kernel's (H, W, C) flatten.
    h = _conv_out(_conv_out(_conv_out(in_hw, 8, 4), 4, 2), 3, 1)
    hidden = params["wfc1"].shape[1]
    assert params["wfc1"].shape[0] == _C3 * h * h
    wfc1 = params["wfc1"].reshape(_C3, h, h, hidden).transpose(1, 2, 0, 3)
    p["fw1"] = wfc1.reshape(_C3 * h * h, hidden).astype(bf16)
    p["fb1"] = params["bfc1"].reshape(1, -1).astype(jnp.float32)
    p["fw2"] = params["wfc2"].astype(bf16)
    p["fb2"] = params["bfc2"].reshape(1, -1).astype(jnp.float32)
    return p


# ---------------------------------------------------------------------------
# DQN forward pass (Pallas path) and a pure-JAX reference for validation.
# ---------------------------------------------------------------------------
def dqn_forward(p, x):
    """x: (B, 2, 100, 100) NCHW f32.  Returns (B, action_space_dim) f32."""
    B = x.shape[0]
    x_bf = x.astype(jnp.bfloat16)
    p1 = _im2col_conv1_nchw(x_bf)                              # (B*576, 128)
    h1 = conv1_gemm(p1, p["cw1"], p["cb1"], rows_per_image=_OH1 * _OH1)
    h1 = h1.reshape(B, _OH1, _OH1, _C1)                        # NHWC
    p2 = _im2col_conv2_nhwc(h1)                                # (B, 121, 512)
    return fused_tail(p2, p["cw2"], p["cb2"], p["w3"], p["cb3"],
                      p["fw1"], p["fb1"], p["fw2"], p["fb2"])


def dqn_reference(params, x, compute_dtype=jnp.float32):
    """Pure-JAX reference with the original PyTorch (NCHW) semantics."""
    cd = compute_dtype

    def conv(h, w, b, s):
        y = jax.lax.conv_general_dilated(
            h.astype(cd), w.astype(cd), (s, s), "VALID",
            dimension_numbers=("NCHW", "OIHW", "NCHW"),
            preferred_element_type=jnp.float32)
        return y + b.reshape(1, -1, 1, 1)

    h = jax.nn.relu(conv(x, params["w1"], params["b1"], 4))
    h = jax.nn.relu(conv(h, params["w2"], params["b2"], 2))
    h = jax.nn.relu(conv(h, params["w3"], params["b3"], 1))
    h = h.reshape(h.shape[0], -1)
    h = jax.nn.relu(jnp.dot(h.astype(cd), params["wfc1"].astype(cd),
                            preferred_element_type=jnp.float32) + params["bfc1"])
    return jnp.dot(h.astype(cd), params["wfc2"].astype(cd),
                   preferred_element_type=jnp.float32) + params["bfc2"]


if __name__ == "__main__":
    key = jax.random.PRNGKey(0)
    k_param, k_input = jax.random.split(key)

    action_space_dim = 3
    hidden = 128            # DQN(hidden=...) constructor arg, kept small
    batch = 2

    params = init_params(k_param, action_space_dim, hidden, in_hw=100)
    # Input shape fixed by the module's getConvDim: (B, 2, 100, 100) NCHW.
    x = jax.random.normal(k_input, (batch, 2, 100, 100), jnp.float32)

    prepared = prepare_params(params, in_hw=100)
    fwd = jax.jit(dqn_forward)
    q_pallas = jax.block_until_ready(fwd(prepared, x))
    assert q_pallas.shape == (batch, action_space_dim)

    # Tight check vs a reference with matched numerics (bf16 MXU inputs,
    # f32 accumulation) -- validates layouts, patch ordering and the kernels.
    q_ref_bf16 = jax.block_until_ready(dqn_reference(params, x, jnp.bfloat16))
    np.testing.assert_allclose(np.asarray(q_pallas), np.asarray(q_ref_bf16),
                               rtol=1e-2, atol=1e-1)

    # Loose check vs the exact f32 original semantics (allows bf16 drift).
    q_ref_f32 = jax.block_until_ready(dqn_reference(params, x, jnp.float32))
    np.testing.assert_allclose(np.asarray(q_pallas), np.asarray(q_ref_f32),
                               rtol=1e-1, atol=1.0)

    print("KERNEL_OK")
</pallas_src>

<mosaic_0001>
module attributes {stable_mosaic.version = 11 : i64} {
  func.func @_conv1_kernel(%arg0: i32, %arg1: memref<576x128xbf16, #tpu.memory_space<vmem>>, %arg2: memref<128x32xbf16, #tpu.memory_space<vmem>>, %arg3: memref<1x32xf32, #tpu.memory_space<vmem>>, %arg4: memref<576x32xbf16, #tpu.memory_space<vmem>>) attributes {dimension_semantics = [#tpu.dimension_semantics<parallel>], iteration_bounds = array<i64: 2>, scalar_prefetch = 0 : i64, scratch_operands = 0 : i64, tpu.core_type = #tpu.core_type<tc>, window_params = [{transform_indices = @transform_0, window_bounds = array<i64: 576, 128>}, {pipeline_mode = #tpu.pipeline_mode<synchronous>, transform_indices = @transform_1, window_bounds = array<i64: 128, 32>}, {pipeline_mode = #tpu.pipeline_mode<synchronous>, transform_indices = @transform_2, window_bounds = array<i64: 1, 32>}, {transform_indices = @transform_3, window_bounds = array<i64: 576, 32>}]} {
    %c0 = arith.constant 0 : index
    %c0_0 = arith.constant 0 : index
    %0 = vector.load %arg1[%c0, %c0_0] : memref<576x128xbf16, #tpu.memory_space<vmem>>, vector<576x128xbf16>
    %c0_1 = arith.constant 0 : index
    %c0_2 = arith.constant 0 : index
    %1 = vector.load %arg2[%c0_1, %c0_2] : memref<128x32xbf16, #tpu.memory_space<vmem>>, vector<128x32xbf16>
    %cst = arith.constant dense<0.000000e+00> : vector<576x32xf32>
    %2 = tpu.matmul %0, %1, %cst {dimension_numbers = #tpu.dot_dimension_numbers<[1], [0], [0], [1], [0, 0, 1, 1], [], []>} : vector<576x128xbf16>, vector<128x32xbf16>, vector<576x32xf32> -> vector<576x32xf32>
    %c0_3 = arith.constant 0 : index
    %c0_4 = arith.constant 0 : index
    %3 = vector.load %arg3[%c0_3, %c0_4] : memref<1x32xf32, #tpu.memory_space<vmem>>, vector<1x32xf32>
    %4 = vector.broadcast %3 : vector<1x32xf32> to vector<576x32xf32>
    %5 = arith.addf %2, %4 : vector<576x32xf32>
    %cst_5 = arith.constant 0.000000e+00 : f32
    %6 = vector.broadcast %cst_5 : f32 to vector<576x32xf32>
    %7 = arith.maximumf %5, %6 : vector<576x32xf32>
    %8 = arith.truncf %7 : vector<576x32xf32> to vector<576x32xbf16>
    %c0_6 = arith.constant 0 : index
    %c0_7 = arith.constant 0 : index
    %9 = vector.load %arg4[%c0_6, %c0_7] : memref<576x32xbf16, #tpu.memory_space<vmem>>, vector<576x32xbf16>
    tpu.vector_store %arg4[%c0_6, %c0_7], %8 {strides = array<i32>} : memref<576x32xbf16, #tpu.memory_space<vmem>>, vector<576x32xbf16>,
    return
  }
  func.func @transform_0(%arg0: i32) -> (i32, i32) {
    %c0_i32 = arith.constant 0 : i32
    %c0_i32_0 = arith.constant 0 : i32
    return %arg0, %c0_i32 : i32, i32
  }
  func.func @transform_1(%arg0: i32) -> (i32, i32) {
    %c0_i32 = arith.constant 0 : i32
    %c0_i32_0 = arith.constant 0 : i32
    %c0_i32_1 = arith.constant 0 : i32
    return %c0_i32, %c0_i32_0 : i32, i32
  }
  func.func @transform_2(%arg0: i32) -> (i32, i32) {
    %c0_i32 = arith.constant 0 : i32
    %c0_i32_0 = arith.constant 0 : i32
    %c0_i32_1 = arith.constant 0 : i32
    return %c0_i32, %c0_i32_0 : i32, i32
  }
  func.func @transform_3(%arg0: i32) -> (i32, i32) {
    %c0_i32 = arith.constant 0 : i32
    %c0_i32_0 = arith.constant 0 : i32
    return %arg0, %c0_i32 : i32, i32
  }
}

module attributes {stable_mosaic.version = 11 : i64} {
  func.func @_tail_kernel(%arg0: i32, %arg1: memref<1x121x512xbf16, #tpu.memory_space<vmem>>, %arg2: memref<512x64xbf16, #tpu.memory_space<vmem>>, %arg3: memref<1x64xf32, #tpu.memory_space<vmem>>, %arg4: memref<9x64x64xbf16, #tpu.memory_space<vmem>>, %arg5: memref<1x64xf32, #tpu.memory_space<vmem>>, %arg6: memref<5184x128xbf16, #tpu.memory_space<vmem>>, %arg7: memref<1x128xf32, #tpu.memory_space<vmem>>, %arg8: memref<128x3xbf16, #tpu.memory_space<vmem>>, %arg9: memref<1x3xf32, #tpu.memory_space<vmem>>, %arg10: memref<1x1x3xf32, #tpu.memory_space<vmem>>, %arg11: memref<121x64xbf16, #tpu.memory_space<vmem>>, %arg12: memref<97x64xbf16, #tpu.memory_space<vmem>>, %arg13: memref<1x5184xbf16, #tpu.memory_space<vmem>>) attributes {dimension_semantics = [#tpu.dimension_semantics<parallel>], iteration_bounds = array<i64: 2>, scalar_prefetch = 0 : i64, scratch_operands = 3 : i64, tpu.core_type = #tpu.core_type<tc>, window_params = [{transform_indices = @transform_0, window_bounds = array<i64: 1, 121, 512>}, {pipeline_mode = #tpu.pipeline_mode<synchronous>, transform_indices = @transform_1, window_bounds = array<i64: 512, 64>}, {pipeline_mode = #tpu.pipeline_mode<synchronous>, transform_indices = @transform_2, window_bounds = array<i64: 1, 64>}, {pipeline_mode = #tpu.pipeline_mode<synchronous>, transform_indices = @transform_3, window_bounds = array<i64: 9, 64, 64>}, {pipeline_mode = #tpu.pipeline_mode<synchronous>, transform_indices = @transform_4, window_bounds = array<i64: 1, 64>}, {pipeline_mode = #tpu.pipeline_mode<synchronous>, transform_indices = @transform_5, window_bounds = array<i64: 5184, 128>}, {pipeline_mode = #tpu.pipeline_mode<synchronous>, transform_indices = @transform_6, window_bounds = array<i64: 1, 128>}, {pipeline_mode = #tpu.pipeline_mode<synchronous>, transform_indices = @transform_7, window_bounds = array<i64: 128, 3>}, {pipeline_mode = #tpu.pipeline_mode<synchronous>, transform_indices = @transform_8, window_bounds = array<i64: 1, 3>}, {transform_indices = @transform_9, window_bounds = array<i64: 1, 1, 3>}]} {
    %c0 = arith.constant 0 : index
    %c0_0 = arith.constant 0 : index
    %c0_1 = arith.constant 0 : index
    %0 = vector.load %arg1[%c0, %c0_0, %c0_1] : memref<1x121x512xbf16, #tpu.memory_space<vmem>>, vector<1x121x512xbf16>
    %1 = vector.shape_cast %0 : vector<1x121x512xbf16> to vector<121x512xbf16>
    %c0_2 = arith.constant 0 : index
    %c0_3 = arith.constant 0 : index
    %2 = vector.load %arg2[%c0_2, %c0_3] : memref<512x64xbf16, #tpu.memory_space<vmem>>, vector<512x64xbf16>
    %cst = arith.constant dense<0.000000e+00> : vector<121x64xf32>
    %3 = tpu.matmul %1, %2, %cst {dimension_numbers = #tpu.dot_dimension_numbers<[1], [0], [0], [1], [0, 0, 1, 1], [], []>} : vector<121x512xbf16>, vector<512x64xbf16>, vector<121x64xf32> -> vector<121x64xf32>
    %c0_4 = arith.constant 0 : index
    %c0_5 = arith.constant 0 : index
    %4 = vector.load %arg3[%c0_4, %c0_5] : memref<1x64xf32, #tpu.memory_space<vmem>>, vector<1x64xf32>
    %5 = vector.broadcast %4 : vector<1x64xf32> to vector<121x64xf32>
    %6 = arith.addf %3, %5 : vector<121x64xf32>
    %cst_6 = arith.constant 0.000000e+00 : f32
    %7 = vector.broadcast %cst_6 : f32 to vector<121x64xf32>
    %8 = arith.maximumf %6, %7 : vector<121x64xf32>
    %9 = arith.truncf %8 : vector<121x64xf32> to vector<121x64xbf16>
    %c0_7 = arith.constant 0 : index
    %c0_8 = arith.constant 0 : index
    %10 = vector.load %arg11[%c0_7, %c0_8] : memref<121x64xbf16, #tpu.memory_space<vmem>>, vector<121x64xbf16>
    tpu.vector_store %arg11[%c0_7, %c0_8], %9 {strides = array<i32>} : memref<121x64xbf16, #tpu.memory_space<vmem>>, vector<121x64xbf16>,
    %cst_9 = arith.constant 0.000000e+00 : f32
    %11 = vector.broadcast %cst_9 : f32 to vector<97x64xf32>
    %c0_10 = arith.constant 0 : index
    %c0_11 = arith.constant 0 : index
    %12 = vector.load %arg11[%c0_10, %c0_11] : memref<121x64xbf16, #tpu.memory_space<vmem>>, vector<97x64xbf16>
    %c0_12 = arith.constant 0 : index
    %c0_13 = arith.constant 0 : index
    %c0_14 = arith.constant 0 : index
    %13 = vector.load %arg4[%c0_12, %c0_13, %c0_14] : memref<9x64x64xbf16, #tpu.memory_space<vmem>>, vector<1x64x64xbf16>
    %14 = vector.shape_cast %13 : vector<1x64x64xbf16> to vector<64x64xbf16>
    %cst_15 = arith.constant dense<0.000000e+00> : vector<97x64xf32>
    %15 = tpu.matmul %12, %14, %cst_15 {dimension_numbers = #tpu.dot_dimension_numbers<[1], [0], [0], [1], [0, 0, 1, 1], [], []>} : vector<97x64xbf16>, vector<64x64xbf16>, vector<97x64xf32> -> vector<97x64xf32>
    %16 = arith.addf %11, %15 : vector<97x64xf32>
    %c1 = arith.constant 1 : index
    %c0_16 = arith.constant 0 : index
    %17 = vector.load %arg11[%c1, %c0_16] : memref<121x64xbf16, #tpu.memory_space<vmem>>, vector<97x64xbf16>
    %c1_17 = arith.constant 1 : index
    %c0_18 = arith.constant 0 : index
    %c0_19 = arith.constant 0 : index
    %18 = vector.load %arg4[%c1_17, %c0_18, %c0_19] : memref<9x64x64xbf16, #tpu.memory_space<vmem>>, vector<1x64x64xbf16>
    %19 = vector.shape_cast %18 : vector<1x64x64xbf16> to vector<64x64xbf16>
    %cst_20 = arith.constant dense<0.000000e+00> : vector<97x64xf32>
    %20 = tpu.matmul %17, %19, %cst_20 {dimension_numbers = #tpu.dot_dimension_numbers<[1], [0], [0], [1], [0, 0, 1, 1], [], []>} : vector<97x64xbf16>, vector<64x64xbf16>, vector<97x64xf32> -> vector<97x64xf32>
    %21 = arith.addf %16, %20 : vector<97x64xf32>
    %c2 = arith.constant 2 : index
    %c0_21 = arith.constant 0 : index
    %22 = vector.load %arg11[%c2, %c0_21] : memref<121x64xbf16, #tpu.memory_space<vmem>>, vector<97x64xbf16>
    %c2_22 = arith.constant 2 : index
    %c0_23 = arith.constant 0 : index
    %c0_24 = arith.constant 0 : index
    %23 = vector.load %arg4[%c2_22, %c0_23, %c0_24] : memref<9x64x64xbf16, #tpu.memory_space<vmem>>, vector<1x64x64xbf16>
    %24 = vector.shape_cast %23 : vector<1x64x64xbf16> to vector<64x64xbf16>
    %cst_25 = arith.constant dense<0.000000e+00> : vector<97x64xf32>
    %25 = tpu.matmul %22, %24, %cst_25 {dimension_numbers = #tpu.dot_dimension_numbers<[1], [0], [0], [1], [0, 0, 1, 1], [], []>} : vector<97x64xbf16>, vector<64x64xbf16>, vector<97x64xf32> -> vector<97x64xf32>
    %26 = arith.addf %21, %25 : vector<97x64xf32>
    %c11 = arith.constant 11 : index
    %c0_26 = arith.constant 0 : index
    %27 = vector.load %arg11[%c11, %c0_26] : memref<121x64xbf16, #tpu.memory_space<vmem>>, vector<97x64xbf16>
    %c3 = arith.constant 3 : index
    %c0_27 = arith.constant 0 : index
    %c0_28 = arith.constant 0 : index
    %28 = vector.load %arg4[%c3, %c0_27, %c0_28] : memref<9x64x64xbf16, #tpu.memory_space<vmem>>, vector<1x64x64xbf16>
    %29 = vector.shape_cast %28 : vector<1x64x64xbf16> to vector<64x64xbf16>
    %cst_29 = arith.constant dense<0.000000e+00> : vector<97x64xf32>
    %30 = tpu.matmul %27, %29, %cst_29 {dimension_numbers = #tpu.dot_dimension_numbers<[1], [0], [0], [1], [0, 0, 1, 1], [], []>} : vector<97x64xbf16>, vector<64x64xbf16>, vector<97x64xf32> -> vector<97x64xf32>
    %31 = arith.addf %26, %30 : vector<97x64xf32>
    %c12 = arith.constant 12 : index
    %c0_30 = arith.constant 0 : index
    %32 = vector.load %arg11[%c12, %c0_30] : memref<121x64xbf16, #tpu.memory_space<vmem>>, vector<97x64xbf16>
    %c4 = arith.constant 4 : index
    %c0_31 = arith.constant 0 : index
    %c0_32 = arith.constant 0 : index
    %33 = vector.load %arg4[%c4, %c0_31, %c0_32] : memref<9x64x64xbf16, #tpu.memory_space<vmem>>, vector<1x64x64xbf16>
    %34 = vector.shape_cast %33 : vector<1x64x64xbf16> to vector<64x64xbf16>
    %cst_33 = arith.constant dense<0.000000e+00> : vector<97x64xf32>
    %35 = tpu.matmul %32, %34, %cst_33 {dimension_numbers = #tpu.dot_dimension_numbers<[1], [0], [0], [1], [0, 0, 1, 1], [], []>} : vector<97x64xbf16>, vector<64x64xbf16>, vector<97x64xf32> -> vector<97x64xf32>
    %36 = arith.addf %31, %35 : vector<97x64xf32>
    %c13 = arith.constant 13 : index
    %c0_34 = arith.constant 0 : index
    %37 = vector.load %arg11[%c13, %c0_34] : memref<121x64xbf16, #tpu.memory_space<vmem>>, vector<97x64xbf16>
    %c5 = arith.constant 5 : index
    %c0_35 = arith.constant 0 : index
    %c0_36 = arith.constant 0 : index
    %38 = vector.load %arg4[%c5, %c0_35, %c0_36] : memref<9x64x64xbf16, #tpu.memory_space<vmem>>, vector<1x64x64xbf16>
    %39 = vector.shape_cast %38 : vector<1x64x64xbf16> to vector<64x64xbf16>
    %cst_37 = arith.constant dense<0.000000e+00> : vector<97x64xf32>
    %40 = tpu.matmul %37, %39, %cst_37 {dimension_numbers = #tpu.dot_dimension_numbers<[1], [0], [0], [1], [0, 0, 1, 1], [], []>} : vector<97x64xbf16>, vector<64x64xbf16>, vector<97x64xf32> -> vector<97x64xf32>
    %41 = arith.addf %36, %40 : vector<97x64xf32>
    %c22 = arith.constant 22 : index
    %c0_38 = arith.constant 0 : index
    %42 = vector.load %arg11[%c22, %c0_38] : memref<121x64xbf16, #tpu.memory_space<vmem>>, vector<97x64xbf16>
    %c6 = arith.constant 6 : index
    %c0_39 = arith.constant 0 : index
    %c0_40 = arith.constant 0 : index
    %43 = vector.load %arg4[%c6, %c0_39, %c0_40] : memref<9x64x64xbf16, #tpu.memory_space<vmem>>, vector<1x64x64xbf16>
    %44 = vector.shape_cast %43 : vector<1x64x64xbf16> to vector<64x64xbf16>
    %cst_41 = arith.constant dense<0.000000e+00> : vector<97x64xf32>
    %45 = tpu.matmul %42, %44, %cst_41 {dimension_numbers = #tpu.dot_dimension_numbers<[1], [0], [0], [1], [0, 0, 1, 1], [], []>} : vector<97x64xbf16>, vector<64x64xbf16>, vector<97x64xf32> -> vector<97x64xf32>
    %46 = arith.addf %41, %45 : vector<97x64xf32>
    %c23 = arith.constant 23 : index
    %c0_42 = arith.constant 0 : index
    %47 = vector.load %arg11[%c23, %c0_42] : memref<121x64xbf16, #tpu.memory_space<vmem>>, vector<97x64xbf16>
    %c7 = arith.constant 7 : index
    %c0_43 = arith.constant 0 : index
    %c0_44 = arith.constant 0 : index
    %48 = vector.load %arg4[%c7, %c0_43, %c0_44] : memref<9x64x64xbf16, #tpu.memory_space<vmem>>, vector<1x64x64xbf16>
    %49 = vector.shape_cast %48 : vector<1x64x64xbf16> to vector<64x64xbf16>
    %cst_45 = arith.constant dense<0.000000e+00> : vector<97x64xf32>
    %50 = tpu.matmul %47, %49, %cst_45 {dimension_numbers = #tpu.dot_dimension_numbers<[1], [0], [0], [1], [0, 0, 1, 1], [], []>} : vector<97x64xbf16>, vector<64x64xbf16>, vector<97x64xf32> -> vector<97x64xf32>
    %51 = arith.addf %46, %50 : vector<97x64xf32>
    %c24 = arith.constant 24 : index
    %c0_46 = arith.constant 0 : index
    %52 = vector.load %arg11[%c24, %c0_46] : memref<121x64xbf16, #tpu.memory_space<vmem>>, vector<97x64xbf16>
    %c8 = arith.constant 8 : index
    %c0_47 = arith.constant 0 : index
    %c0_48 = arith.constant 0 : index
    %53 = vector.load %arg4[%c8, %c0_47, %c0_48] : memref<9x64x64xbf16, #tpu.memory_space<vmem>>, vector<1x64x64xbf16>
    %54 = vector.shape_cast %53 : vector<1x64x64xbf16> to vector<64x64xbf16>
    %cst_49 = arith.constant dense<0.000000e+00> : vector<97x64xf32>
    %55 = tpu.matmul %52, %54, %cst_49 {dimension_numbers = #tpu.dot_dimension_numbers<[1], [0], [0], [1], [0, 0, 1, 1], [], []>} : vector<97x64xbf16>, vector<64x64xbf16>, vector<97x64xf32> -> vector<97x64xf32>
    %56 = arith.addf %51, %55 : vector<97x64xf32>
    %c0_50 = arith.constant 0 : index
    %c0_51 = arith.constant 0 : index
    %57 = vector.load %arg5[%c0_50, %c0_51] : memref<1x64xf32, #tpu.memory_space<vmem>>, vector<1x64xf32>
    %58 = vector.broadcast %57 : vector<1x64xf32> to vector<97x64xf32>
    %59 = arith.addf %56, %58 : vector<97x64xf32>
    %cst_52 = arith.constant 0.000000e+00 : f32
    %60 = vector.broadcast %cst_52 : f32 to vector<97x64xf32>
    %61 = arith.maximumf %59, %60 : vector<97x64xf32>
    %62 = arith.truncf %61 : vector<97x64xf32> to vector<97x64xbf16>
    %c0_53 = arith.constant 0 : index
    %c0_54 = arith.constant 0 : index
    %63 = vector.load %arg12[%c0_53, %c0_54] : memref<97x64xbf16, #tpu.memory_space<vmem>>, vector<97x64xbf16>
    tpu.vector_store %arg12[%c0_53, %c0_54], %62 {strides = array<i32>} : memref<97x64xbf16, #tpu.memory_space<vmem>>, vector<97x64xbf16>,
    %c0_55 = arith.constant 0 : index
    %c0_56 = arith.constant 0 : index
    %64 = vector.load %arg12[%c0_55, %c0_56] : memref<97x64xbf16, #tpu.memory_space<vmem>>, vector<1x64xbf16>
    %c0_57 = arith.constant 0 : index
    %c0_58 = arith.constant 0 : index
    %65 = vector.load %arg13[%c0_57, %c0_58] : memref<1x5184xbf16, #tpu.memory_space<vmem>>, vector<1x64xbf16>
    tpu.vector_store %arg13[%c0_57, %c0_58], %64 {strides = array<i32>} : memref<1x5184xbf16, #tpu.memory_space<vmem>>, vector<1x64xbf16>,
    %c1_59 = arith.constant 1 : index
    %c0_60 = arith.constant 0 : index
    %66 = vector.load %arg12[%c1_59, %c0_60] : memref<97x64xbf16, #tpu.memory_space<vmem>>, vector<1x64xbf16>
    %c0_61 = arith.constant 0 : index
    %c64 = arith.constant 64 : index
    %67 = vector.load %arg13[%c0_61, %c64] : memref<1x5184xbf16, #tpu.memory_space<vmem>>, vector<1x64xbf16>
    tpu.vector_store %arg13[%c0_61, %c64], %66 {strides = array<i32>} : memref<1x5184xbf16, #tpu.memory_space<vmem>>, vector<1x64xbf16>,
    %c2_62 = arith.constant 2 : index
    %c0_63 = arith.constant 0 : index
    %68 = vector.load %arg12[%c2_62, %c0_63] : memref<97x64xbf16, #tpu.memory_space<vmem>>, vector<1x64xbf16>
    %c0_64 = arith.constant 0 : index
    %c128 = arith.constant 128 : index
    %69 = vector.load %arg13[%c0_64, %c128] : memref<1x5184xbf16, #tpu.memory_space<vmem>>, vector<1x64xbf16>
    tpu.vector_store %arg13[%c0_64, %c128], %68 {strides = array<i32>} : memref<1x5184xbf16, #tpu.memory_space<vmem>>, vector<1x64xbf16>,
    %c3_65 = arith.constant 3 : index
    %c0_66 = arith.constant 0 : index
    %70 = vector.load %arg12[%c3_65, %c0_66] : memref<97x64xbf16, #tpu.memory_space<vmem>>, vector<1x64xbf16>
    %c0_67 = arith.constant 0 : index
    %c192 = arith.constant 192 : index
    %71 = vector.load %arg13[%c0_67, %c192] : memref<1x5184xbf16, #tpu.memory_space<vmem>>, vector<1x64xbf16>
    tpu.vector_store %arg13[%c0_67, %c192], %70 {strides = array<i32>} : memref<1x5184xbf16, #tpu.memory_space<vmem>>, vector<1x64xbf16>,
    %c4_68 = arith.constant 4 : index
    %c0_69 = arith.constant 0 : index
    %72 = vector.load %arg12[%c4_68, %c0_69] : memref<97x64xbf16, #tpu.memory_space<vmem>>, vector<1x64xbf16>
    %c0_70 = arith.constant 0 : index
    %c256 = arith.constant 256 : index
    %73 = vector.load %arg13[%c0_70, %c256] : memref<1x5184xbf16, #tpu.memory_space<vmem>>, vector<1x64xbf16>
    tpu.vector_store %arg13[%c0_70, %c256], %72 {strides = array<i32>} : memref<1x5184xbf16, #tpu.memory_space<vmem>>, vector<1x64xbf16>,
    %c5_71 = arith.constant 5 : index
    %c0_72 = arith.constant 0 : index
    %74 = vector.load %arg12[%c5_71, %c0_72] : memref<97x64xbf16, #tpu.memory_space<vmem>>, vector<1x64xbf16>
    %c0_73 = arith.constant 0 : index
    %c320 = arith.constant 320 : index
    %75 = vector.load %arg13[%c0_73, %c320] : memref<1x5184xbf16, #tpu.memory_space<vmem>>, vector<1x64xbf16>
    tpu.vector_store %arg13[%c0_73, %c320], %74 {strides = array<i32>} : memref<1x5184xbf16, #tpu.memory_space<vmem>>, vector<1x64xbf16>,
    %c6_74 = arith.constant 6 : index
    %c0_75 = arith.constant 0 : index
    %76 = vector.load %arg12[%c6_74, %c0_75] : memref<97x64xbf16, #tpu.memory_space<vmem>>, vector<1x64xbf16>
    %c0_76 = arith.constant 0 : index
    %c384 = arith.constant 384 : index
    %77 = vector.load %arg13[%c0_76, %c384] : memref<1x5184xbf16, #tpu.memory_space<vmem>>, vector<1x64xbf16>
    tpu.vector_store %arg13[%c0_76, %c384], %76 {strides = array<i32>} : memref<1x5184xbf16, #tpu.memory_space<vmem>>, vector<1x64xbf16>,
    %c7_77 = arith.constant 7 : index
    %c0_78 = arith.constant 0 : index
    %78 = vector.load %arg12[%c7_77, %c0_78] : memref<97x64xbf16, #tpu.memory_space<vmem>>, vector<1x64xbf16>
    %c0_79 = arith.constant 0 : index
    %c448 = arith.constant 448 : index
    %79 = vector.load %arg13[%c0_79, %c448] : memref<1x5184xbf16, #tpu.memory_space<vmem>>, vector<1x64xbf16>
    tpu.vector_store %arg13[%c0_79, %c448], %78 {strides = array<i32>} : memref<1x5184xbf16, #tpu.memory_space<vmem>>, vector<1x64xbf16>,
    %c8_80 = arith.constant 8 : index
    %c0_81 = arith.constant 0 : index
    %80 = vector.load %arg12[%c8_80, %c0_81] : memref<97x64xbf16, #tpu.memory_space<vmem>>, vector<1x64xbf16>
    %c0_82 = arith.constant 0 : index
    %c512 = arith.constant 512 : index
    %81 = vector.load %arg13[%c0_82, %c512] : memref<1x5184xbf16, #tpu.memory_space<vmem>>, vector<1x64xbf16>
    tpu.vector_store %arg13[%c0_82, %c512], %80 {strides = array<i32>} : memref<1x5184xbf16, #tpu.memory_space<vmem>>, vector<1x64xbf16>,
    %c11_83 = arith.constant 11 : index
    %c0_84 = arith.constant 0 : index
    %82 = vector.load %arg12[%c11_83, %c0_84] : memref<97x64xbf16, #tpu.memory_space<vmem>>, vector<1x64xbf16>
    %c0_85 = arith.constant 0 : index
    %c576 = arith.constant 576 : index
    %83 = vector.load %arg13[%c0_85, %c576] : memref<1x5184xbf16, #tpu.memory_space<vmem>>, vector<1x64xbf16>
    tpu.vector_store %arg13[%c0_85, %c576], %82 {strides = array<i32>} : memref<1x5184xbf16, #tpu.memory_space<vmem>>, vector<1x64xbf16>,
    %c12_86 = arith.constant 12 : index
    %c0_87 = arith.constant 0 : index
    %84 = vector.load %arg12[%c12_86, %c0_87] : memref<97x64xbf16, #tpu.memory_space<vmem>>, vector<1x64xbf16>
    %c0_88 = arith.constant 0 : index
    %c640 = arith.constant 640 : index
    %85 = vector.load %arg13[%c0_88, %c640] : memref<1x5184xbf16, #tpu.memory_space<vmem>>, vector<1x64xbf16>
    tpu.vector_store %arg13[%c0_88, %c640], %84 {strides = array<i32>} : memref<1x5184xbf16, #tpu.memory_space<vmem>>, vector<1x64xbf16>,
    %c13_89 = arith.constant 13 : index
    %c0_90 = arith.constant 0 : index
    %86 = vector.load %arg12[%c13_89, %c0_90] : memref<97x64xbf16, #tpu.memory_space<vmem>>, vector<1x64xbf16>
    %c0_91 = arith.constant 0 : index
    %c704 = arith.constant 704 : index
    %87 = vector.load %arg13[%c0_91, %c704] : memref<1x5184xbf16, #tpu.memory_space<vmem>>, vector<1x64xbf16>
    tpu.vector_store %arg13[%c0_91, %c704], %86 {strides = array<i32>} : memref<1x5184xbf16, #tpu.memory_space<vmem>>, vector<1x64xbf16>,
    %c14 = arith.constant 14 : index
    %c0_92 = arith.constant 0 : index
    %88 = vector.load %arg12[%c14, %c0_92] : memref<97x64xbf16, #tpu.memory_space<vmem>>, vector<1x64xbf16>
    %c0_93 = arith.constant 0 : index
    %c768 = arith.constant 768 : index
    %89 = vector.load %arg13[%c0_93, %c768] : memref<1x5184xbf16, #tpu.memory_space<vmem>>, vector<1x64xbf16>
    tpu.vector_store %arg13[%c0_93, %c768], %88 {strides = array<i32>} : memref<1x5184xbf16, #tpu.memory_space<vmem>>, vector<1x64xbf16>,
    %c15 = arith.constant 15 : index
    %c0_94 = arith.constant 0 : index
    %90 = vector.load %arg12[%c15, %c0_94] : memref<97x64xbf16, #tpu.memory_space<vmem>>, vector<1x64xbf16>
    %c0_95 = arith.constant 0 : index
    %c832 = arith.constant 832 : index
    %91 = vector.load %arg13[%c0_95, %c832] : memref<1x5184xbf16, #tpu.memory_space<vmem>>, vector<1x64xbf16>
    tpu.vector_store %arg13[%c0_95, %c832], %90 {strides = array<i32>} : memref<1x5184xbf16, #tpu.memory_space<vmem>>, vector<1x64xbf16>,
    %c16 = arith.constant 16 : index
    %c0_96 = arith.constant 0 : index
    %92 = vector.load %arg12[%c16, %c0_96] : memref<97x64xbf16, #tpu.memory_space<vmem>>, vector<1x64xbf16>
    %c0_97 = arith.constant 0 : index
    %c896 = arith.constant 896 : index
    %93 = vector.load %arg13[%c0_97, %c896] : memref<1x5184xbf16, #tpu.memory_space<vmem>>, vector<1x64xbf16>
    tpu.vector_store %arg13[%c0_97, %c896], %92 {strides = array<i32>} : memref<1x5184xbf16, #tpu.memory_space<vmem>>, vector<1x64xbf16>,
    %c17 = arith.constant 17 : index
    %c0_98 = arith.constant 0 : index
    %94 = vector.load %arg12[%c17, %c0_98] : memref<97x64xbf16, #tpu.memory_space<vmem>>, vector<1x64xbf16>
    %c0_99 = arith.constant 0 : index
    %c960 = arith.constant 960 : index
    %95 = vector.load %arg13[%c0_99, %c960] : memref<1x5184xbf16, #tpu.memory_space<vmem>>, vector<1x64xbf16>
    tpu.vector_store %arg13[%c0_99, %c960], %94 {strides = array<i32>} : memref<1x5184xbf16, #tpu.memory_space<vmem>>, vector<1x64xbf16>,
    %c18 = arith.constant 18 : index
    %c0_100 = arith.constant 0 : index
    %96 = vector.load %arg12[%c18, %c0_100] : memref<97x64xbf16, #tpu.memory_space<vmem>>, vector<1x64xbf16>
    %c0_101 = arith.constant 0 : index
    %c1024 = arith.constant 1024 : index
    %97 = vector.load %arg13[%c0_101, %c1024] : memref<1x5184xbf16, #tpu.memory_space<vmem>>, vector<1x64xbf16>
    tpu.vector_store %arg13[%c0_101, %c1024], %96 {strides = array<i32>} : memref<1x5184xbf16, #tpu.memory_space<vmem>>, vector<1x64xbf16>,
    %c19 = arith.constant 19 : index
    %c0_102 = arith.constant 0 : index
    %98 = vector.load %arg12[%c19, %c0_102] : memref<97x64xbf16, #tpu.memory_space<vmem>>, vector<1x64xbf16>
    %c0_103 = arith.constant 0 : index
    %c1088 = arith.constant 1088 : index
    %99 = vector.load %arg13[%c0_103, %c1088] : memref<1x5184xbf16, #tpu.memory_space<vmem>>, vector<1x64xbf16>
    tpu.vector_store %arg13[%c0_103, %c1088], %98 {strides = array<i32>} : memref<1x5184xbf16, #tpu.memory_space<vmem>>, vector<1x64xbf16>,
    %c22_104 = arith.constant 22 : index
    %c0_105 = arith.constant 0 : index
    %100 = vector.load %arg12[%c22_104, %c0_105] : memref<97x64xbf16, #tpu.memory_space<vmem>>, vector<1x64xbf16>
    %c0_106 = arith.constant 0 : index
    %c1152 = arith.constant 1152 : index
    %101 = vector.load %arg13[%c0_106, %c1152] : memref<1x5184xbf16, #tpu.memory_space<vmem>>, vector<1x64xbf16>
    tpu.vector_store %arg13[%c0_106, %c1152], %100 {strides = array<i32>} : memref<1x5184xbf16, #tpu.memory_space<vmem>>, vector<1x64xbf16>,
    %c23_107 = arith.constant 23 : index
    %c0_108 = arith.constant 0 : index
    %102 = vector.load %arg12[%c23_107, %c0_108] : memref<97x64xbf16, #tpu.memory_space<vmem>>, vector<1x64xbf16>
    %c0_109 = arith.constant 0 : index
    %c1216 = arith.constant 1216 : index
    %103 = vector.load %arg13[%c0_109, %c1216] : memref<1x5184xbf16, #tpu.memory_space<vmem>>, vector<1x64xbf16>
    tpu.vector_store %arg13[%c0_109, %c1216], %102 {strides = array<i32>} : memref<1x5184xbf16, #tpu.memory_space<vmem>>, vector<1x64xbf16>,
    %c24_110 = arith.constant 24 : index
    %c0_111 = arith.constant 0 : index
    %104 = vector.load %arg12[%c24_110, %c0_111] : memref<97x64xbf16, #tpu.memory_space<vmem>>, vector<1x64xbf16>
    %c0_112 = arith.constant 0 : index
    %c1280 = arith.constant 1280 : index
    %105 = vector.load %arg13[%c0_112, %c1280] : memref<1x5184xbf16, #tpu.memory_space<vmem>>, vector<1x64xbf16>
    tpu.vector_store %arg13[%c0_112, %c1280], %104 {strides = array<i32>} : memref<1x5184xbf16, #tpu.memory_space<vmem>>, vector<1x64xbf16>,
    %c25 = arith.constant 25 : index
    %c0_113 = arith.constant 0 : index
    %106 = vector.load %arg12[%c25, %c0_113] : memref<97x64xbf16, #tpu.memory_space<vmem>>, vector<1x64xbf16>
    %c0_114 = arith.constant 0 : index
    %c1344 = arith.constant 1344 : index
    %107 = vector.load %arg13[%c0_114, %c1344] : memref<1x5184xbf16, #tpu.memory_space<vmem>>, vector<1x64xbf16>
    tpu.vector_store %arg13[%c0_114, %c1344], %106 {strides = array<i32>} : memref<1x5184xbf16, #tpu.memory_space<vmem>>, vector<1x64xbf16>,
    %c26 = arith.constant 26 : index
    %c0_115 = arith.constant 0 : index
    %108 = vector.load %arg12[%c26, %c0_115] : memref<97x64xbf16, #tpu.memory_space<vmem>>, vector<1x64xbf16>
    %c0_116 = arith.constant 0 : index
    %c1408 = arith.constant 1408 : index
    %109 = vector.load %arg13[%c0_116, %c1408] : memref<1x5184xbf16, #tpu.memory_space<vmem>>, vector<1x64xbf16>
    tpu.vector_store %arg13[%c0_116, %c1408], %108 {strides = array<i32>} : memref<1x5184xbf16, #tpu.memory_space<vmem>>, vector<1x64xbf16>,
    %c27 = arith.constant 27 : index
    %c0_117 = arith.constant 0 : index
    %110 = vector.load %arg12[%c27, %c0_117] : memref<97x64xbf16, #tpu.memory_space<vmem>>, vector<1x64xbf16>
    %c0_118 = arith.constant 0 : index
    %c1472 = arith.constant 1472 : index
    %111 = vector.load %arg13[%c0_118, %c1472] : memref<1x5184xbf16, #tpu.memory_space<vmem>>, vector<1x64xbf16>
    tpu.vector_store %arg13[%c0_118, %c1472], %110 {strides = array<i32>} : memref<1x5184xbf16, #tpu.memory_space<vmem>>, vector<1x64xbf16>,
    %c28 = arith.constant 28 : index
    %c0_119 = arith.constant 0 : index
    %112 = vector.load %arg12[%c28, %c0_119] : memref<97x64xbf16, #tpu.memory_space<vmem>>, vector<1x64xbf16>
    %c0_120 = arith.constant 0 : index
    %c1536 = arith.constant 1536 : index
    %113 = vector.load %arg13[%c0_120, %c1536] : memref<1x5184xbf16, #tpu.memory_space<vmem>>, vector<1x64xbf16>
    tpu.vector_store %arg13[%c0_120, %c1536], %112 {strides = array<i32>} : memref<1x5184xbf16, #tpu.memory_space<vmem>>, vector<1x64xbf16>,
    %c29 = arith.constant 29 : index
    %c0_121 = arith.constant 0 : index
    %114 = vector.load %arg12[%c29, %c0_121] : memref<97x64xbf16, #tpu.memory_space<vmem>>, vector<1x64xbf16>
    %c0_122 = arith.constant 0 : index
    %c1600 = arith.constant 1600 : index
    %115 = vector.load %arg13[%c0_122, %c1600] : memref<1x5184xbf16, #tpu.memory_space<vmem>>, vector<1x64xbf16>
    tpu.vector_store %arg13[%c0_122, %c1600], %114 {strides = array<i32>} : memref<1x5184xbf16, #tpu.memory_space<vmem>>, vector<1x64xbf16>,
    %c30 = arith.constant 30 : index
    %c0_123 = arith.constant 0 : index
    %116 = vector.load %arg12[%c30, %c0_123] : memref<97x64xbf16, #tpu.memory_space<vmem>>, vector<1x64xbf16>
    %c0_124 = arith.constant 0 : index
    %c1664 = arith.constant 1664 : index
    %117 = vector.load %arg13[%c0_124, %c1664] : memref<1x5184xbf16, #tpu.memory_space<vmem>>, vector<1x64xbf16>
    tpu.vector_store %arg13[%c0_124, %c1664], %116 {strides = array<i32>} : memref<1x5184xbf16, #tpu.memory_space<vmem>>, vector<1x64xbf16>,
    %c33 = arith.constant 33 : index
    %c0_125 = arith.constant 0 : index
    %118 = vector.load %arg12[%c33, %c0_125] : memref<97x64xbf16, #tpu.memory_space<vmem>>, vector<1x64xbf16>
    %c0_126 = arith.constant 0 : index
    %c1728 = arith.constant 1728 : index
    %119 = vector.load %arg13[%c0_126, %c1728] : memref<1x5184xbf16, #tpu.memory_space<vmem>>, vector<1x64xbf16>
    tpu.vector_store %arg13[%c0_126, %c1728], %118 {strides = array<i32>} : memref<1x5184xbf16, #tpu.memory_space<vmem>>, vector<1x64xbf16>,
    %c34 = arith.constant 34 : index
    %c0_127 = arith.constant 0 : index
    %120 = vector.load %arg12[%c34, %c0_127] : memref<97x64xbf16, #tpu.memory_space<vmem>>, vector<1x64xbf16>
    %c0_128 = arith.constant 0 : index
    %c1792 = arith.constant 1792 : index
    %121 = vector.load %arg13[%c0_128, %c1792] : memref<1x5184xbf16, #tpu.memory_space<vmem>>, vector<1x64xbf16>
    tpu.vector_store %arg13[%c0_128, %c1792], %120 {strides = array<i32>} : memref<1x5184xbf16, #tpu.memory_space<vmem>>, vector<1x64xbf16>,
    %c35 = arith.constant 35 : index
    %c0_129 = arith.constant 0 : index
    %122 = vector.load %arg12[%c35, %c0_129] : memref<97x64xbf16, #tpu.memory_space<vmem>>, vector<1x64xbf16>
    %c0_130 = arith.constant 0 : index
    %c1856 = arith.constant 1856 : index
    %123 = vector.load %arg13[%c0_130, %c1856] : memref<1x5184xbf16, #tpu.memory_space<vmem>>, vector<1x64xbf16>
    tpu.vector_store %arg13[%c0_130, %c1856], %122 {strides = array<i32>} : memref<1x5184xbf16, #tpu.memory_space<vmem>>, vector<1x64xbf16>,
    %c36 = arith.constant 36 : index
    %c0_131 = arith.constant 0 : index
    %124 = vector.load %arg12[%c36, %c0_131] : memref<97x64xbf16, #tpu.memory_space<vmem>>, vector<1x64xbf16>
    %c0_132 = arith.constant 0 : index
    %c1920 = arith.constant 1920 : index
    %125 = vector.load %arg13[%c0_132, %c1920] : memref<1x5184xbf16, #tpu.memory_space<vmem>>, vector<1x64xbf16>
    tpu.vector_store %arg13[%c0_132, %c1920], %124 {strides = array<i32>} : memref<1x5184xbf16, #tpu.memory_space<vmem>>, vector<1x64xbf16>,
    %c37 = arith.constant 37 : index
    %c0_133 = arith.constant 0 : index
    %126 = vector.load %arg12[%c37, %c0_133] : memref<97x64xbf16, #tpu.memory_space<vmem>>, vector<1x64xbf16>
    %c0_134 = arith.constant 0 : index
    %c1984 = arith.constant 1984 : index
    %127 = vector.load %arg13[%c0_134, %c1984] : memref<1x5184xbf16, #tpu.memory_space<vmem>>, vector<1x64xbf16>
    tpu.vector_store %arg13[%c0_134, %c1984], %126 {strides = array<i32>} : memref<1x5184xbf16, #tpu.memory_space<vmem>>, vector<1x64xbf16>,
    %c38 = arith.constant 38 : index
    %c0_135 = arith.constant 0 : index
    %128 = vector.load %arg12[%c38, %c0_135] : memref<97x64xbf16, #tpu.memory_space<vmem>>, vector<1x64xbf16>
    %c0_136 = arith.constant 0 : index
    %c2048 = arith.constant 2048 : index
    %129 = vector.load %arg13[%c0_136, %c2048] : memref<1x5184xbf16, #tpu.memory_space<vmem>>, vector<1x64xbf16>
    tpu.vector_store %arg13[%c0_136, %c2048], %128 {strides = array<i32>} : memref<1x5184xbf16, #tpu.memory_space<vmem>>, vector<1x64xbf16>,
    %c39 = arith.constant 39 : index
    %c0_137 = arith.constant 0 : index
    %130 = vector.load %arg12[%c39, %c0_137] : memref<97x64xbf16, #tpu.memory_space<vmem>>, vector<1x64xbf16>
    %c0_138 = arith.constant 0 : index
    %c2112 = arith.constant 2112 : index
    %131 = vector.load %arg13[%c0_138, %c2112] : memref<1x5184xbf16, #tpu.memory_space<vmem>>, vector<1x64xbf16>
    tpu.vector_store %arg13[%c0_138, %c2112], %130 {strides = array<i32>} : memref<1x5184xbf16, #tpu.memory_space<vmem>>, vector<1x64xbf16>,
    %c40 = arith.constant 40 : index
    %c0_139 = arith.constant 0 : index
    %132 = vector.load %arg12[%c40, %c0_139] : memref<97x64xbf16, #tpu.memory_space<vmem>>, vector<1x64xbf16>
    %c0_140 = arith.constant 0 : index
    %c2176 = arith.constant 2176 : index
    %133 = vector.load %arg13[%c0_140, %c2176] : memref<1x5184xbf16, #tpu.memory_space<vmem>>, vector<1x64xbf16>
    tpu.vector_store %arg13[%c0_140, %c2176], %132 {strides = array<i32>} : memref<1x5184xbf16, #tpu.memory_space<vmem>>, vector<1x64xbf16>,
    %c41 = arith.constant 41 : index
    %c0_141 = arith.constant 0 : index
    %134 = vector.load %arg12[%c41, %c0_141] : memref<97x64xbf16, #tpu.memory_space<vmem>>, vector<1x64xbf16>
    %c0_142 = arith.constant 0 : index
    %c2240 = arith.constant 2240 : index
    %135 = vector.load %arg13[%c0_142, %c2240] : memref<1x5184xbf16, #tpu.memory_space<vmem>>, vector<1x64xbf16>
    tpu.vector_store %arg13[%c0_142, %c2240], %134 {strides = array<i32>} : memref<1x5184xbf16, #tpu.memory_space<vmem>>, vector<1x64xbf16>,
    %c44 = arith.constant 44 : index
    %c0_143 = arith.constant 0 : index
    %136 = vector.load %arg12[%c44, %c0_143] : memref<97x64xbf16, #tpu.memory_space<vmem>>, vector<1x64xbf16>
    %c0_144 = arith.constant 0 : index
    %c2304 = arith.constant 2304 : index
    %137 = vector.load %arg13[%c0_144, %c2304] : memref<1x5184xbf16, #tpu.memory_space<vmem>>, vector<1x64xbf16>
    tpu.vector_store %arg13[%c0_144, %c2304], %136 {strides = array<i32>} : memref<1x5184xbf16, #tpu.memory_space<vmem>>, vector<1x64xbf16>,
    %c45 = arith.constant 45 : index
    %c0_145 = arith.constant 0 : index
    %138 = vector.load %arg12[%c45, %c0_145] : memref<97x64xbf16, #tpu.memory_space<vmem>>, vector<1x64xbf16>
    %c0_146 = arith.constant 0 : index
    %c2368 = arith.constant 2368 : index
    %139 = vector.load %arg13[%c0_146, %c2368] : memref<1x5184xbf16, #tpu.memory_space<vmem>>, vector<1x64xbf16>
    tpu.vector_store %arg13[%c0_146, %c2368], %138 {strides = array<i32>} : memref<1x5184xbf16, #tpu.memory_space<vmem>>, vector<1x64xbf16>,
    %c46 = arith.constant 46 : index
    %c0_147 = arith.constant 0 : index
    %140 = vector.load %arg12[%c46, %c0_147] : memref<97x64xbf16, #tpu.memory_space<vmem>>, vector<1x64xbf16>
    %c0_148 = arith.constant 0 : index
    %c2432 = arith.constant 2432 : index
    %141 = vector.load %arg13[%c0_148, %c2432] : memref<1x5184xbf16, #tpu.memory_space<vmem>>, vector<1x64xbf16>
    tpu.vector_store %arg13[%c0_148, %c2432], %140 {strides = array<i32>} : memref<1x5184xbf16, #tpu.memory_space<vmem>>, vector<1x64xbf16>,
    %c47 = arith.constant 47 : index
    %c0_149 = arith.constant 0 : index
    %142 = vector.load %arg12[%c47, %c0_149] : memref<97x64xbf16, #tpu.memory_space<vmem>>, vector<1x64xbf16>
    %c0_150 = arith.constant 0 : index
    %c2496 = arith.constant 2496 : index
    %143 = vector.load %arg13[%c0_150, %c2496] : memref<1x5184xbf16, #tpu.memory_space<vmem>>, vector<1x64xbf16>
    tpu.vector_store %arg13[%c0_150, %c2496], %142 {strides = array<i32>} : memref<1x5184xbf16, #tpu.memory_space<vmem>>, vector<1x64xbf16>,
    %c48 = arith.constant 48 : index
    %c0_151 = arith.constant 0 : index
    %144 = vector.load %arg12[%c48, %c0_151] : memref<97x64xbf16, #tpu.memory_space<vmem>>, vector<1x64xbf16>
    %c0_152 = arith.constant 0 : index
    %c2560 = arith.constant 2560 : index
    %145 = vector.load %arg13[%c0_152, %c2560] : memref<1x5184xbf16, #tpu.memory_space<vmem>>, vector<1x64xbf16>
    tpu.vector_store %arg13[%c0_152, %c2560], %144 {strides = array<i32>} : memref<1x5184xbf16, #tpu.memory_space<vmem>>, vector<1x64xbf16>,
    %c49 = arith.constant 49 : index
    %c0_153 = arith.constant 0 : index
    %146 = vector.load %arg12[%c49, %c0_153] : memref<97x64xbf16, #tpu.memory_space<vmem>>, vector<1x64xbf16>
    %c0_154 = arith.constant 0 : index
    %c2624 = arith.constant 2624 : index
    %147 = vector.load %arg13[%c0_154, %c2624] : memref<1x5184xbf16, #tpu.memory_space<vmem>>, vector<1x64xbf16>
    tpu.vector_store %arg13[%c0_154, %c2624], %146 {strides = array<i32>} : memref<1x5184xbf16, #tpu.memory_space<vmem>>, vector<1x64xbf16>,
    %c50 = arith.constant 50 : index
    %c0_155 = arith.constant 0 : index
    %148 = vector.load %arg12[%c50, %c0_155] : memref<97x64xbf16, #tpu.memory_space<vmem>>, vector<1x64xbf16>
    %c0_156 = arith.constant 0 : index
    %c2688 = arith.constant 2688 : index
    %149 = vector.load %arg13[%c0_156, %c2688] : memref<1x5184xbf16, #tpu.memory_space<vmem>>, vector<1x64xbf16>
    tpu.vector_store %arg13[%c0_156, %c2688], %148 {strides = array<i32>} : memref<1x5184xbf16, #tpu.memory_space<vmem>>, vector<1x64xbf16>,
    %c51 = arith.constant 51 : index
    %c0_157 = arith.constant 0 : index
    %150 = vector.load %arg12[%c51, %c0_157] : memref<97x64xbf16, #tpu.memory_space<vmem>>, vector<1x64xbf16>
    %c0_158 = arith.constant 0 : index
    %c2752 = arith.constant 2752 : index
    %151 = vector.load %arg13[%c0_158, %c2752] : memref<1x5184xbf16, #tpu.memory_space<vmem>>, vector<1x64xbf16>
    tpu.vector_store %arg13[%c0_158, %c2752], %150 {strides = array<i32>} : memref<1x5184xbf16, #tpu.memory_space<vmem>>, vector<1x64xbf16>,
    %c52 = arith.constant 52 : index
    %c0_159 = arith.constant 0 : index
    %152 = vector.load %arg12[%c52, %c0_159] : memref<97x64xbf16, #tpu.memory_space<vmem>>, vector<1x64xbf16>
    %c0_160 = arith.constant 0 : index
    %c2816 = arith.constant 2816 : index
    %153 = vector.load %arg13[%c0_160, %c2816] : memref<1x5184xbf16, #tpu.memory_space<vmem>>, vector<1x64xbf16>
    tpu.vector_store %arg13[%c0_160, %c2816], %152 {strides = array<i32>} : memref<1x5184xbf16, #tpu.memory_space<vmem>>, vector<1x64xbf16>,
    %c55 = arith.constant 55 : index
    %c0_161 = arith.constant 0 : index
    %154 = vector.load %arg12[%c55, %c0_161] : memref<97x64xbf16, #tpu.memory_space<vmem>>, vector<1x64xbf16>
    %c0_162 = arith.constant 0 : index
    %c2880 = arith.constant 2880 : index
    %155 = vector.load %arg13[%c0_162, %c2880] : memref<1x5184xbf16, #tpu.memory_space<vmem>>, vector<1x64xbf16>
    tpu.vector_store %arg13[%c0_162, %c2880], %154 {strides = array<i32>} : memref<1x5184xbf16, #tpu.memory_space<vmem>>, vector<1x64xbf16>,
    %c56 = arith.constant 56 : index
    %c0_163 = arith.constant 0 : index
    %156 = vector.load %arg12[%c56, %c0_163] : memref<97x64xbf16, #tpu.memory_space<vmem>>, vector<1x64xbf16>
    %c0_164 = arith.constant 0 : index
    %c2944 = arith.constant 2944 : index
    %157 = vector.load %arg13[%c0_164, %c2944] : memref<1x5184xbf16, #tpu.memory_space<vmem>>, vector<1x64xbf16>
    tpu.vector_store %arg13[%c0_164, %c2944], %156 {strides = array<i32>} : memref<1x5184xbf16, #tpu.memory_space<vmem>>, vector<1x64xbf16>,
    %c57 = arith.constant 57 : index
    %c0_165 = arith.constant 0 : index
    %158 = vector.load %arg12[%c57, %c0_165] : memref<97x64xbf16, #tpu.memory_space<vmem>>, vector<1x64xbf16>
    %c0_166 = arith.constant 0 : index
    %c3008 = arith.constant 3008 : index
    %159 = vector.load %arg13[%c0_166, %c3008] : memref<1x5184xbf16, #tpu.memory_space<vmem>>, vector<1x64xbf16>
    tpu.vector_store %arg13[%c0_166, %c3008], %158 {strides = array<i32>} : memref<1x5184xbf16, #tpu.memory_space<vmem>>, vector<1x64xbf16>,
    %c58 = arith.constant 58 : index
    %c0_167 = arith.constant 0 : index
    %160 = vector.load %arg12[%c58, %c0_167] : memref<97x64xbf16, #tpu.memory_space<vmem>>, vector<1x64xbf16>
    %c0_168 = arith.constant 0 : index
    %c3072 = arith.constant 3072 : index
    %161 = vector.load %arg13[%c0_168, %c3072] : memref<1x5184xbf16, #tpu.memory_space<vmem>>, vector<1x64xbf16>
    tpu.vector_store %arg13[%c0_168, %c3072], %160 {strides = array<i32>} : memref<1x5184xbf16, #tpu.memory_space<vmem>>, vector<1x64xbf16>,
    %c59 = arith.constant 59 : index
    %c0_169 = arith.constant 0 : index
    %162 = vector.load %arg12[%c59, %c0_169] : memref<97x64xbf16, #tpu.memory_space<vmem>>, vector<1x64xbf16>
    %c0_170 = arith.constant 0 : index
    %c3136 = arith.constant 3136 : index
    %163 = vector.load %arg13[%c0_170, %c3136] : memref<1x5184xbf16, #tpu.memory_space<vmem>>, vector<1x64xbf16>
    tpu.vector_store %arg13[%c0_170, %c3136], %162 {strides = array<i32>} : memref<1x5184xbf16, #tpu.memory_space<vmem>>, vector<1x64xbf16>,
    %c60 = arith.constant 60 : index
    %c0_171 = arith.constant 0 : index
    %164 = vector.load %arg12[%c60, %c0_171] : memref<97x64xbf16, #tpu.memory_space<vmem>>, vector<1x64xbf16>
    %c0_172 = arith.constant 0 : index
    %c3200 = arith.constant 3200 : index
    %165 = vector.load %arg13[%c0_172, %c3200] : memref<1x5184xbf16, #tpu.memory_space<vmem>>, vector<1x64xbf16>
    tpu.vector_store %arg13[%c0_172, %c3200], %164 {strides = array<i32>} : memref<1x5184xbf16, #tpu.memory_space<vmem>>, vector<1x64xbf16>,
    %c61 = arith.constant 61 : index
    %c0_173 = arith.constant 0 : index
    %166 = vector.load %arg12[%c61, %c0_173] : memref<97x64xbf16, #tpu.memory_space<vmem>>, vector<1x64xbf16>
    %c0_174 = arith.constant 0 : index
    %c3264 = arith.constant 3264 : index
    %167 = vector.load %arg13[%c0_174, %c3264] : memref<1x5184xbf16, #tpu.memory_space<vmem>>, vector<1x64xbf16>
    tpu.vector_store %arg13[%c0_174, %c3264], %166 {strides = array<i32>} : memref<1x5184xbf16, #tpu.memory_space<vmem>>, vector<1x64xbf16>,
    %c62 = arith.constant 62 : index
    %c0_175 = arith.constant 0 : index
    %168 = vector.load %arg12[%c62, %c0_175] : memref<97x64xbf16, #tpu.memory_space<vmem>>, vector<1x64xbf16>
    %c0_176 = arith.constant 0 : index
    %c3328 = arith.constant 3328 : index
    %169 = vector.load %arg13[%c0_176, %c3328] : memref<1x5184xbf16, #tpu.memory_space<vmem>>, vector<1x64xbf16>
    tpu.vector_store %arg13[%c0_176, %c3328], %168 {strides = array<i32>} : memref<1x5184xbf16, #tpu.memory_space<vmem>>, vector<1x64xbf16>,
    %c63 = arith.constant 63 : index
    %c0_177 = arith.constant 0 : index
    %170 = vector.load %arg12[%c63, %c0_177] : memref<97x64xbf16, #tpu.memory_space<vmem>>, vector<1x64xbf16>
    %c0_178 = arith.constant 0 : index
    %c3392 = arith.constant 3392 : index
    %171 = vector.load %arg13[%c0_178, %c3392] : memref<1x5184xbf16, #tpu.memory_space<vmem>>, vector<1x64xbf16>
    tpu.vector_store %arg13[%c0_178, %c3392], %170 {strides = array<i32>} : memref<1x5184xbf16, #tpu.memory_space<vmem>>, vector<1x64xbf16>,
    %c66 = arith.constant 66 : index
    %c0_179 = arith.constant 0 : index
    %172 = vector.load %arg12[%c66, %c0_179] : memref<97x64xbf16, #tpu.memory_space<vmem>>, vector<1x64xbf16>
    %c0_180 = arith.constant 0 : index
    %c3456 = arith.constant 3456 : index
    %173 = vector.load %arg13[%c0_180, %c3456] : memref<1x5184xbf16, #tpu.memory_space<vmem>>, vector<1x64xbf16>
    tpu.vector_store %arg13[%c0_180, %c3456], %172 {strides = array<i32>} : memref<1x5184xbf16, #tpu.memory_space<vmem>>, vector<1x64xbf16>,
    %c67 = arith.constant 67 : index
    %c0_181 = arith.constant 0 : index
    %174 = vector.load %arg12[%c67, %c0_181] : memref<97x64xbf16, #tpu.memory_space<vmem>>, vector<1x64xbf16>
    %c0_182 = arith.constant 0 : index
    %c3520 = arith.constant 3520 : index
    %175 = vector.load %arg13[%c0_182, %c3520] : memref<1x5184xbf16, #tpu.memory_space<vmem>>, vector<1x64xbf16>
    tpu.vector_store %arg13[%c0_182, %c3520], %174 {strides = array<i32>} : memref<1x5184xbf16, #tpu.memory_space<vmem>>, vector<1x64xbf16>,
    %c68 = arith.constant 68 : index
    %c0_183 = arith.constant 0 : index
    %176 = vector.load %arg12[%c68, %c0_183] : memref<97x64xbf16, #tpu.memory_space<vmem>>, vector<1x64xbf16>
    %c0_184 = arith.constant 0 : index
    %c3584 = arith.constant 3584 : index
    %177 = vector.load %arg13[%c0_184, %c3584] : memref<1x5184xbf16, #tpu.memory_space<vmem>>, vector<1x64xbf16>
    tpu.vector_store %arg13[%c0_184, %c3584], %176 {strides = array<i32>} : memref<1x5184xbf16, #tpu.memory_space<vmem>>, vector<1x64xbf16>,
    %c69 = arith.constant 69 : index
    %c0_185 = arith.constant 0 : index
    %178 = vector.load %arg12[%c69, %c0_185] : memref<97x64xbf16, #tpu.memory_space<vmem>>, vector<1x64xbf16>
    %c0_186 = arith.constant 0 : index
    %c3648 = arith.constant 3648 : index
    %179 = vector.load %arg13[%c0_186, %c3648] : memref<1x5184xbf16, #tpu.memory_space<vmem>>, vector<1x64xbf16>
    tpu.vector_store %arg13[%c0_186, %c3648], %178 {strides = array<i32>} : memref<1x5184xbf16, #tpu.memory_space<vmem>>, vector<1x64xbf16>,
    %c70 = arith.constant 70 : index
    %c0_187 = arith.constant 0 : index
    %180 = vector.load %arg12[%c70, %c0_187] : memref<97x64xbf16, #tpu.memory_space<vmem>>, vector<1x64xbf16>
    %c0_188 = arith.constant 0 : index
    %c3712 = arith.constant 3712 : index
    %181 = vector.load %arg13[%c0_188, %c3712] : memref<1x5184xbf16, #tpu.memory_space<vmem>>, vector<1x64xbf16>
    tpu.vector_store %arg13[%c0_188, %c3712], %180 {strides = array<i32>} : memref<1x5184xbf16, #tpu.memory_space<vmem>>, vector<1x64xbf16>,
    %c71 = arith.constant 71 : index
    %c0_189 = arith.constant 0 : index
    %182 = vector.load %arg12[%c71, %c0_189] : memref<97x64xbf16, #tpu.memory_space<vmem>>, vector<1x64xbf16>
    %c0_190 = arith.constant 0 : index
    %c3776 = arith.constant 3776 : index
    %183 = vector.load %arg13[%c0_190, %c3776] : memref<1x5184xbf16, #tpu.memory_space<vmem>>, vector<1x64xbf16>
    tpu.vector_store %arg13[%c0_190, %c3776], %182 {strides = array<i32>} : memref<1x5184xbf16, #tpu.memory_space<vmem>>, vector<1x64xbf16>,
    %c72 = arith.constant 72 : index
    %c0_191 = arith.constant 0 : index
    %184 = vector.load %arg12[%c72, %c0_191] : memref<97x64xbf16, #tpu.memory_space<vmem>>, vector<1x64xbf16>
    %c0_192 = arith.constant 0 : index
    %c3840 = arith.constant 3840 : index
    %185 = vector.load %arg13[%c0_192, %c3840] : memref<1x5184xbf16, #tpu.memory_space<vmem>>, vector<1x64xbf16>
    tpu.vector_store %arg13[%c0_192, %c3840], %184 {strides = array<i32>} : memref<1x5184xbf16, #tpu.memory_space<vmem>>, vector<1x64xbf16>,
    %c73 = arith.constant 73 : index
    %c0_193 = arith.constant 0 : index
    %186 = vector.load %arg12[%c73, %c0_193] : memref<97x64xbf16, #tpu.memory_space<vmem>>, vector<1x64xbf16>
    %c0_194 = arith.constant 0 : index
    %c3904 = arith.constant 3904 : index
    %187 = vector.load %arg13[%c0_194, %c3904] : memref<1x5184xbf16, #tpu.memory_space<vmem>>, vector<1x64xbf16>
    tpu.vector_store %arg13[%c0_194, %c3904], %186 {strides = array<i32>} : memref<1x5184xbf16, #tpu.memory_space<vmem>>, vector<1x64xbf16>,
    %c74 = arith.constant 74 : index
    %c0_195 = arith.constant 0 : index
    %188 = vector.load %arg12[%c74, %c0_195] : memref<97x64xbf16, #tpu.memory_space<vmem>>, vector<1x64xbf16>
    %c0_196 = arith.constant 0 : index
    %c3968 = arith.constant 3968 : index
    %189 = vector.load %arg13[%c0_196, %c3968] : memref<1x5184xbf16, #tpu.memory_space<vmem>>, vector<1x64xbf16>
    tpu.vector_store %arg13[%c0_196, %c3968], %188 {strides = array<i32>} : memref<1x5184xbf16, #tpu.memory_space<vmem>>, vector<1x64xbf16>,
    %c77 = arith.constant 77 : index
    %c0_197 = arith.constant 0 : index
    %190 = vector.load %arg12[%c77, %c0_197] : memref<97x64xbf16, #tpu.memory_space<vmem>>, vector<1x64xbf16>
    %c0_198 = arith.constant 0 : index
    %c4032 = arith.constant 4032 : index
    %191 = vector.load %arg13[%c0_198, %c4032] : memref<1x5184xbf16, #tpu.memory_space<vmem>>, vector<1x64xbf16>
    tpu.vector_store %arg13[%c0_198, %c4032], %190 {strides = array<i32>} : memref<1x5184xbf16, #tpu.memory_space<vmem>>, vector<1x64xbf16>,
    %c78 = arith.constant 78 : index
    %c0_199 = arith.constant 0 : index
    %192 = vector.load %arg12[%c78, %c0_199] : memref<97x64xbf16, #tpu.memory_space<vmem>>, vector<1x64xbf16>
    %c0_200 = arith.constant 0 : index
    %c4096 = arith.constant 4096 : index
    %193 = vector.load %arg13[%c0_200, %c4096] : memref<1x5184xbf16, #tpu.memory_space<vmem>>, vector<1x64xbf16>
    tpu.vector_store %arg13[%c0_200, %c4096], %192 {strides = array<i32>} : memref<1x5184xbf16, #tpu.memory_space<vmem>>, vector<1x64xbf16>,
    %c79 = arith.constant 79 : index
    %c0_201 = arith.constant 0 : index
    %194 = vector.load %arg12[%c79, %c0_201] : memref<97x64xbf16, #tpu.memory_space<vmem>>, vector<1x64xbf16>
    %c0_202 = arith.constant 0 : index
    %c4160 = arith.constant 4160 : index
    %195 = vector.load %arg13[%c0_202, %c4160] : memref<1x5184xbf16, #tpu.memory_space<vmem>>, vector<1x64xbf16>
    tpu.vector_store %arg13[%c0_202, %c4160], %194 {strides = array<i32>} : memref<1x5184xbf16, #tpu.memory_space<vmem>>, vector<1x64xbf16>,
    %c80 = arith.constant 80 : index
    %c0_203 = arith.constant 0 : index
    %196 = vector.load %arg12[%c80, %c0_203] : memref<97x64xbf16, #tpu.memory_space<vmem>>, vector<1x64xbf16>
    %c0_204 = arith.constant 0 : index
    %c4224 = arith.constant 4224 : index
    %197 = vector.load %arg13[%c0_204, %c4224] : memref<1x5184xbf16, #tpu.memory_space<vmem>>, vector<1x64xbf16>
    tpu.vector_store %arg13[%c0_204, %c4224], %196 {strides = array<i32>} : memref<1x5184xbf16, #tpu.memory_space<vmem>>, vector<1x64xbf16>,
    %c81 = arith.constant 81 : index
    %c0_205 = arith.constant 0 : index
    %198 = vector.load %arg12[%c81, %c0_205] : memref<97x64xbf16, #tpu.memory_space<vmem>>, vector<1x64xbf16>
    %c0_206 = arith.constant 0 : index
    %c4288 = arith.constant 4288 : index
    %199 = vector.load %arg13[%c0_206, %c4288] : memref<1x5184xbf16, #tpu.memory_space<vmem>>, vector<1x64xbf16>
    tpu.vector_store %arg13[%c0_206, %c4288], %198 {strides = array<i32>} : memref<1x5184xbf16, #tpu.memory_space<vmem>>, vector<1x64xbf16>,
    %c82 = arith.constant 82 : index
    %c0_207 = arith.constant 0 : index
    %200 = vector.load %arg12[%c82, %c0_207] : memref<97x64xbf16, #tpu.memory_space<vmem>>, vector<1x64xbf16>
    %c0_208 = arith.constant 0 : index
    %c4352 = arith.constant 4352 : index
    %201 = vector.load %arg13[%c0_208, %c4352] : memref<1x5184xbf16, #tpu.memory_space<vmem>>, vector<1x64xbf16>
    tpu.vector_store %arg13[%c0_208, %c4352], %200 {strides = array<i32>} : memref<1x5184xbf16, #tpu.memory_space<vmem>>, vector<1x64xbf16>,
    %c83 = arith.constant 83 : index
    %c0_209 = arith.constant 0 : index
    %202 = vector.load %arg12[%c83, %c0_209] : memref<97x64xbf16, #tpu.memory_space<vmem>>, vector<1x64xbf16>
    %c0_210 = arith.constant 0 : index
    %c4416 = arith.constant 4416 : index
    %203 = vector.load %arg13[%c0_210, %c4416] : memref<1x5184xbf16, #tpu.memory_space<vmem>>, vector<1x64xbf16>
    tpu.vector_store %arg13[%c0_210, %c4416], %202 {strides = array<i32>} : memref<1x5184xbf16, #tpu.memory_space<vmem>>, vector<1x64xbf16>,
    %c84 = arith.constant 84 : index
    %c0_211 = arith.constant 0 : index
    %204 = vector.load %arg12[%c84, %c0_211] : memref<97x64xbf16, #tpu.memory_space<vmem>>, vector<1x64xbf16>
    %c0_212 = arith.constant 0 : index
    %c4480 = arith.constant 4480 : index
    %205 = vector.load %arg13[%c0_212, %c4480] : memref<1x5184xbf16, #tpu.memory_space<vmem>>, vector<1x64xbf16>
    tpu.vector_store %arg13[%c0_212, %c4480], %204 {strides = array<i32>} : memref<1x5184xbf16, #tpu.memory_space<vmem>>, vector<1x64xbf16>,
    %c85 = arith.constant 85 : index
    %c0_213 = arith.constant 0 : index
    %206 = vector.load %arg12[%c85, %c0_213] : memref<97x64xbf16, #tpu.memory_space<vmem>>, vector<1x64xbf16>
    %c0_214 = arith.constant 0 : index
    %c4544 = arith.constant 4544 : index
    %207 = vector.load %arg13[%c0_214, %c4544] : memref<1x5184xbf16, #tpu.memory_space<vmem>>, vector<1x64xbf16>
    tpu.vector_store %arg13[%c0_214, %c4544], %206 {strides = array<i32>} : memref<1x5184xbf16, #tpu.memory_space<vmem>>, vector<1x64xbf16>,
    %c88 = arith.constant 88 : index
    %c0_215 = arith.constant 0 : index
    %208 = vector.load %arg12[%c88, %c0_215] : memref<97x64xbf16, #tpu.memory_space<vmem>>, vector<1x64xbf16>
    %c0_216 = arith.constant 0 : index
    %c4608 = arith.constant 4608 : index
    %209 = vector.load %arg13[%c0_216, %c4608] : memref<1x5184xbf16, #tpu.memory_space<vmem>>, vector<1x64xbf16>
    tpu.vector_store %arg13[%c0_216, %c4608], %208 {strides = array<i32>} : memref<1x5184xbf16, #tpu.memory_space<vmem>>, vector<1x64xbf16>,
    %c89 = arith.constant 89 : index
    %c0_217 = arith.constant 0 : index
    %210 = vector.load %arg12[%c89, %c0_217] : memref<97x64xbf16, #tpu.memory_space<vmem>>, vector<1x64xbf16>
    %c0_218 = arith.constant 0 : index
    %c4672 = arith.constant 4672 : index
    %211 = vector.load %arg13[%c0_218, %c4672] : memref<1x5184xbf16, #tpu.memory_space<vmem>>, vector<1x64xbf16>
    tpu.vector_store %arg13[%c0_218, %c4672], %210 {strides = array<i32>} : memref<1x5184xbf16, #tpu.memory_space<vmem>>, vector<1x64xbf16>,
    %c90 = arith.constant 90 : index
    %c0_219 = arith.constant 0 : index
    %212 = vector.load %arg12[%c90, %c0_219] : memref<97x64xbf16, #tpu.memory_space<vmem>>, vector<1x64xbf16>
    %c0_220 = arith.constant 0 : index
    %c4736 = arith.constant 4736 : index
    %213 = vector.load %arg13[%c0_220, %c4736] : memref<1x5184xbf16, #tpu.memory_space<vmem>>, vector<1x64xbf16>
    tpu.vector_store %arg13[%c0_220, %c4736], %212 {strides = array<i32>} : memref<1x5184xbf16, #tpu.memory_space<vmem>>, vector<1x64xbf16>,
    %c91 = arith.constant 91 : index
    %c0_221 = arith.constant 0 : index
    %214 = vector.load %arg12[%c91, %c0_221] : memref<97x64xbf16, #tpu.memory_space<vmem>>, vector<1x64xbf16>
    %c0_222 = arith.constant 0 : index
    %c4800 = arith.constant 4800 : index
    %215 = vector.load %arg13[%c0_222, %c4800] : memref<1x5184xbf16, #tpu.memory_space<vmem>>, vector<1x64xbf16>
    tpu.vector_store %arg13[%c0_222, %c4800], %214 {strides = array<i32>} : memref<1x5184xbf16, #tpu.memory_space<vmem>>, vector<1x64xbf16>,
    %c92 = arith.constant 92 : index
    %c0_223 = arith.constant 0 : index
    %216 = vector.load %arg12[%c92, %c0_223] : memref<97x64xbf16, #tpu.memory_space<vmem>>, vector<1x64xbf16>
    %c0_224 = arith.constant 0 : index
    %c4864 = arith.constant 4864 : index
    %217 = vector.load %arg13[%c0_224, %c4864] : memref<1x5184xbf16, #tpu.memory_space<vmem>>, vector<1x64xbf16>
    tpu.vector_store %arg13[%c0_224, %c4864], %216 {strides = array<i32>} : memref<1x5184xbf16, #tpu.memory_space<vmem>>, vector<1x64xbf16>,
    %c93 = arith.constant 93 : index
    %c0_225 = arith.constant 0 : index
    %218 = vector.load %arg12[%c93, %c0_225] : memref<97x64xbf16, #tpu.memory_space<vmem>>, vector<1x64xbf16>
    %c0_226 = arith.constant 0 : index
    %c4928 = arith.constant 4928 : index
    %219 = vector.load %arg13[%c0_226, %c4928] : memref<1x5184xbf16, #tpu.memory_space<vmem>>, vector<1x64xbf16>
    tpu.vector_store %arg13[%c0_226, %c4928], %218 {strides = array<i32>} : memref<1x5184xbf16, #tpu.memory_space<vmem>>, vector<1x64xbf16>,
    %c94 = arith.constant 94 : index
    %c0_227 = arith.constant 0 : index
    %220 = vector.load %arg12[%c94, %c0_227] : memref<97x64xbf16, #tpu.memory_space<vmem>>, vector<1x64xbf16>
    %c0_228 = arith.constant 0 : index
    %c4992 = arith.constant 4992 : index
    %221 = vector.load %arg13[%c0_228, %c4992] : memref<1x5184xbf16, #tpu.memory_space<vmem>>, vector<1x64xbf16>
    tpu.vector_store %arg13[%c0_228, %c4992], %220 {strides = array<i32>} : memref<1x5184xbf16, #tpu.memory_space<vmem>>, vector<1x64xbf16>,
    %c95 = arith.constant 95 : index
    %c0_229 = arith.constant 0 : index
    %222 = vector.load %arg12[%c95, %c0_229] : memref<97x64xbf16, #tpu.memory_space<vmem>>, vector<1x64xbf16>
    %c0_230 = arith.constant 0 : index
    %c5056 = arith.constant 5056 : index
    %223 = vector.load %arg13[%c0_230, %c5056] : memref<1x5184xbf16, #tpu.memory_space<vmem>>, vector<1x64xbf16>
    tpu.vector_store %arg13[%c0_230, %c5056], %222 {strides = array<i32>} : memref<1x5184xbf16, #tpu.memory_space<vmem>>, vector<1x64xbf16>,
    %c96 = arith.constant 96 : index
    %c0_231 = arith.constant 0 : index
    %224 = vector.load %arg12[%c96, %c0_231] : memref<97x64xbf16, #tpu.memory_space<vmem>>, vector<1x64xbf16>
    %c0_232 = arith.constant 0 : index
    %c5120 = arith.constant 5120 : index
    %225 = vector.load %arg13[%c0_232, %c5120] : memref<1x5184xbf16, #tpu.memory_space<vmem>>, vector<1x64xbf16>
    tpu.vector_store %arg13[%c0_232, %c5120], %224 {strides = array<i32>} : memref<1x5184xbf16, #tpu.memory_space<vmem>>, vector<1x64xbf16>,
    %c0_233 = arith.constant 0 : index
    %c0_234 = arith.constant 0 : index
    %226 = vector.load %arg13[%c0_233, %c0_234] : memref<1x5184xbf16, #tpu.memory_space<vmem>>, vector<1x5184xbf16>
    %c0_235 = arith.constant 0 : index
    %c0_236 = arith.constant 0 : index
    %227 = vector.load %arg6[%c0_235, %c0_236] : memref<5184x128xbf16, #tpu.memory_space<vmem>>, vector<5184x128xbf16>
    %cst_237 = arith.constant dense<0.000000e+00> : vector<1x128xf32>
    %228 = tpu.matmul %226, %227, %cst_237 {dimension_numbers = #tpu.dot_dimension_numbers<[1], [0], [0], [1], [0, 0, 1, 1], [], []>} : vector<1x5184xbf16>, vector<5184x128xbf16>, vector<1x128xf32> -> vector<1x128xf32>
    %c0_238 = arith.constant 0 : index
    %c0_239 = arith.constant 0 : index
    %229 = vector.load %arg7[%c0_238, %c0_239] : memref<1x128xf32, #tpu.memory_space<vmem>>, vector<1x128xf32>
    %230 = arith.addf %228, %229 : vector<1x128xf32>
    %cst_240 = arith.constant 0.000000e+00 : f32
    %231 = vector.broadcast %cst_240 : f32 to vector<1x128xf32>
    %232 = arith.maximumf %230, %231 : vector<1x128xf32>
    %233 = arith.truncf %232 : vector<1x128xf32> to vector<1x128xbf16>
    %c0_241 = arith.constant 0 : index
    %c0_242 = arith.constant 0 : index
    %234 = vector.load %arg8[%c0_241, %c0_242] : memref<128x3xbf16, #tpu.memory_space<vmem>>, vector<128x3xbf16>
    %cst_243 = arith.constant dense<0.000000e+00> : vector<1x3xf32>
    %235 = tpu.matmul %233, %234, %cst_243 {dimension_numbers = #tpu.dot_dimension_numbers<[1], [0], [0], [1], [0, 0, 1, 1], [], []>} : vector<1x128xbf16>, vector<128x3xbf16>, vector<1x3xf32> -> vector<1x3xf32>
    %c0_244 = arith.constant 0 : index
    %c0_245 = arith.constant 0 : index
    %236 = vector.load %arg9[%c0_244, %c0_245] : memref<1x3xf32, #tpu.memory_space<vmem>>, vector<1x3xf32>
    %237 = arith.addf %235, %236 : vector<1x3xf32>
    %c0_246 = arith.constant 0 : index
    %c0_247 = arith.constant 0 : index
    %c0_248 = arith.constant 0 : index
    %238 = vector.load %arg10[%c0_246, %c0_247, %c0_248] : memref<1x1x3xf32, #tpu.memory_space<vmem>>, vector<1x1x3xf32>
    %239 = vector.shape_cast %238 : vector<1x1x3xf32> to vector<1x3xf32>
    %240 = vector.shape_cast %237 : vector<1x3xf32> to vector<1x1x3xf32>
    tpu.vector_store %arg10[%c0_246, %c0_247, %c0_248], %240 {strides = array<i32>} : memref<1x1x3xf32, #tpu.memory_space<vmem>>, vector<1x1x3xf32>,
    return
  }
  func.func @transform_0(%arg0: i32) -> (i32, i32, i32) {
    %c0_i32 = arith.constant 0 : i32
    %c0_i32_0 = arith.constant 0 : i32
    %c0_i32_1 = arith.constant 0 : i32
    return %arg0, %c0_i32, %c0_i32_0 : i32, i32, i32
  }
  func.func @transform_1(%arg0: i32) -> (i32, i32) {
    %c0_i32 = arith.constant 0 : i32
    %c0_i32_0 = arith.constant 0 : i32
    %c0_i32_1 = arith.constant 0 : i32
    return %c0_i32, %c0_i32_0 : i32, i32
  }
  func.func @transform_2(%arg0: i32) -> (i32, i32) {
    %c0_i32 = arith.constant 0 : i32
    %c0_i32_0 = arith.constant 0 : i32
    %c0_i32_1 = arith.constant 0 : i32
    return %c0_i32, %c0_i32_0 : i32, i32
  }
  func.func @transform_3(%arg0: i32) -> (i32, i32, i32) {
    %c0_i32 = arith.constant 0 : i32
    %c0_i32_0 = arith.constant 0 : i32
    %c0_i32_1 = arith.constant 0 : i32
    %c0_i32_2 = arith.constant 0 : i32
    return %c0_i32, %c0_i32_0, %c0_i32_1 : i32, i32, i32
  }
  func.func @transform_4(%arg0: i32) -> (i32, i32) {
    %c0_i32 = arith.constant 0 : i32
    %c0_i32_0 = arith.constant 0 : i32
    %c0_i32_1 = arith.constant 0 : i32
    return %c0_i32, %c0_i32_0 : i32, i32
  }
  func.func @transform_5(%arg0: i32) -> (i32, i32) {
    %c0_i32 = arith.constant 0 : i32
    %c0_i32_0 = arith.constant 0 : i32
    %c0_i32_1 = arith.constant 0 : i32
    return %c0_i32, %c0_i32_0 : i32, i32
  }
  func.func @transform_6(%arg0: i32) -> (i32, i32) {
    %c0_i32 = arith.constant 0 : i32
    %c0_i32_0 = arith.constant 0 : i32
    %c0_i32_1 = arith.constant 0 : i32
    return %c0_i32, %c0_i32_0 : i32, i32
  }
  func.func @transform_7(%arg0: i32) -> (i32, i32) {
    %c0_i32 = arith.constant 0 : i32
    %c0_i32_0 = arith.constant 0 : i32
    %c0_i32_1 = arith.constant 0 : i32
    return %c0_i32, %c0_i32_0 : i32, i32
  }
  func.func @transform_8(%arg0: i32) -> (i32, i32) {
    %c0_i32 = arith.constant 0 : i32
    %c0_i32_0 = arith.constant 0 : i32
    %c0_i32_1 = arith.constant 0 : i32
    return %c0_i32, %c0_i32_0 : i32, i32
  }
  func.func @transform_9(%arg0: i32) -> (i32, i32, i32) {
    %c0_i32 = arith.constant 0 : i32
    %c0_i32_0 = arith.constant 0 : i32
    %c0_i32_1 = arith.constant 0 : i32
    return %arg0, %c0_i32, %c0_i32_0 : i32, i32, i32
  }
}

</mosaic_0001>

<llo_original>
// kernel: dqn_forward.2
$region0: #{dqn_forward.2}
  #allocation0 [shape = 'u32[]', space=smem, size = 0x4, offset = 0x4, fixed_abs, tag = 'smem constant byte address 0x4 - core index']
  #allocation1 [shape = 'u32[144,128]{1,0:T(1,128)}', space=vmem, size = 0x12000, scoped, tag = 'internal scratch']
  %s0 = inlined_call_operand.vmem [shape: bf16[1152,128], index: 0, kind: input, shape index: {}]
  %s1 = inlined_call_operand.vmem [shape: bf16[128,32], index: 1, kind: input, shape index: {}]
  %s2 = inlined_call_operand.vmem [shape: f32[1,32], index: 2, kind: input, shape index: {}]
  %s3 = inlined_call_operand.vmem [shape: bf16[1152,32], index: 3, kind: output, shape index: {}]
  %s4 = sld [smem:[#allocation0]]
  $region45: #{dqn_forward.2} parent=0
    _
  %s6 = ssub.s32 1, %s4
  %s7 = scalar_select 0, %s6, %s4
  loop: start=0, step=1, limit=4
  $region2: #{dqn_forward.2} parent=0 // loop_pre_header
    _
  $region3: #{dqn_forward.2} parent=0 // loop_header
    %s9 = sphi 0, %s13
    %p10 = scmp.ge.s32.totalorder %s9, 4
    %s19 = sphi 0, %s21
    %s22 = sphi 0, %s19
    %s23 = sphi 0, %s22
    %s39 = sphi 0, %s23
    %s43 = sphi 0, %s43
    %s45 = sphi 0, %s43
    %s46 = sphi 0, %s45
    %s60 = sphi 0, %s46
    %s64 = sphi 0, %s64
    %s66 = sphi 0, %s64
    %s67 = sphi 0, %s66
    %s81 = sphi 0, %s67
    %s87 = sphi 0, %s89
    %s90 = sphi 0, %s87
    %s91 = sphi 0, %s90
    %s107 = sphi 0, %s91
  $region4: #{dqn_forward.2} parent=0 // loop_header_branch
    %12 = sbr.rel (%p10) target = $region8
  $region5: #{dqn_forward.2} parent=0 // loop_body
    %s14 = ssub.s32 %s9, 1
    %s15 = ssub.s32 %s9, 2
    %s16 = sadd.s32 %s9, 1
    %s17 = ssub.s32 %s9, %s16
    %p18 = scmp.eq.s32.totalorder %s17, 0
    %s20 = sadd.s32 %s19, 1
    %s21 = scalar_select %p18, %s19, %s20
    %p24 = pneg %p18
    %p25 = scmp.eq.s32.totalorder %s9, 1
    %p26 = por %p24, %p25
    %p27 = scmp.ne.s32.totalorder %s19, %s22
    %p28 = scmp.eq.s32.totalorder %s9, 0
    %p29 = por %p27, %p28
    %p30 = scmp.ne.s32.totalorder %s19, %s22
    %p31 = scmp.eq.s32.totalorder %s14, 1
    %p32 = por %p30, %p31
    %p33 = scmp.ne.s32.totalorder %s22, %s23
    %p34 = scmp.eq.s32.totalorder %s14, 0
    %p35 = por %p33, %p34
    %p36 = scmp.ne.s32.totalorder %s22, %s23
    %p37 = scmp.eq.s32.totalorder %s15, 1
    %p38 = por %p36, %p37
    %p40 = scmp.ne.s32.totalorder %s23, %s39
    %p41 = scmp.eq.s32.totalorder %s15, 0
    %p42 = por %p40, %p41
    %s44 = sadd.s32 %s43, 1
    %p47 = scmp.eq.s32.totalorder %s9, 1
    %p48 = scmp.ne.s32.totalorder %s43, %s45
    %p49 = scmp.eq.s32.totalorder %s9, 0
    %p50 = por %p48, %p49
    %p51 = scmp.ne.s32.totalorder %s43, %s45
    %p52 = scmp.eq.s32.totalorder %s14, 1
    %p53 = por %p51, %p52
    %p54 = scmp.ne.s32.totalorder %s45, %s46
    %p55 = scmp.eq.s32.totalorder %s14, 0
    %p56 = por %p54, %p55
    %p57 = scmp.ne.s32.totalorder %s45, %s46
    %p58 = scmp.eq.s32.totalorder %s15, 1
    %p59 = por %p57, %p58
    %p61 = scmp.ne.s32.totalorder %s46, %s60
    %p62 = scmp.eq.s32.totalorder %s15, 0
    %p63 = por %p61, %p62
    %s65 = sadd.s32 %s64, 1
    %p68 = scmp.eq.s32.totalorder %s9, 1
    %p69 = scmp.ne.s32.totalorder %s64, %s66
    %p70 = scmp.eq.s32.totalorder %s9, 0
    %p71 = por %p69, %p70
    %p72 = scmp.ne.s32.totalorder %s64, %s66
    %p73 = scmp.eq.s32.totalorder %s14, 1
    %p74 = por %p72, %p73
    %p75 = scmp.ne.s32.totalorder %s66, %s67
    %p76 = scmp.eq.s32.totalorder %s14, 0
    %p77 = por %p75, %p76
    %p78 = scmp.ne.s32.totalorder %s66, %s67
    %p79 = scmp.eq.s32.totalorder %s15, 1
    %p80 = por %p78, %p79
    %p82 = scmp.ne.s32.totalorder %s67, %s81
    %p83 = scmp.eq.s32.totalorder %s15, 0
    %p84 = por %p82, %p83
    %s85 = ssub.s32 %s9, %s16
    %p86 = scmp.eq.s32.totalorder %s85, 0
    %s88 = sadd.s32 %s87, 1
    %s89 = scalar_select %p86, %s87, %s88
    %p92 = pneg %p86
    %p93 = scmp.eq.s32.totalorder %s9, 1
    %p94 = por %p92, %p93
    %p95 = scmp.ne.s32.totalorder %s87, %s90
    %p96 = scmp.eq.s32.totalorder %s9, 0
    %p97 = por %p95, %p96
    %p98 = scmp.ne.s32.totalorder %s87, %s90
    %p99 = scmp.eq.s32.totalorder %s14, 1
    %p100 = por %p98, %p99
    %p101 = scmp.ne.s32.totalorder %s90, %s91
    %p102 = scmp.eq.s32.totalorder %s14, 0
    %p103 = por %p101, %p102
    %p104 = scmp.ne.s32.totalorder %s90, %s91
    %p105 = scmp.eq.s32.totalorder %s15, 1
    %p106 = por %p104, %p105
    %p108 = scmp.ne.s32.totalorder %s91, %s107
    %p109 = scmp.eq.s32.totalorder %s15, 0
    %p110 = por %p108, %p109
    %p111 = scmp.le.s32.totalorder 1, %s9
    %p112 = scmp.lt.s32.totalorder %s9, 3
    %p113 = pnand %p111, %p112
    %p114 = pneg %p113
    // Predicated region
    $region9: #{dqn_forward.2} parent=5 // pred_check
      _
    $region10: #{dqn_forward.2} parent=5 // pred_check_branch
      %116 = sbr.rel (%p113) target = $region12
    $region11: #{dqn_forward.2} parent=5 // pred_region
      %s117 = ssub.s32 %s9, 1
      // Predicated region
      $region13: #{dqn_forward.2} parent=11 // pred_check
        %p118 = pneg %p56
      $region14: #{dqn_forward.2} parent=11 // pred_check_branch
        %120 = sbr.rel (%p118) target = $region16
      $region15: #{dqn_forward.2} parent=11 // pred_region
        _
      $region16: #{dqn_forward.2} parent=11 // pred_fallthru
        _
      // Predicated region
      $region17: #{dqn_forward.2} parent=11 // pred_check
        %p121 = pneg %p77
      $region18: #{dqn_forward.2} parent=11 // pred_check_branch
        %123 = sbr.rel (%p121) target = $region20
      $region19: #{dqn_forward.2} parent=11 // pred_region
        _
      $region20: #{dqn_forward.2} parent=11 // pred_fallthru
        _
    $region12: #{dqn_forward.2} parent=5 // pred_fallthru
      _
    %p124 = scmp.lt.s32.totalorder %s9, 2
    // Predicated region
    $region21: #{dqn_forward.2} parent=5 // pred_check
      %p125 = pneg %p124
    $region22: #{dqn_forward.2} parent=5 // pred_check_branch
      %127 = sbr.rel (%p125) target = $region24
    $region23: #{dqn_forward.2} parent=5 // pred_region
      // Predicated region
      $region25: #{dqn_forward.2} parent=23 // pred_check
        %p128 = pneg %p29
      $region26: #{dqn_forward.2} parent=23 // pred_check_branch
        %130 = sbr.rel (%p128) target = $region28
      $region27: #{dqn_forward.2} parent=23 // pred_region
        %s131 = smul.u32 72, %s9
        %p132 = scmp.lt.s32.totalorder %s131, 143
        %s133 = scalar_select %p132, %s131, 143
        %s134 = smul.addr %s133, 4
        %s135 = scalar_lea.vmem %s0, %s134
        %s136 = smul.u32 72, %s9
      $region28: #{dqn_forward.2} parent=23 // pred_fallthru
        _
    $region24: #{dqn_forward.2} parent=5 // pred_fallthru
      _
    %p137 = scmp.le.s32.totalorder 1, %s9
    %p138 = scmp.lt.s32.totalorder %s9, 3
    %p139 = pnand %p137, %p138
    %p140 = pneg %p139
    // Predicated region
    $region29: #{dqn_forward.2} parent=5 // pred_check
      _
    $region30: #{dqn_forward.2} parent=5 // pred_check_branch
      %142 = sbr.rel (%p139) target = $region32
    $region31: #{dqn_forward.2} parent=5 // pred_region
      %s143 = ssub.s32 %s9, 1
      %s144 = smul.u32 72, %s14
      %p145 = scmp.lt.s32.totalorder %s144, 143
      %s146 = scalar_select %p145, %s144, 143
      %s147 = smul.addr %s146, 4
      %s148 = scalar_lea.vmem %s0, %s147
      %p149 = pneg %p35
      %p150 = pneg %p32
      %p151 = pneg %p56
      %p152 = pneg %p53
      %p153 = pneg %p77
      %p154 = pneg %p74
      %p155 = pneg %p103
      %p156 = pneg %p100
      %s157 = smul.u32 72, %s14
      %p158 = scmp.lt.s32.totalorder %s157, 143
      %s159 = scalar_select %p158, %s157, 143
      %s160 = smul.addr %s159, 4
      %s161 = scalar_lea.vmem %s3, %s160
      %s162 = smul.u32 72, %s14
      %p163 = scmp.lt.s32.totalorder %s162, 143
      %s164 = scalar_select %p163, %s162, 143
      %s165 = smul.addr %s164, 4
      %s166 = scalar_lea.vmem %s0, %s165
      %s167 = smul.u32 72, %s14
      %s168 = smul.u32 72, %s14
      %p169 = scmp.lt.s32.totalorder %s168, 143
      %s170 = scalar_select %p169, %s168, 143
      %s171 = smul.addr %s170, 4
      %s172 = scalar_lea.vmem %s3, %s171
      %s173 = smul.u32 72, %s14
      %v175 = vld [vmem:[%s166] sm:$0xf]
      %v176 = vld [vmem:[%s166 + $0x4] sm:$0xf]
      %v177 = vld [vmem:[%s166 + $0x8] sm:$0xf]
      %v178 = vld [vmem:[%s166 + $0xc] sm:$0xf]
      %v179 = vld [vmem:[%s166 + $0x10] sm:$0xf]
      %v180 = vld [vmem:[%s166 + $0x14] sm:$0xf]
      %v181 = vld [vmem:[%s166 + $0x18] sm:$0xf]
      %v182 = vld [vmem:[%s166 + $0x1c] sm:$0xf]
      %v183 = vld [vmem:[%s166 + $0x20] sm:$0xf]
      %v184 = vld [vmem:[%s166 + $0x24] sm:$0xf]
      %v185 = vld [vmem:[%s166 + $0x28] sm:$0xf]
      %v186 = vld [vmem:[%s166 + $0x2c] sm:$0xf]
      %v187 = vld [vmem:[%s166 + $0x30] sm:$0xf]
      %v188 = vld [vmem:[%s166 + $0x34] sm:$0xf]
      %v189 = vld [vmem:[%s166 + $0x38] sm:$0xf]
      %v190 = vld [vmem:[%s166 + $0x3c] sm:$0xf]
      %v191 = vld [vmem:[%s166 + $0x40] sm:$0xf]
      %v192 = vld [vmem:[%s166 + $0x44] sm:$0xf]
      %v193 = vld [vmem:[%s166 + $0x48] sm:$0xf]
      %v194 = vld [vmem:[%s166 + $0x4c] sm:$0xf]
      %v195 = vld [vmem:[%s166 + $0x50] sm:$0xf]
      %v196 = vld [vmem:[%s166 + $0x54] sm:$0xf]
      %v197 = vld [vmem:[%s166 + $0x58] sm:$0xf]
      %v198 = vld [vmem:[%s166 + $0x5c] sm:$0xf]
      %v199 = vld [vmem:[%s166 + $0x60] sm:$0xf]
      %v200 = vld [vmem:[%s166 + $0x64] sm:$0xf]
      %v201 = vld [vmem:[%s166 + $0x68] sm:$0xf]
      %v202 = vld [vmem:[%s166 + $0x6c] sm:$0xf]
      %v203 = vld [vmem:[%s166 + $0x70] sm:$0xf]
      %v204 = vld [vmem:[%s166 + $0x74] sm:$0xf]
      %v205 = vld [vmem:[%s166 + $0x78] sm:$0xf]
      %v206 = vld [vmem:[%s166 + $0x7c] sm:$0xf]
      %v207 = vld [vmem:[%s166 + $0x80] sm:$0xf]
      %v208 = vld [vmem:[%s166 + $0x84] sm:$0xf]
      %v209 = vld [vmem:[%s166 + $0x88] sm:$0xf]
      %v210 = vld [vmem:[%s166 + $0x8c] sm:$0xf]
      %v211 = vld [vmem:[%s166 + $0x90] sm:$0xf]
      %v212 = vld [vmem:[%s166 + $0x94] sm:$0xf]
      %v213 = vld [vmem:[%s166 + $0x98] sm:$0xf]
      %v214 = vld [vmem:[%s166 + $0x9c] sm:$0xf]
      %v215 = vld [vmem:[%s166 + $0xa0] sm:$0xf]
      %v216 = vld [vmem:[%s166 + $0xa4] sm:$0xf]
      %v217 = vld [vmem:[%s166 + $0xa8] sm:$0xf]
      %v218 = vld [vmem:[%s166 + $0xac] sm:$0xf]
      %v219 = vld [vmem:[%s166 + $0xb0] sm:$0xf]
      %v220 = vld [vmem:[%s166 + $0xb4] sm:$0xf]
      %v221 = vld [vmem:[%s166 + $0xb8] sm:$0xf]
      %v222 = vld [vmem:[%s166 + $0xbc] sm:$0xf]
      %v223 = vld [vmem:[%s166 + $0xc0] sm:$0xf]
      %v224 = vld [vmem:[%s166 + $0xc4] sm:$0xf]
      %v225 = vld [vmem:[%s166 + $0xc8] sm:$0xf]
      %v226 = vld [vmem:[%s166 + $0xcc] sm:$0xf]
      %v227 = vld [vmem:[%s166 + $0xd0] sm:$0xf]
      %v228 = vld [vmem:[%s166 + $0xd4] sm:$0xf]
      %v229 = vld [vmem:[%s166 + $0xd8] sm:$0xf]
      %v230 = vld [vmem:[%s166 + $0xdc] sm:$0xf]
      %v231 = vld [vmem:[%s166 + $0xe0] sm:$0xf]
      %v232 = vld [vmem:[%s166 + $0xe4] sm:$0xf]
      %v233 = vld [vmem:[%s166 + $0xe8] sm:$0xf]
      %v234 = vld [vmem:[%s166 + $0xec] sm:$0xf]
      %v235 = vld [vmem:[%s166 + $0xf0] sm:$0xf]
      %v236 = vld [vmem:[%s166 + $0xf4] sm:$0xf]
      %v237 = vld [vmem:[%s166 + $0xf8] sm:$0xf]
      %v238 = vld [vmem:[%s166 + $0xfc] sm:$0xf]
      %v239 = vld [vmem:[%s166 + $0x100] sm:$0xf]
      %v240 = vld [vmem:[%s166 + $0x104] sm:$0xf]
      %v241 = vld [vmem:[%s166 + $0x108] sm:$0xf]
      %v242 = vld [vmem:[%s166 + $0x10c] sm:$0xf]
      %v243 = vld [vmem:[%s166 + $0x110] sm:$0xf]
      %v244 = vld [vmem:[%s166 + $0x114] sm:$0xf]
      %v245 = vld [vmem:[%s166 + $0x118] sm:$0xf]
      %v246 = vld [vmem:[%s166 + $0x11c] sm:$0xf]
      %v247 = vld [vmem:[%s1] sm:$0xf]
      %v248 = vld [vmem:[%s1 + $0x4] sm:$0xf]
      %v249 = vld [vmem:[%s1 + $0x8] sm:$0xf]
      %v250 = vld [vmem:[%s1 + $0xc] sm:$0xf]
      %v251 = vld [vmem:[%s1 + $0x10] sm:$0xf]
      %v252 = vld [vmem:[%s1 + $0x14] sm:$0xf]
      %v253 = vld [vmem:[%s1 + $0x18] sm:$0xf]
      %v254 = vld [vmem:[%s1 + $0x1c] sm:$0xf]
      %v255 = vld [vmem:[%s1 + $0x20] sm:$0xf]
      %v256 = vld [vmem:[%s1 + $0x24] sm:$0xf]
      %v257 = vld [vmem:[%s1 + $0x28] sm:$0xf]
      %v258 = vld [vmem:[%s1 + $0x2c] sm:$0xf]
      %v259 = vld [vmem:[%s1 + $0x30] sm:$0xf]
      %v260 = vld [vmem:[%s1 + $0x34] sm:$0xf]
      %v261 = vld [vmem:[%s1 + $0x38] sm:$0xf]
      %v262 = vld [vmem:[%s1 + $0x3c] sm:$0xf]
      %v263 = vld [vmem:[%s2] sm:$0x1]
      %v265 = vlaneseq
      %v266 = vshrl.u32 %v265, 7
      %v267 = vsub.s32 0, %v266
      %v268 = vrot.slane %v263, %v267
      %v342 = vunpack.c.l.b16 %v175
      %v343 = vunpack.c.l.b16 %v176
      %v344 = vunpack.c.l.b16 %v177
      %v345 = vunpack.c.l.b16 %v178
      %v346 = vunpack.c.l.b16 %v179
      %v347 = vunpack.c.l.b16 %v180
      %v348 = vunpack.c.l.b16 %v181
      %v349 = vunpack.c.l.b16 %v182
      %v350 = vunpack.c.l.b16 %v183
      %v351 = vunpack.c.l.b16 %v184
      %v352 = vunpack.c.l.b16 %v185
      %v353 = vunpack.c.l.b16 %v186
      %v354 = vunpack.c.l.b16 %v187
      %v355 = vunpack.c.l.b16 %v188
      %v356 = vunpack.c.l.b16 %v189
      %v357 = vunpack.c.l.b16 %v190
      %v358 = vunpack.c.l.b16 %v191
      %v359 = vunpack.c.l.b16 %v192
      %v360 = vunpack.c.l.b16 %v193
      %v361 = vunpack.c.l.b16 %v194
      %v362 = vunpack.c.l.b16 %v195
      %v363 = vunpack.c.l.b16 %v196
      %v364 = vunpack.c.l.b16 %v197
      %v365 = vunpack.c.l.b16 %v198
      %v366 = vunpack.c.l.b16 %v199
      %v367 = vunpack.c.l.b16 %v200
      %v368 = vunpack.c.l.b16 %v201
      %v369 = vunpack.c.l.b16 %v202
      %v370 = vunpack.c.l.b16 %v203
      %v371 = vunpack.c.l.b16 %v204
      %v372 = vunpack.c.l.b16 %v205
      %v373 = vunpack.c.l.b16 %v206
      %v374 = vunpack.c.l.b16 %v207
      %v375 = vunpack.c.l.b16 %v208
      %v376 = vunpack.c.l.b16 %v209
      %v377 = vunpack.c.l.b16 %v210
      %v378 = vunpack.c.l.b16 %v211
      %v379 = vunpack.c.l.b16 %v212
      %v380 = vunpack.c.l.b16 %v213
      %v381 = vunpack.c.l.b16 %v214
      %v382 = vunpack.c.l.b16 %v215
      %v383 = vunpack.c.l.b16 %v216
      %v384 = vunpack.c.l.b16 %v217
      %v385 = vunpack.c.l.b16 %v218
      %v386 = vunpack.c.l.b16 %v219
      %v387 = vunpack.c.l.b16 %v220
      %v388 = vunpack.c.l.b16 %v221
      %v389 = vunpack.c.l.b16 %v222
      %v390 = vunpack.c.l.b16 %v223
      %v391 = vunpack.c.l.b16 %v224
      %v392 = vunpack.c.l.b16 %v225
      %v393 = vunpack.c.l.b16 %v226
      %v394 = vunpack.c.l.b16 %v227
      %v395 = vunpack.c.l.b16 %v228
      %v396 = vunpack.c.l.b16 %v229
      %v397 = vunpack.c.l.b16 %v230
      %v398 = vunpack.c.l.b16 %v231
      %v399 = vunpack.c.l.b16 %v232
      %v400 = vunpack.c.l.b16 %v233
      %v401 = vunpack.c.l.b16 %v234
      %v402 = vunpack.c.l.b16 %v235
      %v403 = vunpack.c.l.b16 %v236
      %v404 = vunpack.c.l.b16 %v237
      %v405 = vunpack.c.l.b16 %v238
      %v406 = vunpack.c.l.b16 %v239
      %v407 = vunpack.c.l.b16 %v240
      %v408 = vunpack.c.l.b16 %v241
      %v409 = vunpack.c.l.b16 %v242
      %v410 = vunpack.c.l.b16 %v243
      %v411 = vunpack.c.l.b16 %v244
      %v412 = vunpack.c.l.b16 %v245
      %v413 = vunpack.c.l.b16 %v246
      %v414 = vpack.c.b16 %v343, %v342
      %v415 = vpack.c.b16 %v345, %v344
      %v416 = vpack.c.b16 %v347, %v346
      %v417 = vpack.c.b16 %v349, %v348
      %v418 = vpack.c.b16 %v351, %v350
      %v419 = vpack.c.b16 %v353, %v352
      %v420 = vpack.c.b16 %v355, %v354
      %v421 = vpack.c.b16 %v357, %v356
      %v422 = vpack.c.b16 %v359, %v358
      %v423 = vpack.c.b16 %v361, %v360
      %v424 = vpack.c.b16 %v363, %v362
      %v425 = vpack.c.b16 %v365, %v364
      %v426 = vpack.c.b16 %v367, %v366
      %v427 = vpack.c.b16 %v369, %v368
      %v428 = vpack.c.b16 %v371, %v370
      %v429 = vpack.c.b16 %v373, %v372
      %v430 = vpack.c.b16 %v375, %v374
      %v431 = vpack.c.b16 %v377, %v376
      %v432 = vpack.c.b16 %v379, %v378
      %v433 = vpack.c.b16 %v381, %v380
      %v434 = vpack.c.b16 %v383, %v382
      %v435 = vpack.c.b16 %v385, %v384
      %v436 = vpack.c.b16 %v387, %v386
      %v437 = vpack.c.b16 %v389, %v388
      %v438 = vpack.c.b16 %v391, %v390
      %v439 = vpack.c.b16 %v393, %v392
      %v440 = vpack.c.b16 %v395, %v394
      %v441 = vpack.c.b16 %v397, %v396
      %v442 = vpack.c.b16 %v399, %v398
      %v443 = vpack.c.b16 %v401, %v400
      %v444 = vpack.c.b16 %v403, %v402
      %v445 = vpack.c.b16 %v405, %v404
      %v446 = vpack.c.b16 %v407, %v406
      %v447 = vpack.c.b16 %v409, %v408
      %v448 = vpack.c.b16 %v411, %v410
      %v449 = vpack.c.b16 %v413, %v412
      %v502 = vunpack.c.l.b16 %v247
      %v503 = vunpack.c.l.b16 %v248
      %v504 = vunpack.c.l.b16 %v249
      %v505 = vunpack.c.l.b16 %v250
      %v506 = vunpack.c.l.b16 %v251
      %v507 = vunpack.c.l.b16 %v252
      %v508 = vunpack.c.l.b16 %v253
      %v509 = vunpack.c.l.b16 %v254
      %v510 = vunpack.c.l.b16 %v255
      %v511 = vunpack.c.l.b16 %v256
      %v512 = vunpack.c.l.b16 %v257
      %v513 = vunpack.c.l.b16 %v258
      %v514 = vunpack.c.l.b16 %v259
      %v515 = vunpack.c.l.b16 %v260
      %v516 = vunpack.c.l.b16 %v261
      %v517 = vunpack.c.l.b16 %v262
      %v518 = vpack.c.b16 %v503, %v502
      %v519 = vpack.c.b16 %v505, %v504
      %v520 = vpack.c.b16 %v507, %v506
      %v521 = vpack.c.b16 %v509, %v508
      %v522 = vpack.c.b16 %v511, %v510
      %v523 = vpack.c.b16 %v513, %v512
      %v524 = vpack.c.b16 %v515, %v514
      %v525 = vpack.c.b16 %v517, %v516
      %534 = vmatprep.subr.bf16.mxu0 0
      %535 = vmatpush1.bf16.msra.mxu0 %v525
      %536 = vmatprep.subr.bf16.mxu0 0
      %537 = vmatpush1.bf16.msra.mxu0 %v524
      %538 = vmatprep.subr.bf16.mxu0 0
      %539 = vmatpush1.bf16.msra.mxu0 %v523
      %540 = vmatprep.subr.bf16.mxu0 0
      %541 = vmatpush1.bf16.msra.mxu0 %v522
      %542 = vmatprep.subr.bf16.mxu0 0
      %543 = vmatpush1.bf16.msra.mxu0 %v521
      %544 = vmatprep.subr.bf16.mxu0 0
      %545 = vmatpush1.bf16.msra.mxu0 %v520
      %546 = vmatprep.subr.bf16.mxu0 0
      %547 = vmatpush1.bf16.msra.mxu0 %v519
      %548 = vmatprep.subr.bf16.mxu0 0
      %549 = vmatpush1.bf16.msra.mxu0 %v518
      %550 = vmatprep.subr.bf16.mxu0 0
      %551 = vmatpush2.bf16.msra.mxu0 0
      %552 = vmatprep.subr.bf16.mxu0 0
      %553 = vmatpush2.bf16.msra.mxu0 0
      %554 = vmatprep.subr.bf16.mxu0 0
      %555 = vmatpush2.bf16.msra.mxu0 0
      %556 = vmatprep.subr.bf16.mxu0 0
      %557 = vmatpush2.bf16.msra.mxu0 0
      %558 = vmatprep.subr.bf16.mxu0 0
      %559 = vmatpush2.bf16.msra.mxu0 0
      %560 = vmatprep.subr.bf16.mxu0 0
      %561 = vmatpush2.bf16.msra.mxu0 0
      %562 = vmatprep.subr.bf16.mxu0 0
      %563 = vmatpush2.bf16.msra.mxu0 0
      %564 = vmatprep.subr.bf16.mxu0 0
      %565 = vmatpush2.bf16.msra.mxu0 0
      %566 = vmatprep.mubr.bf16.mxu0 0
      %567 = vmatmul.mubr.bf16.gmra.mxu0 %v414
      %v568 = vpop.f32.mrf.mxu0
      %v569 = vadd.f32 %v268, %v568
      %v570 = vpop.f32.mrf.mxu0
      %v571 = vpop.f32.mrf.mxu0
      %v572 = vadd.f32 %v268, %v571
      %v573 = vpop.f32.mrf.mxu0
      %574 = vmatprep.mubr.bf16.mxu0 0
      %575 = vmatmul.mubr.bf16.gmra.mxu0 %v415
      %v576 = vpop.f32.mrf.mxu0
      %v577 = vadd.f32 %v268, %v576
      %v578 = vpop.f32.mrf.mxu0
      %v579 = vpop.f32.mrf.mxu0
      %v580 = vadd.f32 %v268, %v579
      %v581 = vpop.f32.mrf.mxu0
      %582 = vmatprep.mubr.bf16.mxu0 0
      %583 = vmatmul.mubr.bf16.gmra.mxu0 %v416
      %v584 = vpop.f32.mrf.mxu0
      %v585 = vadd.f32 %v268, %v584
      %v586 = vpop.f32.mrf.mxu0
      %v587 = vpop.f32.mrf.mxu0
      %v588 = vadd.f32 %v268, %v587
      %v589 = vpop.f32.mrf.mxu0
      %590 = vmatprep.mubr.bf16.mxu0 0
      %591 = vmatmul.mubr.bf16.gmra.mxu0 %v417
      %v592 = vpop.f32.mrf.mxu0
      %v593 = vadd.f32 %v268, %v592
      %v594 = vpop.f32.mrf.mxu0
      %v595 = vpop.f32.mrf.mxu0
      %v596 = vadd.f32 %v268, %v595
      %v597 = vpop.f32.mrf.mxu0
      %598 = vmatprep.mubr.bf16.mxu0 0
      %599 = vmatmul.mubr.bf16.gmra.mxu0 %v418
      %v600 = vpop.f32.mrf.mxu0
      %v601 = vadd.f32 %v268, %v600
      %v602 = vpop.f32.mrf.mxu0
      %v603 = vpop.f32.mrf.mxu0
      %v604 = vadd.f32 %v268, %v603
      %v605 = vpop.f32.mrf.mxu0
      %606 = vmatprep.mubr.bf16.mxu0 0
      %607 = vmatmul.mubr.bf16.gmra.mxu0 %v419
      %v608 = vpop.f32.mrf.mxu0
      %v609 = vadd.f32 %v268, %v608
      %v610 = vpop.f32.mrf.mxu0
      %v611 = vpop.f32.mrf.mxu0
      %v612 = vadd.f32 %v268, %v611
      %v613 = vpop.f32.mrf.mxu0
      %614 = vmatprep.mubr.bf16.mxu0 0
      %615 = vmatmul.mubr.bf16.gmra.mxu0 %v420
      %v616 = vpop.f32.mrf.mxu0
      %v617 = vadd.f32 %v268, %v616
      %v618 = vpop.f32.mrf.mxu0
      %v619 = vpop.f32.mrf.mxu0
      %v620 = vadd.f32 %v268, %v619
      %v621 = vpop.f32.mrf.mxu0
      %622 = vmatprep.mubr.bf16.mxu0 0
      %623 = vmatmul.mubr.bf16.gmra.mxu0 %v421
      %v624 = vpop.f32.mrf.mxu0
      %v625 = vadd.f32 %v268, %v624
      %v626 = vpop.f32.mrf.mxu0
      %v627 = vpop.f32.mrf.mxu0
      %v628 = vadd.f32 %v268, %v627
      %v629 = vpop.f32.mrf.mxu0
      %630 = vmatprep.mubr.bf16.mxu0 0
      %631 = vmatmul.mubr.bf16.gmra.mxu0 %v422
      %v632 = vpop.f32.mrf.mxu0
      %v633 = vadd.f32 %v268, %v632
      %v634 = vpop.f32.mrf.mxu0
      %v635 = vpop.f32.mrf.mxu0
      %v636 = vadd.f32 %v268, %v635
      %v637 = vpop.f32.mrf.mxu0
      %638 = vmatprep.mubr.bf16.mxu0 0
      %639 = vmatmul.mubr.bf16.gmra.mxu0 %v423
      %v640 = vpop.f32.mrf.mxu0
      %v641 = vadd.f32 %v268, %v640
      %v642 = vpop.f32.mrf.mxu0
      %v643 = vpop.f32.mrf.mxu0
      %v644 = vadd.f32 %v268, %v643
      %v645 = vpop.f32.mrf.mxu0
      %646 = vmatprep.mubr.bf16.mxu0 0
      %647 = vmatmul.mubr.bf16.gmra.mxu0 %v424
      %v648 = vpop.f32.mrf.mxu0
      %v649 = vadd.f32 %v268, %v648
      %v650 = vpop.f32.mrf.mxu0
      %v651 = vpop.f32.mrf.mxu0
      %v652 = vadd.f32 %v268, %v651
      %v653 = vpop.f32.mrf.mxu0
      %654 = vmatprep.mubr.bf16.mxu0 0
      %655 = vmatmul.mubr.bf16.gmra.mxu0 %v425
      %v656 = vpop.f32.mrf.mxu0
      %v657 = vadd.f32 %v268, %v656
      %v658 = vpop.f32.mrf.mxu0
      %v659 = vpop.f32.mrf.mxu0
      %v660 = vadd.f32 %v268, %v659
      %v661 = vpop.f32.mrf.mxu0
      %662 = vmatprep.mubr.bf16.mxu0 0
      %663 = vmatmul.mubr.bf16.gmra.mxu0 %v426
      %v664 = vpop.f32.mrf.mxu0
      %v665 = vadd.f32 %v268, %v664
      %v666 = vpop.f32.mrf.mxu0
      %v667 = vpop.f32.mrf.mxu0
      %v668 = vadd.f32 %v268, %v667
      %v669 = vpop.f32.mrf.mxu0
      %670 = vmatprep.mubr.bf16.mxu0 0
      %671 = vmatmul.mubr.bf16.gmra.mxu0 %v427
      %v672 = vpop.f32.mrf.mxu0
      %v673 = vadd.f32 %v268, %v672
      %v674 = vpop.f32.mrf.mxu0
      %v675 = vpop.f32.mrf.mxu0
      %v676 = vadd.f32 %v268, %v675
      %v677 = vpop.f32.mrf.mxu0
      %678 = vmatprep.mubr.bf16.mxu0 0
      %679 = vmatmul.mubr.bf16.gmra.mxu0 %v428
      %v680 = vpop.f32.mrf.mxu0
      %v681 = vadd.f32 %v268, %v680
      %v682 = vpop.f32.mrf.mxu0
      %v683 = vpop.f32.mrf.mxu0
      %v684 = vadd.f32 %v268, %v683
      %v685 = vpop.f32.mrf.mxu0
      %686 = vmatprep.mubr.bf16.mxu0 0
      %687 = vmatmul.mubr.bf16.gmra.mxu0 %v429
      %v688 = vpop.f32.mrf.mxu0
      %v689 = vadd.f32 %v268, %v688
      %v690 = vpop.f32.mrf.mxu0
      %v691 = vpop.f32.mrf.mxu0
      %v692 = vadd.f32 %v268, %v691
      %v693 = vpop.f32.mrf.mxu0
      %694 = vmatprep.mubr.bf16.mxu0 0
      %695 = vmatmul.mubr.bf16.gmra.mxu0 %v430
      %v696 = vpop.f32.mrf.mxu0
      %v697 = vadd.f32 %v268, %v696
      %v698 = vpop.f32.mrf.mxu0
      %v699 = vpop.f32.mrf.mxu0
      %v700 = vadd.f32 %v268, %v699
      %v701 = vpop.f32.mrf.mxu0
      %702 = vmatprep.mubr.bf16.mxu0 0
      %703 = vmatmul.mubr.bf16.gmra.mxu0 %v431
      %v704 = vpop.f32.mrf.mxu0
      %v705 = vadd.f32 %v268, %v704
      %v706 = vpop.f32.mrf.mxu0
      %v707 = vpop.f32.mrf.mxu0
      %v708 = vadd.f32 %v268, %v707
      %v709 = vpop.f32.mrf.mxu0
      %710 = vmatprep.mubr.bf16.mxu0 0
      %711 = vmatmul.mubr.bf16.gmra.mxu0 %v432
      %v712 = vpop.f32.mrf.mxu0
      %v713 = vadd.f32 %v268, %v712
      %v714 = vpop.f32.mrf.mxu0
      %v715 = vpop.f32.mrf.mxu0
      %v716 = vadd.f32 %v268, %v715
      %v717 = vpop.f32.mrf.mxu0
      %718 = vmatprep.mubr.bf16.mxu0 0
      %719 = vmatmul.mubr.bf16.gmra.mxu0 %v433
      %v720 = vpop.f32.mrf.mxu0
      %v721 = vadd.f32 %v268, %v720
      %v722 = vpop.f32.mrf.mxu0
      %v723 = vpop.f32.mrf.mxu0
      %v724 = vadd.f32 %v268, %v723
      %v725 = vpop.f32.mrf.mxu0
      %726 = vmatprep.mubr.bf16.mxu0 0
      %727 = vmatmul.mubr.bf16.gmra.mxu0 %v434
      %v728 = vpop.f32.mrf.mxu0
      %v729 = vadd.f32 %v268, %v728
      %v730 = vpop.f32.mrf.mxu0
      %v731 = vpop.f32.mrf.mxu0
      %v732 = vadd.f32 %v268, %v731
      %v733 = vpop.f32.mrf.mxu0
      %734 = vmatprep.mubr.bf16.mxu0 0
      %735 = vmatmul.mubr.bf16.gmra.mxu0 %v435
      %v736 = vpop.f32.mrf.mxu0
      %v737 = vadd.f32 %v268, %v736
      %v738 = vpop.f32.mrf.mxu0
      %v739 = vpop.f32.mrf.mxu0
      %v740 = vadd.f32 %v268, %v739
      %v741 = vpop.f32.mrf.mxu0
      %742 = vmatprep.mubr.bf16.mxu0 0
      %743 = vmatmul.mubr.bf16.gmra.mxu0 %v436
      %v744 = vpop.f32.mrf.mxu0
      %v745 = vadd.f32 %v268, %v744
      %v746 = vpop.f32.mrf.mxu0
      %v747 = vpop.f32.mrf.mxu0
      %v748 = vadd.f32 %v268, %v747
      %v749 = vpop.f32.mrf.mxu0
      %750 = vmatprep.mubr.bf16.mxu0 0
      %751 = vmatmul.mubr.bf16.gmra.mxu0 %v437
      %v752 = vpop.f32.mrf.mxu0
      %v753 = vadd.f32 %v268, %v752
      %v754 = vpop.f32.mrf.mxu0
      %v755 = vpop.f32.mrf.mxu0
      %v756 = vadd.f32 %v268, %v755
      %v757 = vpop.f32.mrf.mxu0
      %758 = vmatprep.mubr.bf16.mxu0 0
      %759 = vmatmul.mubr.bf16.gmra.mxu0 %v438
      %v760 = vpop.f32.mrf.mxu0
      %v761 = vadd.f32 %v268, %v760
      %v762 = vpop.f32.mrf.mxu0
      %v763 = vpop.f32.mrf.mxu0
      %v764 = vadd.f32 %v268, %v763
      %v765 = vpop.f32.mrf.mxu0
      %766 = vmatprep.mubr.bf16.mxu0 0
      %767 = vmatmul.mubr.bf16.gmra.mxu0 %v439
      %v768 = vpop.f32.mrf.mxu0
      %v769 = vadd.f32 %v268, %v768
      %v770 = vpop.f32.mrf.mxu0
      %v771 = vpop.f32.mrf.mxu0
      %v772 = vadd.f32 %v268, %v771
      %v773 = vpop.f32.mrf.mxu0
      %774 = vmatprep.mubr.bf16.mxu0 0
      %775 = vmatmul.mubr.bf16.gmra.mxu0 %v440
      %v776 = vpop.f32.mrf.mxu0
      %v777 = vadd.f32 %v268, %v776
      %v778 = vpop.f32.mrf.mxu0
      %v779 = vpop.f32.mrf.mxu0
      %v780 = vadd.f32 %v268, %v779
      %v781 = vpop.f32.mrf.mxu0
      %782 = vmatprep.mubr.bf16.mxu0 0
      %783 = vmatmul.mubr.bf16.gmra.mxu0 %v441
      %v784 = vpop.f32.mrf.mxu0
      %v785 = vadd.f32 %v268, %v784
      %v786 = vpop.f32.mrf.mxu0
      %v787 = vpop.f32.mrf.mxu0
      %v788 = vadd.f32 %v268, %v787
      %v789 = vpop.f32.mrf.mxu0
      %790 = vmatprep.mubr.bf16.mxu0 0
      %791 = vmatmul.mubr.bf16.gmra.mxu0 %v442
      %v792 = vpop.f32.mrf.mxu0
      %v793 = vadd.f32 %v268, %v792
      %v794 = vpop.f32.mrf.mxu0
      %v795 = vpop.f32.mrf.mxu0
      %v796 = vadd.f32 %v268, %v795
      %v797 = vpop.f32.mrf.mxu0
      %798 = vmatprep.mubr.bf16.mxu0 0
      %799 = vmatmul.mubr.bf16.gmra.mxu0 %v443
      %v800 = vpop.f32.mrf.mxu0
      %v801 = vadd.f32 %v268, %v800
      %v802 = vpop.f32.mrf.mxu0
      %v803 = vpop.f32.mrf.mxu0
      %v804 = vadd.f32 %v268, %v803
      %v805 = vpop.f32.mrf.mxu0
      %806 = vmatprep.mubr.bf16.mxu0 0
      %807 = vmatmul.mubr.bf16.gmra.mxu0 %v444
      %v808 = vpop.f32.mrf.mxu0
      %v809 = vadd.f32 %v268, %v808
      %v810 = vpop.f32.mrf.mxu0
      %v811 = vpop.f32.mrf.mxu0
      %v812 = vadd.f32 %v268, %v811
      %v813 = vpop.f32.mrf.mxu0
      %814 = vmatprep.mubr.bf16.mxu0 0
      %815 = vmatmul.mubr.bf16.gmra.mxu0 %v445
      %v816 = vpop.f32.mrf.mxu0
      %v817 = vadd.f32 %v268, %v816
      %v818 = vpop.f32.mrf.mxu0
      %v819 = vpop.f32.mrf.mxu0
      %v820 = vadd.f32 %v268, %v819
      %v821 = vpop.f32.mrf.mxu0
      %822 = vmatprep.mubr.bf16.mxu0 0
      %823 = vmatmul.mubr.bf16.gmra.mxu0 %v446
      %v824 = vpop.f32.mrf.mxu0
      %v825 = vadd.f32 %v268, %v824
      %v826 = vpop.f32.mrf.mxu0
      %v827 = vpop.f32.mrf.mxu0
      %v828 = vadd.f32 %v268, %v827
      %v829 = vpop.f32.mrf.mxu0
      %830 = vmatprep.mubr.bf16.mxu0 0
      %831 = vmatmul.mubr.bf16.gmra.mxu0 %v447
      %v832 = vpop.f32.mrf.mxu0
      %v833 = vadd.f32 %v268, %v832
      %v834 = vpop.f32.mrf.mxu0
      %v835 = vpop.f32.mrf.mxu0
      %v836 = vadd.f32 %v268, %v835
      %v837 = vpop.f32.mrf.mxu0
      %838 = vmatprep.mubr.bf16.mxu0 0
      %839 = vmatmul.mubr.bf16.gmra.mxu0 %v448
      %v840 = vpop.f32.mrf.mxu0
      %v841 = vadd.f32 %v268, %v840
      %v842 = vpop.f32.mrf.mxu0
      %v843 = vpop.f32.mrf.mxu0
      %v844 = vadd.f32 %v268, %v843
      %v845 = vpop.f32.mrf.mxu0
      %846 = vmatprep.mubr.bf16.mxu0 0
      %847 = vmatmul.mubr.bf16.gmra.mxu0 %v449
      %v848 = vpop.f32.mrf.mxu0
      %v849 = vadd.f32 %v268, %v848
      %v850 = vpop.f32.mrf.mxu0
      %v851 = vpop.f32.mrf.mxu0
      %v852 = vadd.f32 %v268, %v851
      %v853 = vpop.f32.mrf.mxu0
      %854 = vdwg.mxu0
      %v855 = vmax.f32 %v569, 0.0
      %v856 = vmax.f32 %v572, 0.0
      %v857 = vmax.f32 %v577, 0.0
      %v858 = vmax.f32 %v580, 0.0
      %v859 = vmax.f32 %v585, 0.0
      %v860 = vmax.f32 %v588, 0.0
      %v861 = vmax.f32 %v593, 0.0
      %v862 = vmax.f32 %v596, 0.0
      %v863 = vmax.f32 %v601, 0.0
      %v864 = vmax.f32 %v604, 0.0
      %v865 = vmax.f32 %v609, 0.0
      %v866 = vmax.f32 %v612, 0.0
      %v867 = vmax.f32 %v617, 0.0
      %v868 = vmax.f32 %v620, 0.0
      %v869 = vmax.f32 %v625, 0.0
      %v870 = vmax.f32 %v628, 0.0
      %v871 = vmax.f32 %v633, 0.0
      %v872 = vmax.f32 %v636, 0.0
      %v873 = vmax.f32 %v641, 0.0
      %v874 = vmax.f32 %v644, 0.0
      %v875 = vmax.f32 %v649, 0.0
      %v876 = vmax.f32 %v652, 0.0
      %v877 = vmax.f32 %v657, 0.0
      %v878 = vmax.f32 %v660, 0.0
      %v879 = vmax.f32 %v665, 0.0
      %v880 = vmax.f32 %v668, 0.0
      %v881 = vmax.f32 %v673, 0.0
      %v882 = vmax.f32 %v676, 0.0
      %v883 = vmax.f32 %v681, 0.0
      %v884 = vmax.f32 %v684, 0.0
      %v885 = vmax.f32 %v689, 0.0
      %v886 = vmax.f32 %v692, 0.0
      %v887 = vmax.f32 %v697, 0.0
      %v888 = vmax.f32 %v700, 0.0
      %v889 = vmax.f32 %v705, 0.0
      %v890 = vmax.f32 %v708, 0.0
      %v891 = vmax.f32 %v713, 0.0
      %v892 = vmax.f32 %v716, 0.0
      %v893 = vmax.f32 %v721, 0.0
      %v894 = vmax.f32 %v724, 0.0
      %v895 = vmax.f32 %v729, 0.0
      %v896 = vmax.f32 %v732, 0.0
      %v897 = vmax.f32 %v737, 0.0
      %v898 = vmax.f32 %v740, 0.0
      %v899 = vmax.f32 %v745, 0.0
      %v900 = vmax.f32 %v748, 0.0
      %v901 = vmax.f32 %v753, 0.0
      %v902 = vmax.f32 %v756, 0.0
      %v903 = vmax.f32 %v761, 0.0
      %v904 = vmax.f32 %v764, 0.0
      %v905 = vmax.f32 %v769, 0.0
      %v906 = vmax.f32 %v772, 0.0
      %v907 = vmax.f32 %v777, 0.0
      %v908 = vmax.f32 %v780, 0.0
      %v909 = vmax.f32 %v785, 0.0
      %v910 = vmax.f32 %v788, 0.0
      %v911 = vmax.f32 %v793, 0.0
      %v912 = vmax.f32 %v796, 0.0
      %v913 = vmax.f32 %v801, 0.0
      %v914 = vmax.f32 %v804, 0.0
      %v915 = vmax.f32 %v809, 0.0
      %v916 = vmax.f32 %v812, 0.0
      %v917 = vmax.f32 %v817, 0.0
      %v918 = vmax.f32 %v820, 0.0
      %v919 = vmax.f32 %v825, 0.0
      %v920 = vmax.f32 %v828, 0.0
      %v921 = vmax.f32 %v833, 0.0
      %v922 = vmax.f32 %v836, 0.0
      %v923 = vmax.f32 %v841, 0.0
      %v924 = vmax.f32 %v844, 0.0
      %v925 = vmax.f32 %v849, 0.0
      %v926 = vmax.f32 %v852, 0.0
      %v927 = vpack.c.bf16 %v856, %v855
      %v928 = vpack.c.bf16 %v858, %v857
      %v929 = vpack.c.bf16 %v860, %v859
      %v930 = vpack.c.bf16 %v862, %v861
      %v931 = vpack.c.bf16 %v864, %v863
      %v932 = vpack.c.bf16 %v866, %v865
      %v933 = vpack.c.bf16 %v868, %v867
      %v934 = vpack.c.bf16 %v870, %v869
      %v935 = vpack.c.bf16 %v872, %v871
      %v936 = vpack.c.bf16 %v874, %v873
      %v937 = vpack.c.bf16 %v876, %v875
      %v938 = vpack.c.bf16 %v878, %v877
      %v939 = vpack.c.bf16 %v880, %v879
      %v940 = vpack.c.bf16 %v882, %v881
      %v941 = vpack.c.bf16 %v884, %v883
      %v942 = vpack.c.bf16 %v886, %v885
      %v943 = vpack.c.bf16 %v888, %v887
      %v944 = vpack.c.bf16 %v890, %v889
      %v945 = vpack.c.bf16 %v892, %v891
      %v946 = vpack.c.bf16 %v894, %v893
      %v947 = vpack.c.bf16 %v896, %v895
      %v948 = vpack.c.bf16 %v898, %v897
      %v949 = vpack.c.bf16 %v900, %v899
      %v950 = vpack.c.bf16 %v902, %v901
      %v951 = vpack.c.bf16 %v904, %v903
      %v952 = vpack.c.bf16 %v906, %v905
      %v953 = vpack.c.bf16 %v908, %v907
      %v954 = vpack.c.bf16 %v910, %v909
      %v955 = vpack.c.bf16 %v912, %v911
      %v956 = vpack.c.bf16 %v914, %v913
      %v957 = vpack.c.bf16 %v916, %v915
      %v958 = vpack.c.bf16 %v918, %v917
      %v959 = vpack.c.bf16 %v920, %v919
      %v960 = vpack.c.bf16 %v922, %v921
      %v961 = vpack.c.bf16 %v924, %v923
      %v962 = vpack.c.bf16 %v926, %v925
      %v999 = vunpack.c.l.b16 %v927
      %v1000 = vunpack.c.h.b16 %v927
      %v1001 = vunpack.c.l.b16 %v928
      %v1002 = vunpack.c.h.b16 %v928
      %v1003 = vunpack.c.l.b16 %v929
      %v1004 = vunpack.c.h.b16 %v929
      %v1005 = vunpack.c.l.b16 %v930
      %v1006 = vunpack.c.h.b16 %v930
      %v1007 = vunpack.c.l.b16 %v931
      %v1008 = vunpack.c.h.b16 %v931
      %v1009 = vunpack.c.l.b16 %v932
      %v1010 = vunpack.c.h.b16 %v932
      %v1011 = vunpack.c.l.b16 %v933
      %v1012 = vunpack.c.h.b16 %v933
      %v1013 = vunpack.c.l.b16 %v934
      %v1014 = vunpack.c.h.b16 %v934
      %v1015 = vunpack.c.l.b16 %v935
      %v1016 = vunpack.c.h.b16 %v935
      %v1017 = vunpack.c.l.b16 %v936
      %v1018 = vunpack.c.h.b16 %v936
      %v1019 = vunpack.c.l.b16 %v937
      %v1020 = vunpack.c.h.b16 %v937
      %v1021 = vunpack.c.l.b16 %v938
      %v1022 = vunpack.c.h.b16 %v938
      %v1023 = vunpack.c.l.b16 %v939
      %v1024 = vunpack.c.h.b16 %v939
      %v1025 = vunpack.c.l.b16 %v940
      %v1026 = vunpack.c.h.b16 %v940
      %v1027 = vunpack.c.l.b16 %v941
      %v1028 = vunpack.c.h.b16 %v941
      %v1029 = vunpack.c.l.b16 %v942
      %v1030 = vunpack.c.h.b16 %v942
      %v1031 = vunpack.c.l.b16 %v943
      %v1032 = vunpack.c.h.b16 %v943
      %v1033 = vunpack.c.l.b16 %v944
      %v1034 = vunpack.c.h.b16 %v944
      %v1035 = vunpack.c.l.b16 %v945
      %v1036 = vunpack.c.h.b16 %v945
      %v1037 = vunpack.c.l.b16 %v946
      %v1038 = vunpack.c.h.b16 %v946
      %v1039 = vunpack.c.l.b16 %v947
      %v1040 = vunpack.c.h.b16 %v947
      %v1041 = vunpack.c.l.b16 %v948
      %v1042 = vunpack.c.h.b16 %v948
      %v1043 = vunpack.c.l.b16 %v949
      %v1044 = vunpack.c.h.b16 %v949
      %v1045 = vunpack.c.l.b16 %v950
      %v1046 = vunpack.c.h.b16 %v950
      %v1047 = vunpack.c.l.b16 %v951
      %v1048 = vunpack.c.h.b16 %v951
      %v1049 = vunpack.c.l.b16 %v952
      %v1050 = vunpack.c.h.b16 %v952
      %v1051 = vunpack.c.l.b16 %v953
      %v1052 = vunpack.c.h.b16 %v953
      %v1053 = vunpack.c.l.b16 %v954
      %v1054 = vunpack.c.h.b16 %v954
      %v1055 = vunpack.c.l.b16 %v955
      %v1056 = vunpack.c.h.b16 %v955
      %v1057 = vunpack.c.l.b16 %v956
      %v1058 = vunpack.c.h.b16 %v956
      %v1059 = vunpack.c.l.b16 %v957
      %v1060 = vunpack.c.h.b16 %v957
      %v1061 = vunpack.c.l.b16 %v958
      %v1062 = vunpack.c.h.b16 %v958
      %v1063 = vunpack.c.l.b16 %v959
      %v1064 = vunpack.c.h.b16 %v959
      %v1065 = vunpack.c.l.b16 %v960
      %v1066 = vunpack.c.h.b16 %v960
      %v1067 = vunpack.c.l.b16 %v961
      %v1068 = vunpack.c.h.b16 %v961
      %v1069 = vunpack.c.l.b16 %v962
      %v1070 = vunpack.c.h.b16 %v962
      %v1071 = vpack.c.b16 %v999, %v999
      %v1072 = vpack.c.b16 %v1000, %v1000
      %v1073 = vpack.c.b16 %v1001, %v1001
      %v1074 = vpack.c.b16 %v1002, %v1002
      %v1075 = vpack.c.b16 %v1003, %v1003
      %v1076 = vpack.c.b16 %v1004, %v1004
      %v1077 = vpack.c.b16 %v1005, %v1005
      %v1078 = vpack.c.b16 %v1006, %v1006
      %v1079 = vpack.c.b16 %v1007, %v1007
      %v1080 = vpack.c.b16 %v1008, %v1008
      %v1081 = vpack.c.b16 %v1009, %v1009
      %v1082 = vpack.c.b16 %v1010, %v1010
      %v1083 = vpack.c.b16 %v1011, %v1011
      %v1084 = vpack.c.b16 %v1012, %v1012
      %v1085 = vpack.c.b16 %v1013, %v1013
      %v1086 = vpack.c.b16 %v1014, %v1014
      %v1087 = vpack.c.b16 %v1015, %v1015
      %v1088 = vpack.c.b16 %v1016, %v1016
      %v1089 = vpack.c.b16 %v1017, %v1017
      %v1090 = vpack.c.b16 %v1018, %v1018
      %v1091 = vpack.c.b16 %v1019, %v1019
      %v1092 = vpack.c.b16 %v1020, %v1020
      %v1093 = vpack.c.b16 %v1021, %v1021
      %v1094 = vpack.c.b16 %v1022, %v1022
      %v1095 = vpack.c.b16 %v1023, %v1023
      %v1096 = vpack.c.b16 %v1024, %v1024
      %v1097 = vpack.c.b16 %v1025, %v1025
      %v1098 = vpack.c.b16 %v1026, %v1026
      %v1099 = vpack.c.b16 %v1027, %v1027
      %v1100 = vpack.c.b16 %v1028, %v1028
      %v1101 = vpack.c.b16 %v1029, %v1029
      %v1102 = vpack.c.b16 %v1030, %v1030
      %v1103 = vpack.c.b16 %v1031, %v1031
      %v1104 = vpack.c.b16 %v1032, %v1032
      %v1105 = vpack.c.b16 %v1033, %v1033
      %v1106 = vpack.c.b16 %v1034, %v1034
      %v1107 = vpack.c.b16 %v1035, %v1035
      %v1108 = vpack.c.b16 %v1036, %v1036
      %v1109 = vpack.c.b16 %v1037, %v1037
      %v1110 = vpack.c.b16 %v1038, %v1038
      %v1111 = vpack.c.b16 %v1039, %v1039
      %v1112 = vpack.c.b16 %v1040, %v1040
      %v1113 = vpack.c.b16 %v1041, %v1041
      %v1114 = vpack.c.b16 %v1042, %v1042
      %v1115 = vpack.c.b16 %v1043, %v1043
      %v1116 = vpack.c.b16 %v1044, %v1044
      %v1117 = vpack.c.b16 %v1045, %v1045
      %v1118 = vpack.c.b16 %v1046, %v1046
      %v1119 = vpack.c.b16 %v1047, %v1047
      %v1120 = vpack.c.b16 %v1048, %v1048
      %v1121 = vpack.c.b16 %v1049, %v1049
      %v1122 = vpack.c.b16 %v1050, %v1050
      %v1123 = vpack.c.b16 %v1051, %v1051
      %v1124 = vpack.c.b16 %v1052, %v1052
      %v1125 = vpack.c.b16 %v1053, %v1053
      %v1126 = vpack.c.b16 %v1054, %v1054
      %v1127 = vpack.c.b16 %v1055, %v1055
      %v1128 = vpack.c.b16 %v1056, %v1056
      %v1129 = vpack.c.b16 %v1057, %v1057
      %v1130 = vpack.c.b16 %v1058, %v1058
      %v1131 = vpack.c.b16 %v1059, %v1059
      %v1132 = vpack.c.b16 %v1060, %v1060
      %v1133 = vpack.c.b16 %v1061, %v1061
      %v1134 = vpack.c.b16 %v1062, %v1062
      %v1135 = vpack.c.b16 %v1063, %v1063
      %v1136 = vpack.c.b16 %v1064, %v1064
      %v1137 = vpack.c.b16 %v1065, %v1065
      %v1138 = vpack.c.b16 %v1066, %v1066
      %v1139 = vpack.c.b16 %v1067, %v1067
      %v1140 = vpack.c.b16 %v1068, %v1068
      %v1141 = vpack.c.b16 %v1069, %v1069
      %v1142 = vpack.c.b16 %v1070, %v1070
      %vm1215 = vcmask 257024
      %1216 = vst.msk [vmem:[%s172] sm:$0xf] %vm1215, %v1071
      %1217 = vst.msk [vmem:[%s172 + $0x4] sm:$0xf] %vm1215, %v1072
      %1218 = vst.msk [vmem:[%s172 + $0x8] sm:$0xf] %vm1215, %v1073
      %1219 = vst.msk [vmem:[%s172 + $0xc] sm:$0xf] %vm1215, %v1074
      %1220 = vst.msk [vmem:[%s172 + $0x10] sm:$0xf] %vm1215, %v1075
      %1221 = vst.msk [vmem:[%s172 + $0x14] sm:$0xf] %vm1215, %v1076
      %1222 = vst.msk [vmem:[%s172 + $0x18] sm:$0xf] %vm1215, %v1077
      %1223 = vst.msk [vmem:[%s172 + $0x1c] sm:$0xf] %vm1215, %v1078
      %1224 = vst.msk [vmem:[%s172 + $0x20] sm:$0xf] %vm1215, %v1079
      %1225 = vst.msk [vmem:[%s172 + $0x24] sm:$0xf] %vm1215, %v1080
      %1226 = vst.msk [vmem:[%s172 + $0x28] sm:$0xf] %vm1215, %v1081
      %1227 = vst.msk [vmem:[%s172 + $0x2c] sm:$0xf] %vm1215, %v1082
      %1228 = vst.msk [vmem:[%s172 + $0x30] sm:$0xf] %vm1215, %v1083
      %1229 = vst.msk [vmem:[%s172 + $0x34] sm:$0xf] %vm1215, %v1084
      %1230 = vst.msk [vmem:[%s172 + $0x38] sm:$0xf] %vm1215, %v1085
      %1231 = vst.msk [vmem:[%s172 + $0x3c] sm:$0xf] %vm1215, %v1086
      %1232 = vst.msk [vmem:[%s172 + $0x40] sm:$0xf] %vm1215, %v1087
      %1233 = vst.msk [vmem:[%s172 + $0x44] sm:$0xf] %vm1215, %v1088
      %1234 = vst.msk [vmem:[%s172 + $0x48] sm:$0xf] %vm1215, %v1089
      %1235 = vst.msk [vmem:[%s172 + $0x4c] sm:$0xf] %vm1215, %v1090
      %1236 = vst.msk [vmem:[%s172 + $0x50] sm:$0xf] %vm1215, %v1091
      %1237 = vst.msk [vmem:[%s172 + $0x54] sm:$0xf] %vm1215, %v1092
      %1238 = vst.msk [vmem:[%s172 + $0x58] sm:$0xf] %vm1215, %v1093
      %1239 = vst.msk [vmem:[%s172 + $0x5c] sm:$0xf] %vm1215, %v1094
      %1240 = vst.msk [vmem:[%s172 + $0x60] sm:$0xf] %vm1215, %v1095
      %1241 = vst.msk [vmem:[%s172 + $0x64] sm:$0xf] %vm1215, %v1096
      %1242 = vst.msk [vmem:[%s172 + $0x68] sm:$0xf] %vm1215, %v1097
      %1243 = vst.msk [vmem:[%s172 + $0x6c] sm:$0xf] %vm1215, %v1098
      %1244 = vst.msk [vmem:[%s172 + $0x70] sm:$0xf] %vm1215, %v1099
      %1245 = vst.msk [vmem:[%s172 + $0x74] sm:$0xf] %vm1215, %v1100
      %1246 = vst.msk [vmem:[%s172 + $0x78] sm:$0xf] %vm1215, %v1101
      %1247 = vst.msk [vmem:[%s172 + $0x7c] sm:$0xf] %vm1215, %v1102
      %1248 = vst.msk [vmem:[%s172 + $0x80] sm:$0xf] %vm1215, %v1103
      %1249 = vst.msk [vmem:[%s172 + $0x84] sm:$0xf] %vm1215, %v1104
      %1250 = vst.msk [vmem:[%s172 + $0x88] sm:$0xf] %vm1215, %v1105
      %1251 = vst.msk [vmem:[%s172 + $0x8c] sm:$0xf] %vm1215, %v1106
      %1252 = vst.msk [vmem:[%s172 + $0x90] sm:$0xf] %vm1215, %v1107
      %1253 = vst.msk [vmem:[%s172 + $0x94] sm:$0xf] %vm1215, %v1108
      %1254 = vst.msk [vmem:[%s172 + $0x98] sm:$0xf] %vm1215, %v1109
      %1255 = vst.msk [vmem:[%s172 + $0x9c] sm:$0xf] %vm1215, %v1110
      %1256 = vst.msk [vmem:[%s172 + $0xa0] sm:$0xf] %vm1215, %v1111
      %1257 = vst.msk [vmem:[%s172 + $0xa4] sm:$0xf] %vm1215, %v1112
      %1258 = vst.msk [vmem:[%s172 + $0xa8] sm:$0xf] %vm1215, %v1113
      %1259 = vst.msk [vmem:[%s172 + $0xac] sm:$0xf] %vm1215, %v1114
      %1260 = vst.msk [vmem:[%s172 + $0xb0] sm:$0xf] %vm1215, %v1115
      %1261 = vst.msk [vmem:[%s172 + $0xb4] sm:$0xf] %vm1215, %v1116
      %1262 = vst.msk [vmem:[%s172 + $0xb8] sm:$0xf] %vm1215, %v1117
      %1263 = vst.msk [vmem:[%s172 + $0xbc] sm:$0xf] %vm1215, %v1118
      %1264 = vst.msk [vmem:[%s172 + $0xc0] sm:$0xf] %vm1215, %v1119
      %1265 = vst.msk [vmem:[%s172 + $0xc4] sm:$0xf] %vm1215, %v1120
      %1266 = vst.msk [vmem:[%s172 + $0xc8] sm:$0xf] %vm1215, %v1121
      %1267 = vst.msk [vmem:[%s172 + $0xcc] sm:$0xf] %vm1215, %v1122
      %1268 = vst.msk [vmem:[%s172 + $0xd0] sm:$0xf] %vm1215, %v1123
      %1269 = vst.msk [vmem:[%s172 + $0xd4] sm:$0xf] %vm1215, %v1124
      %1270 = vst.msk [vmem:[%s172 + $0xd8] sm:$0xf] %vm1215, %v1125
      %1271 = vst.msk [vmem:[%s172 + $0xdc] sm:$0xf] %vm1215, %v1126
      %1272 = vst.msk [vmem:[%s172 + $0xe0] sm:$0xf] %vm1215, %v1127
      %1273 = vst.msk [vmem:[%s172 + $0xe4] sm:$0xf] %vm1215, %v1128
      %1274 = vst.msk [vmem:[%s172 + $0xe8] sm:$0xf] %vm1215, %v1129
      %1275 = vst.msk [vmem:[%s172 + $0xec] sm:$0xf] %vm1215, %v1130
      %1276 = vst.msk [vmem:[%s172 + $0xf0] sm:$0xf] %vm1215, %v1131
      %1277 = vst.msk [vmem:[%s172 + $0xf4] sm:$0xf] %vm1215, %v1132
      %1278 = vst.msk [vmem:[%s172 + $0xf8] sm:$0xf] %vm1215, %v1133
      %1279 = vst.msk [vmem:[%s172 + $0xfc] sm:$0xf] %vm1215, %v1134
      %1280 = vst.msk [vmem:[%s172 + $0x100] sm:$0xf] %vm1215, %v1135
      %1281 = vst.msk [vmem:[%s172 + $0x104] sm:$0xf] %vm1215, %v1136
      %1282 = vst.msk [vmem:[%s172 + $0x108] sm:$0xf] %vm1215, %v1137
      %1283 = vst.msk [vmem:[%s172 + $0x10c] sm:$0xf] %vm1215, %v1138
      %1284 = vst.msk [vmem:[%s172 + $0x110] sm:$0xf] %vm1215, %v1139
      %1285 = vst.msk [vmem:[%s172 + $0x114] sm:$0xf] %vm1215, %v1140
      %1286 = vst.msk [vmem:[%s172 + $0x118] sm:$0xf] %vm1215, %v1141
      %1287 = vst.msk [vmem:[%s172 + $0x11c] sm:$0xf] %vm1215, %v1142
      %s1288 = smul.u32 72, %s14
      %p1289 = scmp.lt.s32.totalorder %s1288, 143
      %s1290 = scalar_select %p1289, %s1288, 143
      %s1291 = smul.addr %s1290, 4
      %s1292 = scalar_lea.vmem %s3, %s1291
      // Predicated region
      $region33: #{dqn_forward.2} parent=31 // pred_check
        %p1293 = pneg %p100
      $region34: #{dqn_forward.2} parent=31 // pred_check_branch
        %1295 = sbr.rel (%p1293) target = $region36
      $region35: #{dqn_forward.2} parent=31 // pred_region
        %s1296 = smul.u32 72, %s14
      $region36: #{dqn_forward.2} parent=31 // pred_fallthru
        _
    $region32: #{dqn_forward.2} parent=5 // pred_fallthru
      _
    %p1297 = scmp.le.s32.totalorder 2, %s9
    // Predicated region
    $region37: #{dqn_forward.2} parent=5 // pred_check
      %p1298 = pneg %p1297
    $region38: #{dqn_forward.2} parent=5 // pred_check_branch
      %1300 = sbr.rel (%p1298) target = $region40
    $region39: #{dqn_forward.2} parent=5 // pred_region
      %s1301 = ssub.s32 %s9, 2
      // Predicated region
      $region41: #{dqn_forward.2} parent=39 // pred_check
        %p1302 = pneg %p106
      $region42: #{dqn_forward.2} parent=39 // pred_check_branch
        %1304 = sbr.rel (%p1302) target = $region44
      $region43: #{dqn_forward.2} parent=39 // pred_region
        %s1305 = smul.u32 72, %s15
        %p1306 = scmp.lt.s32.totalorder %s1305, 143
        %s1307 = scalar_select %p1306, %s1305, 143
        %s1308 = smul.addr %s1307, 4
        %s1309 = scalar_lea.vmem %s3, %s1308
      $region44: #{dqn_forward.2} parent=39 // pred_fallthru
        _
    $region40: #{dqn_forward.2} parent=5 // pred_fallthru
      _
  $region6: #{dqn_forward.2} parent=0 // loop_footer
    %s13 = sadd.s32 1, %s9
  $region7: #{dqn_forward.2} parent=0 // loop_footer_branch
    %8 = sbr.rel target = $region3
  $region8: #{dqn_forward.2} parent=0 // loop_exit
    _

// kernel: dqn_forward.3
$region0: #{dqn_forward.3}
  #allocation0 [shape = 'u32[]', space=smem, size = 0x4, offset = 0x4, fixed_abs, tag = 'smem constant byte address 0x4 - core index']
  #allocation1 [shape = 'u32[144,128]{1,0:T(1,128)}', space=vmem, size = 0x12000, scoped, tag = 'internal scratch']
  #allocation2 [shape = 'bf16[121,64]{1,0:T(8,128)(2,1)}', space=vmem, size = 0x8000, scoped, tag = 'scratch operand']
  #allocation3 [shape = 'bf16[97,64]{1,0:T(8,128)(2,1)}', space=vmem, size = 0x6800, scoped, tag = 'scratch operand']
  #allocation4 [shape = 'bf16[1,5184]{1,0:T(2,128)(2,1)}', space=vmem, size = 0x5200, scoped, tag = 'scratch operand']
  %s0 = inlined_call_operand.vmem [shape: bf16[2,121,512], index: 0, kind: input, shape index: {}]
  %s1 = inlined_call_operand.vmem [shape: bf16[512,64], index: 1, kind: input, shape index: {}]
  %s2 = inlined_call_operand.vmem [shape: f32[1,64], index: 2, kind: input, shape index: {}]
  %s3 = inlined_call_operand.vmem [shape: bf16[9,64,64], index: 3, kind: input, shape index: {}]
  %s4 = inlined_call_operand.vmem [shape: f32[1,64], index: 4, kind: input, shape index: {}]
  %s5 = inlined_call_operand.vmem [shape: bf16[5184,128], index: 5, kind: input, shape index: {}]
  %s6 = inlined_call_operand.vmem [shape: f32[1,128], index: 6, kind: input, shape index: {}]
  %s7 = inlined_call_operand.vmem [shape: bf16[128,3], index: 7, kind: input, shape index: {}]
  %s8 = inlined_call_operand.vmem [shape: f32[1,3], index: 8, kind: input, shape index: {}]
  %s9 = inlined_call_operand.hbm [shape: f32[2,1,3], index: 9, kind: output, shape index: {}]
  %s10 = sld [smem:[#allocation0]]
  $region69: #{dqn_forward.3} parent=0
    _
  %s12 = ssub.s32 1, %s10
  %s13 = scalar_select 0, %s12, %s10
  $region1: #{dqn_forward.3} parent=0
    #allocation5 [shape = 'u8[1024]{0}', space=vmem, size = 0x400, scoped, tag = 'output window, operand 0']
    #allocation6 [shape = 's32[2]{0}', space=sflag, size = 0x8, scoped, tag = 'scoped memory for dqn_forward.3']
    %14 = vsyncpa [#allocation6], 0
    %s15 = scalar_lea.sflag [#allocation6], 1
    %16 = vsyncpa %s15, 0
    loop: start=0, step=1, limit=4
    $region2: #{dqn_forward.3} parent=1 // loop_pre_header
      _
    $region3: #{dqn_forward.3} parent=1 // loop_header
      %s18 = sphi 0, %s22
      %p19 = scmp.ge.s32.totalorder %s18, 4
      %s28 = sphi 0, %s30
      %s31 = sphi 0, %s28
      %s32 = sphi 0, %s31
      %s48 = sphi 0, %s32
      %s52 = sphi 0, %s52
      %s54 = sphi 0, %s52
      %s55 = sphi 0, %s54
      %s69 = sphi 0, %s55
      %s73 = sphi 0, %s73
      %s75 = sphi 0, %s73
      %s76 = sphi 0, %s75
      %s90 = sphi 0, %s76
      %s94 = sphi 0, %s94
      %s96 = sphi 0, %s94
      %s97 = sphi 0, %s96
      %s111 = sphi 0, %s97
      %s115 = sphi 0, %s115
      %s117 = sphi 0, %s115
      %s118 = sphi 0, %s117
      %s132 = sphi 0, %s118
      %s136 = sphi 0, %s136
      %s138 = sphi 0, %s136
      %s139 = sphi 0, %s138
      %s153 = sphi 0, %s139
      %s157 = sphi 0, %s157
      %s159 = sphi 0, %s157
      %s160 = sphi 0, %s159
      %s174 = sphi 0, %s160
      %s178 = sphi 0, %s178
      %s180 = sphi 0, %s178
      %s181 = sphi 0, %s180
      %s195 = sphi 0, %s181
      %s199 = sphi 0, %s199
      %s201 = sphi 0, %s199
      %s202 = sphi 0, %s201
      %s216 = sphi 0, %s202
      %s222 = sphi 0, %s224
      %s225 = sphi 0, %s222
      %s226 = sphi 0, %s225
      %s242 = sphi 0, %s226
    $region4: #{dqn_forward.3} parent=1 // loop_header_branch
      %21 = sbr.rel (%p19) target = $region8
    $region5: #{dqn_forward.3} parent=1 // loop_body
      %s23 = ssub.s32 %s18, 1
      %s24 = ssub.s32 %s18, 2
      %s25 = sadd.s32 %s18, 1
      %s26 = ssub.s32 %s18, %s25
      %p27 = scmp.eq.s32.totalorder %s26, 0
      %s29 = sadd.s32 %s28, 1
      %s30 = scalar_select %p27, %s28, %s29
      %p33 = pneg %p27
      %p34 = scmp.eq.s32.totalorder %s18, 1
      %p35 = por %p33, %p34
      %p36 = scmp.ne.s32.totalorder %s28, %s31
      %p37 = scmp.eq.s32.totalorder %s18, 0
      %p38 = por %p36, %p37
      %p39 = scmp.ne.s32.totalorder %s28, %s31
      %p40 = scmp.eq.s32.totalorder %s23, 1
      %p41 = por %p39, %p40
      %p42 = scmp.ne.s32.totalorder %s31, %s32
      %p43 = scmp.eq.s32.totalorder %s23, 0
      %p44 = por %p42, %p43
      %p45 = scmp.ne.s32.totalorder %s31, %s32
      %p46 = scmp.eq.s32.totalorder %s24, 1
      %p47 = por %p45, %p46
      %p49 = scmp.ne.s32.totalorder %s32, %s48
      %p50 = scmp.eq.s32.totalorder %s24, 0
      %p51 = por %p49, %p50
      %s53 = sadd.s32 %s52, 1
      %p56 = scmp.eq.s32.totalorder %s18, 1
      %p57 = scmp.ne.s32.totalorder %s52, %s54
      %p58 = scmp.eq.s32.totalorder %s18, 0
      %p59 = por %p57, %p58
      %p60 = scmp.ne.s32.totalorder %s52, %s54
      %p61 = scmp.eq.s32.totalorder %s23, 1
      %p62 = por %p60, %p61
      %p63 = scmp.ne.s32.totalorder %s54, %s55
      %p64 = scmp.eq.s32.totalorder %s23, 0
      %p65 = por %p63, %p64
      %p66 = scmp.ne.s32.totalorder %s54, %s55
      %p67 = scmp.eq.s32.totalorder %s24, 1
      %p68 = por %p66, %p67
      %p70 = scmp.ne.s32.totalorder %s55, %s69
      %p71 = scmp.eq.s32.totalorder %s24, 0
      %p72 = por %p70, %p71
      %s74 = sadd.s32 %s73, 1
      %p77 = scmp.eq.s32.totalorder %s18, 1
      %p78 = scmp.ne.s32.totalorder %s73, %s75
      %p79 = scmp.eq.s32.totalorder %s18, 0
      %p80 = por %p78, %p79
      %p81 = scmp.ne.s32.totalorder %s73, %s75
      %p82 = scmp.eq.s32.totalorder %s23, 1
      %p83 = por %p81, %p82
      %p84 = scmp.ne.s32.totalorder %s75, %s76
      %p85 = scmp.eq.s32.totalorder %s23, 0
      %p86 = por %p84, %p85
      %p87 = scmp.ne.s32.totalorder %s75, %s76
      %p88 = scmp.eq.s32.totalorder %s24, 1
      %p89 = por %p87, %p88
      %p91 = scmp.ne.s32.totalorder %s76, %s90
      %p92 = scmp.eq.s32.totalorder %s24, 0
      %p93 = por %p91, %p92
      %s95 = sadd.s32 %s94, 1
      %p98 = scmp.eq.s32.totalorder %s18, 1
      %p99 = scmp.ne.s32.totalorder %s94, %s96
      %p100 = scmp.eq.s32.totalorder %s18, 0
      %p101 = por %p99, %p100
      %p102 = scmp.ne.s32.totalorder %s94, %s96
      %p103 = scmp.eq.s32.totalorder %s23, 1
      %p104 = por %p102, %p103
      %p105 = scmp.ne.s32.totalorder %s96, %s97
      %p106 = scmp.eq.s32.totalorder %s23, 0
      %p107 = por %p105, %p106
      %p108 = scmp.ne.s32.totalorder %s96, %s97
      %p109 = scmp.eq.s32.totalorder %s24, 1
      %p110 = por %p108, %p109
      %p112 = scmp.ne.s32.totalorder %s97, %s111
      %p113 = scmp.eq.s32.totalorder %s24, 0
      %p114 = por %p112, %p113
      %s116 = sadd.s32 %s115, 1
      %p119 = scmp.eq.s32.totalorder %s18, 1
      %p120 = scmp.ne.s32.totalorder %s115, %s117
      %p121 = scmp.eq.s32.totalorder %s18, 0
      %p122 = por %p120, %p121
      %p123 = scmp.ne.s32.totalorder %s115, %s117
      %p124 = scmp.eq.s32.totalorder %s23, 1
      %p125 = por %p123, %p124
      %p126 = scmp.ne.s32.totalorder %s117, %s118
      %p127 = scmp.eq.s32.totalorder %s23, 0
      %p128 = por %p126, %p127
      %p129 = scmp.ne.s32.totalorder %s117, %s118
      %p130 = scmp.eq.s32.totalorder %s24, 1
      %p131 = por %p129, %p130
      %p133 = scmp.ne.s32.totalorder %s118, %s132
      %p134 = scmp.eq.s32.totalorder %s24, 0
      %p135 = por %p133, %p134
      %s137 = sadd.s32 %s136, 1
      %p140 = scmp.eq.s32.totalorder %s18, 1
      %p141 = scmp.ne.s32.totalorder %s136, %s138
      %p142 = scmp.eq.s32.totalorder %s18, 0
      %p143 = por %p141, %p142
      %p144 = scmp.ne.s32.totalorder %s136, %s138
      %p145 = scmp.eq.s32.totalorder %s23, 1
      %p146 = por %p144, %p145
      %p147 = scmp.ne.s32.totalorder %s138, %s139
      %p148 = scmp.eq.s32.totalorder %s23, 0
      %p149 = por %p147, %p148
      %p150 = scmp.ne.s32.totalorder %s138, %s139
      %p151 = scmp.eq.s32.totalorder %s24, 1
      %p152 = por %p150, %p151
      %p154 = scmp.ne.s32.totalorder %s139, %s153
      %p155 = scmp.eq.s32.totalorder %s24, 0
      %p156 = por %p154, %p155
      %s158 = sadd.s32 %s157, 1
      %p161 = scmp.eq.s32.totalorder %s18, 1
      %p162 = scmp.ne.s32.totalorder %s157, %s159
      %p163 = scmp.eq.s32.totalorder %s18, 0
      %p164 = por %p162, %p163
      %p165 = scmp.ne.s32.totalorder %s157, %s159
      %p166 = scmp.eq.s32.totalorder %s23, 1
      %p167 = por %p165, %p166
      %p168 = scmp.ne.s32.totalorder %s159, %s160
      %p169 = scmp.eq.s32.totalorder %s23, 0
      %p170 = por %p168, %p169
      %p171 = scmp.ne.s32.totalorder %s159, %s160
      %p172 = scmp.eq.s32.totalorder %s24, 1
      %p173 = por %p171, %p172
      %p175 = scmp.ne.s32.totalorder %s160, %s174
      %p176 = scmp.eq.s32.totalorder %s24, 0
      %p177 = por %p175, %p176
      %s179 = sadd.s32 %s178, 1
      %p182 = scmp.eq.s32.totalorder %s18, 1
      %p183 = scmp.ne.s32.totalorder %s178, %s180
      %p184 = scmp.eq.s32.totalorder %s18, 0
      %p185 = por %p183, %p184
      %p186 = scmp.ne.s32.totalorder %s178, %s180
      %p187 = scmp.eq.s32.totalorder %s23, 1
      %p188 = por %p186, %p187
      %p189 = scmp.ne.s32.totalorder %s180, %s181
      %p190 = scmp.eq.s32.totalorder %s23, 0
      %p191 = por %p189, %p190
      %p192 = scmp.ne.s32.totalorder %s180, %s181
      %p193 = scmp.eq.s32.totalorder %s24, 1
      %p194 = por %p192, %p193
      %p196 = scmp.ne.s32.totalorder %s181, %s195
      %p197 = scmp.eq.s32.totalorder %s24, 0
      %p198 = por %p196, %p197
      %s200 = sadd.s32 %s199, 1
      %p203 = scmp.eq.s32.totalorder %s18, 1
      %p204 = scmp.ne.s32.totalorder %s199, %s201
      %p205 = scmp.eq.s32.totalorder %s18, 0
      %p206 = por %p204, %p205
      %p207 = scmp.ne.s32.totalorder %s199, %s201
      %p208 = scmp.eq.s32.totalorder %s23, 1
      %p209 = por %p207, %p208
      %p210 = scmp.ne.s32.totalorder %s201, %s202
      %p211 = scmp.eq.s32.totalorder %s23, 0
      %p212 = por %p210, %p211
      %p213 = scmp.ne.s32.totalorder %s201, %s202
      %p214 = scmp.eq.s32.totalorder %s24, 1
      %p215 = por %p213, %p214
      %p217 = scmp.ne.s32.totalorder %s202, %s216
      %p218 = scmp.eq.s32.totalorder %s24, 0
      %p219 = por %p217, %p218
      %s220 = ssub.s32 %s18, %s25
      %p221 = scmp.eq.s32.totalorder %s220, 0
      %s223 = sadd.s32 %s222, 1
      %s224 = scalar_select %p221, %s222, %s223
      %p227 = pneg %p221
      %p228 = scmp.eq.s32.totalorder %s18, 1
      %p229 = por %p227, %p228
      %p230 = scmp.ne.s32.totalorder %s222, %s225
      %p231 = scmp.eq.s32.totalorder %s18, 0
      %p232 = por %p230, %p231
      %p233 = scmp.ne.s32.totalorder %s222, %s225
      %p234 = scmp.eq.s32.totalorder %s23, 1
      %p235 = por %p233, %p234
      %p236 = scmp.ne.s32.totalorder %s225, %s226
      %p237 = scmp.eq.s32.totalorder %s23, 0
      %p238 = por %p236, %p237
      %p239 = scmp.ne.s32.totalorder %s225, %s226
      %p240 = scmp.eq.s32.totalorder %s24, 1
      %p241 = por %p239, %p240
      %p243 = scmp.ne.s32.totalorder %s226, %s242
      %p244 = scmp.eq.s32.totalorder %s24, 0
      %p245 = por %p243, %p244
      %p246 = scmp.le.s32.totalorder 1, %s18
      %p247 = scmp.lt.s32.totalorder %s18, 3
      %p248 = pnand %p246, %p247
      %p249 = pneg %p248
      // Predicated region
      $region9: #{dqn_forward.3} parent=5 // pred_check
        _
      $region10: #{dqn_forward.3} parent=5 // pred_check_branch
        %251 = sbr.rel (%p248) target = $region12
      $region11: #{dqn_forward.3} parent=5 // pred_region
        %s252 = ssub.s32 %s18, 1
        // Predicated region
        $region13: #{dqn_forward.3} parent=11 // pred_check
          %p253 = pneg %p65
        $region14: #{dqn_forward.3} parent=11 // pred_check_branch
          %255 = sbr.rel (%p253) target = $region16
        $region15: #{dqn_forward.3} parent=11 // pred_region
          _
        $region16: #{dqn_forward.3} parent=11 // pred_fallthru
          _
        // Predicated region
        $region17: #{dqn_forward.3} parent=11 // pred_check
          %p256 = pneg %p86
        $region18: #{dqn_forward.3} parent=11 // pred_check_branch
          %258 = sbr.rel (%p256) target = $region20
        $region19: #{dqn_forward.3} parent=11 // pred_region
          _
        $region20: #{dqn_forward.3} parent=11 // pred_fallthru
          _
        // Predicated region
        $region21: #{dqn_forward.3} parent=11 // pred_check
          %p259 = pneg %p107
        $region22: #{dqn_forward.3} parent=11 // pred_check_branch
          %261 = sbr.rel (%p259) target = $region24
        $region23: #{dqn_forward.3} parent=11 // pred_region
          _
        $region24: #{dqn_forward.3} parent=11 // pred_fallthru
          _
        // Predicated region
        $region25: #{dqn_forward.3} parent=11 // pred_check
          %p262 = pneg %p128
        $region26: #{dqn_forward.3} parent=11 // pred_check_branch
          %264 = sbr.rel (%p262) target = $region28
        $region27: #{dqn_forward.3} parent=11 // pred_region
          _
        $region28: #{dqn_forward.3} parent=11 // pred_fallthru
          _
        // Predicated region
        $region29: #{dqn_forward.3} parent=11 // pred_check
          %p265 = pneg %p149
        $region30: #{dqn_forward.3} parent=11 // pred_check_branch
          %267 = sbr.rel (%p265) target = $region32
        $region31: #{dqn_forward.3} parent=11 // pred_region
          _
        $region32: #{dqn_forward.3} parent=11 // pred_fallthru
          _
        // Predicated region
        $region33: #{dqn_forward.3} parent=11 // pred_check
          %p268 = pneg %p170
        $region34: #{dqn_forward.3} parent=11 // pred_check_branch
          %270 = sbr.rel (%p268) target = $region36
        $region35: #{dqn_forward.3} parent=11 // pred_region
          _
        $region36: #{dqn_forward.3} parent=11 // pred_fallthru
          _
        // Predicated region
        $region37: #{dqn_forward.3} parent=11 // pred_check
          %p271 = pneg %p191
        $region38: #{dqn_forward.3} parent=11 // pred_check_branch
          %273 = sbr.rel (%p271) target = $region40
        $region39: #{dqn_forward.3} parent=11 // pred_region
          _
        $region40: #{dqn_forward.3} parent=11 // pred_fallthru
          _
        // Predicated region
        $region41: #{dqn_forward.3} parent=11 // pred_check
          %p274 = pneg %p212
        $region42: #{dqn_forward.3} parent=11 // pred_check_branch
          %276 = sbr.rel (%p274) target = $region44
        $region43: #{dqn_forward.3} parent=11 // pred_region
          _
        $region44: #{dqn_forward.3} parent=11 // pred_fallthru
          _
      $region12: #{dqn_forward.3} parent=5 // pred_fallthru
        _
      %p277 = scmp.lt.s32.totalorder %s18, 2
      // Predicated region
      $region45: #{dqn_forward.3} parent=5 // pred_check
        %p278 = pneg %p277
      $region46: #{dqn_forward.3} parent=5 // pred_check_branch
        %280 = sbr.rel (%p278) target = $region48
      $region47: #{dqn_forward.3} parent=5 // pred_region
        // Predicated region
        $region49: #{dqn_forward.3} parent=47 // pred_check
          %p281 = pneg %p38
        $region50: #{dqn_forward.3} parent=47 // pred_check_branch
          %283 = sbr.rel (%p281) target = $region52
        $region51: #{dqn_forward.3} parent=47 // pred_region
          %p284 = scmp.lt.s32.totalorder %s18, 1
          %s285 = scalar_select %p284, %s18, 1
          %s286 = smul.addr %s285, 64
          %s287 = smul.addr %s286, 4
          %s288 = scalar_lea.vmem %s0, %s287
        $region52: #{dqn_forward.3} parent=47 // pred_fallthru
          _
      $region48: #{dqn_forward.3} parent=5 // pred_fallthru
        _
      %p289 = scmp.le.s32.totalorder 1, %s18
      %p290 = scmp.lt.s32.totalorder %s18, 3
      %p291 = pnand %p289, %p290
      %p292 = pneg %p291
      // Predicated region
      $region53: #{dqn_forward.3} parent=5 // pred_check
        _
      $region54: #{dqn_forward.3} parent=5 // pred_check_branch
        %294 = sbr.rel (%p291) target = $region56
      $region55: #{dqn_forward.3} parent=5 // pred_region
        %s295 = ssub.s32 %s18, 1
        %p296 = scmp.lt.s32.totalorder %s23, 1
        %s297 = scalar_select %p296, %s23, 1
        %s298 = smul.addr %s297, 64
        %s299 = smul.addr %s298, 4
        %s300 = scalar_lea.vmem %s0, %s299
        %p301 = pneg %p44
        %p302 = pneg %p41
        %p303 = pneg %p65
        %p304 = pneg %p62
        %p305 = pneg %p86
        %p306 = pneg %p83
        %p307 = pneg %p107
        %p308 = pneg %p104
        %p309 = pneg %p128
        %p310 = pneg %p125
        %p311 = pneg %p149
        %p312 = pneg %p146
        %p313 = pneg %p170
        %p314 = pneg %p167
        %p315 = pneg %p191
        %p316 = pneg %p188
        %p317 = pneg %p212
        %p318 = pneg %p209
        %p319 = pneg %p238
        %p320 = pneg %p235
        %s321 = sand.u32 %s225, 1
        %s322 = scalar_lea.sflag [#allocation6], %s321
        %s323 = sand.u32 %s225, 1
        %s324 = scalar_lea.vmem [#allocation5], %s323
        %p325 = scmp.lt.s32.totalorder %s23, 1
        %s326 = scalar_select %p325, %s23, 1
        %s327 = smul.addr %s326, 64
        %s328 = smul.addr %s327, 4
        %s329 = scalar_lea.vmem %s0, %s328
        %v331 = vld [vmem:[%s329] sm:$0xff]
        %v332 = vld [vmem:[%s329 + $0x8] sm:$0xff]
        %v333 = vld [vmem:[%s329 + $0x10] sm:$0xff]
        %v334 = vld [vmem:[%s329 + $0x18] sm:$0xff]
        %v335 = vld [vmem:[%s329 + $0x20] sm:$0xff]
        %v336 = vld [vmem:[%s329 + $0x28] sm:$0xff]
        %v337 = vld [vmem:[%s329 + $0x30] sm:$0xff]
        %v338 = vld [vmem:[%s329 + $0x38] sm:$0xff]
        %v339 = vld [vmem:[%s329 + $0x40] sm:$0xff]
        %v340 = vld [vmem:[%s329 + $0x48] sm:$0xff]
        %v341 = vld [vmem:[%s329 + $0x50] sm:$0xff]
        %v342 = vld [vmem:[%s329 + $0x58] sm:$0xff]
        %v343 = vld [vmem:[%s329 + $0x60] sm:$0xff]
        %v344 = vld [vmem:[%s329 + $0x68] sm:$0xff]
        %v345 = vld [vmem:[%s329 + $0x70] sm:$0xff]
        %v346 = vld [vmem:[%s329 + $0x78] sm:$0xff]
        %v347 = vld [vmem:[%s329 + $0x80] sm:$0xff]
        %v348 = vld [vmem:[%s329 + $0x88] sm:$0xff]
        %v349 = vld [vmem:[%s329 + $0x90] sm:$0xff]
        %v350 = vld [vmem:[%s329 + $0x98] sm:$0xff]
        %v351 = vld [vmem:[%s329 + $0xa0] sm:$0xff]
        %v352 = vld [vmem:[%s329 + $0xa8] sm:$0xff]
        %v353 = vld [vmem:[%s329 + $0xb0] sm:$0xff]
        %v354 = vld [vmem:[%s329 + $0xb8] sm:$0xff]
        %v355 = vld [vmem:[%s329 + $0xc0] sm:$0xff]
        %v356 = vld [vmem:[%s329 + $0xc8] sm:$0xff]
        %v357 = vld [vmem:[%s329 + $0xd0] sm:$0xff]
        %v358 = vld [vmem:[%s329 + $0xd8] sm:$0xff]
        %v359 = vld [vmem:[%s329 + $0xe0] sm:$0xff]
        %v360 = vld [vmem:[%s329 + $0xe8] sm:$0xff]
        %v361 = vld [vmem:[%s329 + $0xf0] sm:$0x11]
        %v362 = vld [vmem:[%s329 + $0xf8] sm:$0x11]
        %v363 = vld [vmem:[%s1] sm:$0xf]
        %v364 = vld [vmem:[%s1 + $0x4] sm:$0xf]
        %v365 = vld [vmem:[%s1 + $0x8] sm:$0xf]
        %v366 = vld [vmem:[%s1 + $0xc] sm:$0xf]
        %v367 = vld [vmem:[%s1 + $0x10] sm:$0xf]
        %v368 = vld [vmem:[%s1 + $0x14] sm:$0xf]
        %v369 = vld [vmem:[%s1 + $0x18] sm:$0xf]
        %v370 = vld [vmem:[%s1 + $0x1c] sm:$0xf]
        %v371 = vld [vmem:[%s1 + $0x20] sm:$0xf]
        %v372 = vld [vmem:[%s1 + $0x24] sm:$0xf]
        %v373 = vld [vmem:[%s1 + $0x28] sm:$0xf]
        %v374 = vld [vmem:[%s1 + $0x2c] sm:$0xf]
        %v375 = vld [vmem:[%s1 + $0x30] sm:$0xf]
        %v376 = vld [vmem:[%s1 + $0x34] sm:$0xf]
        %v377 = vld [vmem:[%s1 + $0x38] sm:$0xf]
        %v378 = vld [vmem:[%s1 + $0x3c] sm:$0xf]
        %v379 = vld [vmem:[%s1 + $0x40] sm:$0xf]
        %v380 = vld [vmem:[%s1 + $0x44] sm:$0xf]
        %v381 = vld [vmem:[%s1 + $0x48] sm:$0xf]
        %v382 = vld [vmem:[%s1 + $0x4c] sm:$0xf]
        %v383 = vld [vmem:[%s1 + $0x50] sm:$0xf]
        %v384 = vld [vmem:[%s1 + $0x54] sm:$0xf]
        %v385 = vld [vmem:[%s1 + $0x58] sm:$0xf]
        %v386 = vld [vmem:[%s1 + $0x5c] sm:$0xf]
        %v387 = vld [vmem:[%s1 + $0x60] sm:$0xf]
        %v388 = vld [vmem:[%s1 + $0x64] sm:$0xf]
        %v389 = vld [vmem:[%s1 + $0x68] sm:$0xf]
        %v390 = vld [vmem:[%s1 + $0x6c] sm:$0xf]
        %v391 = vld [vmem:[%s1 + $0x70] sm:$0xf]
        %v392 = vld [vmem:[%s1 + $0x74] sm:$0xf]
        %v393 = vld [vmem:[%s1 + $0x78] sm:$0xf]
        %v394 = vld [vmem:[%s1 + $0x7c] sm:$0xf]
        %v395 = vld [vmem:[%s1 + $0x80] sm:$0xf]
        %v396 = vld [vmem:[%s1 + $0x84] sm:$0xf]
        %v397 = vld [vmem:[%s1 + $0x88] sm:$0xf]
        %v398 = vld [vmem:[%s1 + $0x8c] sm:$0xf]
        %v399 = vld [vmem:[%s1 + $0x90] sm:$0xf]
        %v400 = vld [vmem:[%s1 + $0x94] sm:$0xf]
        %v401 = vld [vmem:[%s1 + $0x98] sm:$0xf]
        %v402 = vld [vmem:[%s1 + $0x9c] sm:$0xf]
        %v403 = vld [vmem:[%s1 + $0xa0] sm:$0xf]
        %v404 = vld [vmem:[%s1 + $0xa4] sm:$0xf]
        %v405 = vld [vmem:[%s1 + $0xa8] sm:$0xf]
        %v406 = vld [vmem:[%s1 + $0xac] sm:$0xf]
        %v407 = vld [vmem:[%s1 + $0xb0] sm:$0xf]
        %v408 = vld [vmem:[%s1 + $0xb4] sm:$0xf]
        %v409 = vld [vmem:[%s1 + $0xb8] sm:$0xf]
        %v410 = vld [vmem:[%s1 + $0xbc] sm:$0xf]
        %v411 = vld [vmem:[%s1 + $0xc0] sm:$0xf]
        %v412 = vld [vmem:[%s1 + $0xc4] sm:$0xf]
        %v413 = vld [vmem:[%s1 + $0xc8] sm:$0xf]
        %v414 = vld [vmem:[%s1 + $0xcc] sm:$0xf]
        %v415 = vld [vmem:[%s1 + $0xd0] sm:$0xf]
        %v416 = vld [vmem:[%s1 + $0xd4] sm:$0xf]
        %v417 = vld [vmem:[%s1 + $0xd8] sm:$0xf]
        %v418 = vld [vmem:[%s1 + $0xdc] sm:$0xf]
        %v419 = vld [vmem:[%s1 + $0xe0] sm:$0xf]
        %v420 = vld [vmem:[%s1 + $0xe4] sm:$0xf]
        %v421 = vld [vmem:[%s1 + $0xe8] sm:$0xf]
        %v422 = vld [vmem:[%s1 + $0xec] sm:$0xf]
        %v423 = vld [vmem:[%s1 + $0xf0] sm:$0xf]
        %v424 = vld [vmem:[%s1 + $0xf4] sm:$0xf]
        %v425 = vld [vmem:[%s1 + $0xf8] sm:$0xf]
        %v426 = vld [vmem:[%s1 + $0xfc] sm:$0xf]
        %v427 = vld [vmem:[%s2] sm:$0x1]
        %v429 = vlaneseq
        %v430 = vshrl.u32 %v429, 7
        %v431 = vsub.s32 0, %v430
        %v432 = vrot.slane %v427, %v431
        %v466 = vunpack.c.l.b16 %v331
        %v467 = vunpack.c.h.b16 %v331
        %v468 = vunpack.c.l.b16 %v332
        %v469 = vunpack.c.h.b16 %v332
        %v470 = vunpack.c.l.b16 %v333
        %v471 = vunpack.c.h.b16 %v333
        %v472 = vunpack.c.l.b16 %v334
        %v473 = vunpack.c.h.b16 %v334
        %v474 = vunpack.c.l.b16 %v335
        %v475 = vunpack.c.h.b16 %v335
        %v476 = vunpack.c.l.b16 %v336
        %v477 = vunpack.c.h.b16 %v336
        %v478 = vunpack.c.l.b16 %v337
        %v479 = vunpack.c.h.b16 %v337
        %v480 = vunpack.c.l.b16 %v338
        %v481 = vunpack.c.h.b16 %v338
        %v482 = vunpack.c.l.b16 %v339
        %v483 = vunpack.c.h.b16 %v339
        %v484 = vunpack.c.l.b16 %v340
        %v485 = vunpack.c.h.b16 %v340
        %v486 = vunpack.c.l.b16 %v341
        %v487 = vunpack.c.h.b16 %v341
        %v488 = vunpack.c.l.b16 %v342
        %v489 = vunpack.c.h.b16 %v342
        %v490 = vunpack.c.l.b16 %v343
        %v491 = vunpack.c.h.b16 %v343
        %v492 = vunpack.c.l.b16 %v344
        %v493 = vunpack.c.h.b16 %v344
        %v494 = vunpack.c.l.b16 %v345
        %v495 = vunpack.c.h.b16 %v345
        %v496 = vunpack.c.l.b16 %v346
        %v497 = vunpack.c.h.b16 %v346
        %v498 = vunpack.c.l.b16 %v347
        %v499 = vunpack.c.h.b16 %v347
        %v500 = vunpack.c.l.b16 %v348
        %v501 = vunpack.c.h.b16 %v348
        %v502 = vunpack.c.l.b16 %v349
        %v503 = vunpack.c.h.b16 %v349
        %v504 = vunpack.c.l.b16 %v350
        %v505 = vunpack.c.h.b16 %v350
        %v506 = vunpack.c.l.b16 %v351
        %v507 = vunpack.c.h.b16 %v351
        %v508 = vunpack.c.l.b16 %v352
        %v509 = vunpack.c.h.b16 %v352
        %v510 = vunpack.c.l.b16 %v353
        %v511 = vunpack.c.h.b16 %v353
        %v512 = vunpack.c.l.b16 %v354
        %v513 = vunpack.c.h.b16 %v354
        %v514 = vunpack.c.l.b16 %v355
        %v515 = vunpack.c.h.b16 %v355
        %v516 = vunpack.c.l.b16 %v356
        %v517 = vunpack.c.h.b16 %v356
        %v518 = vunpack.c.l.b16 %v357
        %v519 = vunpack.c.h.b16 %v357
        %v520 = vunpack.c.l.b16 %v358
        %v521 = vunpack.c.h.b16 %v358
        %v522 = vunpack.c.l.b16 %v359
        %v523 = vunpack.c.h.b16 %v359
        %v524 = vunpack.c.l.b16 %v360
        %v525 = vunpack.c.h.b16 %v360
        %v526 = vunpack.c.l.b16 %v361
        %v527 = vunpack.c.h.b16 %v361
        %v528 = vunpack.c.l.b16 %v362
        %v529 = vunpack.c.h.b16 %v362
        %v530 = vpack.c.b16 %v470, %v466
        %v531 = vpack.c.b16 %v471, %v467
        %v532 = vpack.c.b16 %v472, %v468
        %v533 = vpack.c.b16 %v473, %v469
        %v534 = vpack.c.b16 %v478, %v474
        %v535 = vpack.c.b16 %v479, %v475
        %v536 = vpack.c.b16 %v480, %v476
        %v537 = vpack.c.b16 %v481, %v477
        %v538 = vpack.c.b16 %v486, %v482
        %v539 = vpack.c.b16 %v487, %v483
        %v540 = vpack.c.b16 %v488, %v484
        %v541 = vpack.c.b16 %v489, %v485
        %v542 = vpack.c.b16 %v494, %v490
        %v543 = vpack.c.b16 %v495, %v491
        %v544 = vpack.c.b16 %v496, %v492
        %v545 = vpack.c.b16 %v497, %v493
        %v546 = vpack.c.b16 %v502, %v498
        %v547 = vpack.c.b16 %v503, %v499
        %v548 = vpack.c.b16 %v504, %v500
        %v549 = vpack.c.b16 %v505, %v501
        %v550 = vpack.c.b16 %v510, %v506
        %v551 = vpack.c.b16 %v511, %v507
        %v552 = vpack.c.b16 %v512, %v508
        %v553 = vpack.c.b16 %v513, %v509
        %v554 = vpack.c.b16 %v518, %v514
        %v555 = vpack.c.b16 %v519, %v515
        %v556 = vpack.c.b16 %v520, %v516
        %v557 = vpack.c.b16 %v521, %v517
        %v558 = vpack.c.b16 %v526, %v522
        %v559 = vpack.c.b16 %v527, %v523
        %v560 = vpack.c.b16 %v528, %v524
        %v561 = vpack.c.b16 %v529, %v525
        %v658 = vunpack.c.l.b16 %v363
        %v659 = vunpack.c.l.b16 %v364
        %v660 = vunpack.c.l.b16 %v365
        %v661 = vunpack.c.l.b16 %v366
        %v662 = vunpack.c.l.b16 %v367
        %v663 = vunpack.c.l.b16 %v368
        %v664 = vunpack.c.l.b16 %v369
        %v665 = vunpack.c.l.b16 %v370
        %v666 = vunpack.c.l.b16 %v371
        %v667 = vunpack.c.l.b16 %v372
        %v668 = vunpack.c.l.b16 %v373
        %v669 = vunpack.c.l.b16 %v374
        %v670 = vunpack.c.l.b16 %v375
        %v671 = vunpack.c.l.b16 %v376
        %v672 = vunpack.c.l.b16 %v377
        %v673 = vunpack.c.l.b16 %v378
        %v674 = vunpack.c.l.b16 %v379
        %v675 = vunpack.c.l.b16 %v380
        %v676 = vunpack.c.l.b16 %v381
        %v677 = vunpack.c.l.b16 %v382
        %v678 = vunpack.c.l.b16 %v383
        %v679 = vunpack.c.l.b16 %v384
        %v680 = vunpack.c.l.b16 %v385
        %v681 = vunpack.c.l.b16 %v386
        %v682 = vunpack.c.l.b16 %v387
        %v683 = vunpack.c.l.b16 %v388
        %v684 = vunpack.c.l.b16 %v389
        %v685 = vunpack.c.l.b16 %v390
        %v686 = vunpack.c.l.b16 %v391
        %v687 = vunpack.c.l.b16 %v392
        %v688 = vunpack.c.l.b16 %v393
        %v689 = vunpack.c.l.b16 %v394
        %v690 = vunpack.c.l.b16 %v395
        %v691 = vunpack.c.l.b16 %v396
        %v692 = vunpack.c.l.b16 %v397
        %v693 = vunpack.c.l.b16 %v398
        %v694 = vunpack.c.l.b16 %v399
        %v695 = vunpack.c.l.b16 %v400
        %v696 = vunpack.c.l.b16 %v401
        %v697 = vunpack.c.l.b16 %v402
        %v698 = vunpack.c.l.b16 %v403
        %v699 = vunpack.c.l.b16 %v404
        %v700 = vunpack.c.l.b16 %v405
        %v701 = vunpack.c.l.b16 %v406
        %v702 = vunpack.c.l.b16 %v407
        %v703 = vunpack.c.l.b16 %v408
        %v704 = vunpack.c.l.b16 %v409
        %v705 = vunpack.c.l.b16 %v410
        %v706 = vunpack.c.l.b16 %v411
        %v707 = vunpack.c.l.b16 %v412
        %v708 = vunpack.c.l.b16 %v413
        %v709 = vunpack.c.l.b16 %v414
        %v710 = vunpack.c.l.b16 %v415
        %v711 = vunpack.c.l.b16 %v416
        %v712 = vunpack.c.l.b16 %v417
        %v713 = vunpack.c.l.b16 %v418
        %v714 = vunpack.c.l.b16 %v419
        %v715 = vunpack.c.l.b16 %v420
        %v716 = vunpack.c.l.b16 %v421
        %v717 = vunpack.c.l.b16 %v422
        %v718 = vunpack.c.l.b16 %v423
        %v719 = vunpack.c.l.b16 %v424
        %v720 = vunpack.c.l.b16 %v425
        %v721 = vunpack.c.l.b16 %v426
        %v722 = vpack.c.b16 %v659, %v658
        %v723 = vpack.c.b16 %v661, %v660
        %v724 = vpack.c.b16 %v663, %v662
        %v725 = vpack.c.b16 %v665, %v664
        %v726 = vpack.c.b16 %v667, %v666
        %v727 = vpack.c.b16 %v669, %v668
        %v728 = vpack.c.b16 %v671, %v670
        %v729 = vpack.c.b16 %v673, %v672
        %v730 = vpack.c.b16 %v675, %v674
        %v731 = vpack.c.b16 %v677, %v676
        %v732 = vpack.c.b16 %v679, %v678
        %v733 = vpack.c.b16 %v681, %v680
        %v734 = vpack.c.b16 %v683, %v682
        %v735 = vpack.c.b16 %v685, %v684
        %v736 = vpack.c.b16 %v687, %v686
        %v737 = vpack.c.b16 %v689, %v688
        %v738 = vpack.c.b16 %v691, %v690
        %v739 = vpack.c.b16 %v693, %v692
        %v740 = vpack.c.b16 %v695, %v694
        %v741 = vpack.c.b16 %v697, %v696
        %v742 = vpack.c.b16 %v699, %v698
        %v743 = vpack.c.b16 %v701, %v700
        %v744 = vpack.c.b16 %v703, %v702
        %v745 = vpack.c.b16 %v705, %v704
        %v746 = vpack.c.b16 %v707, %v706
        %v747 = vpack.c.b16 %v709, %v708
        %v748 = vpack.c.b16 %v711, %v710
        %v749 = vpack.c.b16 %v713, %v712
        %v750 = vpack.c.b16 %v715, %v714
        %v751 = vpack.c.b16 %v717, %v716
        %v752 = vpack.c.b16 %v719, %v718
        %v753 = vpack.c.b16 %v721, %v720
        %786 = vmatprep.subr.bf16.mxu0 0
        %787 = vmatpush1.bf16.msra.mxu0 %v729
        %788 = vmatprep.subr.bf16.mxu0 0
        %789 = vmatpush1.bf16.msra.mxu0 %v728
        %790 = vmatprep.subr.bf16.mxu0 0
        %791 = vmatpush1.bf16.msra.mxu0 %v727
        %792 = vmatprep.subr.bf16.mxu0 0
        %793 = vmatpush1.bf16.msra.mxu0 %v726
        %794 = vmatprep.subr.bf16.mxu0 0
        %795 = vmatpush1.bf16.msra.mxu0 %v725
        %796 = vmatprep.subr.bf16.mxu0 0
        %797 = vmatpush1.bf16.msra.mxu0 %v724
        %798 = vmatprep.subr.bf16.mxu0 0
        %799 = vmatpush1.bf16.msra.mxu0 %v723
        %800 = vmatprep.subr.bf16.mxu0 0
        %801 = vmatpush1.bf16.msra.mxu0 %v722
        %802 = vmatprep.subr.bf16.mxu0 0
        %803 = vmatpush2.bf16.msra.mxu0 %v737
        %804 = vmatprep.subr.bf16.mxu0 0
        %805 = vmatpush2.bf16.msra.mxu0 %v736
        %806 = vmatprep.subr.bf16.mxu0 0
        %807 = vmatpush2.bf16.msra.mxu0 %v735
        %808 = vmatprep.subr.bf16.mxu0 0
        %809 = vmatpush2.bf16.msra.mxu0 %v734
        %810 = vmatprep.subr.bf16.mxu0 0
        %811 = vmatpush2.bf16.msra.mxu0 %v733
        %812 = vmatprep.subr.bf16.mxu0 0
        %813 = vmatpush2.bf16.msra.mxu0 %v732
        %814 = vmatprep.subr.bf16.mxu0 0
        %815 = vmatpush2.bf16.msra.mxu0 %v731
        %816 = vmatprep.subr.bf16.mxu0 0
        %817 = vmatpush2.bf16.msra.mxu0 %v730
        %818 = vmatprep.mubr.bf16.mxu0 %v531
        %819 = vmatmul.mubr.bf16.gmra.mxu0 %v530
        %v820 = vpop.f32.mrf.mxu0
        %v821 = vadd.f32 %v432, %v820
        %v822 = vpop.f32.mrf.mxu0
        %v823 = vpop.f32.mrf.mxu0
        %v824 = vadd.f32 %v432, %v823
        %v825 = vpop.f32.mrf.mxu0
        %826 = vmatprep.mubr.bf16.mxu0 %v535
        %827 = vmatmul.mubr.bf16.gmra.mxu0 %v534
        %v828 = vpop.f32.mrf.mxu0
        %v829 = vadd.f32 %v432, %v828
        %v830 = vpop.f32.mrf.mxu0
        %v831 = vpop.f32.mrf.mxu0
        %v832 = vadd.f32 %v432, %v831
        %v833 = vpop.f32.mrf.mxu0
        %834 = vmatprep.mubr.bf16.mxu0 %v539
        %835 = vmatmul.mubr.bf16.gmra.mxu0 %v538
        %v836 = vpop.f32.mrf.mxu0
        %v837 = vadd.f32 %v432, %v836
        %v838 = vpop.f32.mrf.mxu0
        %v839 = vpop.f32.mrf.mxu0
        %v840 = vadd.f32 %v432, %v839
        %v841 = vpop.f32.mrf.mxu0
        %842 = vmatprep.mubr.bf16.mxu0 %v543
        %843 = vmatmul.mubr.bf16.gmra.mxu0 %v542
        %v844 = vpop.f32.mrf.mxu0
        %v845 = vadd.f32 %v432, %v844
        %v846 = vpop.f32.mrf.mxu0
        %v847 = vpop.f32.mrf.mxu0
        %v848 = vadd.f32 %v432, %v847
        %v849 = vpop.f32.mrf.mxu0
        %850 = vmatprep.mubr.bf16.mxu0 %v547
        %851 = vmatmul.mubr.bf16.gmra.mxu0 %v546
        %v852 = vpop.f32.mrf.mxu0
        %v853 = vadd.f32 %v432, %v852
        %v854 = vpop.f32.mrf.mxu0
        %v855 = vpop.f32.mrf.mxu0
        %v856 = vadd.f32 %v432, %v855
        %v857 = vpop.f32.mrf.mxu0
        %858 = vmatprep.mubr.bf16.mxu0 %v551
        %859 = vmatmul.mubr.bf16.gmra.mxu0 %v550
        %v860 = vpop.f32.mrf.mxu0
        %v861 = vadd.f32 %v432, %v860
        %v862 = vpop.f32.mrf.mxu0
        %v863 = vpop.f32.mrf.mxu0
        %v864 = vadd.f32 %v432, %v863
        %v865 = vpop.f32.mrf.mxu0
        %866 = vmatprep.mubr.bf16.mxu0 %v555
        %867 = vmatmul.mubr.bf16.gmra.mxu0 %v554
        %v868 = vpop.f32.mrf.mxu0
        %v869 = vadd.f32 %v432, %v868
        %v870 = vpop.f32.mrf.mxu0
        %v871 = vpop.f32.mrf.mxu0
        %v872 = vadd.f32 %v432, %v871
        %v873 = vpop.f32.mrf.mxu0
        %874 = vmatprep.mubr.bf16.mxu0 %v559
        %875 = vmatmul.mubr.bf16.gmra.mxu0 %v558
        %v876 = vpop.f32.mrf.mxu0
        %v877 = vadd.f32 %v432, %v876
        %v878 = vpop.f32.mrf.mxu0
        %v879 = vpop.f32.mrf.mxu0
        %v880 = vadd.f32 %v432, %v879
        %v881 = vpop.f32.mrf.mxu0
        %882 = vdwg.mxu0
        %883 = vmatprep.subr.bf16.mxu0 0
        %884 = vmatpush1.bf16.msra.mxu0 %v745
        %885 = vmatprep.subr.bf16.mxu0 0
        %886 = vmatpush1.bf16.msra.mxu0 %v744
        %887 = vmatprep.subr.bf16.mxu0 0
        %888 = vmatpush1.bf16.msra.mxu0 %v743
        %889 = vmatprep.subr.bf16.mxu0 0
        %890 = vmatpush1.bf16.msra.mxu0 %v742
        %891 = vmatprep.subr.bf16.mxu0 0
        %892 = vmatpush1.bf16.msra.mxu0 %v741
        %893 = vmatprep.subr.bf16.mxu0 0
        %894 = vmatpush1.bf16.msra.mxu0 %v740
        %895 = vmatprep.subr.bf16.mxu0 0
        %896 = vmatpush1.bf16.msra.mxu0 %v739
        %897 = vmatprep.subr.bf16.mxu0 0
        %898 = vmatpush1.bf16.msra.mxu0 %v738
        %899 = vmatprep.subr.bf16.mxu0 0
        %900 = vmatpush2.bf16.msra.mxu0 %v753
        %901 = vmatprep.subr.bf16.mxu0 0
        %902 = vmatpush2.bf16.msra.mxu0 %v752
        %903 = vmatprep.subr.bf16.mxu0 0
        %904 = vmatpush2.bf16.msra.mxu0 %v751
        %905 = vmatprep.subr.bf16.mxu0 0
        %906 = vmatpush2.bf16.msra.mxu0 %v750
        %907 = vmatprep.subr.bf16.mxu0 0
        %908 = vmatpush2.bf16.msra.mxu0 %v749
        %909 = vmatprep.subr.bf16.mxu0 0
        %910 = vmatpush2.bf16.msra.mxu0 %v748
        %911 = vmatprep.subr.bf16.mxu0 0
        %912 = vmatpush2.bf16.msra.mxu0 %v747
        %913 = vmatprep.subr.bf16.mxu0 0
        %914 = vmatpush2.bf16.msra.mxu0 %v746
        %915 = vmatprep.mubr.bf16.mxu0 %v533
        %916 = vmatmul.mubr.bf16.gmra.mxu0 %v532
        %v917 = vpop.f32.mrf.mxu0
        %v918 = vadd.f32 %v821, %v917
        %v919 = vpop.f32.mrf.mxu0
        %v920 = vpop.f32.mrf.mxu0
        %v921 = vadd.f32 %v824, %v920
        %v922 = vpop.f32.mrf.mxu0
        %923 = vmatprep.mubr.bf16.mxu0 %v537
        %924 = vmatmul.mubr.bf16.gmra.mxu0 %v536
        %v925 = vpop.f32.mrf.mxu0
        %v926 = vadd.f32 %v829, %v925
        %v927 = vpop.f32.mrf.mxu0
        %v928 = vpop.f32.mrf.mxu0
        %v929 = vadd.f32 %v832, %v928
        %v930 = vpop.f32.mrf.mxu0
        %931 = vmatprep.mubr.bf16.mxu0 %v541
        %932 = vmatmul.mubr.bf16.gmra.mxu0 %v540
        %v933 = vpop.f32.mrf.mxu0
        %v934 = vadd.f32 %v837, %v933
        %v935 = vpop.f32.mrf.mxu0
        %v936 = vpop.f32.mrf.mxu0
        %v937 = vadd.f32 %v840, %v936
        %v938 = vpop.f32.mrf.mxu0
        %939 = vmatprep.mubr.bf16.mxu0 %v545
        %940 = vmatmul.mubr.bf16.gmra.mxu0 %v544
        %v941 = vpop.f32.mrf.mxu0
        %v942 = vadd.f32 %v845, %v941
        %v943 = vpop.f32.mrf.mxu0
        %v944 = vpop.f32.mrf.mxu0
        %v945 = vadd.f32 %v848, %v944
        %v946 = vpop.f32.mrf.mxu0
        %947 = vmatprep.mubr.bf16.mxu0 %v549
        %948 = vmatmul.mubr.bf16.gmra.mxu0 %v548
        %v949 = vpop.f32.mrf.mxu0
        %v950 = vadd.f32 %v853, %v949
        %v951 = vpop.f32.mrf.mxu0
        %v952 = vpop.f32.mrf.mxu0
        %v953 = vadd.f32 %v856, %v952
        %v954 = vpop.f32.mrf.mxu0
        %955 = vmatprep.mubr.bf16.mxu0 %v553
        %956 = vmatmul.mubr.bf16.gmra.mxu0 %v552
        %v957 = vpop.f32.mrf.mxu0
        %v958 = vadd.f32 %v861, %v957
        %v959 = vpop.f32.mrf.mxu0
        %v960 = vpop.f32.mrf.mxu0
        %v961 = vadd.f32 %v864, %v960
        %v962 = vpop.f32.mrf.mxu0
        %963 = vmatprep.mubr.bf16.mxu0 %v557
        %964 = vmatmul.mubr.bf16.gmra.mxu0 %v556
        %v965 = vpop.f32.mrf.mxu0
        %v966 = vadd.f32 %v869, %v965
        %v967 = vpop.f32.mrf.mxu0
        %v968 = vpop.f32.mrf.mxu0
        %v969 = vadd.f32 %v872, %v968
        %v970 = vpop.f32.mrf.mxu0
        %971 = vmatprep.mubr.bf16.mxu0 %v561
        %972 = vmatmul.mubr.bf16.gmra.mxu0 %v560
        %v973 = vpop.f32.mrf.mxu0
        %v974 = vadd.f32 %v877, %v973
        %v975 = vpop.f32.mrf.mxu0
        %v976 = vpop.f32.mrf.mxu0
        %v977 = vadd.f32 %v880, %v976
        %v978 = vpop.f32.mrf.mxu0
        %979 = vdwg.mxu0
        %v980 = vmax.f32 %v918, 0.0
        %v981 = vmax.f32 %v921, 0.0
        %v982 = vmax.f32 %v926, 0.0
        %v983 = vmax.f32 %v929, 0.0
        %v984 = vmax.f32 %v934, 0.0
        %v985 = vmax.f32 %v937, 0.0
        %v986 = vmax.f32 %v942, 0.0
        %v987 = vmax.f32 %v945, 0.0
        %v988 = vmax.f32 %v950, 0.0
        %v989 = vmax.f32 %v953, 0.0
        %v990 = vmax.f32 %v958, 0.0
        %v991 = vmax.f32 %v961, 0.0
        %v992 = vmax.f32 %v966, 0.0
        %v993 = vmax.f32 %v969, 0.0
        %v994 = vmax.f32 %v974, 0.0
        %v995 = vmax.f32 %v977, 0.0
        %v996 = vpack.c.bf16 %v981, %v980
        %v997 = vpack.c.bf16 %v983, %v982
        %v998 = vpack.c.bf16 %v985, %v984
        %v999 = vpack.c.bf16 %v987, %v986
        %v1000 = vpack.c.bf16 %v989, %v988
        %v1001 = vpack.c.bf16 %v991, %v990
        %v1002 = vpack.c.bf16 %v993, %v992
        %v1003 = vpack.c.bf16 %v995, %v994
        %v1012 = vunpack.c.l.b16 %v996
        %v1013 = vunpack.c.h.b16 %v996
        %v1014 = vunpack.c.l.b16 %v997
        %v1015 = vunpack.c.h.b16 %v997
        %v1016 = vunpack.c.l.b16 %v998
        %v1017 = vunpack.c.h.b16 %v998
        %v1018 = vunpack.c.l.b16 %v999
        %v1019 = vunpack.c.h.b16 %v999
        %v1020 = vunpack.c.l.b16 %v1000
        %v1021 = vunpack.c.h.b16 %v1000
        %v1022 = vunpack.c.l.b16 %v1001
        %v1023 = vunpack.c.h.b16 %v1001
        %v1024 = vunpack.c.l.b16 %v1002
        %v1025 = vunpack.c.h.b16 %v1002
        %v1026 = vunpack.c.l.b16 %v1003
        %v1027 = vunpack.c.h.b16 %v1003
        %v1028 = vpack.c.b16 %v1012, %v1012
        %v1029 = vpack.c.b16 %v1013, %v1013
        %v1030 = vpack.c.b16 %v1014, %v1014
        %v1031 = vpack.c.b16 %v1015, %v1015
        %v1032 = vpack.c.b16 %v1016, %v1016
        %v1033 = vpack.c.b16 %v1017, %v1017
        %v1034 = vpack.c.b16 %v1018, %v1018
        %v1035 = vpack.c.b16 %v1019, %v1019
        %v1036 = vpack.c.b16 %v1020, %v1020
        %v1037 = vpack.c.b16 %v1021, %v1021
        %v1038 = vpack.c.b16 %v1022, %v1022
        %v1039 = vpack.c.b16 %v1023, %v1023
        %v1040 = vpack.c.b16 %v1024, %v1024
        %v1041 = vpack.c.b16 %v1025, %v1025
        %v1042 = vpack.c.b16 %v1026, %v1026
        %v1043 = vpack.c.b16 %v1027, %v1027
        %vm1060 = vcmask 519168
        %1061 = vst.msk [vmem:[#allocation2] sm:$0xf] %vm1060, %v1028
        %1062 = vst.msk [vmem:[#allocation2 + $0x4] sm:$0xf] %vm1060, %v1029
        %1063 = vst.msk [vmem:[#allocation2 + $0x8] sm:$0xf] %vm1060, %v1030
        %1064 = vst.msk [vmem:[#allocation2 + $0xc] sm:$0xf] %vm1060, %v1031
        %1065 = vst.msk [vmem:[#allocation2 + $0x10] sm:$0xf] %vm1060, %v1032
        %1066 = vst.msk [vmem:[#allocation2 + $0x14] sm:$0xf] %vm1060, %v1033
        %1067 = vst.msk [vmem:[#allocation2 + $0x18] sm:$0xf] %vm1060, %v1034
        %1068 = vst.msk [vmem:[#allocation2 + $0x1c] sm:$0xf] %vm1060, %v1035
        %1069 = vst.msk [vmem:[#allocation2 + $0x20] sm:$0xf] %vm1060, %v1036
        %1070 = vst.msk [vmem:[#allocation2 + $0x24] sm:$0xf] %vm1060, %v1037
        %1071 = vst.msk [vmem:[#allocation2 + $0x28] sm:$0xf] %vm1060, %v1038
        %1072 = vst.msk [vmem:[#allocation2 + $0x2c] sm:$0xf] %vm1060, %v1039
        %1073 = vst.msk [vmem:[#allocation2 + $0x30] sm:$0xf] %vm1060, %v1040
        %1074 = vst.msk [vmem:[#allocation2 + $0x34] sm:$0xf] %vm1060, %v1041
        %1075 = vst.msk [vmem:[#allocation2 + $0x38] sm:$0xf] %vm1060, %v1042
        %vm1076 = vcmask 516096
        %vm1077 = vsmask.f32 256
        %vm1078 = vmand %vm1076, %vm1077
        %v1079 = vld [vmem:[#allocation2 + $0x3c] sm:$0x1]
        %v1080 = vsel %vm1078, %v1043, %v1079
        %1081 = vst [vmem:[#allocation2 + $0x3c] sm:$0x1] %v1080
        %v1082 = vld [vmem:[#allocation2] sm:$0xf]
        %v1083 = vld [vmem:[#allocation2 + $0x4] sm:$0xf]
        %v1084 = vld [vmem:[#allocation2 + $0x8] sm:$0xf]
        %v1085 = vld [vmem:[#allocation2 + $0xc] sm:$0xf]
        %v1086 = vld [vmem:[#allocation2 + $0x10] sm:$0xf]
        %v1087 = vld [vmem:[#allocation2 + $0x14] sm:$0xf]
        %v1088 = vld [vmem:[#allocation2 + $0x18] sm:$0xf]
        %v1089 = vld [vmem:[#allocation2 + $0x1c] sm:$0xf]
        %v1090 = vld [vmem:[#allocation2 + $0x20] sm:$0xf]
        %v1091 = vld [vmem:[#allocation2 + $0x24] sm:$0xf]
        %v1092 = vld [vmem:[#allocation2 + $0x28] sm:$0xf]
        %v1093 = vld [vmem:[#allocation2 + $0x2c] sm:$0xf]
        %v1094 = vld [vmem:[#allocation2 + $0x30] sm:$0x1]
        %v1095 = vld [vmem:[%s3] sm:$0xf]
        %v1096 = vld [vmem:[%s3 + $0x4] sm:$0xf]
        %v1097 = vld [vmem:[%s3 + $0x8] sm:$0xf]
        %v1098 = vld [vmem:[%s3 + $0xc] sm:$0xf]
        %v1099 = vld [vmem:[%s3 + $0x10] sm:$0xf]
        %v1100 = vld [vmem:[%s3 + $0x14] sm:$0xf]
        %v1101 = vld [vmem:[%s3 + $0x18] sm:$0xf]
        %v1102 = vld [vmem:[%s3 + $0x1c] sm:$0xf]
        %s1103 = scalar_lea.vmem %s3, 32
        %v1104 = vld [vmem:[%s1103] sm:$0xf]
        %v1105 = vld [vmem:[%s1103 + $0x4] sm:$0xf]
        %v1106 = vld [vmem:[%s1103 + $0x8] sm:$0xf]
        %v1107 = vld [vmem:[%s1103 + $0xc] sm:$0xf]
        %v1108 = vld [vmem:[%s1103 + $0x10] sm:$0xf]
        %v1109 = vld [vmem:[%s1103 + $0x14] sm:$0xf]
        %v1110 = vld [vmem:[%s1103 + $0x18] sm:$0xf]
        %v1111 = vld [vmem:[%s1103 + $0x1c] sm:$0xf]
        %v1125 = vunpack.c.l.b16 %v1082
        %v1126 = vunpack.c.l.b16 %v1083
        %v1127 = vunpack.c.l.b16 %v1084
        %v1128 = vunpack.c.l.b16 %v1085
        %v1129 = vunpack.c.l.b16 %v1086
        %v1130 = vunpack.c.l.b16 %v1087
        %v1131 = vunpack.c.l.b16 %v1088
        %v1132 = vunpack.c.l.b16 %v1089
        %v1133 = vunpack.c.l.b16 %v1090
        %v1134 = vunpack.c.l.b16 %v1091
        %v1135 = vunpack.c.l.b16 %v1092
        %v1136 = vunpack.c.l.b16 %v1093
        %v1137 = vunpack.c.l.b16 %v1094
        %v1138 = vpack.c.b16 %v1126, %v1125
        %v1139 = vpack.c.b16 %v1128, %v1127
        %v1140 = vpack.c.b16 %v1130, %v1129
        %v1141 = vpack.c.b16 %v1132, %v1131
        %v1142 = vpack.c.b16 %v1134, %v1133
        %v1143 = vpack.c.b16 %v1136, %v1135
        %v1144 = vpack.c.b16 %v1137, %v1137
        %vm1145 = vsmask.f32 7424
        %v1147 = vshrl.u32 %v1138, 16
        %v1149 = vshll.u32 %v1138, 16
        %v1151 = vrot.slane %v1149, 1
        %v1152 = vor.u32 %v1147, %v1151
        %v1154 = vshll.u32 %v1139, 16
        %v1156 = vrot.slane %v1154, 1
        %v1157 = vsel %vm1145, %v1152, %v1156
        %v1158 = vshrl.u32 %v1139, 16
        %v1160 = vor.u32 %v1158, %v1156
        %v1162 = vshll.u32 %v1140, 16
        %v1164 = vrot.slane %v1162, 1
        %v1165 = vsel %vm1145, %v1160, %v1164
        %v1166 = vshrl.u32 %v1140, 16
        %v1168 = vor.u32 %v1166, %v1164
        %v1170 = vshll.u32 %v1141, 16
        %v1172 = vrot.slane %v1170, 1
        %v1173 = vsel %vm1145, %v1168, %v1172
        %v1174 = vshrl.u32 %v1141, 16
        %v1176 = vor.u32 %v1174, %v1172
        %v1178 = vshll.u32 %v1142, 16
        %v1180 = vrot.slane %v1178, 1
        %v1181 = vsel %vm1145, %v1176, %v1180
        %v1182 = vshrl.u32 %v1142, 16
        %v1184 = vor.u32 %v1182, %v1180
        %v1186 = vshll.u32 %v1143, 16
        %v1188 = vrot.slane %v1186, 1
        %v1189 = vsel %vm1145, %v1184, %v1188
        %v1190 = vshrl.u32 %v1143, 16
        %v1192 = vor.u32 %v1190, %v1188
        %v1194 = vshll.u32 %v1144, 16
        %v1196 = vrot.slane %v1194, 1
        %v1197 = vsel %vm1145, %v1192, %v1196
        %v1198 = vshrl.u32 %v1144, 16
        %v1208 = vunpack.c.l.b16 %v1104
        %v1209 = vunpack.c.l.b16 %v1105
        %v1210 = vunpack.c.l.b16 %v1106
        %v1211 = vunpack.c.l.b16 %v1107
        %v1212 = vunpack.c.l.b16 %v1108
        %v1213 = vunpack.c.l.b16 %v1109
        %v1214 = vunpack.c.l.b16 %v1110
        %v1215 = vunpack.c.l.b16 %v1111
        %v1216 = vpack.c.b16 %v1209, %v1208
        %v1217 = vpack.c.b16 %v1211, %v1210
        %v1218 = vpack.c.b16 %v1213, %v1212
        %v1219 = vpack.c.b16 %v1215, %v1214
        %vm1224 = vcmask 523264
        %v1226 = vsel %vm1224, %v1157, 0
        %v1229 = vsel %vm1224, %v1165, 0
        %v1232 = vsel %vm1224, %v1173, 0
        %v1235 = vsel %vm1224, %v1181, 0
        %v1238 = vsel %vm1224, %v1189, 0
        %v1241 = vsel %vm1224, %v1197, 0
        %v1244 = vsel %vm1224, %v1198, 0
        %1246 = vmatprep.subr.bf16.mxu0 0
        %1247 = vmatpush1.bf16.msra.mxu0 0
        %1248 = vmatprep.subr.bf16.mxu0 0
        %1249 = vmatpush1.bf16.msra.mxu0 0
        %1250 = vmatprep.subr.bf16.mxu0 0
        %1251 = vmatpush1.bf16.msra.mxu0 0
        %1252 = vmatprep.subr.bf16.mxu0 0
        %1253 = vmatpush1.bf16.msra.mxu0 0
        %1254 = vmatprep.subr.bf16.mxu0 0
        %1255 = vmatpush1.bf16.msra.mxu0 %v1219
        %1256 = vmatprep.subr.bf16.mxu0 0
        %1257 = vmatpush1.bf16.msra.mxu0 %v1218
        %1258 = vmatprep.subr.bf16.mxu0 0
        %1259 = vmatpush1.bf16.msra.mxu0 %v1217
        %1260 = vmatprep.subr.bf16.mxu0 0
        %1261 = vmatpush1.bf16.msra.mxu0 %v1216
        %1262 = vmatprep.subr.bf16.mxu0 0
        %1263 = vmatpush2.bf16.msra.mxu0 0
        %1264 = vmatprep.subr.bf16.mxu0 0
        %1265 = vmatpush2.bf16.msra.mxu0 0
        %1266 = vmatprep.subr.bf16.mxu0 0
        %1267 = vmatpush2.bf16.msra.mxu0 0
        %1268 = vmatprep.subr.bf16.mxu0 0
        %1269 = vmatpush2.bf16.msra.mxu0 0
        %1270 = vmatprep.subr.bf16.mxu0 0
        %1271 = vmatpush2.bf16.msra.mxu0 0
        %1272 = vmatprep.subr.bf16.mxu0 0
        %1273 = vmatpush2.bf16.msra.mxu0 0
        %1274 = vmatprep.subr.bf16.mxu0 0
        %1275 = vmatpush2.bf16.msra.mxu0 0
        %1276 = vmatprep.subr.bf16.mxu0 0
        %1277 = vmatpush2.bf16.msra.mxu0 0
        %1278 = vmatprep.mubr.bf16.mxu0 0
        %1279 = vmatmul.mubr.bf16.gmra.mxu0 %v1226
        %v1280 = vpop.f32.mrf.mxu0
        %v1281 = vadd.f32 0.0, %v1280
        %v1282 = vpop.f32.mrf.mxu0
        %v1283 = vpop.f32.mrf.mxu0
        %v1284 = vadd.f32 0.0, %v1283
        %v1285 = vpop.f32.mrf.mxu0
        %1286 = vmatprep.mubr.bf16.mxu0 0
        %1287 = vmatmul.mubr.bf16.gmra.mxu0 %v1229
        %v1288 = vpop.f32.mrf.mxu0
        %v1289 = vadd.f32 0.0, %v1288
        %v1290 = vpop.f32.mrf.mxu0
        %v1291 = vpop.f32.mrf.mxu0
        %v1292 = vadd.f32 0.0, %v1291
        %v1293 = vpop.f32.mrf.mxu0
        %1294 = vmatprep.mubr.bf16.mxu0 0
        %1295 = vmatmul.mubr.bf16.gmra.mxu0 %v1232
        %v1296 = vpop.f32.mrf.mxu0
        %v1297 = vadd.f32 0.0, %v1296
        %v1298 = vpop.f32.mrf.mxu0
        %v1299 = vpop.f32.mrf.mxu0
        %v1300 = vadd.f32 0.0, %v1299
        %v1301 = vpop.f32.mrf.mxu0
        %1302 = vmatprep.mubr.bf16.mxu0 0
        %1303 = vmatmul.mubr.bf16.gmra.mxu0 %v1235
        %v1304 = vpop.f32.mrf.mxu0
        %v1305 = vadd.f32 0.0, %v1304
        %v1306 = vpop.f32.mrf.mxu0
        %v1307 = vpop.f32.mrf.mxu0
        %v1308 = vadd.f32 0.0, %v1307
        %v1309 = vpop.f32.mrf.mxu0
        %1310 = vmatprep.mubr.bf16.mxu0 0
        %1311 = vmatmul.mubr.bf16.gmra.mxu0 %v1238
        %v1312 = vpop.f32.mrf.mxu0
        %v1313 = vadd.f32 0.0, %v1312
        %v1314 = vpop.f32.mrf.mxu0
        %v1315 = vpop.f32.mrf.mxu0
        %v1316 = vadd.f32 0.0, %v1315
        %v1317 = vpop.f32.mrf.mxu0
        %1318 = vmatprep.mubr.bf16.mxu0 0
        %1319 = vmatmul.mubr.bf16.gmra.mxu0 %v1241
        %v1320 = vpop.f32.mrf.mxu0
        %v1321 = vadd.f32 0.0, %v1320
        %v1322 = vpop.f32.mrf.mxu0
        %v1323 = vpop.f32.mrf.mxu0
        %v1324 = vadd.f32 0.0, %v1323
        %v1325 = vpop.f32.mrf.mxu0
        %1326 = vmatprep.mubr.bf16.mxu0 0
        %1327 = vmatmul.mubr.bf16.gmra.mxu0 %v1244
        %v1328 = vpop.f32.mrf.mxu0
        %v1329 = vadd.f32 0.0, %v1328
        %v1330 = vpop.f32.mrf.mxu0
        %v1331 = vpop.f32.mrf.mxu0
        %v1332 = vpop.f32.mrf.mxu0
        %1333 = vdwg.mxu0
        %v1342 = vunpack.c.l.b16 %v1095
        %v1343 = vunpack.c.l.b16 %v1096
        %v1344 = vunpack.c.l.b16 %v1097
        %v1345 = vunpack.c.l.b16 %v1098
        %v1346 = vunpack.c.l.b16 %v1099
        %v1347 = vunpack.c.l.b16 %v1100
        %v1348 = vunpack.c.l.b16 %v1101
        %v1349 = vunpack.c.l.b16 %v1102
        %v1350 = vpack.c.b16 %v1343, %v1342
        %v1351 = vpack.c.b16 %v1345, %v1344
        %v1352 = vpack.c.b16 %v1347, %v1346
        %v1353 = vpack.c.b16 %v1349, %v1348
        %v1358 = vsel %vm1224, %v1138, 0
        %v1360 = vsel %vm1224, %v1139, 0
        %v1362 = vsel %vm1224, %v1140, 0
        %v1364 = vsel %vm1224, %v1141, 0
        %v1366 = vsel %vm1224, %v1142, 0
        %v1368 = vsel %vm1224, %v1143, 0
        %v1370 = vsel %vm1224, %v1144, 0
        %1372 = vmatprep.subr.bf16.mxu0 0
        %1373 = vmatpush1.bf16.msra.mxu0 0
        %1374 = vmatprep.subr.bf16.mxu0 0
        %1375 = vmatpush1.bf16.msra.mxu0 0
        %1376 = vmatprep.subr.bf16.mxu0 0
        %1377 = vmatpush1.bf16.msra.mxu0 0
        %1378 = vmatprep.subr.bf16.mxu0 0
        %1379 = vmatpush1.bf16.msra.mxu0 0
        %1380 = vmatprep.subr.bf16.mxu0 0
        %1381 = vmatpush1.bf16.msra.mxu0 %v1353
        %1382 = vmatprep.subr.bf16.mxu0 0
        %1383 = vmatpush1.bf16.msra.mxu0 %v1352
        %1384 = vmatprep.subr.bf16.mxu0 0
        %1385 = vmatpush1.bf16.msra.mxu0 %v1351
        %1386 = vmatprep.subr.bf16.mxu0 0
        %1387 = vmatpush1.bf16.msra.mxu0 %v1350
        %1388 = vmatprep.subr.bf16.mxu0 0
        %1389 = vmatpush2.bf16.msra.mxu0 0
        %1390 = vmatprep.subr.bf16.mxu0 0
        %1391 = vmatpush2.bf16.msra.mxu0 0
        %1392 = vmatprep.subr.bf16.mxu0 0
        %1393 = vmatpush2.bf16.msra.mxu0 0
        %1394 = vmatprep.subr.bf16.mxu0 0
        %1395 = vmatpush2.bf16.msra.mxu0 0
        %1396 = vmatprep.subr.bf16.mxu0 0
        %1397 = vmatpush2.bf16.msra.mxu0 0
        %1398 = vmatprep.subr.bf16.mxu0 0
        %1399 = vmatpush2.bf16.msra.mxu0 0
        %1400 = vmatprep.subr.bf16.mxu0 0
        %1401 = vmatpush2.bf16.msra.mxu0 0
        %1402 = vmatprep.subr.bf16.mxu0 0
        %1403 = vmatpush2.bf16.msra.mxu0 0
        %1404 = vmatprep.mubr.bf16.mxu0 0
        %1405 = vmatmul.mubr.bf16.gmra.mxu0 %v1358
        %v1406 = vpop.f32.mrf.mxu0
        %v1407 = vadd.f32 %v1281, %v1406
        %v1408 = vpop.f32.mrf.mxu0
        %v1409 = vpop.f32.mrf.mxu0
        %v1410 = vadd.f32 %v1284, %v1409
        %v1411 = vpop.f32.mrf.mxu0
        %1412 = vmatprep.mubr.bf16.mxu0 0
        %1413 = vmatmul.mubr.bf16.gmra.mxu0 %v1360
        %v1414 = vpop.f32.mrf.mxu0
        %v1415 = vadd.f32 %v1289, %v1414
        %v1416 = vpop.f32.mrf.mxu0
        %v1417 = vpop.f32.mrf.mxu0
        %v1418 = vadd.f32 %v1292, %v1417
        %v1419 = vpop.f32.mrf.mxu0
        %1420 = vmatprep.mubr.bf16.mxu0 0
        %1421 = vmatmul.mubr.bf16.gmra.mxu0 %v1362
        %v1422 = vpop.f32.mrf.mxu0
        %v1423 = vadd.f32 %v1297, %v1422
        %v1424 = vpop.f32.mrf.mxu0
        %v1425 = vpop.f32.mrf.mxu0
        %v1426 = vadd.f32 %v1300, %v1425
        %v1427 = vpop.f32.mrf.mxu0
        %1428 = vmatprep.mubr.bf16.mxu0 0
        %1429 = vmatmul.mubr.bf16.gmra.mxu0 %v1364
        %v1430 = vpop.f32.mrf.mxu0
        %v1431 = vadd.f32 %v1305, %v1430
        %v1432 = vpop.f32.mrf.mxu0
        %v1433 = vpop.f32.mrf.mxu0
        %v1434 = vadd.f32 %v1308, %v1433
        %v1435 = vpop.f32.mrf.mxu0
        %1436 = vmatprep.mubr.bf16.mxu0 0
        %1437 = vmatmul.mubr.bf16.gmra.mxu0 %v1366
        %v1438 = vpop.f32.mrf.mxu0
        %v1439 = vadd.f32 %v1313, %v1438
        %v1440 = vpop.f32.mrf.mxu0
        %v1441 = vpop.f32.mrf.mxu0
        %v1442 = vadd.f32 %v1316, %v1441
        %v1443 = vpop.f32.mrf.mxu0
        %1444 = vmatprep.mubr.bf16.mxu0 0
        %1445 = vmatmul.mubr.bf16.gmra.mxu0 %v1368
        %v1446 = vpop.f32.mrf.mxu0
        %v1447 = vadd.f32 %v1321, %v1446
        %v1448 = vpop.f32.mrf.mxu0
        %v1449 = vpop.f32.mrf.mxu0
        %v1450 = vadd.f32 %v1324, %v1449
        %v1451 = vpop.f32.mrf.mxu0
        %1452 = vmatprep.mubr.bf16.mxu0 0
        %1453 = vmatmul.mubr.bf16.gmra.mxu0 %v1370
        %v1454 = vpop.f32.mrf.mxu0
        %v1455 = vadd.f32 %v1329, %v1454
        %v1456 = vpop.f32.mrf.mxu0
        %v1457 = vpop.f32.mrf.mxu0
        %v1458 = vpop.f32.mrf.mxu0
        %1459 = vdwg.mxu0
        %v1460 = vld [vmem:[#allocation2] sm:$0xe]
        %v1461 = vld [vmem:[#allocation2 + $0x30] sm:$0x3]
        %s1462 = scalar_lea.vmem %s3, 64
        %v1463 = vld [vmem:[%s1462] sm:$0xf]
        %v1464 = vld [vmem:[%s1462 + $0x4] sm:$0xf]
        %v1465 = vld [vmem:[%s1462 + $0x8] sm:$0xf]
        %v1466 = vld [vmem:[%s1462 + $0xc] sm:$0xf]
        %v1467 = vld [vmem:[%s1462 + $0x10] sm:$0xf]
        %v1468 = vld [vmem:[%s1462 + $0x14] sm:$0xf]
        %v1469 = vld [vmem:[%s1462 + $0x18] sm:$0xf]
        %v1470 = vld [vmem:[%s1462 + $0x1c] sm:$0xf]
        %v1473 = vunpack.c.l.b16 %v1460
        %v1474 = vunpack.c.l.b16 %v1461
        %v1475 = vpack.c.b16 %v1126, %v1473
        %v1476 = vpack.c.b16 %v1474, %v1474
        %vm1477 = vcmask 1046528
        %v1478 = vrot.slane %v1475, 1
        %v1479 = vrot.slane %v1139, 1
        %v1480 = vsel %vm1477, %v1478, %v1479
        %v1481 = vrot.slane %v1140, 1
        %v1482 = vsel %vm1477, %v1479, %v1481
        %v1483 = vrot.slane %v1141, 1
        %v1484 = vsel %vm1477, %v1481, %v1483
        %v1485 = vrot.slane %v1142, 1
        %v1486 = vsel %vm1477, %v1483, %v1485
        %v1487 = vrot.slane %v1143, 1
        %v1488 = vsel %vm1477, %v1485, %v1487
        %v1489 = vrot.slane %v1476, 1
        %v1490 = vsel %vm1477, %v1487, %v1489
        %v1499 = vunpack.c.l.b16 %v1463
        %v1500 = vunpack.c.l.b16 %v1464
        %v1501 = vunpack.c.l.b16 %v1465
        %v1502 = vunpack.c.l.b16 %v1466
        %v1503 = vunpack.c.l.b16 %v1467
        %v1504 = vunpack.c.l.b16 %v1468
        %v1505 = vunpack.c.l.b16 %v1469
        %v1506 = vunpack.c.l.b16 %v1470
        %v1507 = vpack.c.b16 %v1500, %v1499
        %v1508 = vpack.c.b16 %v1502, %v1501
        %v1509 = vpack.c.b16 %v1504, %v1503
        %v1510 = vpack.c.b16 %v1506, %v1505
        %v1516 = vsel %vm1224, %v1480, 0
        %v1519 = vsel %vm1224, %v1482, 0
        %v1522 = vsel %vm1224, %v1484, 0
        %v1525 = vsel %vm1224, %v1486, 0
        %v1528 = vsel %vm1224, %v1488, 0
        %v1531 = vsel %vm1224, %v1490, 0
        %v1534 = vsel %vm1224, %v1489, 0
        %1536 = vmatprep.subr.bf16.mxu0 0
        %1537 = vmatpush1.bf16.msra.mxu0 0
        %1538 = vmatprep.subr.bf16.mxu0 0
        %1539 = vmatpush1.bf16.msra.mxu0 0
        %1540 = vmatprep.subr.bf16.mxu0 0
        %1541 = vmatpush1.bf16.msra.mxu0 0
        %1542 = vmatprep.subr.bf16.mxu0 0
        %1543 = vmatpush1.bf16.msra.mxu0 0
        %1544 = vmatprep.subr.bf16.mxu0 0
        %1545 = vmatpush1.bf16.msra.mxu0 %v1510
        %1546 = vmatprep.subr.bf16.mxu0 0
        %1547 = vmatpush1.bf16.msra.mxu0 %v1509
        %1548 = vmatprep.subr.bf16.mxu0 0
        %1549 = vmatpush1.bf16.msra.mxu0 %v1508
        %1550 = vmatprep.subr.bf16.mxu0 0
        %1551 = vmatpush1.bf16.msra.mxu0 %v1507
        %1552 = vmatprep.subr.bf16.mxu0 0
        %1553 = vmatpush2.bf16.msra.mxu0 0
        %1554 = vmatprep.subr.bf16.mxu0 0
        %1555 = vmatpush2.bf16.msra.mxu0 0
        %1556 = vmatprep.subr.bf16.mxu0 0
        %1557 = vmatpush2.bf16.msra.mxu0 0
        %1558 = vmatprep.subr.bf16.mxu0 0
        %1559 = vmatpush2.bf16.msra.mxu0 0
        %1560 = vmatprep.subr.bf16.mxu0 0
        %1561 = vmatpush2.bf16.msra.mxu0 0
        %1562 = vmatprep.subr.bf16.mxu0 0
        %1563 = vmatpush2.bf16.msra.mxu0 0
        %1564 = vmatprep.subr.bf16.mxu0 0
        %1565 = vmatpush2.bf16.msra.mxu0 0
        %1566 = vmatprep.subr.bf16.mxu0 0
        %1567 = vmatpush2.bf16.msra.mxu0 0
        %1568 = vmatprep.mubr.bf16.mxu0 0
        %1569 = vmatmul.mubr.bf16.gmra.mxu0 %v1516
        %v1570 = vpop.f32.mrf.mxu0
        %v1571 = vadd.f32 0.0, %v1570
        %v1572 = vpop.f32.mrf.mxu0
        %v1573 = vpop.f32.mrf.mxu0
        %v1574 = vadd.f32 0.0, %v1573
        %v1575 = vpop.f32.mrf.mxu0
        %1576 = vmatprep.mubr.bf16.mxu0 0
        %1577 = vmatmul.mubr.bf16.gmra.mxu0 %v1519
        %v1578 = vpop.f32.mrf.mxu0
        %v1579 = vadd.f32 0.0, %v1578
        %v1580 = vpop.f32.mrf.mxu0
        %v1581 = vpop.f32.mrf.mxu0
        %v1582 = vadd.f32 0.0, %v1581
        %v1583 = vpop.f32.mrf.mxu0
        %1584 = vmatprep.mubr.bf16.mxu0 0
        %1585 = vmatmul.mubr.bf16.gmra.mxu0 %v1522
        %v1586 = vpop.f32.mrf.mxu0
        %v1587 = vadd.f32 0.0, %v1586
        %v1588 = vpop.f32.mrf.mxu0
        %v1589 = vpop.f32.mrf.mxu0
        %v1590 = vadd.f32 0.0, %v1589
        %v1591 = vpop.f32.mrf.mxu0
        %1592 = vmatprep.mubr.bf16.mxu0 0
        %1593 = vmatmul.mubr.bf16.gmra.mxu0 %v1525
        %v1594 = vpop.f32.mrf.mxu0
        %v1595 = vadd.f32 0.0, %v1594
        %v1596 = vpop.f32.mrf.mxu0
        %v1597 = vpop.f32.mrf.mxu0
        %v1598 = vadd.f32 0.0, %v1597
        %v1599 = vpop.f32.mrf.mxu0
        %1600 = vmatprep.mubr.bf16.mxu0 0
        %1601 = vmatmul.mubr.bf16.gmra.mxu0 %v1528
        %v1602 = vpop.f32.mrf.mxu0
        %v1603 = vadd.f32 0.0, %v1602
        %v1604 = vpop.f32.mrf.mxu0
        %v1605 = vpop.f32.mrf.mxu0
        %v1606 = vadd.f32 0.0, %v1605
        %v1607 = vpop.f32.mrf.mxu0
        %1608 = vmatprep.mubr.bf16.mxu0 0
        %1609 = vmatmul.mubr.bf16.gmra.mxu0 %v1531
        %v1610 = vpop.f32.mrf.mxu0
        %v1611 = vadd.f32 0.0, %v1610
        %v1612 = vpop.f32.mrf.mxu0
        %v1613 = vpop.f32.mrf.mxu0
        %v1614 = vadd.f32 0.0, %v1613
        %v1615 = vpop.f32.mrf.mxu0
        %1616 = vmatprep.mubr.bf16.mxu0 0
        %1617 = vmatmul.mubr.bf16.gmra.mxu0 %v1534
        %v1618 = vpop.f32.mrf.mxu0
        %v1619 = vadd.f32 0.0, %v1618
        %v1620 = vpop.f32.mrf.mxu0
        %v1621 = vpop.f32.mrf.mxu0
        %v1622 = vpop.f32.mrf.mxu0
        %1623 = vdwg.mxu0
        %v1624 = vadd.f32 %v1407, %v1571
        %v1625 = vadd.f32 %v1410, %v1574
        %v1626 = vadd.f32 %v1415, %v1579
        %v1627 = vadd.f32 %v1418, %v1582
        %v1628 = vadd.f32 %v1423, %v1587
        %v1629 = vadd.f32 %v1426, %v1590
        %v1630 = vadd.f32 %v1431, %v1595
        %v1631 = vadd.f32 %v1434, %v1598
        %v1632 = vadd.f32 %v1439, %v1603
        %v1633 = vadd.f32 %v1442, %v1606
        %v1634 = vadd.f32 %v1447, %v1611
        %v1635 = vadd.f32 %v1450, %v1614
        %v1636 = vadd.f32 %v1455, %v1619
        %v1637 = vld [vmem:[#allocation2 + $0x4] sm:$0xe]
        %v1638 = vld [vmem:[#allocation2 + $0x8] sm:$0xf]
        %v1639 = vld [vmem:[#allocation2 + $0xc] sm:$0xf]
        %v1640 = vld [vmem:[#allocation2 + $0x10] sm:$0xf]
        %v1641 = vld [vmem:[#allocation2 + $0x14] sm:$0xf]
        %v1642 = vld [vmem:[#allocation2 + $0x18] sm:$0xf]
        %v1643 = vld [vmem:[#allocation2 + $0x1c] sm:$0xf]
        %v1644 = vld [vmem:[#allocation2 + $0x20] sm:$0xf]
        %v1645 = vld [vmem:[#allocation2 + $0x24] sm:$0xf]
        %v1646 = vld [vmem:[#allocation2 + $0x28] sm:$0xf]
        %v1647 = vld [vmem:[#allocation2 + $0x2c] sm:$0xf]
        %v1648 = vld [vmem:[#allocation2 + $0x30] sm:$0xf]
        %v1649 = vld [vmem:[#allocation2 + $0x34] sm:$0x3]
        %s1650 = scalar_lea.vmem %s3, 96
        %v1651 = vld [vmem:[%s1650] sm:$0xf]
        %v1652 = vld [vmem:[%s1650 + $0x4] sm:$0xf]
        %v1653 = vld [vmem:[%s1650 + $0x8] sm:$0xf]
        %v1654 = vld [vmem:[%s1650 + $0xc] sm:$0xf]
        %v1655 = vld [vmem:[%s1650 + $0x10] sm:$0xf]
        %v1656 = vld [vmem:[%s1650 + $0x14] sm:$0xf]
        %v1657 = vld [vmem:[%s1650 + $0x18] sm:$0xf]
        %v1658 = vld [vmem:[%s1650 + $0x1c] sm:$0xf]
        %v1672 = vunpack.c.l.b16 %v1637
        %v1673 = vunpack.c.l.b16 %v1638
        %v1674 = vunpack.c.l.b16 %v1639
        %v1675 = vunpack.c.l.b16 %v1640
        %v1676 = vunpack.c.l.b16 %v1641
        %v1677 = vunpack.c.l.b16 %v1642
        %v1678 = vunpack.c.l.b16 %v1643
        %v1679 = vunpack.c.l.b16 %v1644
        %v1680 = vunpack.c.l.b16 %v1645
        %v1681 = vunpack.c.l.b16 %v1646
        %v1682 = vunpack.c.l.b16 %v1647
        %v1683 = vunpack.c.l.b16 %v1648
        %v1684 = vunpack.c.l.b16 %v1649
        %v1685 = vpack.c.b16 %v1673, %v1672
        %v1686 = vpack.c.b16 %v1675, %v1674
        %v1687 = vpack.c.b16 %v1677, %v1676
        %v1688 = vpack.c.b16 %v1679, %v1678
        %v1689 = vpack.c.b16 %v1681, %v1680
        %v1690 = vpack.c.b16 %v1683, %v1682
        %v1691 = vpack.c.b16 %v1684, %v1684
        %vm1692 = vsmask.f32 6400
        %v1694 = vshrl.u32 %v1685, 16
        %v1696 = vrot.slane %v1694, 1
        %v1697 = vshll.u32 %v1685, 16
        %v1699 = vrot.slane %v1697, 2
        %v1700 = vor.u32 %v1696, %v1699
        %v1702 = vshrl.u32 %v1686, 16
        %v1704 = vrot.slane %v1702, 1
        %v1705 = vshll.u32 %v1686, 16
        %v1707 = vrot.slane %v1705, 2
        %v1708 = vor.u32 %v1704, %v1707
        %v1709 = vsel %vm1692, %v1700, %v1708
        %v1711 = vshrl.u32 %v1687, 16
        %v1713 = vrot.slane %v1711, 1
        %v1714 = vshll.u32 %v1687, 16
        %v1716 = vrot.slane %v1714, 2
        %v1717 = vor.u32 %v1713, %v1716
        %v1718 = vsel %vm1692, %v1708, %v1717
        %v1720 = vshrl.u32 %v1688, 16
        %v1722 = vrot.slane %v1720, 1
        %v1723 = vshll.u32 %v1688, 16
        %v1725 = vrot.slane %v1723, 2
        %v1726 = vor.u32 %v1722, %v1725
        %v1727 = vsel %vm1692, %v1717, %v1726
        %v1729 = vshrl.u32 %v1689, 16
        %v1731 = vrot.slane %v1729, 1
        %v1732 = vshll.u32 %v1689, 16
        %v1734 = vrot.slane %v1732, 2
        %v1735 = vor.u32 %v1731, %v1734
        %v1736 = vsel %vm1692, %v1726, %v1735
        %v1738 = vshrl.u32 %v1690, 16
        %v1740 = vrot.slane %v1738, 1
        %v1741 = vshll.u32 %v1690, 16
        %v1743 = vrot.slane %v1741, 2
        %v1744 = vor.u32 %v1740, %v1743
        %v1745 = vsel %vm1692, %v1735, %v1744
        %v1747 = vshrl.u32 %v1691, 16
        %v1749 = vrot.slane %v1747, 1
        %v1750 = vshll.u32 %v1691, 16
        %v1752 = vrot.slane %v1750, 2
        %v1753 = vor.u32 %v1749, %v1752
        %v1754 = vsel %vm1692, %v1744, %v1753
        %v1763 = vunpack.c.l.b16 %v1651
        %v1764 = vunpack.c.l.b16 %v1652
        %v1765 = vunpack.c.l.b16 %v1653
        %v1766 = vunpack.c.l.b16 %v1654
        %v1767 = vunpack.c.l.b16 %v1655
        %v1768 = vunpack.c.l.b16 %v1656
        %v1769 = vunpack.c.l.b16 %v1657
        %v1770 = vunpack.c.l.b16 %v1658
        %v1771 = vpack.c.b16 %v1764, %v1763
        %v1772 = vpack.c.b16 %v1766, %v1765
        %v1773 = vpack.c.b16 %v1768, %v1767
        %v1774 = vpack.c.b16 %v1770, %v1769
        %v1780 = vsel %vm1224, %v1709, 0
        %v1783 = vsel %vm1224, %v1718, 0
        %v1786 = vsel %vm1224, %v1727, 0
        %v1789 = vsel %vm1224, %v1736, 0
        %v1792 = vsel %vm1224, %v1745, 0
        %v1795 = vsel %vm1224, %v1754, 0
        %v1798 = vsel %vm1224, %v1749, 0
        %1800 = vmatprep.subr.bf16.mxu0 0
        %1801 = vmatpush1.bf16.msra.mxu0 0
        %1802 = vmatprep.subr.bf16.mxu0 0
        %1803 = vmatpush1.bf16.msra.mxu0 0
        %1804 = vmatprep.subr.bf16.mxu0 0
        %1805 = vmatpush1.bf16.msra.mxu0 0
        %1806 = vmatprep.subr.bf16.mxu0 0
        %1807 = vmatpush1.bf16.msra.mxu0 0
        %1808 = vmatprep.subr.bf16.mxu0 0
        %1809 = vmatpush1.bf16.msra.mxu0 %v1774
        %1810 = vmatprep.subr.bf16.mxu0 0
        %1811 = vmatpush1.bf16.msra.mxu0 %v1773
        %1812 = vmatprep.subr.bf16.mxu0 0
        %1813 = vmatpush1.bf16.msra.mxu0 %v1772
        %1814 = vmatprep.subr.bf16.mxu0 0
        %1815 = vmatpush1.bf16.msra.mxu0 %v1771
        %1816 = vmatprep.subr.bf16.mxu0 0
        %1817 = vmatpush2.bf16.msra.mxu0 0
        %1818 = vmatprep.subr.bf16.mxu0 0
        %1819 = vmatpush2.bf16.msra.mxu0 0
        %1820 = vmatprep.subr.bf16.mxu0 0
        %1821 = vmatpush2.bf16.msra.mxu0 0
        %1822 = vmatprep.subr.bf16.mxu0 0
        %1823 = vmatpush2.bf16.msra.mxu0 0
        %1824 = vmatprep.subr.bf16.mxu0 0
        %1825 = vmatpush2.bf16.msra.mxu0 0
        %1826 = vmatprep.subr.bf16.mxu0 0
        %1827 = vmatpush2.bf16.msra.mxu0 0
        %1828 = vmatprep.subr.bf16.mxu0 0
        %1829 = vmatpush2.bf16.msra.mxu0 0
        %1830 = vmatprep.subr.bf16.mxu0 0
        %1831 = vmatpush2.bf16.msra.mxu0 0
        %1832 = vmatprep.mubr.bf16.mxu0 0
        %1833 = vmatmul.mubr.bf16.gmra.mxu0 %v1780
        %v1834 = vpop.f32.mrf.mxu0
        %v1835 = vadd.f32 0.0, %v1834
        %v1836 = vpop.f32.mrf.mxu0
        %v1837 = vpop.f32.mrf.mxu0
        %v1838 = vadd.f32 0.0, %v1837
        %v1839 = vpop.f32.mrf.mxu0
        %1840 = vmatprep.mubr.bf16.mxu0 0
        %1841 = vmatmul.mubr.bf16.gmra.mxu0 %v1783
        %v1842 = vpop.f32.mrf.mxu0
        %v1843 = vadd.f32 0.0, %v1842
        %v1844 = vpop.f32.mrf.mxu0
        %v1845 = vpop.f32.mrf.mxu0
        %v1846 = vadd.f32 0.0, %v1845
        %v1847 = vpop.f32.mrf.mxu0
        %1848 = vmatprep.mubr.bf16.mxu0 0
        %1849 = vmatmul.mubr.bf16.gmra.mxu0 %v1786
        %v1850 = vpop.f32.mrf.mxu0
        %v1851 = vadd.f32 0.0, %v1850
        %v1852 = vpop.f32.mrf.mxu0
        %v1853 = vpop.f32.mrf.mxu0
        %v1854 = vadd.f32 0.0, %v1853
        %v1855 = vpop.f32.mrf.mxu0
        %1856 = vmatprep.mubr.bf16.mxu0 0
        %1857 = vmatmul.mubr.bf16.gmra.mxu0 %v1789
        %v1858 = vpop.f32.mrf.mxu0
        %v1859 = vadd.f32 0.0, %v1858
        %v1860 = vpop.f32.mrf.mxu0
        %v1861 = vpop.f32.mrf.mxu0
        %v1862 = vadd.f32 0.0, %v1861
        %v1863 = vpop.f32.mrf.mxu0
        %1864 = vmatprep.mubr.bf16.mxu0 0
        %1865 = vmatmul.mubr.bf16.gmra.mxu0 %v1792
        %v1866 = vpop.f32.mrf.mxu0
        %v1867 = vadd.f32 0.0, %v1866
        %v1868 = vpop.f32.mrf.mxu0
        %v1869 = vpop.f32.mrf.mxu0
        %v1870 = vadd.f32 0.0, %v1869
        %v1871 = vpop.f32.mrf.mxu0
        %1872 = vmatprep.mubr.bf16.mxu0 0
        %1873 = vmatmul.mubr.bf16.gmra.mxu0 %v1795
        %v1874 = vpop.f32.mrf.mxu0
        %v1875 = vadd.f32 0.0, %v1874
        %v1876 = vpop.f32.mrf.mxu0
        %v1877 = vpop.f32.mrf.mxu0
        %v1878 = vadd.f32 0.0, %v1877
        %v1879 = vpop.f32.mrf.mxu0
        %1880 = vmatprep.mubr.bf16.mxu0 0
        %1881 = vmatmul.mubr.bf16.gmra.mxu0 %v1798
        %v1882 = vpop.f32.mrf.mxu0
        %v1883 = vadd.f32 0.0, %v1882
        %v1884 = vpop.f32.mrf.mxu0
        %v1885 = vpop.f32.mrf.mxu0
        %v1886 = vpop.f32.mrf.mxu0
        %1887 = vdwg.mxu0
        %v1888 = vadd.f32 %v1624, %v1835
        %v1889 = vadd.f32 %v1625, %v1838
        %v1890 = vadd.f32 %v1626, %v1843
        %v1891 = vadd.f32 %v1627, %v1846
        %v1892 = vadd.f32 %v1628, %v1851
        %v1893 = vadd.f32 %v1629, %v1854
        %v1894 = vadd.f32 %v1630, %v1859
        %v1895 = vadd.f32 %v1631, %v1862
        %v1896 = vadd.f32 %v1632, %v1867
        %v1897 = vadd.f32 %v1633, %v1870
        %v1898 = vadd.f32 %v1634, %v1875
        %v1899 = vadd.f32 %v1635, %v1878
        %v1900 = vadd.f32 %v1636, %v1883
        %v1901 = vld [vmem:[#allocation2 + $0x4] sm:$0xc]
        %v1902 = vld [vmem:[#allocation2 + $0x34] sm:$0x7]
        %s1903 = scalar_lea.vmem %s3, 128
        %v1904 = vld [vmem:[%s1903] sm:$0xf]
        %v1905 = vld [vmem:[%s1903 + $0x4] sm:$0xf]
        %v1906 = vld [vmem:[%s1903 + $0x8] sm:$0xf]
        %v1907 = vld [vmem:[%s1903 + $0xc] sm:$0xf]
        %v1908 = vld [vmem:[%s1903 + $0x10] sm:$0xf]
        %v1909 = vld [vmem:[%s1903 + $0x14] sm:$0xf]
        %v1910 = vld [vmem:[%s1903 + $0x18] sm:$0xf]
        %v1911 = vld [vmem:[%s1903 + $0x1c] sm:$0xf]
        %v1914 = vunpack.c.l.b16 %v1901
        %v1915 = vunpack.c.l.b16 %v1902
        %v1916 = vpack.c.b16 %v1673, %v1914
        %v1917 = vpack.c.b16 %v1915, %v1915
        %vm1918 = vcmask 1045504
        %v1919 = vrot.slane %v1916, 2
        %v1920 = vrot.slane %v1686, 2
        %v1921 = vsel %vm1918, %v1919, %v1920
        %v1922 = vrot.slane %v1687, 2
        %v1923 = vsel %vm1918, %v1920, %v1922
        %v1924 = vrot.slane %v1688, 2
        %v1925 = vsel %vm1918, %v1922, %v1924
        %v1926 = vrot.slane %v1689, 2
        %v1927 = vsel %vm1918, %v1924, %v1926
        %v1928 = vrot.slane %v1690, 2
        %v1929 = vsel %vm1918, %v1926, %v1928
        %v1930 = vrot.slane %v1917, 2
        %v1931 = vsel %vm1918, %v1928, %v1930
        %v1940 = vunpack.c.l.b16 %v1904
        %v1941 = vunpack.c.l.b16 %v1905
        %v1942 = vunpack.c.l.b16 %v1906
        %v1943 = vunpack.c.l.b16 %v1907
        %v1944 = vunpack.c.l.b16 %v1908
        %v1945 = vunpack.c.l.b16 %v1909
        %v1946 = vunpack.c.l.b16 %v1910
        %v1947 = vunpack.c.l.b16 %v1911
        %v1948 = vpack.c.b16 %v1941, %v1940
        %v1949 = vpack.c.b16 %v1943, %v1942
        %v1950 = vpack.c.b16 %v1945, %v1944
        %v1951 = vpack.c.b16 %v1947, %v1946
        %v1957 = vsel %vm1224, %v1921, 0
        %v1960 = vsel %vm1224, %v1923, 0
        %v1963 = vsel %vm1224, %v1925, 0
        %v1966 = vsel %vm1224, %v1927, 0
        %v1969 = vsel %vm1224, %v1929, 0
        %v1972 = vsel %vm1224, %v1931, 0
        %v1975 = vsel %vm1224, %v1930, 0
        %1977 = vmatprep.subr.bf16.mxu0 0
        %1978 = vmatpush1.bf16.msra.mxu0 0
        %1979 = vmatprep.subr.bf16.mxu0 0
        %1980 = vmatpush1.bf16.msra.mxu0 0
        %1981 = vmatprep.subr.bf16.mxu0 0
        %1982 = vmatpush1.bf16.msra.mxu0 0
        %1983 = vmatprep.subr.bf16.mxu0 0
        %1984 = vmatpush1.bf16.msra.mxu0 0
        %1985 = vmatprep.subr.bf16.mxu0 0
        %1986 = vmatpush1.bf16.msra.mxu0 %v1951
        %1987 = vmatprep.subr.bf16.mxu0 0
        %1988 = vmatpush1.bf16.msra.mxu0 %v1950
        %1989 = vmatprep.subr.bf16.mxu0 0
        %1990 = vmatpush1.bf16.msra.mxu0 %v1949
        %1991 = vmatprep.subr.bf16.mxu0 0
        %1992 = vmatpush1.bf16.msra.mxu0 %v1948
        %1993 = vmatprep.subr.bf16.mxu0 0
        %1994 = vmatpush2.bf16.msra.mxu0 0
        %1995 = vmatprep.subr.bf16.mxu0 0
        %1996 = vmatpush2.bf16.msra.mxu0 0
        %1997 = vmatprep.subr.bf16.mxu0 0
        %1998 = vmatpush2.bf16.msra.mxu0 0
        %1999 = vmatprep.subr.bf16.mxu0 0
        %2000 = vmatpush2.bf16.msra.mxu0 0
        %2001 = vmatprep.subr.bf16.mxu0 0
        %2002 = vmatpush2.bf16.msra.mxu0 0
        %2003 = vmatprep.subr.bf16.mxu0 0
        %2004 = vmatpush2.bf16.msra.mxu0 0
        %2005 = vmatprep.subr.bf16.mxu0 0
        %2006 = vmatpush2.bf16.msra.mxu0 0
        %2007 = vmatprep.subr.bf16.mxu0 0
        %2008 = vmatpush2.bf16.msra.mxu0 0
        %2009 = vmatprep.mubr.bf16.mxu0 0
        %2010 = vmatmul.mubr.bf16.gmra.mxu0 %v1957
        %v2011 = vpop.f32.mrf.mxu0
        %v2012 = vadd.f32 0.0, %v2011
        %v2013 = vpop.f32.mrf.mxu0
        %v2014 = vpop.f32.mrf.mxu0
        %v2015 = vadd.f32 0.0, %v2014
        %v2016 = vpop.f32.mrf.mxu0
        %2017 = vmatprep.mubr.bf16.mxu0 0
        %2018 = vmatmul.mubr.bf16.gmra.mxu0 %v1960
        %v2019 = vpop.f32.mrf.mxu0
        %v2020 = vadd.f32 0.0, %v2019
        %v2021 = vpop.f32.mrf.mxu0
        %v2022 = vpop.f32.mrf.mxu0
        %v2023 = vadd.f32 0.0, %v2022
        %v2024 = vpop.f32.mrf.mxu0
        %2025 = vmatprep.mubr.bf16.mxu0 0
        %2026 = vmatmul.mubr.bf16.gmra.mxu0 %v1963
        %v2027 = vpop.f32.mrf.mxu0
        %v2028 = vadd.f32 0.0, %v2027
        %v2029 = vpop.f32.mrf.mxu0
        %v2030 = vpop.f32.mrf.mxu0
        %v2031 = vadd.f32 0.0, %v2030
        %v2032 = vpop.f32.mrf.mxu0
        %2033 = vmatprep.mubr.bf16.mxu0 0
        %2034 = vmatmul.mubr.bf16.gmra.mxu0 %v1966
        %v2035 = vpop.f32.mrf.mxu0
        %v2036 = vadd.f32 0.0, %v2035
        %v2037 = vpop.f32.mrf.mxu0
        %v2038 = vpop.f32.mrf.mxu0
        %v2039 = vadd.f32 0.0, %v2038
        %v2040 = vpop.f32.mrf.mxu0
        %2041 = vmatprep.mubr.bf16.mxu0 0
        %2042 = vmatmul.mubr.bf16.gmra.mxu0 %v1969
        %v2043 = vpop.f32.mrf.mxu0
        %v2044 = vadd.f32 0.0, %v2043
        %v2045 = vpop.f32.mrf.mxu0
        %v2046 = vpop.f32.mrf.mxu0
        %v2047 = vadd.f32 0.0, %v2046
        %v2048 = vpop.f32.mrf.mxu0
        %2049 = vmatprep.mubr.bf16.mxu0 0
        %2050 = vmatmul.mubr.bf16.gmra.mxu0 %v1972
        %v2051 = vpop.f32.mrf.mxu0
        %v2052 = vadd.f32 0.0, %v2051
        %v2053 = vpop.f32.mrf.mxu0
        %v2054 = vpop.f32.mrf.mxu0
        %v2055 = vadd.f32 0.0, %v2054
        %v2056 = vpop.f32.mrf.mxu0
        %2057 = vmatprep.mubr.bf16.mxu0 0
        %2058 = vmatmul.mubr.bf16.gmra.mxu0 %v1975
        %v2059 = vpop.f32.mrf.mxu0
        %v2060 = vadd.f32 0.0, %v2059
        %v2061 = vpop.f32.mrf.mxu0
        %v2062 = vpop.f32.mrf.mxu0
        %v2063 = vpop.f32.mrf.mxu0
        %2064 = vdwg.mxu0
        %v2065 = vadd.f32 %v1888, %v2012
        %v2066 = vadd.f32 %v1889, %v2015
        %v2067 = vadd.f32 %v1890, %v2020
        %v2068 = vadd.f32 %v1891, %v2023
        %v2069 = vadd.f32 %v1892, %v2028
        %v2070 = vadd.f32 %v1893, %v2031
        %v2071 = vadd.f32 %v1894, %v2036
        %v2072 = vadd.f32 %v1895, %v2039
        %v2073 = vadd.f32 %v1896, %v2044
        %v2074 = vadd.f32 %v1897, %v2047
        %v2075 = vadd.f32 %v1898, %v2052
        %v2076 = vadd.f32 %v1899, %v2055
        %v2077 = vadd.f32 %v1900, %v2060
        %s2078 = scalar_lea.vmem %s3, 160
        %v2079 = vld [vmem:[%s2078] sm:$0xf]
        %v2080 = vld [vmem:[%s2078 + $0x4] sm:$0xf]
        %v2081 = vld [vmem:[%s2078 + $0x8] sm:$0xf]
        %v2082 = vld [vmem:[%s2078 + $0xc] sm:$0xf]
        %v2083 = vld [vmem:[%s2078 + $0x10] sm:$0xf]
        %v2084 = vld [vmem:[%s2078 + $0x14] sm:$0xf]
        %v2085 = vld [vmem:[%s2078 + $0x18] sm:$0xf]
        %v2086 = vld [vmem:[%s2078 + $0x1c] sm:$0xf]
        %vm2087 = vsmask.f32 5376
        %v2089 = vshrl.u32 %v1916, 16
        %v2091 = vrot.slane %v2089, 2
        %v2092 = vshll.u32 %v1916, 16
        %v2094 = vrot.slane %v2092, 3
        %v2095 = vor.u32 %v2091, %v2094
        %v2096 = vrot.slane %v1702, 2
        %v2097 = vrot.slane %v1705, 3
        %v2098 = vor.u32 %v2096, %v2097
        %v2099 = vsel %vm2087, %v2095, %v2098
        %v2100 = vrot.slane %v1711, 2
        %v2101 = vrot.slane %v1714, 3
        %v2102 = vor.u32 %v2100, %v2101
        %v2103 = vsel %vm2087, %v2098, %v2102
        %v2104 = vrot.slane %v1720, 2
        %v2105 = vrot.slane %v1723, 3
        %v2106 = vor.u32 %v2104, %v2105
        %v2107 = vsel %vm2087, %v2102, %v2106
        %v2108 = vrot.slane %v1729, 2
        %v2109 = vrot.slane %v1732, 3
        %v2110 = vor.u32 %v2108, %v2109
        %v2111 = vsel %vm2087, %v2106, %v2110
        %v2112 = vrot.slane %v1738, 2
        %v2113 = vrot.slane %v1741, 3
        %v2114 = vor.u32 %v2112, %v2113
        %v2115 = vsel %vm2087, %v2110, %v2114
        %v2117 = vshrl.u32 %v1917, 16
        %v2119 = vrot.slane %v2117, 2
        %v2120 = vshll.u32 %v1917, 16
        %v2122 = vrot.slane %v2120, 3
        %v2123 = vor.u32 %v2119, %v2122
        %v2124 = vsel %vm2087, %v2114, %v2123
        %v2133 = vunpack.c.l.b16 %v2079
        %v2134 = vunpack.c.l.b16 %v2080
        %v2135 = vunpack.c.l.b16 %v2081
        %v2136 = vunpack.c.l.b16 %v2082
        %v2137 = vunpack.c.l.b16 %v2083
        %v2138 = vunpack.c.l.b16 %v2084
        %v2139 = vunpack.c.l.b16 %v2085
        %v2140 = vunpack.c.l.b16 %v2086
        %v2141 = vpack.c.b16 %v2134, %v2133
        %v2142 = vpack.c.b16 %v2136, %v2135
        %v2143 = vpack.c.b16 %v2138, %v2137
        %v2144 = vpack.c.b16 %v2140, %v2139
        %v2150 = vsel %vm1224, %v2099, 0
        %v2153 = vsel %vm1224, %v2103, 0
        %v2156 = vsel %vm1224, %v2107, 0
        %v2159 = vsel %vm1224, %v2111, 0
        %v2162 = vsel %vm1224, %v2115, 0
        %v2165 = vsel %vm1224, %v2124, 0
        %v2168 = vsel %vm1224, %v2119, 0
        %2170 = vmatprep.subr.bf16.mxu0 0
        %2171 = vmatpush1.bf16.msra.mxu0 0
        %2172 = vmatprep.subr.bf16.mxu0 0
        %2173 = vmatpush1.bf16.msra.mxu0 0
        %2174 = vmatprep.subr.bf16.mxu0 0
        %2175 = vmatpush1.bf16.msra.mxu0 0
        %2176 = vmatprep.subr.bf16.mxu0 0
        %2177 = vmatpush1.bf16.msra.mxu0 0
        %2178 = vmatprep.subr.bf16.mxu0 0
        %2179 = vmatpush1.bf16.msra.mxu0 %v2144
        %2180 = vmatprep.subr.bf16.mxu0 0
        %2181 = vmatpush1.bf16.msra.mxu0 %v2143
        %2182 = vmatprep.subr.bf16.mxu0 0
        %2183 = vmatpush1.bf16.msra.mxu0 %v2142
        %2184 = vmatprep.subr.bf16.mxu0 0
        %2185 = vmatpush1.bf16.msra.mxu0 %v2141
        %2186 = vmatprep.subr.bf16.mxu0 0
        %2187 = vmatpush2.bf16.msra.mxu0 0
        %2188 = vmatprep.subr.bf16.mxu0 0
        %2189 = vmatpush2.bf16.msra.mxu0 0
        %2190 = vmatprep.subr.bf16.mxu0 0
        %2191 = vmatpush2.bf16.msra.mxu0 0
        %2192 = vmatprep.subr.bf16.mxu0 0
        %2193 = vmatpush2.bf16.msra.mxu0 0
        %2194 = vmatprep.subr.bf16.mxu0 0
        %2195 = vmatpush2.bf16.msra.mxu0 0
        %2196 = vmatprep.subr.bf16.mxu0 0
        %2197 = vmatpush2.bf16.msra.mxu0 0
        %2198 = vmatprep.subr.bf16.mxu0 0
        %2199 = vmatpush2.bf16.msra.mxu0 0
        %2200 = vmatprep.subr.bf16.mxu0 0
        %2201 = vmatpush2.bf16.msra.mxu0 0
        %2202 = vmatprep.mubr.bf16.mxu0 0
        %2203 = vmatmul.mubr.bf16.gmra.mxu0 %v2150
        %v2204 = vpop.f32.mrf.mxu0
        %v2205 = vadd.f32 0.0, %v2204
        %v2206 = vpop.f32.mrf.mxu0
        %v2207 = vpop.f32.mrf.mxu0
        %v2208 = vadd.f32 0.0, %v2207
        %v2209 = vpop.f32.mrf.mxu0
        %2210 = vmatprep.mubr.bf16.mxu0 0
        %2211 = vmatmul.mubr.bf16.gmra.mxu0 %v2153
        %v2212 = vpop.f32.mrf.mxu0
        %v2213 = vadd.f32 0.0, %v2212
        %v2214 = vpop.f32.mrf.mxu0
        %v2215 = vpop.f32.mrf.mxu0
        %v2216 = vadd.f32 0.0, %v2215
        %v2217 = vpop.f32.mrf.mxu0
        %2218 = vmatprep.mubr.bf16.mxu0 0
        %2219 = vmatmul.mubr.bf16.gmra.mxu0 %v2156
        %v2220 = vpop.f32.mrf.mxu0
        %v2221 = vadd.f32 0.0, %v2220
        %v2222 = vpop.f32.mrf.mxu0
        %v2223 = vpop.f32.mrf.mxu0
        %v2224 = vadd.f32 0.0, %v2223
        %v2225 = vpop.f32.mrf.mxu0
        %2226 = vmatprep.mubr.bf16.mxu0 0
        %2227 = vmatmul.mubr.bf16.gmra.mxu0 %v2159
        %v2228 = vpop.f32.mrf.mxu0
        %v2229 = vadd.f32 0.0, %v2228
        %v2230 = vpop.f32.mrf.mxu0
        %v2231 = vpop.f32.mrf.mxu0
        %v2232 = vadd.f32 0.0, %v2231
        %v2233 = vpop.f32.mrf.mxu0
        %2234 = vmatprep.mubr.bf16.mxu0 0
        %2235 = vmatmul.mubr.bf16.gmra.mxu0 %v2162
        %v2236 = vpop.f32.mrf.mxu0
        %v2237 = vadd.f32 0.0, %v2236
        %v2238 = vpop.f32.mrf.mxu0
        %v2239 = vpop.f32.mrf.mxu0
        %v2240 = vadd.f32 0.0, %v2239
        %v2241 = vpop.f32.mrf.mxu0
        %2242 = vmatprep.mubr.bf16.mxu0 0
        %2243 = vmatmul.mubr.bf16.gmra.mxu0 %v2165
        %v2244 = vpop.f32.mrf.mxu0
        %v2245 = vadd.f32 0.0, %v2244
        %v2246 = vpop.f32.mrf.mxu0
        %v2247 = vpop.f32.mrf.mxu0
        %v2248 = vadd.f32 0.0, %v2247
        %v2249 = vpop.f32.mrf.mxu0
        %2250 = vmatprep.mubr.bf16.mxu0 0
        %2251 = vmatmul.mubr.bf16.gmra.mxu0 %v2168
        %v2252 = vpop.f32.mrf.mxu0
        %v2253 = vadd.f32 0.0, %v2252
        %v2254 = vpop.f32.mrf.mxu0
        %v2255 = vpop.f32.mrf.mxu0
        %v2256 = vpop.f32.mrf.mxu0
        %2257 = vdwg.mxu0
        %v2258 = vadd.f32 %v2065, %v2205
        %v2259 = vadd.f32 %v2066, %v2208
        %v2260 = vadd.f32 %v2067, %v2213
        %v2261 = vadd.f32 %v2068, %v2216
        %v2262 = vadd.f32 %v2069, %v2221
        %v2263 = vadd.f32 %v2070, %v2224
        %v2264 = vadd.f32 %v2071, %v2229
        %v2265 = vadd.f32 %v2072, %v2232
        %v2266 = vadd.f32 %v2073, %v2237
        %v2267 = vadd.f32 %v2074, %v2240
        %v2268 = vadd.f32 %v2075, %v2245
        %v2269 = vadd.f32 %v2076, %v2248
        %v2270 = vadd.f32 %v2077, %v2253
        %v2271 = vld [vmem:[#allocation2 + $0x8] sm:$0x8]
        %v2272 = vld [vmem:[#allocation2 + $0xc] sm:$0xf]
        %v2273 = vld [vmem:[#allocation2 + $0x10] sm:$0xf]
        %v2274 = vld [vmem:[#allocation2 + $0x14] sm:$0xf]
        %v2275 = vld [vmem:[#allocation2 + $0x18] sm:$0xf]
        %v2276 = vld [vmem:[#allocation2 + $0x1c] sm:$0xf]
        %v2277 = vld [vmem:[#allocation2 + $0x20] sm:$0xf]
        %v2278 = vld [vmem:[#allocation2 + $0x24] sm:$0xf]
        %v2279 = vld [vmem:[#allocation2 + $0x28] sm:$0xf]
        %v2280 = vld [vmem:[#allocation2 + $0x2c] sm:$0xf]
        %v2281 = vld [vmem:[#allocation2 + $0x30] sm:$0xf]
        %v2282 = vld [vmem:[#allocation2 + $0x34] sm:$0xf]
        %v2283 = vld [vmem:[#allocation2 + $0x38] sm:$0xf]
        %s2284 = scalar_lea.vmem %s3, 192
        %v2285 = vld [vmem:[%s2284] sm:$0xf]
        %v2286 = vld [vmem:[%s2284 + $0x4] sm:$0xf]
        %v2287 = vld [vmem:[%s2284 + $0x8] sm:$0xf]
        %v2288 = vld [vmem:[%s2284 + $0xc] sm:$0xf]
        %v2289 = vld [vmem:[%s2284 + $0x10] sm:$0xf]
        %v2290 = vld [vmem:[%s2284 + $0x14] sm:$0xf]
        %v2291 = vld [vmem:[%s2284 + $0x18] sm:$0xf]
        %v2292 = vld [vmem:[%s2284 + $0x1c] sm:$0xf]
        %v2306 = vunpack.c.l.b16 %v2271
        %v2307 = vunpack.c.l.b16 %v2272
        %v2308 = vunpack.c.l.b16 %v2273
        %v2309 = vunpack.c.l.b16 %v2274
        %v2310 = vunpack.c.l.b16 %v2275
        %v2311 = vunpack.c.l.b16 %v2276
        %v2312 = vunpack.c.l.b16 %v2277
        %v2313 = vunpack.c.l.b16 %v2278
        %v2314 = vunpack.c.l.b16 %v2279
        %v2315 = vunpack.c.l.b16 %v2280
        %v2316 = vunpack.c.l.b16 %v2281
        %v2317 = vunpack.c.l.b16 %v2282
        %v2318 = vunpack.c.l.b16 %v2283
        %v2319 = vpack.c.b16 %v2307, %v2306
        %v2320 = vpack.c.b16 %v2309, %v2308
        %v2321 = vpack.c.b16 %v2311, %v2310
        %v2322 = vpack.c.b16 %v2313, %v2312
        %v2323 = vpack.c.b16 %v2315, %v2314
        %v2324 = vpack.c.b16 %v2317, %v2316
        %v2325 = vpack.c.b16 %v2318, %v2318
        %vm2326 = vcmask 1044480
        %v2327 = vrot.slane %v2319, 3
        %v2328 = vrot.slane %v2320, 3
        %v2329 = vsel %vm2326, %v2327, %v2328
        %v2330 = vrot.slane %v2321, 3
        %v2331 = vsel %vm2326, %v2328, %v2330
        %v2332 = vrot.slane %v2322, 3
        %v2333 = vsel %vm2326, %v2330, %v2332
        %v2334 = vrot.slane %v2323, 3
        %v2335 = vsel %vm2326, %v2332, %v2334
        %v2336 = vrot.slane %v2324, 3
        %v2337 = vsel %vm2326, %v2334, %v2336
        %v2338 = vrot.slane %v2325, 3
        %v2339 = vsel %vm2326, %v2336, %v2338
        %v2348 = vunpack.c.l.b16 %v2285
        %v2349 = vunpack.c.l.b16 %v2286
        %v2350 = vunpack.c.l.b16 %v2287
        %v2351 = vunpack.c.l.b16 %v2288
        %v2352 = vunpack.c.l.b16 %v2289
        %v2353 = vunpack.c.l.b16 %v2290
        %v2354 = vunpack.c.l.b16 %v2291
        %v2355 = vunpack.c.l.b16 %v2292
        %v2356 = vpack.c.b16 %v2349, %v2348
        %v2357 = vpack.c.b16 %v2351, %v2350
        %v2358 = vpack.c.b16 %v2353, %v2352
        %v2359 = vpack.c.b16 %v2355, %v2354
        %v2365 = vsel %vm1224, %v2329, 0
        %v2368 = vsel %vm1224, %v2331, 0
        %v2371 = vsel %vm1224, %v2333, 0
        %v2374 = vsel %vm1224, %v2335, 0
        %v2377 = vsel %vm1224, %v2337, 0
        %v2380 = vsel %vm1224, %v2339, 0
        %v2383 = vsel %vm1224, %v2338, 0
        %2385 = vmatprep.subr.bf16.mxu0 0
        %2386 = vmatpush1.bf16.msra.mxu0 0
        %2387 = vmatprep.subr.bf16.mxu0 0
        %2388 = vmatpush1.bf16.msra.mxu0 0
        %2389 = vmatprep.subr.bf16.mxu0 0
        %2390 = vmatpush1.bf16.msra.mxu0 0
        %2391 = vmatprep.subr.bf16.mxu0 0
        %2392 = vmatpush1.bf16.msra.mxu0 0
        %2393 = vmatprep.subr.bf16.mxu0 0
        %2394 = vmatpush1.bf16.msra.mxu0 %v2359
        %2395 = vmatprep.subr.bf16.mxu0 0
        %2396 = vmatpush1.bf16.msra.mxu0 %v2358
        %2397 = vmatprep.subr.bf16.mxu0 0
        %2398 = vmatpush1.bf16.msra.mxu0 %v2357
        %2399 = vmatprep.subr.bf16.mxu0 0
        %2400 = vmatpush1.bf16.msra.mxu0 %v2356
        %2401 = vmatprep.subr.bf16.mxu0 0
        %2402 = vmatpush2.bf16.msra.mxu0 0
        %2403 = vmatprep.subr.bf16.mxu0 0
        %2404 = vmatpush2.bf16.msra.mxu0 0
        %2405 = vmatprep.subr.bf16.mxu0 0
        %2406 = vmatpush2.bf16.msra.mxu0 0
        %2407 = vmatprep.subr.bf16.mxu0 0
        %2408 = vmatpush2.bf16.msra.mxu0 0
        %2409 = vmatprep.subr.bf16.mxu0 0
        %2410 = vmatpush2.bf16.msra.mxu0 0
        %2411 = vmatprep.subr.bf16.mxu0 0
        %2412 = vmatpush2.bf16.msra.mxu0 0
        %2413 = vmatprep.subr.bf16.mxu0 0
        %2414 = vmatpush2.bf16.msra.mxu0 0
        %2415 = vmatprep.subr.bf16.mxu0 0
        %2416 = vmatpush2.bf16.msra.mxu0 0
        %2417 = vmatprep.mubr.bf16.mxu0 0
        %2418 = vmatmul.mubr.bf16.gmra.mxu0 %v2365
        %v2419 = vpop.f32.mrf.mxu0
        %v2420 = vadd.f32 0.0, %v2419
        %v2421 = vpop.f32.mrf.mxu0
        %v2422 = vpop.f32.mrf.mxu0
        %v2423 = vadd.f32 0.0, %v2422
        %v2424 = vpop.f32.mrf.mxu0
        %2425 = vmatprep.mubr.bf16.mxu0 0
        %2426 = vmatmul.mubr.bf16.gmra.mxu0 %v2368
        %v2427 = vpop.f32.mrf.mxu0
        %v2428 = vadd.f32 0.0, %v2427
        %v2429 = vpop.f32.mrf.mxu0
        %v2430 = vpop.f32.mrf.mxu0
        %v2431 = vadd.f32 0.0, %v2430
        %v2432 = vpop.f32.mrf.mxu0
        %2433 = vmatprep.mubr.bf16.mxu0 0
        %2434 = vmatmul.mubr.bf16.gmra.mxu0 %v2371
        %v2435 = vpop.f32.mrf.mxu0
        %v2436 = vadd.f32 0.0, %v2435
        %v2437 = vpop.f32.mrf.mxu0
        %v2438 = vpop.f32.mrf.mxu0
        %v2439 = vadd.f32 0.0, %v2438
        %v2440 = vpop.f32.mrf.mxu0
        %2441 = vmatprep.mubr.bf16.mxu0 0
        %2442 = vmatmul.mubr.bf16.gmra.mxu0 %v2374
        %v2443 = vpop.f32.mrf.mxu0
        %v2444 = vadd.f32 0.0, %v2443
        %v2445 = vpop.f32.mrf.mxu0
        %v2446 = vpop.f32.mrf.mxu0
        %v2447 = vadd.f32 0.0, %v2446
        %v2448 = vpop.f32.mrf.mxu0
        %2449 = vmatprep.mubr.bf16.mxu0 0
        %2450 = vmatmul.mubr.bf16.gmra.mxu0 %v2377
        %v2451 = vpop.f32.mrf.mxu0
        %v2452 = vadd.f32 0.0, %v2451
        %v2453 = vpop.f32.mrf.mxu0
        %v2454 = vpop.f32.mrf.mxu0
        %v2455 = vadd.f32 0.0, %v2454
        %v2456 = vpop.f32.mrf.mxu0
        %2457 = vmatprep.mubr.bf16.mxu0 0
        %2458 = vmatmul.mubr.bf16.gmra.mxu0 %v2380
        %v2459 = vpop.f32.mrf.mxu0
        %v2460 = vadd.f32 0.0, %v2459
        %v2461 = vpop.f32.mrf.mxu0
        %v2462 = vpop.f32.mrf.mxu0
        %v2463 = vadd.f32 0.0, %v2462
        %v2464 = vpop.f32.mrf.mxu0
        %2465 = vmatprep.mubr.bf16.mxu0 0
        %2466 = vmatmul.mubr.bf16.gmra.mxu0 %v2383
        %v2467 = vpop.f32.mrf.mxu0
        %v2468 = vadd.f32 0.0, %v2467
        %v2469 = vpop.f32.mrf.mxu0
        %v2470 = vpop.f32.mrf.mxu0
        %v2471 = vpop.f32.mrf.mxu0
        %2472 = vdwg.mxu0
        %v2473 = vadd.f32 %v2258, %v2420
        %v2474 = vadd.f32 %v2259, %v2423
        %v2475 = vadd.f32 %v2260, %v2428
        %v2476 = vadd.f32 %v2261, %v2431
        %v2477 = vadd.f32 %v2262, %v2436
        %v2478 = vadd.f32 %v2263, %v2439
        %v2479 = vadd.f32 %v2264, %v2444
        %v2480 = vadd.f32 %v2265, %v2447
        %v2481 = vadd.f32 %v2266, %v2452
        %v2482 = vadd.f32 %v2267, %v2455
        %v2483 = vadd.f32 %v2268, %v2460
        %v2484 = vadd.f32 %v2269, %v2463
        %v2485 = vadd.f32 %v2270, %v2468
        %s2486 = scalar_lea.vmem %s3, 224
        %v2487 = vld [vmem:[%s2486] sm:$0xf]
        %v2488 = vld [vmem:[%s2486 + $0x4] sm:$0xf]
        %v2489 = vld [vmem:[%s2486 + $0x8] sm:$0xf]
        %v2490 = vld [vmem:[%s2486 + $0xc] sm:$0xf]
        %v2491 = vld [vmem:[%s2486 + $0x10] sm:$0xf]
        %v2492 = vld [vmem:[%s2486 + $0x14] sm:$0xf]
        %v2493 = vld [vmem:[%s2486 + $0x18] sm:$0xf]
        %v2494 = vld [vmem:[%s2486 + $0x1c] sm:$0xf]
        %vm2495 = vsmask.f32 4352
        %v2497 = vshrl.u32 %v2319, 16
        %v2499 = vrot.slane %v2497, 3
        %v2500 = vshll.u32 %v2319, 16
        %v2502 = vrot.slane %v2500, 4
        %v2503 = vor.u32 %v2499, %v2502
        %v2505 = vshrl.u32 %v2320, 16
        %v2507 = vrot.slane %v2505, 3
        %v2508 = vshll.u32 %v2320, 16
        %v2510 = vrot.slane %v2508, 4
        %v2511 = vor.u32 %v2507, %v2510
        %v2512 = vsel %vm2495, %v2503, %v2511
        %v2514 = vshrl.u32 %v2321, 16
        %v2516 = vrot.slane %v2514, 3
        %v2517 = vshll.u32 %v2321, 16
        %v2519 = vrot.slane %v2517, 4
        %v2520 = vor.u32 %v2516, %v2519
        %v2521 = vsel %vm2495, %v2511, %v2520
        %v2523 = vshrl.u32 %v2322, 16
        %v2525 = vrot.slane %v2523, 3
        %v2526 = vshll.u32 %v2322, 16
        %v2528 = vrot.slane %v2526, 4
        %v2529 = vor.u32 %v2525, %v2528
        %v2530 = vsel %vm2495, %v2520, %v2529
        %v2532 = vshrl.u32 %v2323, 16
        %v2534 = vrot.slane %v2532, 3
        %v2535 = vshll.u32 %v2323, 16
        %v2537 = vrot.slane %v2535, 4
        %v2538 = vor.u32 %v2534, %v2537
        %v2539 = vsel %vm2495, %v2529, %v2538
        %v2541 = vshrl.u32 %v2324, 16
        %v2543 = vrot.slane %v2541, 3
        %v2544 = vshll.u32 %v2324, 16
        %v2546 = vrot.slane %v2544, 4
        %v2547 = vor.u32 %v2543, %v2546
        %v2548 = vsel %vm2495, %v2538, %v2547
        %v2550 = vshrl.u32 %v2325, 16
        %v2552 = vrot.slane %v2550, 3
        %v2553 = vshll.u32 %v2325, 16
        %v2555 = vrot.slane %v2553, 4
        %v2556 = vor.u32 %v2552, %v2555
        %v2557 = vsel %vm2495, %v2547, %v2556
        %v2566 = vunpack.c.l.b16 %v2487
        %v2567 = vunpack.c.l.b16 %v2488
        %v2568 = vunpack.c.l.b16 %v2489
        %v2569 = vunpack.c.l.b16 %v2490
        %v2570 = vunpack.c.l.b16 %v2491
        %v2571 = vunpack.c.l.b16 %v2492
        %v2572 = vunpack.c.l.b16 %v2493
        %v2573 = vunpack.c.l.b16 %v2494
        %v2574 = vpack.c.b16 %v2567, %v2566
        %v2575 = vpack.c.b16 %v2569, %v2568
        %v2576 = vpack.c.b16 %v2571, %v2570
        %v2577 = vpack.c.b16 %v2573, %v2572
        %v2583 = vsel %vm1224, %v2512, 0
        %v2586 = vsel %vm1224, %v2521, 0
        %v2589 = vsel %vm1224, %v2530, 0
        %v2592 = vsel %vm1224, %v2539, 0
        %v2595 = vsel %vm1224, %v2548, 0
        %v2598 = vsel %vm1224, %v2557, 0
        %v2601 = vsel %vm1224, %v2552, 0
        %2603 = vmatprep.subr.bf16.mxu0 0
        %2604 = vmatpush1.bf16.msra.mxu0 0
        %2605 = vmatprep.subr.bf16.mxu0 0
        %2606 = vmatpush1.bf16.msra.mxu0 0
        %2607 = vmatprep.subr.bf16.mxu0 0
        %2608 = vmatpush1.bf16.msra.mxu0 0
        %2609 = vmatprep.subr.bf16.mxu0 0
        %2610 = vmatpush1.bf16.msra.mxu0 0
        %2611 = vmatprep.subr.bf16.mxu0 0
        %2612 = vmatpush1.bf16.msra.mxu0 %v2577
        %2613 = vmatprep.subr.bf16.mxu0 0
        %2614 = vmatpush1.bf16.msra.mxu0 %v2576
        %2615 = vmatprep.subr.bf16.mxu0 0
        %2616 = vmatpush1.bf16.msra.mxu0 %v2575
        %2617 = vmatprep.subr.bf16.mxu0 0
        %2618 = vmatpush1.bf16.msra.mxu0 %v2574
        %2619 = vmatprep.subr.bf16.mxu0 0
        %2620 = vmatpush2.bf16.msra.mxu0 0
        %2621 = vmatprep.subr.bf16.mxu0 0
        %2622 = vmatpush2.bf16.msra.mxu0 0
        %2623 = vmatprep.subr.bf16.mxu0 0
        %2624 = vmatpush2.bf16.msra.mxu0 0
        %2625 = vmatprep.subr.bf16.mxu0 0
        %2626 = vmatpush2.bf16.msra.mxu0 0
        %2627 = vmatprep.subr.bf16.mxu0 0
        %2628 = vmatpush2.bf16.msra.mxu0 0
        %2629 = vmatprep.subr.bf16.mxu0 0
        %2630 = vmatpush2.bf16.msra.mxu0 0
        %2631 = vmatprep.subr.bf16.mxu0 0
        %2632 = vmatpush2.bf16.msra.mxu0 0
        %2633 = vmatprep.subr.bf16.mxu0 0
        %2634 = vmatpush2.bf16.msra.mxu0 0
        %2635 = vmatprep.mubr.bf16.mxu0 0
        %2636 = vmatmul.mubr.bf16.gmra.mxu0 %v2583
        %v2637 = vpop.f32.mrf.mxu0
        %v2638 = vadd.f32 0.0, %v2637
        %v2639 = vpop.f32.mrf.mxu0
        %v2640 = vpop.f32.mrf.mxu0
        %v2641 = vadd.f32 0.0, %v2640
        %v2642 = vpop.f32.mrf.mxu0
        %2643 = vmatprep.mubr.bf16.mxu0 0
        %2644 = vmatmul.mubr.bf16.gmra.mxu0 %v2586
        %v2645 = vpop.f32.mrf.mxu0
        %v2646 = vadd.f32 0.0, %v2645
        %v2647 = vpop.f32.mrf.mxu0
        %v2648 = vpop.f32.mrf.mxu0
        %v2649 = vadd.f32 0.0, %v2648
        %v2650 = vpop.f32.mrf.mxu0
        %2651 = vmatprep.mubr.bf16.mxu0 0
        %2652 = vmatmul.mubr.bf16.gmra.mxu0 %v2589
        %v2653 = vpop.f32.mrf.mxu0
        %v2654 = vadd.f32 0.0, %v2653
        %v2655 = vpop.f32.mrf.mxu0
        %v2656 = vpop.f32.mrf.mxu0
        %v2657 = vadd.f32 0.0, %v2656
        %v2658 = vpop.f32.mrf.mxu0
        %2659 = vmatprep.mubr.bf16.mxu0 0
        %2660 = vmatmul.mubr.bf16.gmra.mxu0 %v2592
        %v2661 = vpop.f32.mrf.mxu0
        %v2662 = vadd.f32 0.0, %v2661
        %v2663 = vpop.f32.mrf.mxu0
        %v2664 = vpop.f32.mrf.mxu0
        %v2665 = vadd.f32 0.0, %v2664
        %v2666 = vpop.f32.mrf.mxu0
        %2667 = vmatprep.mubr.bf16.mxu0 0
        %2668 = vmatmul.mubr.bf16.gmra.mxu0 %v2595
        %v2669 = vpop.f32.mrf.mxu0
        %v2670 = vadd.f32 0.0, %v2669
        %v2671 = vpop.f32.mrf.mxu0
        %v2672 = vpop.f32.mrf.mxu0
        %v2673 = vadd.f32 0.0, %v2672
        %v2674 = vpop.f32.mrf.mxu0
        %2675 = vmatprep.mubr.bf16.mxu0 0
        %2676 = vmatmul.mubr.bf16.gmra.mxu0 %v2598
        %v2677 = vpop.f32.mrf.mxu0
        %v2678 = vadd.f32 0.0, %v2677
        %v2679 = vpop.f32.mrf.mxu0
        %v2680 = vpop.f32.mrf.mxu0
        %v2681 = vadd.f32 0.0, %v2680
        %v2682 = vpop.f32.mrf.mxu0
        %2683 = vmatprep.mubr.bf16.mxu0 0
        %2684 = vmatmul.mubr.bf16.gmra.mxu0 %v2601
        %v2685 = vpop.f32.mrf.mxu0
        %v2686 = vadd.f32 0.0, %v2685
        %v2687 = vpop.f32.mrf.mxu0
        %v2688 = vpop.f32.mrf.mxu0
        %v2689 = vpop.f32.mrf.mxu0
        %2690 = vdwg.mxu0
        %v2691 = vadd.f32 %v2473, %v2638
        %v2692 = vadd.f32 %v2474, %v2641
        %v2693 = vadd.f32 %v2475, %v2646
        %v2694 = vadd.f32 %v2476, %v2649
        %v2695 = vadd.f32 %v2477, %v2654
        %v2696 = vadd.f32 %v2478, %v2657
        %v2697 = vadd.f32 %v2479, %v2662
        %v2698 = vadd.f32 %v2480, %v2665
        %v2699 = vadd.f32 %v2481, %v2670
        %v2700 = vadd.f32 %v2482, %v2673
        %v2701 = vadd.f32 %v2483, %v2678
        %v2702 = vadd.f32 %v2484, %v2681
        %v2703 = vadd.f32 %v2485, %v2686
        %v2704 = vld [vmem:[#allocation2 + $0xc] sm:$0xf]
        %v2705 = vld [vmem:[#allocation2 + $0x10] sm:$0xf]
        %v2706 = vld [vmem:[#allocation2 + $0x14] sm:$0xf]
        %v2707 = vld [vmem:[#allocation2 + $0x18] sm:$0xf]
        %v2708 = vld [vmem:[#allocation2 + $0x1c] sm:$0xf]
        %v2709 = vld [vmem:[#allocation2 + $0x20] sm:$0xf]
        %v2710 = vld [vmem:[#allocation2 + $0x24] sm:$0xf]
        %v2711 = vld [vmem:[#allocation2 + $0x28] sm:$0xf]
        %v2712 = vld [vmem:[#allocation2 + $0x2c] sm:$0xf]
        %v2713 = vld [vmem:[#allocation2 + $0x30] sm:$0xf]
        %v2714 = vld [vmem:[#allocation2 + $0x34] sm:$0xf]
        %v2715 = vld [vmem:[#allocation2 + $0x38] sm:$0xf]
        %v2716 = vld [vmem:[#allocation2 + $0x3c] sm:$0x1]
        %s2717 = scalar_lea.vmem %s3, 256
        %v2718 = vld [vmem:[%s2717] sm:$0xf]
        %v2719 = vld [vmem:[%s2717 + $0x4] sm:$0xf]
        %v2720 = vld [vmem:[%s2717 + $0x8] sm:$0xf]
        %v2721 = vld [vmem:[%s2717 + $0xc] sm:$0xf]
        %v2722 = vld [vmem:[%s2717 + $0x10] sm:$0xf]
        %v2723 = vld [vmem:[%s2717 + $0x14] sm:$0xf]
        %v2724 = vld [vmem:[%s2717 + $0x18] sm:$0xf]
        %v2725 = vld [vmem:[%s2717 + $0x1c] sm:$0xf]
        %v2739 = vunpack.c.l.b16 %v2704
        %v2740 = vunpack.c.l.b16 %v2705
        %v2741 = vunpack.c.l.b16 %v2706
        %v2742 = vunpack.c.l.b16 %v2707
        %v2743 = vunpack.c.l.b16 %v2708
        %v2744 = vunpack.c.l.b16 %v2709
        %v2745 = vunpack.c.l.b16 %v2710
        %v2746 = vunpack.c.l.b16 %v2711
        %v2747 = vunpack.c.l.b16 %v2712
        %v2748 = vunpack.c.l.b16 %v2713
        %v2749 = vunpack.c.l.b16 %v2714
        %v2750 = vunpack.c.l.b16 %v2715
        %v2751 = vunpack.c.l.b16 %v2716
        %v2752 = vpack.c.b16 %v2740, %v2739
        %v2753 = vpack.c.b16 %v2742, %v2741
        %v2754 = vpack.c.b16 %v2744, %v2743
        %v2755 = vpack.c.b16 %v2746, %v2745
        %v2756 = vpack.c.b16 %v2748, %v2747
        %v2757 = vpack.c.b16 %v2750, %v2749
        %v2758 = vpack.c.b16 %v2751, %v2751
        %v2767 = vunpack.c.l.b16 %v2718
        %v2768 = vunpack.c.l.b16 %v2719
        %v2769 = vunpack.c.l.b16 %v2720
        %v2770 = vunpack.c.l.b16 %v2721
        %v2771 = vunpack.c.l.b16 %v2722
        %v2772 = vunpack.c.l.b16 %v2723
        %v2773 = vunpack.c.l.b16 %v2724
        %v2774 = vunpack.c.l.b16 %v2725
        %v2775 = vpack.c.b16 %v2768, %v2767
        %v2776 = vpack.c.b16 %v2770, %v2769
        %v2777 = vpack.c.b16 %v2772, %v2771
        %v2778 = vpack.c.b16 %v2774, %v2773
        %v2784 = vsel %vm1224, %v2752, 0
        %v2787 = vsel %vm1224, %v2753, 0
        %v2790 = vsel %vm1224, %v2754, 0
        %v2793 = vsel %vm1224, %v2755, 0
        %v2796 = vsel %vm1224, %v2756, 0
        %v2799 = vsel %vm1224, %v2757, 0
        %v2802 = vsel %vm1224, %v2758, 0
        %2804 = vmatprep.subr.bf16.mxu0 0
        %2805 = vmatpush1.bf16.msra.mxu0 0
        %2806 = vmatprep.subr.bf16.mxu0 0
        %2807 = vmatpush1.bf16.msra.mxu0 0
        %2808 = vmatprep.subr.bf16.mxu0 0
        %2809 = vmatpush1.bf16.msra.mxu0 0
        %2810 = vmatprep.subr.bf16.mxu0 0
        %2811 = vmatpush1.bf16.msra.mxu0 0
        %2812 = vmatprep.subr.bf16.mxu0 0
        %2813 = vmatpush1.bf16.msra.mxu0 %v2778
        %2814 = vmatprep.subr.bf16.mxu0 0
        %2815 = vmatpush1.bf16.msra.mxu0 %v2777
        %2816 = vmatprep.subr.bf16.mxu0 0
        %2817 = vmatpush1.bf16.msra.mxu0 %v2776
        %2818 = vmatprep.subr.bf16.mxu0 0
        %2819 = vmatpush1.bf16.msra.mxu0 %v2775
        %2820 = vmatprep.subr.bf16.mxu0 0
        %2821 = vmatpush2.bf16.msra.mxu0 0
        %2822 = vmatprep.subr.bf16.mxu0 0
        %2823 = vmatpush2.bf16.msra.mxu0 0
        %2824 = vmatprep.subr.bf16.mxu0 0
        %2825 = vmatpush2.bf16.msra.mxu0 0
        %2826 = vmatprep.subr.bf16.mxu0 0
        %2827 = vmatpush2.bf16.msra.mxu0 0
        %2828 = vmatprep.subr.bf16.mxu0 0
        %2829 = vmatpush2.bf16.msra.mxu0 0
        %2830 = vmatprep.subr.bf16.mxu0 0
        %2831 = vmatpush2.bf16.msra.mxu0 0
        %2832 = vmatprep.subr.bf16.mxu0 0
        %2833 = vmatpush2.bf16.msra.mxu0 0
        %2834 = vmatprep.subr.bf16.mxu0 0
        %2835 = vmatpush2.bf16.msra.mxu0 0
        %2836 = vmatprep.mubr.bf16.mxu0 0
        %2837 = vmatmul.mubr.bf16.gmra.mxu0 %v2784
        %v2838 = vpop.f32.mrf.mxu0
        %v2839 = vadd.f32 0.0, %v2838
        %v2840 = vpop.f32.mrf.mxu0
        %v2841 = vpop.f32.mrf.mxu0
        %v2842 = vadd.f32 0.0, %v2841
        %v2843 = vpop.f32.mrf.mxu0
        %2844 = vmatprep.mubr.bf16.mxu0 0
        %2845 = vmatmul.mubr.bf16.gmra.mxu0 %v2787
        %v2846 = vpop.f32.mrf.mxu0
        %v2847 = vadd.f32 0.0, %v2846
        %v2848 = vpop.f32.mrf.mxu0
        %v2849 = vpop.f32.mrf.mxu0
        %v2850 = vadd.f32 0.0, %v2849
        %v2851 = vpop.f32.mrf.mxu0
        %2852 = vmatprep.mubr.bf16.mxu0 0
        %2853 = vmatmul.mubr.bf16.gmra.mxu0 %v2790
        %v2854 = vpop.f32.mrf.mxu0
        %v2855 = vadd.f32 0.0, %v2854
        %v2856 = vpop.f32.mrf.mxu0
        %v2857 = vpop.f32.mrf.mxu0
        %v2858 = vadd.f32 0.0, %v2857
        %v2859 = vpop.f32.mrf.mxu0
        %2860 = vmatprep.mubr.bf16.mxu0 0
        %2861 = vmatmul.mubr.bf16.gmra.mxu0 %v2793
        %v2862 = vpop.f32.mrf.mxu0
        %v2863 = vadd.f32 0.0, %v2862
        %v2864 = vpop.f32.mrf.mxu0
        %v2865 = vpop.f32.mrf.mxu0
        %v2866 = vadd.f32 0.0, %v2865
        %v2867 = vpop.f32.mrf.mxu0
        %2868 = vmatprep.mubr.bf16.mxu0 0
        %2869 = vmatmul.mubr.bf16.gmra.mxu0 %v2796
        %v2870 = vpop.f32.mrf.mxu0
        %v2871 = vadd.f32 0.0, %v2870
        %v2872 = vpop.f32.mrf.mxu0
        %v2873 = vpop.f32.mrf.mxu0
        %v2874 = vadd.f32 0.0, %v2873
        %v2875 = vpop.f32.mrf.mxu0
        %2876 = vmatprep.mubr.bf16.mxu0 0
        %2877 = vmatmul.mubr.bf16.gmra.mxu0 %v2799
        %v2878 = vpop.f32.mrf.mxu0
        %v2879 = vadd.f32 0.0, %v2878
        %v2880 = vpop.f32.mrf.mxu0
        %v2881 = vpop.f32.mrf.mxu0
        %v2882 = vadd.f32 0.0, %v2881
        %v2883 = vpop.f32.mrf.mxu0
        %2884 = vmatprep.mubr.bf16.mxu0 0
        %2885 = vmatmul.mubr.bf16.gmra.mxu0 %v2802
        %v2886 = vpop.f32.mrf.mxu0
        %v2887 = vadd.f32 0.0, %v2886
        %v2888 = vpop.f32.mrf.mxu0
        %v2889 = vpop.f32.mrf.mxu0
        %v2890 = vpop.f32.mrf.mxu0
        %2891 = vdwg.mxu0
        %v2892 = vadd.f32 %v2691, %v2839
        %v2893 = vadd.f32 %v2692, %v2842
        %v2894 = vadd.f32 %v2693, %v2847
        %v2895 = vadd.f32 %v2694, %v2850
        %v2896 = vadd.f32 %v2695, %v2855
        %v2897 = vadd.f32 %v2696, %v2858
        %v2898 = vadd.f32 %v2697, %v2863
        %v2899 = vadd.f32 %v2698, %v2866
        %v2900 = vadd.f32 %v2699, %v2871
        %v2901 = vadd.f32 %v2700, %v2874
        %v2902 = vadd.f32 %v2701, %v2879
        %v2903 = vadd.f32 %v2702, %v2882
        %v2904 = vadd.f32 %v2703, %v2887
        %v2905 = vld [vmem:[%s4] sm:$0x1]
        %v2907 = vlaneseq
        %v2908 = vshrl.u32 %v2907, 7
        %v2909 = vsub.s32 0, %v2908
        %v2910 = vrot.slane %v2905, %v2909
        %v2912 = vadd.f32 %v2892, %v2910
        %v2913 = vadd.f32 %v2893, %v2910
        %v2914 = vadd.f32 %v2894, %v2910
        %v2915 = vadd.f32 %v2895, %v2910
        %v2916 = vadd.f32 %v2896, %v2910
        %v2917 = vadd.f32 %v2897, %v2910
        %v2918 = vadd.f32 %v2898, %v2910
        %v2919 = vadd.f32 %v2899, %v2910
        %v2920 = vadd.f32 %v2900, %v2910
        %v2921 = vadd.f32 %v2901, %v2910
        %v2922 = vadd.f32 %v2902, %v2910
        %v2923 = vadd.f32 %v2903, %v2910
        %v2924 = vadd.f32 %v2904, %v2910
        %v2925 = vmax.f32 %v2912, 0.0
        %v2926 = vmax.f32 %v2913, 0.0
        %v2927 = vmax.f32 %v2914, 0.0
        %v2928 = vmax.f32 %v2915, 0.0
        %v2929 = vmax.f32 %v2916, 0.0
        %v2930 = vmax.f32 %v2917, 0.0
        %v2931 = vmax.f32 %v2918, 0.0
        %v2932 = vmax.f32 %v2919, 0.0
        %v2933 = vmax.f32 %v2920, 0.0
        %v2934 = vmax.f32 %v2921, 0.0
        %v2935 = vmax.f32 %v2922, 0.0
        %v2936 = vmax.f32 %v2923, 0.0
        %v2937 = vmax.f32 %v2924, 0.0
        %v2938 = vpack.c.bf16 %v2926, %v2925
        %v2939 = vpack.c.bf16 %v2928, %v2927
        %v2940 = vpack.c.bf16 %v2930, %v2929
        %v2941 = vpack.c.bf16 %v2932, %v2931
        %v2942 = vpack.c.bf16 %v2934, %v2933
        %v2943 = vpack.c.bf16 %v2936, %v2935
        %v2944 = vpack.c.bf16 %v2937, %v2937
        %v2952 = vunpack.c.l.b16 %v2938
        %v2953 = vunpack.c.h.b16 %v2938
        %v2954 = vunpack.c.l.b16 %v2939
        %v2955 = vunpack.c.h.b16 %v2939
        %v2956 = vunpack.c.l.b16 %v2940
        %v2957 = vunpack.c.h.b16 %v2940
        %v2958 = vunpack.c.l.b16 %v2941
        %v2959 = vunpack.c.h.b16 %v2941
        %v2960 = vunpack.c.l.b16 %v2942
        %v2961 = vunpack.c.h.b16 %v2942
        %v2962 = vunpack.c.l.b16 %v2943
        %v2963 = vunpack.c.h.b16 %v2943
        %v2964 = vunpack.c.l.b16 %v2944
        %v2965 = vpack.c.b16 %v2952, %v2952
        %v2966 = vpack.c.b16 %v2953, %v2953
        %v2967 = vpack.c.b16 %v2954, %v2954
        %v2968 = vpack.c.b16 %v2955, %v2955
        %v2969 = vpack.c.b16 %v2956, %v2956
        %v2970 = vpack.c.b16 %v2957, %v2957
        %v2971 = vpack.c.b16 %v2958, %v2958
        %v2972 = vpack.c.b16 %v2959, %v2959
        %v2973 = vpack.c.b16 %v2960, %v2960
        %v2974 = vpack.c.b16 %v2961, %v2961
        %v2975 = vpack.c.b16 %v2962, %v2962
        %v2976 = vpack.c.b16 %v2963, %v2963
        %v2977 = vpack.c.b16 %v2964, %v2964
        %2991 = vst.msk [vmem:[#allocation3] sm:$0xf] %vm1060, %v2965
        %2992 = vst.msk [vmem:[#allocation3 + $0x4] sm:$0xf] %vm1060, %v2966
        %2993 = vst.msk [vmem:[#allocation3 + $0x8] sm:$0xf] %vm1060, %v2967
        %2994 = vst.msk [vmem:[#allocation3 + $0xc] sm:$0xf] %vm1060, %v2968
        %2995 = vst.msk [vmem:[#allocation3 + $0x10] sm:$0xf] %vm1060, %v2969
        %2996 = vst.msk [vmem:[#allocation3 + $0x14] sm:$0xf] %vm1060, %v2970
        %2997 = vst.msk [vmem:[#allocation3 + $0x18] sm:$0xf] %vm1060, %v2971
        %2998 = vst.msk [vmem:[#allocation3 + $0x1c] sm:$0xf] %vm1060, %v2972
        %2999 = vst.msk [vmem:[#allocation3 + $0x20] sm:$0xf] %vm1060, %v2973
        %3000 = vst.msk [vmem:[#allocation3 + $0x24] sm:$0xf] %vm1060, %v2974
        %3001 = vst.msk [vmem:[#allocation3 + $0x28] sm:$0xf] %vm1060, %v2975
        %3002 = vst.msk [vmem:[#allocation3 + $0x2c] sm:$0xf] %vm1060, %v2976
        %v3003 = vld [vmem:[#allocation3 + $0x30] sm:$0x1]
        %v3004 = vsel %vm1078, %v2977, %v3003
        %3005 = vst [vmem:[#allocation3 + $0x30] sm:$0x1] %v3004
        %v3006 = vld [vmem:[#allocation3] sm:$0x1]
        %v3007 = vld [vmem:[#allocation4] sm:$0x1]
        %v3008 = vsel %vm1078, %v3006, %v3007
        %3009 = vst [vmem:[#allocation4] sm:$0x1] %v3008
        %v3010 = vld [vmem:[#allocation3] sm:$0x1]
        %v3013 = vunpack.c.l.s4 1966171168
        %v3014 = vunpack.c.0.s8 %v3013
        %v3015 = vlaneseq
        %v3016 = vshrl.u32 %v3015, 7
        %v3017 = vsub.s32 %v3014, %v3016
        %v3018 = vrot.slane %v3010, %v3017
        %v3020 = vunpack.c.l.s4 1966171168
        %v3021 = vunpack.c.0.s8 %v3020
        %v3022 = vlaneseq
        %v3023 = vshrl.u32 %v3022, 7
        %v3024 = vsub.s32 %v3021, %v3023
        %v3025 = vrot.slane %v3018, %v3024
        %v3027 = vshrl.u32 %v3025, 16
        %v3029 = vrot.slane %v3027, 7
        %v3030 = vrot.slane %v3029, 1
        %3031 = vrot.lane.b32.xlu0 %v3030, 64
        %v3032 = vpop.permute.xlu0 %3031
        %vm3034 = vcmask 1040896
        %vm3035 = vmand %vm3034, %vm1077
        %v3036 = vld [vmem:[#allocation4] sm:$0x1]
        %v3037 = vsel %vm3035, %v3032, %v3036
        %3038 = vst [vmem:[#allocation4] sm:$0x1] %v3037
        %v3039 = vld [vmem:[#allocation3] sm:$0x2]
        %v3042 = vunpack.c.l.s4 1966171168
        %v3043 = vunpack.c.0.s8 %v3042
        %v3044 = vlaneseq
        %v3045 = vshrl.u32 %v3044, 7
        %v3046 = vsub.s32 %v3043, %v3045
        %v3047 = vrot.slane %v3039, %v3046
        %v3048 = vcombine.high %v3047, %v3047
        %v3050 = vunpack.c.l.s4 1966171168
        %v3051 = vunpack.c.0.s8 %v3050
        %v3052 = vlaneseq
        %v3053 = vshrl.u32 %v3052, 7
        %v3054 = vsub.s32 %v3051, %v3053
        %v3055 = vrot.slane %v3048, %v3054
        %v3057 = vld [vmem:[#allocation4 + $0x1] sm:$0x1]
        %v3058 = vsel %vm1078, %v3055, %v3057
        %3059 = vst [vmem:[#allocation4 + $0x1] sm:$0x1] %v3058
        %v3060 = vld [vmem:[#allocation3] sm:$0x2]
        %v3063 = vunpack.c.l.s4 1966171168
        %v3064 = vunpack.c.0.s8 %v3063
        %v3065 = vlaneseq
        %v3066 = vshrl.u32 %v3065, 7
        %v3067 = vsub.s32 %v3064, %v3066
        %v3068 = vrot.slane %v3060, %v3067
        %v3069 = vcombine.high %v3068, %v3068
        %v3071 = vunpack.c.l.s4 1966171168
        %v3072 = vunpack.c.0.s8 %v3071
        %v3073 = vlaneseq
        %v3074 = vshrl.u32 %v3073, 7
        %v3075 = vsub.s32 %v3072, %v3074
        %v3076 = vrot.slane %v3069, %v3075
        %v3078 = vshrl.u32 %v3076, 16
        %v3080 = vrot.slane %v3078, 7
        %v3081 = vrot.slane %v3080, 1
        %3082 = vrot.lane.b32.xlu0 %v3081, 64
        %v3083 = vpop.permute.xlu0 %3082
        %v3085 = vld [vmem:[#allocation4 + $0x1] sm:$0x1]
        %v3086 = vsel %vm3035, %v3083, %v3085
        %3087 = vst [vmem:[#allocation4 + $0x1] sm:$0x1] %v3086
        %v3088 = vld [vmem:[#allocation3] sm:$0x4]
        %v3091 = vunpack.c.l.s4 1966171168
        %v3092 = vunpack.c.0.s8 %v3091
        %v3093 = vlaneseq
        %v3094 = vshrl.u32 %v3093, 7
        %v3095 = vsub.s32 %v3092, %v3094
        %v3096 = vrot.slane %v3088, %v3095
        %v3098 = vunpack.c.l.s4 1966171168
        %v3099 = vunpack.c.0.s8 %v3098
        %v3100 = vlaneseq
        %v3101 = vshrl.u32 %v3100, 7
        %v3102 = vsub.s32 %v3099, %v3101
        %v3103 = vrot.slane %v3096, %v3102
        %v3104 = vcombine.high %v3103, %v3103
        %v3106 = vld [vmem:[#allocation4 + $0x2] sm:$0x1]
        %v3107 = vsel %vm1078, %v3104, %v3106
        %3108 = vst [vmem:[#allocation4 + $0x2] sm:$0x1] %v3107
        %v3109 = vld [vmem:[#allocation3] sm:$0x4]
        %v3112 = vunpack.c.l.s4 1966171168
        %v3113 = vunpack.c.0.s8 %v3112
        %v3114 = vlaneseq
        %v3115 = vshrl.u32 %v3114, 7
        %v3116 = vsub.s32 %v3113, %v3115
        %v3117 = vrot.slane %v3109, %v3116
        %v3119 = vunpack.c.l.s4 1966171168
        %v3120 = vunpack.c.0.s8 %v3119
        %v3121 = vlaneseq
        %v3122 = vshrl.u32 %v3121, 7
        %v3123 = vsub.s32 %v3120, %v3122
        %v3124 = vrot.slane %v3117, %v3123
        %v3125 = vcombine.high %v3124, %v3124
        %v3127 = vshrl.u32 %v3125, 16
        %v3129 = vrot.slane %v3127, 7
        %v3130 = vrot.slane %v3129, 1
        %3131 = vrot.lane.b32.xlu0 %v3130, 64
        %v3132 = vpop.permute.xlu0 %3131
        %v3134 = vld [vmem:[#allocation4 + $0x2] sm:$0x1]
        %v3135 = vsel %vm3035, %v3132, %v3134
        %3136 = vst [vmem:[#allocation4 + $0x2] sm:$0x1] %v3135
        %v3137 = vld [vmem:[#allocation3] sm:$0x8]
        %v3140 = vunpack.c.l.s4 1966171168
        %v3141 = vunpack.c.0.s8 %v3140
        %v3142 = vlaneseq
        %v3143 = vshrl.u32 %v3142, 7
        %v3144 = vsub.s32 %v3141, %v3143
        %v3145 = vrot.slane %v3137, %v3144
        %v3146 = vcombine.high %v3145, %v3145
        %v3148 = vunpack.c.l.s4 1966171168
        %v3149 = vunpack.c.0.s8 %v3148
        %v3150 = vlaneseq
        %v3151 = vshrl.u32 %v3150, 7
        %v3152 = vsub.s32 %v3149, %v3151
        %v3153 = vrot.slane %v3146, %v3152
        %v3154 = vcombine.high %v3153, %v3153
        %v3156 = vld [vmem:[#allocation4 + $0x3] sm:$0x1]
        %v3157 = vsel %vm1078, %v3154, %v3156
        %3158 = vst [vmem:[#allocation4 + $0x3] sm:$0x1] %v3157
        %v3159 = vld [vmem:[#allocation3] sm:$0x8]
        %v3162 = vunpack.c.l.s4 1966171168
        %v3163 = vunpack.c.0.s8 %v3162
        %v3164 = vlaneseq
        %v3165 = vshrl.u32 %v3164, 7
        %v3166 = vsub.s32 %v3163, %v3165
        %v3167 = vrot.slane %v3159, %v3166
        %v3168 = vcombine.high %v3167, %v3167
        %v3170 = vunpack.c.l.s4 1966171168
        %v3171 = vunpack.c.0.s8 %v3170
        %v3172 = vlaneseq
        %v3173 = vshrl.u32 %v3172, 7
        %v3174 = vsub.s32 %v3171, %v3173
        %v3175 = vrot.slane %v3168, %v3174
        %v3176 = vcombine.high %v3175, %v3175
        %v3178 = vshrl.u32 %v3176, 16
        %v3180 = vrot.slane %v3178, 7
        %v3181 = vrot.slane %v3180, 1
        %3182 = vrot.lane.b32.xlu0 %v3181, 64
        %v3183 = vpop.permute.xlu0 %3182
        %v3185 = vld [vmem:[#allocation4 + $0x3] sm:$0x1]
        %v3186 = vsel %vm3035, %v3183, %v3185
        %3187 = vst [vmem:[#allocation4 + $0x3] sm:$0x1] %v3186
        %v3188 = vld [vmem:[#allocation3 + $0x4] sm:$0x1]
        %v3189 = vld [vmem:[#allocation4 + $0x4] sm:$0x1]
        %v3190 = vsel %vm1078, %v3188, %v3189
        %3191 = vst [vmem:[#allocation4 + $0x4] sm:$0x1] %v3190
        %v3192 = vld [vmem:[#allocation3 + $0x4] sm:$0x2]
        %v3195 = vunpack.c.l.s4 1966171168
        %v3196 = vunpack.c.0.s8 %v3195
        %v3197 = vlaneseq
        %v3198 = vshrl.u32 %v3197, 7
        %v3199 = vsub.s32 %v3196, %v3198
        %v3200 = vrot.slane %v3192, %v3199
        %v3201 = vcombine.high %v3200, %v3200
        %v3203 = vunpack.c.l.s4 1966171168
        %v3204 = vunpack.c.0.s8 %v3203
        %v3205 = vlaneseq
        %v3206 = vshrl.u32 %v3205, 7
        %v3207 = vsub.s32 %v3204, %v3206
        %v3208 = vrot.slane %v3201, %v3207
        %v3210 = vshrl.u32 %v3208, 16
        %v3212 = vrot.slane %v3210, 7
        %v3213 = vrot.slane %v3212, 1
        %3214 = vrot.lane.b32.xlu0 %v3213, 64
        %v3215 = vpop.permute.xlu0 %3214
        %v3217 = vld [vmem:[#allocation4 + $0x4] sm:$0x1]
        %v3218 = vsel %vm3035, %v3215, %v3217
        %3219 = vst [vmem:[#allocation4 + $0x4] sm:$0x1] %v3218
        %v3220 = vld [vmem:[#allocation3 + $0x4] sm:$0x4]
        %v3223 = vunpack.c.l.s4 1966171168
        %v3224 = vunpack.c.0.s8 %v3223
        %v3225 = vlaneseq
        %v3226 = vshrl.u32 %v3225, 7
        %v3227 = vsub.s32 %v3224, %v3226
        %v3228 = vrot.slane %v3220, %v3227
        %v3230 = vunpack.c.l.s4 1966171168
        %v3231 = vunpack.c.0.s8 %v3230
        %v3232 = vlaneseq
        %v3233 = vshrl.u32 %v3232, 7
        %v3234 = vsub.s32 %v3231, %v3233
        %v3235 = vrot.slane %v3228, %v3234
        %v3236 = vcombine.high %v3235, %v3235
        %v3238 = vld [vmem:[#allocation4 + $0x5] sm:$0x1]
        %v3239 = vsel %vm1078, %v3236, %v3238
        %3240 = vst [vmem:[#allocation4 + $0x5] sm:$0x1] %v3239
        %v3241 = vld [vmem:[#allocation3 + $0x4] sm:$0x4]
        %v3244 = vunpack.c.l.s4 1966171168
        %v3245 = vunpack.c.0.s8 %v3244
        %v3246 = vlaneseq
        %v3247 = vshrl.u32 %v3246, 7
        %v3248 = vsub.s32 %v3245, %v3247
        %v3249 = vrot.slane %v3241, %v3248
        %v3251 = vunpack.c.l.s4 1966171168
        %v3252 = vunpack.c.0.s8 %v3251
        %v3253 = vlaneseq
        %v3254 = vshrl.u32 %v3253, 7
        %v3255 = vsub.s32 %v3252, %v3254
        %v3256 = vrot.slane %v3249, %v3255
        %v3257 = vcombine.high %v3256, %v3256
        %v3259 = vshrl.u32 %v3257, 16
        %v3261 = vrot.slane %v3259, 7
        %v3262 = vrot.slane %v3261, 1
        %3263 = vrot.lane.b32.xlu0 %v3262, 64
        %v3264 = vpop.permute.xlu0 %3263
        %v3266 = vld [vmem:[#allocation4 + $0x5] sm:$0x1]
        %v3267 = vsel %vm3035, %v3264, %v3266
        %3268 = vst [vmem:[#allocation4 + $0x5] sm:$0x1] %v3267
        %v3269 = vld [vmem:[#allocation3 + $0x4] sm:$0x8]
        %v3272 = vunpack.c.l.s4 1966171168
        %v3273 = vunpack.c.0.s8 %v3272
        %v3274 = vlaneseq
        %v3275 = vshrl.u32 %v3274, 7
        %v3276 = vsub.s32 %v3273, %v3275
        %v3277 = vrot.slane %v3269, %v3276
        %v3278 = vcombine.high %v3277, %v3277
        %v3280 = vunpack.c.l.s4 1966171168
        %v3281 = vunpack.c.0.s8 %v3280
        %v3282 = vlaneseq
        %v3283 = vshrl.u32 %v3282, 7
        %v3284 = vsub.s32 %v3281, %v3283
        %v3285 = vrot.slane %v3278, %v3284
        %v3286 = vcombine.high %v3285, %v3285
        %v3288 = vld [vmem:[#allocation4 + $0x6] sm:$0x1]
        %v3289 = vsel %vm1078, %v3286, %v3288
        %3290 = vst [vmem:[#allocation4 + $0x6] sm:$0x1] %v3289
        %v3291 = vld [vmem:[#allocation3 + $0x4] sm:$0x8]
        %v3294 = vunpack.c.l.s4 1966171168
        %v3295 = vunpack.c.0.s8 %v3294
        %v3296 = vlaneseq
        %v3297 = vshrl.u32 %v3296, 7
        %v3298 = vsub.s32 %v3295, %v3297
        %v3299 = vrot.slane %v3291, %v3298
        %v3300 = vcombine.high %v3299, %v3299
        %v3302 = vunpack.c.l.s4 1966171168
        %v3303 = vunpack.c.0.s8 %v3302
        %v3304 = vlaneseq
        %v3305 = vshrl.u32 %v3304, 7
        %v3306 = vsub.s32 %v3303, %v3305
        %v3307 = vrot.slane %v3300, %v3306
        %v3308 = vcombine.high %v3307, %v3307
        %v3310 = vshrl.u32 %v3308, 16
        %v3312 = vrot.slane %v3310, 7
        %v3313 = vrot.slane %v3312, 1
        %3314 = vrot.lane.b32.xlu0 %v3313, 64
        %v3315 = vpop.permute.xlu0 %3314
        %v3317 = vld [vmem:[#allocation4 + $0x6] sm:$0x1]
        %v3318 = vsel %vm3035, %v3315, %v3317
        %3319 = vst [vmem:[#allocation4 + $0x6] sm:$0x1] %v3318
        %v3320 = vld [vmem:[#allocation3 + $0x8] sm:$0x1]
        %v3321 = vld [vmem:[#allocation4 + $0x7] sm:$0x1]
        %v3322 = vsel %vm1078, %v3320, %v3321
        %3323 = vst [vmem:[#allocation4 + $0x7] sm:$0x1] %v3322
        %v3324 = vld [vmem:[#allocation3 + $0x8] sm:$0x1]
        %v3327 = vunpack.c.l.s4 1966171168
        %v3328 = vunpack.c.0.s8 %v3327
        %v3329 = vlaneseq
        %v3330 = vshrl.u32 %v3329, 7
        %v3331 = vsub.s32 %v3328, %v3330
        %v3332 = vrot.slane %v3324, %v3331
        %v3334 = vunpack.c.l.s4 1966171168
        %v3335 = vunpack.c.0.s8 %v3334
        %v3336 = vlaneseq
        %v3337 = vshrl.u32 %v3336, 7
        %v3338 = vsub.s32 %v3335, %v3337
        %v3339 = vrot.slane %v3332, %v3338
        %v3341 = vshrl.u32 %v3339, 16
        %v3343 = vrot.slane %v3341, 7
        %v3344 = vrot.slane %v3343, 1
        %3345 = vrot.lane.b32.xlu0 %v3344, 64
        %v3346 = vpop.permute.xlu0 %3345
        %v3348 = vld [vmem:[#allocation4 + $0x7] sm:$0x1]
        %v3349 = vsel %vm3035, %v3346, %v3348
        %3350 = vst [vmem:[#allocation4 + $0x7] sm:$0x1] %v3349
        %v3351 = vld [vmem:[#allocation3 + $0x8] sm:$0x2]
        %v3354 = vunpack.c.l.s4 1966171168
        %v3355 = vunpack.c.0.s8 %v3354
        %v3356 = vlaneseq
        %v3357 = vshrl.u32 %v3356, 7
        %v3358 = vsub.s32 %v3355, %v3357
        %v3359 = vrot.slane %v3351, %v3358
        %v3360 = vcombine.high %v3359, %v3359
        %v3362 = vunpack.c.l.s4 1966171168
        %v3363 = vunpack.c.0.s8 %v3362
        %v3364 = vlaneseq
        %v3365 = vshrl.u32 %v3364, 7
        %v3366 = vsub.s32 %v3363, %v3365
        %v3367 = vrot.slane %v3360, %v3366
        %v3369 = vld [vmem:[#allocation4 + $0x8] sm:$0x1]
        %v3370 = vsel %vm1078, %v3367, %v3369
        %3371 = vst [vmem:[#allocation4 + $0x8] sm:$0x1] %v3370
        %v3372 = vld [vmem:[#allocation3 + $0x8] sm:$0x2]
        %v3375 = vunpack.c.l.s4 1966171168
        %v3376 = vunpack.c.0.s8 %v3375
        %v3377 = vlaneseq
        %v3378 = vshrl.u32 %v3377, 7
        %v3379 = vsub.s32 %v3376, %v3378
        %v3380 = vrot.slane %v3372, %v3379
        %v3381 = vcombine.high %v3380, %v3380
        %v3383 = vunpack.c.l.s4 1966171168
        %v3384 = vunpack.c.0.s8 %v3383
        %v3385 = vlaneseq
        %v3386 = vshrl.u32 %v3385, 7
        %v3387 = vsub.s32 %v3384, %v3386
        %v3388 = vrot.slane %v3381, %v3387
        %v3390 = vshrl.u32 %v3388, 16
        %v3392 = vrot.slane %v3390, 7
        %v3393 = vrot.slane %v3392, 1
        %3394 = vrot.lane.b32.xlu0 %v3393, 64
        %v3395 = vpop.permute.xlu0 %3394
        %v3397 = vld [vmem:[#allocation4 + $0x8] sm:$0x1]
        %v3398 = vsel %vm3035, %v3395, %v3397
        %3399 = vst [vmem:[#allocation4 + $0x8] sm:$0x1] %v3398
        %v3400 = vld [vmem:[#allocation3 + $0x8] sm:$0x8]
        %v3403 = vunpack.c.l.s4 1966171168
        %v3404 = vunpack.c.0.s8 %v3403
        %v3405 = vlaneseq
        %v3406 = vshrl.u32 %v3405, 7
        %v3407 = vsub.s32 %v3404, %v3406
        %v3408 = vrot.slane %v3400, %v3407
        %v3409 = vcombine.high %v3408, %v3408
        %v3411 = vunpack.c.l.s4 1966171168
        %v3412 = vunpack.c.0.s8 %v3411
        %v3413 = vlaneseq
        %v3414 = vshrl.u32 %v3413, 7
        %v3415 = vsub.s32 %v3412, %v3414
        %v3416 = vrot.slane %v3409, %v3415
        %v3417 = vcombine.high %v3416, %v3416
        %v3419 = vld [vmem:[#allocation4 + $0x9] sm:$0x1]
        %v3420 = vsel %vm1078, %v3417, %v3419
        %3421 = vst [vmem:[#allocation4 + $0x9] sm:$0x1] %v3420
        %v3422 = vld [vmem:[#allocation3 + $0x8] sm:$0x8]
        %v3425 = vunpack.c.l.s4 1966171168
        %v3426 = vunpack.c.0.s8 %v3425
        %v3427 = vlaneseq
        %v3428 = vshrl.u32 %v3427, 7
        %v3429 = vsub.s32 %v3426, %v3428
        %v3430 = vrot.slane %v3422, %v3429
        %v3431 = vcombine.high %v3430, %v3430
        %v3433 = vunpack.c.l.s4 1966171168
        %v3434 = vunpack.c.0.s8 %v3433
        %v3435 = vlaneseq
        %v3436 = vshrl.u32 %v3435, 7
        %v3437 = vsub.s32 %v3434, %v3436
        %v3438 = vrot.slane %v3431, %v3437
        %v3439 = vcombine.high %v3438, %v3438
        %v3441 = vshrl.u32 %v3439, 16
        %v3443 = vrot.slane %v3441, 7
        %v3444 = vrot.slane %v3443, 1
        %3445 = vrot.lane.b32.xlu0 %v3444, 64
        %v3446 = vpop.permute.xlu0 %3445
        %v3448 = vld [vmem:[#allocation4 + $0x9] sm:$0x1]
        %v3449 = vsel %vm3035, %v3446, %v3448
        %3450 = vst [vmem:[#allocation4 + $0x9] sm:$0x1] %v3449
        %v3451 = vld [vmem:[#allocation3 + $0xc] sm:$0x1]
        %v3452 = vld [vmem:[#allocation4 + $0xa] sm:$0x1]
        %v3453 = vsel %vm1078, %v3451, %v3452
        %3454 = vst [vmem:[#allocation4 + $0xa] sm:$0x1] %v3453
        %v3455 = vld [vmem:[#allocation3 + $0xc] sm:$0x1]
        %v3458 = vunpack.c.l.s4 1966171168
        %v3459 = vunpack.c.0.s8 %v3458
        %v3460 = vlaneseq
        %v3461 = vshrl.u32 %v3460, 7
        %v3462 = vsub.s32 %v3459, %v3461
        %v3463 = vrot.slane %v3455, %v3462
        %v3465 = vunpack.c.l.s4 1966171168
        %v3466 = vunpack.c.0.s8 %v3465
        %v3467 = vlaneseq
        %v3468 = vshrl.u32 %v3467, 7
        %v3469 = vsub.s32 %v3466, %v3468
        %v3470 = vrot.slane %v3463, %v3469
        %v3472 = vshrl.u32 %v3470, 16
        %v3474 = vrot.slane %v3472, 7
        %v3475 = vrot.slane %v3474, 1
        %3476 = vrot.lane.b32.xlu0 %v3475, 64
        %v3477 = vpop.permute.xlu0 %3476
        %v3479 = vld [vmem:[#allocation4 + $0xa] sm:$0x1]
        %v3480 = vsel %vm3035, %v3477, %v3479
        %3481 = vst [vmem:[#allocation4 + $0xa] sm:$0x1] %v3480
        %v3482 = vld [vmem:[#allocation3 + $0xc] sm:$0x2]
        %v3485 = vunpack.c.l.s4 1966171168
        %v3486 = vunpack.c.0.s8 %v3485
        %v3487 = vlaneseq
        %v3488 = vshrl.u32 %v3487, 7
        %v3489 = vsub.s32 %v3486, %v3488
        %v3490 = vrot.slane %v3482, %v3489
        %v3491 = vcombine.high %v3490, %v3490
        %v3493 = vunpack.c.l.s4 1966171168
        %v3494 = vunpack.c.0.s8 %v3493
        %v3495 = vlaneseq
        %v3496 = vshrl.u32 %v3495, 7
        %v3497 = vsub.s32 %v3494, %v3496
        %v3498 = vrot.slane %v3491, %v3497
        %v3500 = vld [vmem:[#allocation4 + $0xb] sm:$0x1]
        %v3501 = vsel %vm1078, %v3498, %v3500
        %3502 = vst [vmem:[#allocation4 + $0xb] sm:$0x1] %v3501
        %v3503 = vld [vmem:[#allocation3 + $0xc] sm:$0x2]
        %v3506 = vunpack.c.l.s4 1966171168
        %v3507 = vunpack.c.0.s8 %v3506
        %v3508 = vlaneseq
        %v3509 = vshrl.u32 %v3508, 7
        %v3510 = vsub.s32 %v3507, %v3509
        %v3511 = vrot.slane %v3503, %v3510
        %v3512 = vcombine.high %v3511, %v3511
        %v3514 = vunpack.c.l.s4 1966171168
        %v3515 = vunpack.c.0.s8 %v3514
        %v3516 = vlaneseq
        %v3517 = vshrl.u32 %v3516, 7
        %v3518 = vsub.s32 %v3515, %v3517
        %v3519 = vrot.slane %v3512, %v3518
        %v3521 = vshrl.u32 %v3519, 16
        %v3523 = vrot.slane %v3521, 7
        %v3524 = vrot.slane %v3523, 1
        %3525 = vrot.lane.b32.xlu0 %v3524, 64
        %v3526 = vpop.permute.xlu0 %3525
        %v3528 = vld [vmem:[#allocation4 + $0xb] sm:$0x1]
        %v3529 = vsel %vm3035, %v3526, %v3528
        %3530 = vst [vmem:[#allocation4 + $0xb] sm:$0x1] %v3529
        %v3531 = vld [vmem:[#allocation3 + $0xc] sm:$0x4]
        %v3534 = vunpack.c.l.s4 1966171168
        %v3535 = vunpack.c.0.s8 %v3534
        %v3536 = vlaneseq
        %v3537 = vshrl.u32 %v3536, 7
        %v3538 = vsub.s32 %v3535, %v3537
        %v3539 = vrot.slane %v3531, %v3538
        %v3541 = vunpack.c.l.s4 1966171168
        %v3542 = vunpack.c.0.s8 %v3541
        %v3543 = vlaneseq
        %v3544 = vshrl.u32 %v3543, 7
        %v3545 = vsub.s32 %v3542, %v3544
        %v3546 = vrot.slane %v3539, %v3545
        %v3547 = vcombine.high %v3546, %v3546
        %v3549 = vld [vmem:[#allocation4 + $0xc] sm:$0x1]
        %v3550 = vsel %vm1078, %v3547, %v3549
        %3551 = vst [vmem:[#allocation4 + $0xc] sm:$0x1] %v3550
        %v3552 = vld [vmem:[#allocation3 + $0xc] sm:$0x4]
        %v3555 = vunpack.c.l.s4 1966171168
        %v3556 = vunpack.c.0.s8 %v3555
        %v3557 = vlaneseq
        %v3558 = vshrl.u32 %v3557, 7
        %v3559 = vsub.s32 %v3556, %v3558
        %v3560 = vrot.slane %v3552, %v3559
        %v3562 = vunpack.c.l.s4 1966171168
        %v3563 = vunpack.c.0.s8 %v3562
        %v3564 = vlaneseq
        %v3565 = vshrl.u32 %v3564, 7
        %v3566 = vsub.s32 %v3563, %v3565
        %v3567 = vrot.slane %v3560, %v3566
        %v3568 = vcombine.high %v3567, %v3567
        %v3570 = vshrl.u32 %v3568, 16
        %v3572 = vrot.slane %v3570, 7
        %v3573 = vrot.slane %v3572, 1
        %3574 = vrot.lane.b32.xlu0 %v3573, 64
        %v3575 = vpop.permute.xlu0 %3574
        %v3577 = vld [vmem:[#allocation4 + $0xc] sm:$0x1]
        %v3578 = vsel %vm3035, %v3575, %v3577
        %3579 = vst [vmem:[#allocation4 + $0xc] sm:$0x1] %v3578
        %v3580 = vld [vmem:[#allocation3 + $0xc] sm:$0x8]
        %v3583 = vunpack.c.l.s4 1966171168
        %v3584 = vunpack.c.0.s8 %v3583
        %v3585 = vlaneseq
        %v3586 = vshrl.u32 %v3585, 7
        %v3587 = vsub.s32 %v3584, %v3586
        %v3588 = vrot.slane %v3580, %v3587
        %v3589 = vcombine.high %v3588, %v3588
        %v3591 = vunpack.c.l.s4 1966171168
        %v3592 = vunpack.c.0.s8 %v3591
        %v3593 = vlaneseq
        %v3594 = vshrl.u32 %v3593, 7
        %v3595 = vsub.s32 %v3592, %v3594
        %v3596 = vrot.slane %v3589, %v3595
        %v3597 = vcombine.high %v3596, %v3596
        %v3599 = vld [vmem:[#allocation4 + $0xd] sm:$0x1]
        %v3600 = vsel %vm1078, %v3597, %v3599
        %3601 = vst [vmem:[#allocation4 + $0xd] sm:$0x1] %v3600
        %v3602 = vld [vmem:[#allocation3 + $0x10] sm:$0x1]
        %v3605 = vunpack.c.l.s4 1966171168
        %v3606 = vunpack.c.0.s8 %v3605
        %v3607 = vlaneseq
        %v3608 = vshrl.u32 %v3607, 7
        %v3609 = vsub.s32 %v3606, %v3608
        %v3610 = vrot.slane %v3602, %v3609
        %v3612 = vunpack.c.l.s4 1966171168
        %v3613 = vunpack.c.0.s8 %v3612
        %v3614 = vlaneseq
        %v3615 = vshrl.u32 %v3614, 7
        %v3616 = vsub.s32 %v3613, %v3615
        %v3617 = vrot.slane %v3610, %v3616
        %v3619 = vshrl.u32 %v3617, 16
        %v3621 = vrot.slane %v3619, 7
        %v3622 = vrot.slane %v3621, 1
        %3623 = vrot.lane.b32.xlu0 %v3622, 64
        %v3624 = vpop.permute.xlu0 %3623
        %v3626 = vld [vmem:[#allocation4 + $0xd] sm:$0x1]
        %v3627 = vsel %vm3035, %v3624, %v3626
        %3628 = vst [vmem:[#allocation4 + $0xd] sm:$0x1] %v3627
        %v3629 = vld [vmem:[#allocation3 + $0x10] sm:$0x2]
        %v3632 = vunpack.c.l.s4 1966171168
        %v3633 = vunpack.c.0.s8 %v3632
        %v3634 = vlaneseq
        %v3635 = vshrl.u32 %v3634, 7
        %v3636 = vsub.s32 %v3633, %v3635
        %v3637 = vrot.slane %v3629, %v3636
        %v3638 = vcombine.high %v3637, %v3637
        %v3640 = vunpack.c.l.s4 1966171168
        %v3641 = vunpack.c.0.s8 %v3640
        %v3642 = vlaneseq
        %v3643 = vshrl.u32 %v3642, 7
        %v3644 = vsub.s32 %v3641, %v3643
        %v3645 = vrot.slane %v3638, %v3644
        %v3647 = vld [vmem:[#allocation4 + $0xe] sm:$0x1]
        %v3648 = vsel %vm1078, %v3645, %v3647
        %3649 = vst [vmem:[#allocation4 + $0xe] sm:$0x1] %v3648
        %v3650 = vld [vmem:[#allocation3 + $0x10] sm:$0x2]
        %v3653 = vunpack.c.l.s4 1966171168
        %v3654 = vunpack.c.0.s8 %v3653
        %v3655 = vlaneseq
        %v3656 = vshrl.u32 %v3655, 7
        %v3657 = vsub.s32 %v3654, %v3656
        %v3658 = vrot.slane %v3650, %v3657
        %v3659 = vcombine.high %v3658, %v3658
        %v3661 = vunpack.c.l.s4 1966171168
        %v3662 = vunpack.c.0.s8 %v3661
        %v3663 = vlaneseq
        %v3664 = vshrl.u32 %v3663, 7
        %v3665 = vsub.s32 %v3662, %v3664
        %v3666 = vrot.slane %v3659, %v3665
        %v3668 = vshrl.u32 %v3666, 16
        %v3670 = vrot.slane %v3668, 7
        %v3671 = vrot.slane %v3670, 1
        %3672 = vrot.lane.b32.xlu0 %v3671, 64
        %v3673 = vpop.permute.xlu0 %3672
        %v3675 = vld [vmem:[#allocation4 + $0xe] sm:$0x1]
        %v3676 = vsel %vm3035, %v3673, %v3675
        %3677 = vst [vmem:[#allocation4 + $0xe] sm:$0x1] %v3676
        %v3678 = vld [vmem:[#allocation3 + $0x10] sm:$0x4]
        %v3681 = vunpack.c.l.s4 1966171168
        %v3682 = vunpack.c.0.s8 %v3681
        %v3683 = vlaneseq
        %v3684 = vshrl.u32 %v3683, 7
        %v3685 = vsub.s32 %v3682, %v3684
        %v3686 = vrot.slane %v3678, %v3685
        %v3688 = vunpack.c.l.s4 1966171168
        %v3689 = vunpack.c.0.s8 %v3688
        %v3690 = vlaneseq
        %v3691 = vshrl.u32 %v3690, 7
        %v3692 = vsub.s32 %v3689, %v3691
        %v3693 = vrot.slane %v3686, %v3692
        %v3694 = vcombine.high %v3693, %v3693
        %v3696 = vld [vmem:[#allocation4 + $0xf] sm:$0x1]
        %v3697 = vsel %vm1078, %v3694, %v3696
        %3698 = vst [vmem:[#allocation4 + $0xf] sm:$0x1] %v3697
        %v3699 = vld [vmem:[#allocation3 + $0x10] sm:$0x4]
        %v3702 = vunpack.c.l.s4 1966171168
        %v3703 = vunpack.c.0.s8 %v3702
        %v3704 = vlaneseq
        %v3705 = vshrl.u32 %v3704, 7
        %v3706 = vsub.s32 %v3703, %v3705
        %v3707 = vrot.slane %v3699, %v3706
        %v3709 = vunpack.c.l.s4 1966171168
        %v3710 = vunpack.c.0.s8 %v3709
        %v3711 = vlaneseq
        %v3712 = vshrl.u32 %v3711, 7
        %v3713 = vsub.s32 %v3710, %v3712
        %v3714 = vrot.slane %v3707, %v3713
        %v3715 = vcombine.high %v3714, %v3714
        %v3717 = vshrl.u32 %v3715, 16
        %v3719 = vrot.slane %v3717, 7
        %v3720 = vrot.slane %v3719, 1
        %3721 = vrot.lane.b32.xlu0 %v3720, 64
        %v3722 = vpop.permute.xlu0 %3721
        %v3724 = vld [vmem:[#allocation4 + $0xf] sm:$0x1]
        %v3725 = vsel %vm3035, %v3722, %v3724
        %3726 = vst [vmem:[#allocation4 + $0xf] sm:$0x1] %v3725
        %v3727 = vld [vmem:[#allocation3 + $0x10] sm:$0x8]
        %v3730 = vunpack.c.l.s4 1966171168
        %v3731 = vunpack.c.0.s8 %v3730
        %v3732 = vlaneseq
        %v3733 = vshrl.u32 %v3732, 7
        %v3734 = vsub.s32 %v3731, %v3733
        %v3735 = vrot.slane %v3727, %v3734
        %v3736 = vcombine.high %v3735, %v3735
        %v3738 = vunpack.c.l.s4 1966171168
        %v3739 = vunpack.c.0.s8 %v3738
        %v3740 = vlaneseq
        %v3741 = vshrl.u32 %v3740, 7
        %v3742 = vsub.s32 %v3739, %v3741
        %v3743 = vrot.slane %v3736, %v3742
        %v3744 = vcombine.high %v3743, %v3743
        %v3746 = vld [vmem:[#allocation4 + $0x10] sm:$0x1]
        %v3747 = vsel %vm1078, %v3744, %v3746
        %3748 = vst [vmem:[#allocation4 + $0x10] sm:$0x1] %v3747
        %v3749 = vld [vmem:[#allocation3 + $0x10] sm:$0x8]
        %v3752 = vunpack.c.l.s4 1966171168
        %v3753 = vunpack.c.0.s8 %v3752
        %v3754 = vlaneseq
        %v3755 = vshrl.u32 %v3754, 7
        %v3756 = vsub.s32 %v3753, %v3755
        %v3757 = vrot.slane %v3749, %v3756
        %v3758 = vcombine.high %v3757, %v3757
        %v3760 = vunpack.c.l.s4 1966171168
        %v3761 = vunpack.c.0.s8 %v3760
        %v3762 = vlaneseq
        %v3763 = vshrl.u32 %v3762, 7
        %v3764 = vsub.s32 %v3761, %v3763
        %v3765 = vrot.slane %v3758, %v3764
        %v3766 = vcombine.high %v3765, %v3765
        %v3768 = vshrl.u32 %v3766, 16
        %v3770 = vrot.slane %v3768, 7
        %v3771 = vrot.slane %v3770, 1
        %3772 = vrot.lane.b32.xlu0 %v3771, 64
        %v3773 = vpop.permute.xlu0 %3772
        %v3775 = vld [vmem:[#allocation4 + $0x10] sm:$0x1]
        %v3776 = vsel %vm3035, %v3773, %v3775
        %3777 = vst [vmem:[#allocation4 + $0x10] sm:$0x1] %v3776
        %v3778 = vld [vmem:[#allocation3 + $0x14] sm:$0x1]
        %v3779 = vld [vmem:[#allocation4 + $0x11] sm:$0x1]
        %v3780 = vsel %vm1078, %v3778, %v3779
        %3781 = vst [vmem:[#allocation4 + $0x11] sm:$0x1] %v3780
        %v3782 = vld [vmem:[#allocation3 + $0x14] sm:$0x1]
        %v3785 = vunpack.c.l.s4 1966171168
        %v3786 = vunpack.c.0.s8 %v3785
        %v3787 = vlaneseq
        %v3788 = vshrl.u32 %v3787, 7
        %v3789 = vsub.s32 %v3786, %v3788
        %v3790 = vrot.slane %v3782, %v3789
        %v3792 = vunpack.c.l.s4 1966171168
        %v3793 = vunpack.c.0.s8 %v3792
        %v3794 = vlaneseq
        %v3795 = vshrl.u32 %v3794, 7
        %v3796 = vsub.s32 %v3793, %v3795
        %v3797 = vrot.slane %v3790, %v3796
        %v3799 = vshrl.u32 %v3797, 16
        %v3801 = vrot.slane %v3799, 7
        %v3802 = vrot.slane %v3801, 1
        %3803 = vrot.lane.b32.xlu0 %v3802, 64
        %v3804 = vpop.permute.xlu0 %3803
        %v3806 = vld [vmem:[#allocation4 + $0x11] sm:$0x1]
        %v3807 = vsel %vm3035, %v3804, %v3806
        %3808 = vst [vmem:[#allocation4 + $0x11] sm:$0x1] %v3807
        %v3809 = vld [vmem:[#allocation3 + $0x14] sm:$0x4]
        %v3812 = vunpack.c.l.s4 1966171168
        %v3813 = vunpack.c.0.s8 %v3812
        %v3814 = vlaneseq
        %v3815 = vshrl.u32 %v3814, 7
        %v3816 = vsub.s32 %v3813, %v3815
        %v3817 = vrot.slane %v3809, %v3816
        %v3819 = vunpack.c.l.s4 1966171168
        %v3820 = vunpack.c.0.s8 %v3819
        %v3821 = vlaneseq
        %v3822 = vshrl.u32 %v3821, 7
        %v3823 = vsub.s32 %v3820, %v3822
        %v3824 = vrot.slane %v3817, %v3823
        %v3825 = vcombine.high %v3824, %v3824
        %v3827 = vld [vmem:[#allocation4 + $0x12] sm:$0x1]
        %v3828 = vsel %vm1078, %v3825, %v3827
        %3829 = vst [vmem:[#allocation4 + $0x12] sm:$0x1] %v3828
        %v3830 = vld [vmem:[#allocation3 + $0x14] sm:$0x4]
        %v3833 = vunpack.c.l.s4 1966171168
        %v3834 = vunpack.c.0.s8 %v3833
        %v3835 = vlaneseq
        %v3836 = vshrl.u32 %v3835, 7
        %v3837 = vsub.s32 %v3834, %v3836
        %v3838 = vrot.slane %v3830, %v3837
        %v3840 = vunpack.c.l.s4 1966171168
        %v3841 = vunpack.c.0.s8 %v3840
        %v3842 = vlaneseq
        %v3843 = vshrl.u32 %v3842, 7
        %v3844 = vsub.s32 %v3841, %v3843
        %v3845 = vrot.slane %v3838, %v3844
        %v3846 = vcombine.high %v3845, %v3845
        %v3848 = vshrl.u32 %v3846, 16
        %v3850 = vrot.slane %v3848, 7
        %v3851 = vrot.slane %v3850, 1
        %3852 = vrot.lane.b32.xlu0 %v3851, 64
        %v3853 = vpop.permute.xlu0 %3852
        %v3855 = vld [vmem:[#allocation4 + $0x12] sm:$0x1]
        %v3856 = vsel %vm3035, %v3853, %v3855
        %3857 = vst [vmem:[#allocation4 + $0x12] sm:$0x1] %v3856
        %v3858 = vld [vmem:[#allocation3 + $0x14] sm:$0x8]
        %v3861 = vunpack.c.l.s4 1966171168
        %v3862 = vunpack.c.0.s8 %v3861
        %v3863 = vlaneseq
        %v3864 = vshrl.u32 %v3863, 7
        %v3865 = vsub.s32 %v3862, %v3864
        %v3866 = vrot.slane %v3858, %v3865
        %v3867 = vcombine.high %v3866, %v3866
        %v3869 = vunpack.c.l.s4 1966171168
        %v3870 = vunpack.c.0.s8 %v3869
        %v3871 = vlaneseq
        %v3872 = vshrl.u32 %v3871, 7
        %v3873 = vsub.s32 %v3870, %v3872
        %v3874 = vrot.slane %v3867, %v3873
        %v3875 = vcombine.high %v3874, %v3874
        %v3877 = vld [vmem:[#allocation4 + $0x13] sm:$0x1]
        %v3878 = vsel %vm1078, %v3875, %v3877
        %3879 = vst [vmem:[#allocation4 + $0x13] sm:$0x1] %v3878
        %v3880 = vld [vmem:[#allocation3 + $0x14] sm:$0x8]
        %v3883 = vunpack.c.l.s4 1966171168
        %v3884 = vunpack.c.0.s8 %v3883
        %v3885 = vlaneseq
        %v3886 = vshrl.u32 %v3885, 7
        %v3887 = vsub.s32 %v3884, %v3886
        %v3888 = vrot.slane %v3880, %v3887
        %v3889 = vcombine.high %v3888, %v3888
        %v3891 = vunpack.c.l.s4 1966171168
        %v3892 = vunpack.c.0.s8 %v3891
        %v3893 = vlaneseq
        %v3894 = vshrl.u32 %v3893, 7
        %v3895 = vsub.s32 %v3892, %v3894
        %v3896 = vrot.slane %v3889, %v3895
        %v3897 = vcombine.high %v3896, %v3896
        %v3899 = vshrl.u32 %v3897, 16
        %v3901 = vrot.slane %v3899, 7
        %v3902 = vrot.slane %v3901, 1
        %3903 = vrot.lane.b32.xlu0 %v3902, 64
        %v3904 = vpop.permute.xlu0 %3903
        %v3906 = vld [vmem:[#allocation4 + $0x13] sm:$0x1]
        %v3907 = vsel %vm3035, %v3904, %v3906
        %3908 = vst [vmem:[#allocation4 + $0x13] sm:$0x1] %v3907
        %v3909 = vld [vmem:[#allocation3 + $0x18] sm:$0x1]
        %v3910 = vld [vmem:[#allocation4 + $0x14] sm:$0x1]
        %v3911 = vsel %vm1078, %v3909, %v3910
        %3912 = vst [vmem:[#allocation4 + $0x14] sm:$0x1] %v3911
        %v3913 = vld [vmem:[#allocation3 + $0x18] sm:$0x1]
        %v3916 = vunpack.c.l.s4 1966171168
        %v3917 = vunpack.c.0.s8 %v3916
        %v3918 = vlaneseq
        %v3919 = vshrl.u32 %v3918, 7
        %v3920 = vsub.s32 %v3917, %v3919
        %v3921 = vrot.slane %v3913, %v3920
        %v3923 = vunpack.c.l.s4 1966171168
        %v3924 = vunpack.c.0.s8 %v3923
        %v3925 = vlaneseq
        %v3926 = vshrl.u32 %v3925, 7
        %v3927 = vsub.s32 %v3924, %v3926
        %v3928 = vrot.slane %v3921, %v3927
        %v3930 = vshrl.u32 %v3928, 16
        %v3932 = vrot.slane %v3930, 7
        %v3933 = vrot.slane %v3932, 1
        %3934 = vrot.lane.b32.xlu0 %v3933, 64
        %v3935 = vpop.permute.xlu0 %3934
        %v3937 = vld [vmem:[#allocation4 + $0x14] sm:$0x1]
        %v3938 = vsel %vm3035, %v3935, %v3937
        %3939 = vst [vmem:[#allocation4 + $0x14] sm:$0x1] %v3938
        %v3940 = vld [vmem:[#allocation3 + $0x18] sm:$0x2]
        %v3943 = vunpack.c.l.s4 1966171168
        %v3944 = vunpack.c.0.s8 %v3943
        %v3945 = vlaneseq
        %v3946 = vshrl.u32 %v3945, 7
        %v3947 = vsub.s32 %v3944, %v3946
        %v3948 = vrot.slane %v3940, %v3947
        %v3949 = vcombine.high %v3948, %v3948
        %v3951 = vunpack.c.l.s4 1966171168
        %v3952 = vunpack.c.0.s8 %v3951
        %v3953 = vlaneseq
        %v3954 = vshrl.u32 %v3953, 7
        %v3955 = vsub.s32 %v3952, %v3954
        %v3956 = vrot.slane %v3949, %v3955
        %v3958 = vld [vmem:[#allocation4 + $0x15] sm:$0x1]
        %v3959 = vsel %vm1078, %v3956, %v3958
        %3960 = vst [vmem:[#allocation4 + $0x15] sm:$0x1] %v3959
        %v3961 = vld [vmem:[#allocation3 + $0x18] sm:$0x2]
        %v3964 = vunpack.c.l.s4 1966171168
        %v3965 = vunpack.c.0.s8 %v3964
        %v3966 = vlaneseq
        %v3967 = vshrl.u32 %v3966, 7
        %v3968 = vsub.s32 %v3965, %v3967
        %v3969 = vrot.slane %v3961, %v3968
        %v3970 = vcombine.high %v3969, %v3969
        %v3972 = vunpack.c.l.s4 1966171168
        %v3973 = vunpack.c.0.s8 %v3972
        %v3974 = vlaneseq
        %v3975 = vshrl.u32 %v3974, 7
        %v3976 = vsub.s32 %v3973, %v3975
        %v3977 = vrot.slane %v3970, %v3976
        %v3979 = vshrl.u32 %v3977, 16
        %v3981 = vrot.slane %v3979, 7
        %v3982 = vrot.slane %v3981, 1
        %3983 = vrot.lane.b32.xlu0 %v3982, 64
        %v3984 = vpop.permute.xlu0 %3983
        %v3986 = vld [vmem:[#allocation4 + $0x15] sm:$0x1]
        %v3987 = vsel %vm3035, %v3984, %v3986
        %3988 = vst [vmem:[#allocation4 + $0x15] sm:$0x1] %v3987
        %v3989 = vld [vmem:[#allocation3 + $0x18] sm:$0x4]
        %v3992 = vunpack.c.l.s4 1966171168
        %v3993 = vunpack.c.0.s8 %v3992
        %v3994 = vlaneseq
        %v3995 = vshrl.u32 %v3994, 7
        %v3996 = vsub.s32 %v3993, %v3995
        %v3997 = vrot.slane %v3989, %v3996
        %v3999 = vunpack.c.l.s4 1966171168
        %v4000 = vunpack.c.0.s8 %v3999
        %v4001 = vlaneseq
        %v4002 = vshrl.u32 %v4001, 7
        %v4003 = vsub.s32 %v4000, %v4002
        %v4004 = vrot.slane %v3997, %v4003
        %v4005 = vcombine.high %v4004, %v4004
        %v4007 = vld [vmem:[#allocation4 + $0x16] sm:$0x1]
        %v4008 = vsel %vm1078, %v4005, %v4007
        %4009 = vst [vmem:[#allocation4 + $0x16] sm:$0x1] %v4008
        %v4010 = vld [vmem:[#allocation3 + $0x18] sm:$0x8]
        %v4013 = vunpack.c.l.s4 1966171168
        %v4014 = vunpack.c.0.s8 %v4013
        %v4015 = vlaneseq
        %v4016 = vshrl.u32 %v4015, 7
        %v4017 = vsub.s32 %v4014, %v4016
        %v4018 = vrot.slane %v4010, %v4017
        %v4019 = vcombine.high %v4018, %v4018
        %v4021 = vunpack.c.l.s4 1966171168
        %v4022 = vunpack.c.0.s8 %v4021
        %v4023 = vlaneseq
        %v4024 = vshrl.u32 %v4023, 7
        %v4025 = vsub.s32 %v4022, %v4024
        %v4026 = vrot.slane %v4019, %v4025
        %v4027 = vcombine.high %v4026, %v4026
        %v4029 = vshrl.u32 %v4027, 16
        %v4031 = vrot.slane %v4029, 7
        %v4032 = vrot.slane %v4031, 1
        %4033 = vrot.lane.b32.xlu0 %v4032, 64
        %v4034 = vpop.permute.xlu0 %4033
        %v4036 = vld [vmem:[#allocation4 + $0x16] sm:$0x1]
        %v4037 = vsel %vm3035, %v4034, %v4036
        %4038 = vst [vmem:[#allocation4 + $0x16] sm:$0x1] %v4037
        %v4039 = vld [vmem:[#allocation3 + $0x1c] sm:$0x1]
        %v4040 = vld [vmem:[#allocation4 + $0x17] sm:$0x1]
        %v4041 = vsel %vm1078, %v4039, %v4040
        %4042 = vst [vmem:[#allocation4 + $0x17] sm:$0x1] %v4041
        %v4043 = vld [vmem:[#allocation3 + $0x1c] sm:$0x1]
        %v4046 = vunpack.c.l.s4 1966171168
        %v4047 = vunpack.c.0.s8 %v4046
        %v4048 = vlaneseq
        %v4049 = vshrl.u32 %v4048, 7
        %v4050 = vsub.s32 %v4047, %v4049
        %v4051 = vrot.slane %v4043, %v4050
        %v4053 = vunpack.c.l.s4 1966171168
        %v4054 = vunpack.c.0.s8 %v4053
        %v4055 = vlaneseq
        %v4056 = vshrl.u32 %v4055, 7
        %v4057 = vsub.s32 %v4054, %v4056
        %v4058 = vrot.slane %v4051, %v4057
        %v4060 = vshrl.u32 %v4058, 16
        %v4062 = vrot.slane %v4060, 7
        %v4063 = vrot.slane %v4062, 1
        %4064 = vrot.lane.b32.xlu0 %v4063, 64
        %v4065 = vpop.permute.xlu0 %4064
        %v4067 = vld [vmem:[#allocation4 + $0x17] sm:$0x1]
        %v4068 = vsel %vm3035, %v4065, %v4067
        %4069 = vst [vmem:[#allocation4 + $0x17] sm:$0x1] %v4068
        %v4070 = vld [vmem:[#allocation3 + $0x1c] sm:$0x2]
        %v4073 = vunpack.c.l.s4 1966171168
        %v4074 = vunpack.c.0.s8 %v4073
        %v4075 = vlaneseq
        %v4076 = vshrl.u32 %v4075, 7
        %v4077 = vsub.s32 %v4074, %v4076
        %v4078 = vrot.slane %v4070, %v4077
        %v4079 = vcombine.high %v4078, %v4078
        %v4081 = vunpack.c.l.s4 1966171168
        %v4082 = vunpack.c.0.s8 %v4081
        %v4083 = vlaneseq
        %v4084 = vshrl.u32 %v4083, 7
        %v4085 = vsub.s32 %v4082, %v4084
        %v4086 = vrot.slane %v4079, %v4085
        %v4088 = vld [vmem:[#allocation4 + $0x18] sm:$0x1]
        %v4089 = vsel %vm1078, %v4086, %v4088
        %4090 = vst [vmem:[#allocation4 + $0x18] sm:$0x1] %v4089
        %v4091 = vld [vmem:[#allocation3 + $0x1c] sm:$0x2]
        %v4094 = vunpack.c.l.s4 1966171168
        %v4095 = vunpack.c.0.s8 %v4094
        %v4096 = vlaneseq
        %v4097 = vshrl.u32 %v4096, 7
        %v4098 = vsub.s32 %v4095, %v4097
        %v4099 = vrot.slane %v4091, %v4098
        %v4100 = vcombine.high %v4099, %v4099
        %v4102 = vunpack.c.l.s4 1966171168
        %v4103 = vunpack.c.0.s8 %v4102
        %v4104 = vlaneseq
        %v4105 = vshrl.u32 %v4104, 7
        %v4106 = vsub.s32 %v4103, %v4105
        %v4107 = vrot.slane %v4100, %v4106
        %v4109 = vshrl.u32 %v4107, 16
        %v4111 = vrot.slane %v4109, 7
        %v4112 = vrot.slane %v4111, 1
        %4113 = vrot.lane.b32.xlu0 %v4112, 64
        %v4114 = vpop.permute.xlu0 %4113
        %v4116 = vld [vmem:[#allocation4 + $0x18] sm:$0x1]
        %v4117 = vsel %vm3035, %v4114, %v4116
        %4118 = vst [vmem:[#allocation4 + $0x18] sm:$0x1] %v4117
        %v4119 = vld [vmem:[#allocation3 + $0x1c] sm:$0x4]
        %v4122 = vunpack.c.l.s4 1966171168
        %v4123 = vunpack.c.0.s8 %v4122
        %v4124 = vlaneseq
        %v4125 = vshrl.u32 %v4124, 7
        %v4126 = vsub.s32 %v4123, %v4125
        %v4127 = vrot.slane %v4119, %v4126
        %v4129 = vunpack.c.l.s4 1966171168
        %v4130 = vunpack.c.0.s8 %v4129
        %v4131 = vlaneseq
        %v4132 = vshrl.u32 %v4131, 7
        %v4133 = vsub.s32 %v4130, %v4132
        %v4134 = vrot.slane %v4127, %v4133
        %v4135 = vcombine.high %v4134, %v4134
        %v4137 = vld [vmem:[#allocation4 + $0x19] sm:$0x1]
        %v4138 = vsel %vm1078, %v4135, %v4137
        %4139 = vst [vmem:[#allocation4 + $0x19] sm:$0x1] %v4138
        %v4140 = vld [vmem:[#allocation3 + $0x1c] sm:$0x4]
        %v4143 = vunpack.c.l.s4 1966171168
        %v4144 = vunpack.c.0.s8 %v4143
        %v4145 = vlaneseq
        %v4146 = vshrl.u32 %v4145, 7
        %v4147 = vsub.s32 %v4144, %v4146
        %v4148 = vrot.slane %v4140, %v4147
        %v4150 = vunpack.c.l.s4 1966171168
        %v4151 = vunpack.c.0.s8 %v4150
        %v4152 = vlaneseq
        %v4153 = vshrl.u32 %v4152, 7
        %v4154 = vsub.s32 %v4151, %v4153
        %v4155 = vrot.slane %v4148, %v4154
        %v4156 = vcombine.high %v4155, %v4155
        %v4158 = vshrl.u32 %v4156, 16
        %v4160 = vrot.slane %v4158, 7
        %v4161 = vrot.slane %v4160, 1
        %4162 = vrot.lane.b32.xlu0 %v4161, 64
        %v4163 = vpop.permute.xlu0 %4162
        %v4165 = vld [vmem:[#allocation4 + $0x19] sm:$0x1]
        %v4166 = vsel %vm3035, %v4163, %v4165
        %4167 = vst [vmem:[#allocation4 + $0x19] sm:$0x1] %v4166
        %v4168 = vld [vmem:[#allocation3 + $0x1c] sm:$0x8]
        %v4171 = vunpack.c.l.s4 1966171168
        %v4172 = vunpack.c.0.s8 %v4171
        %v4173 = vlaneseq
        %v4174 = vshrl.u32 %v4173, 7
        %v4175 = vsub.s32 %v4172, %v4174
        %v4176 = vrot.slane %v4168, %v4175
        %v4177 = vcombine.high %v4176, %v4176
        %v4179 = vunpack.c.l.s4 1966171168
        %v4180 = vunpack.c.0.s8 %v4179
        %v4181 = vlaneseq
        %v4182 = vshrl.u32 %v4181, 7
        %v4183 = vsub.s32 %v4180, %v4182
        %v4184 = vrot.slane %v4177, %v4183
        %v4185 = vcombine.high %v4184, %v4184
        %v4187 = vld [vmem:[#allocation4 + $0x1a] sm:$0x1]
        %v4188 = vsel %vm1078, %v4185, %v4187
        %4189 = vst [vmem:[#allocation4 + $0x1a] sm:$0x1] %v4188
        %v4190 = vld [vmem:[#allocation3 + $0x1c] sm:$0x8]
        %v4193 = vunpack.c.l.s4 1966171168
        %v4194 = vunpack.c.0.s8 %v4193
        %v4195 = vlaneseq
        %v4196 = vshrl.u32 %v4195, 7
        %v4197 = vsub.s32 %v4194, %v4196
        %v4198 = vrot.slane %v4190, %v4197
        %v4199 = vcombine.high %v4198, %v4198
        %v4201 = vunpack.c.l.s4 1966171168
        %v4202 = vunpack.c.0.s8 %v4201
        %v4203 = vlaneseq
        %v4204 = vshrl.u32 %v4203, 7
        %v4205 = vsub.s32 %v4202, %v4204
        %v4206 = vrot.slane %v4199, %v4205
        %v4207 = vcombine.high %v4206, %v4206
        %v4209 = vshrl.u32 %v4207, 16
        %v4211 = vrot.slane %v4209, 7
        %v4212 = vrot.slane %v4211, 1
        %4213 = vrot.lane.b32.xlu0 %v4212, 64
        %v4214 = vpop.permute.xlu0 %4213
        %v4216 = vld [vmem:[#allocation4 + $0x1a] sm:$0x1]
        %v4217 = vsel %vm3035, %v4214, %v4216
        %4218 = vst [vmem:[#allocation4 + $0x1a] sm:$0x1] %v4217
        %v4219 = vld [vmem:[#allocation3 + $0x20] sm:$0x2]
        %v4222 = vunpack.c.l.s4 1966171168
        %v4223 = vunpack.c.0.s8 %v4222
        %v4224 = vlaneseq
        %v4225 = vshrl.u32 %v4224, 7
        %v4226 = vsub.s32 %v4223, %v4225
        %v4227 = vrot.slane %v4219, %v4226
        %v4228 = vcombine.high %v4227, %v4227
        %v4230 = vunpack.c.l.s4 1966171168
        %v4231 = vunpack.c.0.s8 %v4230
        %v4232 = vlaneseq
        %v4233 = vshrl.u32 %v4232, 7
        %v4234 = vsub.s32 %v4231, %v4233
        %v4235 = vrot.slane %v4228, %v4234
        %v4237 = vld [vmem:[#allocation4 + $0x1b] sm:$0x1]
        %v4238 = vsel %vm1078, %v4235, %v4237
        %4239 = vst [vmem:[#allocation4 + $0x1b] sm:$0x1] %v4238
        %v4240 = vld [vmem:[#allocation3 + $0x20] sm:$0x2]
        %v4243 = vunpack.c.l.s4 1966171168
        %v4244 = vunpack.c.0.s8 %v4243
        %v4245 = vlaneseq
        %v4246 = vshrl.u32 %v4245, 7
        %v4247 = vsub.s32 %v4244, %v4246
        %v4248 = vrot.slane %v4240, %v4247
        %v4249 = vcombine.high %v4248, %v4248
        %v4251 = vunpack.c.l.s4 1966171168
        %v4252 = vunpack.c.0.s8 %v4251
        %v4253 = vlaneseq
        %v4254 = vshrl.u32 %v4253, 7
        %v4255 = vsub.s32 %v4252, %v4254
        %v4256 = vrot.slane %v4249, %v4255
        %v4258 = vshrl.u32 %v4256, 16
        %v4260 = vrot.slane %v4258, 7
        %v4261 = vrot.slane %v4260, 1
        %4262 = vrot.lane.b32.xlu0 %v4261, 64
        %v4263 = vpop.permute.xlu0 %4262
        %v4265 = vld [vmem:[#allocation4 + $0x1b] sm:$0x1]
        %v4266 = vsel %vm3035, %v4263, %v4265
        %4267 = vst [vmem:[#allocation4 + $0x1b] sm:$0x1] %v4266
        %v4268 = vld [vmem:[#allocation3 + $0x20] sm:$0x4]
        %v4271 = vunpack.c.l.s4 1966171168
        %v4272 = vunpack.c.0.s8 %v4271
        %v4273 = vlaneseq
        %v4274 = vshrl.u32 %v4273, 7
        %v4275 = vsub.s32 %v4272, %v4274
        %v4276 = vrot.slane %v4268, %v4275
        %v4278 = vunpack.c.l.s4 1966171168
        %v4279 = vunpack.c.0.s8 %v4278
        %v4280 = vlaneseq
        %v4281 = vshrl.u32 %v4280, 7
        %v4282 = vsub.s32 %v4279, %v4281
        %v4283 = vrot.slane %v4276, %v4282
        %v4284 = vcombine.high %v4283, %v4283
        %v4286 = vld [vmem:[#allocation4 + $0x1c] sm:$0x1]
        %v4287 = vsel %vm1078, %v4284, %v4286
        %4288 = vst [vmem:[#allocation4 + $0x1c] sm:$0x1] %v4287
        %v4289 = vld [vmem:[#allocation3 + $0x20] sm:$0x4]
        %v4292 = vunpack.c.l.s4 1966171168
        %v4293 = vunpack.c.0.s8 %v4292
        %v4294 = vlaneseq
        %v4295 = vshrl.u32 %v4294, 7
        %v4296 = vsub.s32 %v4293, %v4295
        %v4297 = vrot.slane %v4289, %v4296
        %v4299 = vunpack.c.l.s4 1966171168
        %v4300 = vunpack.c.0.s8 %v4299
        %v4301 = vlaneseq
        %v4302 = vshrl.u32 %v4301, 7
        %v4303 = vsub.s32 %v4300, %v4302
        %v4304 = vrot.slane %v4297, %v4303
        %v4305 = vcombine.high %v4304, %v4304
        %v4307 = vshrl.u32 %v4305, 16
        %v4309 = vrot.slane %v4307, 7
        %v4310 = vrot.slane %v4309, 1
        %4311 = vrot.lane.b32.xlu0 %v4310, 64
        %v4312 = vpop.permute.xlu0 %4311
        %v4314 = vld [vmem:[#allocation4 + $0x1c] sm:$0x1]
        %v4315 = vsel %vm3035, %v4312, %v4314
        %4316 = vst [vmem:[#allocation4 + $0x1c] sm:$0x1] %v4315
        %v4317 = vld [vmem:[#allocation3 + $0x20] sm:$0x8]
        %v4320 = vunpack.c.l.s4 1966171168
        %v4321 = vunpack.c.0.s8 %v4320
        %v4322 = vlaneseq
        %v4323 = vshrl.u32 %v4322, 7
        %v4324 = vsub.s32 %v4321, %v4323
        %v4325 = vrot.slane %v4317, %v4324
        %v4326 = vcombine.high %v4325, %v4325
        %v4328 = vunpack.c.l.s4 1966171168
        %v4329 = vunpack.c.0.s8 %v4328
        %v4330 = vlaneseq
        %v4331 = vshrl.u32 %v4330, 7
        %v4332 = vsub.s32 %v4329, %v4331
        %v4333 = vrot.slane %v4326, %v4332
        %v4334 = vcombine.high %v4333, %v4333
        %v4336 = vld [vmem:[#allocation4 + $0x1d] sm:$0x1]
        %v4337 = vsel %vm1078, %v4334, %v4336
        %4338 = vst [vmem:[#allocation4 + $0x1d] sm:$0x1] %v4337
        %v4339 = vld [vmem:[#allocation3 + $0x20] sm:$0x8]
        %v4342 = vunpack.c.l.s4 1966171168
        %v4343 = vunpack.c.0.s8 %v4342
        %v4344 = vlaneseq
        %v4345 = vshrl.u32 %v4344, 7
        %v4346 = vsub.s32 %v4343, %v4345
        %v4347 = vrot.slane %v4339, %v4346
        %v4348 = vcombine.high %v4347, %v4347
        %v4350 = vunpack.c.l.s4 1966171168
        %v4351 = vunpack.c.0.s8 %v4350
        %v4352 = vlaneseq
        %v4353 = vshrl.u32 %v4352, 7
        %v4354 = vsub.s32 %v4351, %v4353
        %v4355 = vrot.slane %v4348, %v4354
        %v4356 = vcombine.high %v4355, %v4355
        %v4358 = vshrl.u32 %v4356, 16
        %v4360 = vrot.slane %v4358, 7
        %v4361 = vrot.slane %v4360, 1
        %4362 = vrot.lane.b32.xlu0 %v4361, 64
        %v4363 = vpop.permute.xlu0 %4362
        %v4365 = vld [vmem:[#allocation4 + $0x1d] sm:$0x1]
        %v4366 = vsel %vm3035, %v4363, %v4365
        %4367 = vst [vmem:[#allocation4 + $0x1d] sm:$0x1] %v4366
        %v4368 = vld [vmem:[#allocation3 + $0x24] sm:$0x1]
        %v4369 = vld [vmem:[#allocation4 + $0x1e] sm:$0x1]
        %v4370 = vsel %vm1078, %v4368, %v4369
        %4371 = vst [vmem:[#allocation4 + $0x1e] sm:$0x1] %v4370
        %v4372 = vld [vmem:[#allocation3 + $0x24] sm:$0x1]
        %v4375 = vunpack.c.l.s4 1966171168
        %v4376 = vunpack.c.0.s8 %v4375
        %v4377 = vlaneseq
        %v4378 = vshrl.u32 %v4377, 7
        %v4379 = vsub.s32 %v4376, %v4378
        %v4380 = vrot.slane %v4372, %v4379
        %v4382 = vunpack.c.l.s4 1966171168
        %v4383 = vunpack.c.0.s8 %v4382
        %v4384 = vlaneseq
        %v4385 = vshrl.u32 %v4384, 7
        %v4386 = vsub.s32 %v4383, %v4385
        %v4387 = vrot.slane %v4380, %v4386
        %v4389 = vshrl.u32 %v4387, 16
        %v4391 = vrot.slane %v4389, 7
        %v4392 = vrot.slane %v4391, 1
        %4393 = vrot.lane.b32.xlu0 %v4392, 64
        %v4394 = vpop.permute.xlu0 %4393
        %v4396 = vld [vmem:[#allocation4 + $0x1e] sm:$0x1]
        %v4397 = vsel %vm3035, %v4394, %v4396
        %4398 = vst [vmem:[#allocation4 + $0x1e] sm:$0x1] %v4397
        %v4399 = vld [vmem:[#allocation3 + $0x24] sm:$0x2]
        %v4402 = vunpack.c.l.s4 1966171168
        %v4403 = vunpack.c.0.s8 %v4402
        %v4404 = vlaneseq
        %v4405 = vshrl.u32 %v4404, 7
        %v4406 = vsub.s32 %v4403, %v4405
        %v4407 = vrot.slane %v4399, %v4406
        %v4408 = vcombine.high %v4407, %v4407
        %v4410 = vunpack.c.l.s4 1966171168
        %v4411 = vunpack.c.0.s8 %v4410
        %v4412 = vlaneseq
        %v4413 = vshrl.u32 %v4412, 7
        %v4414 = vsub.s32 %v4411, %v4413
        %v4415 = vrot.slane %v4408, %v4414
        %v4417 = vld [vmem:[#allocation4 + $0x1f] sm:$0x1]
        %v4418 = vsel %vm1078, %v4415, %v4417
        %4419 = vst [vmem:[#allocation4 + $0x1f] sm:$0x1] %v4418
        %v4420 = vld [vmem:[#allocation3 + $0x24] sm:$0x4]
        %v4423 = vunpack.c.l.s4 1966171168
        %v4424 = vunpack.c.0.s8 %v4423
        %v4425 = vlaneseq
        %v4426 = vshrl.u32 %v4425, 7
        %v4427 = vsub.s32 %v4424, %v4426
        %v4428 = vrot.slane %v4420, %v4427
        %v4430 = vunpack.c.l.s4 1966171168
        %v4431 = vunpack.c.0.s8 %v4430
        %v4432 = vlaneseq
        %v4433 = vshrl.u32 %v4432, 7
        %v4434 = vsub.s32 %v4431, %v4433
        %v4435 = vrot.slane %v4428, %v4434
        %v4436 = vcombine.high %v4435, %v4435
        %v4438 = vshrl.u32 %v4436, 16
        %v4440 = vrot.slane %v4438, 7
        %v4441 = vrot.slane %v4440, 1
        %4442 = vrot.lane.b32.xlu0 %v4441, 64
        %v4443 = vpop.permute.xlu0 %4442
        %v4445 = vld [vmem:[#allocation4 + $0x1f] sm:$0x1]
        %v4446 = vsel %vm3035, %v4443, %v4445
        %4447 = vst [vmem:[#allocation4 + $0x1f] sm:$0x1] %v4446
        %v4448 = vld [vmem:[#allocation3 + $0x24] sm:$0x8]
        %v4451 = vunpack.c.l.s4 1966171168
        %v4452 = vunpack.c.0.s8 %v4451
        %v4453 = vlaneseq
        %v4454 = vshrl.u32 %v4453, 7
        %v4455 = vsub.s32 %v4452, %v4454
        %v4456 = vrot.slane %v4448, %v4455
        %v4457 = vcombine.high %v4456, %v4456
        %v4459 = vunpack.c.l.s4 1966171168
        %v4460 = vunpack.c.0.s8 %v4459
        %v4461 = vlaneseq
        %v4462 = vshrl.u32 %v4461, 7
        %v4463 = vsub.s32 %v4460, %v4462
        %v4464 = vrot.slane %v4457, %v4463
        %v4465 = vcombine.high %v4464, %v4464
        %v4467 = vld [vmem:[#allocation4 + $0x20] sm:$0x1]
        %v4468 = vsel %vm1078, %v4465, %v4467
        %4469 = vst [vmem:[#allocation4 + $0x20] sm:$0x1] %v4468
        %v4470 = vld [vmem:[#allocation3 + $0x24] sm:$0x8]
        %v4473 = vunpack.c.l.s4 1966171168
        %v4474 = vunpack.c.0.s8 %v4473
        %v4475 = vlaneseq
        %v4476 = vshrl.u32 %v4475, 7
        %v4477 = vsub.s32 %v4474, %v4476
        %v4478 = vrot.slane %v4470, %v4477
        %v4479 = vcombine.high %v4478, %v4478
        %v4481 = vunpack.c.l.s4 1966171168
        %v4482 = vunpack.c.0.s8 %v4481
        %v4483 = vlaneseq
        %v4484 = vshrl.u32 %v4483, 7
        %v4485 = vsub.s32 %v4482, %v4484
        %v4486 = vrot.slane %v4479, %v4485
        %v4487 = vcombine.high %v4486, %v4486
        %v4489 = vshrl.u32 %v4487, 16
        %v4491 = vrot.slane %v4489, 7
        %v4492 = vrot.slane %v4491, 1
        %4493 = vrot.lane.b32.xlu0 %v4492, 64
        %v4494 = vpop.permute.xlu0 %4493
        %v4496 = vld [vmem:[#allocation4 + $0x20] sm:$0x1]
        %v4497 = vsel %vm3035, %v4494, %v4496
        %4498 = vst [vmem:[#allocation4 + $0x20] sm:$0x1] %v4497
        %v4499 = vld [vmem:[#allocation3 + $0x28] sm:$0x1]
        %v4500 = vld [vmem:[#allocation4 + $0x21] sm:$0x1]
        %v4501 = vsel %vm1078, %v4499, %v4500
        %4502 = vst [vmem:[#allocation4 + $0x21] sm:$0x1] %v4501
        %v4503 = vld [vmem:[#allocation3 + $0x28] sm:$0x1]
        %v4506 = vunpack.c.l.s4 1966171168
        %v4507 = vunpack.c.0.s8 %v4506
        %v4508 = vlaneseq
        %v4509 = vshrl.u32 %v4508, 7
        %v4510 = vsub.s32 %v4507, %v4509
        %v4511 = vrot.slane %v4503, %v4510
        %v4513 = vunpack.c.l.s4 1966171168
        %v4514 = vunpack.c.0.s8 %v4513
        %v4515 = vlaneseq
        %v4516 = vshrl.u32 %v4515, 7
        %v4517 = vsub.s32 %v4514, %v4516
        %v4518 = vrot.slane %v4511, %v4517
        %v4520 = vshrl.u32 %v4518, 16
        %v4522 = vrot.slane %v4520, 7
        %v4523 = vrot.slane %v4522, 1
        %4524 = vrot.lane.b32.xlu0 %v4523, 64
        %v4525 = vpop.permute.xlu0 %4524
        %v4527 = vld [vmem:[#allocation4 + $0x21] sm:$0x1]
        %v4528 = vsel %vm3035, %v4525, %v4527
        %4529 = vst [vmem:[#allocation4 + $0x21] sm:$0x1] %v4528
        %v4530 = vld [vmem:[#allocation3 + $0x28] sm:$0x2]
        %v4533 = vunpack.c.l.s4 1966171168
        %v4534 = vunpack.c.0.s8 %v4533
        %v4535 = vlaneseq
        %v4536 = vshrl.u32 %v4535, 7
        %v4537 = vsub.s32 %v4534, %v4536
        %v4538 = vrot.slane %v4530, %v4537
        %v4539 = vcombine.high %v4538, %v4538
        %v4541 = vunpack.c.l.s4 1966171168
        %v4542 = vunpack.c.0.s8 %v4541
        %v4543 = vlaneseq
        %v4544 = vshrl.u32 %v4543, 7
        %v4545 = vsub.s32 %v4542, %v4544
        %v4546 = vrot.slane %v4539, %v4545
        %v4548 = vld [vmem:[#allocation4 + $0x22] sm:$0x1]
        %v4549 = vsel %vm1078, %v4546, %v4548
        %4550 = vst [vmem:[#allocation4 + $0x22] sm:$0x1] %v4549
        %v4551 = vld [vmem:[#allocation3 + $0x28] sm:$0x2]
        %v4554 = vunpack.c.l.s4 1966171168
        %v4555 = vunpack.c.0.s8 %v4554
        %v4556 = vlaneseq
        %v4557 = vshrl.u32 %v4556, 7
        %v4558 = vsub.s32 %v4555, %v4557
        %v4559 = vrot.slane %v4551, %v4558
        %v4560 = vcombine.high %v4559, %v4559
        %v4562 = vunpack.c.l.s4 1966171168
        %v4563 = vunpack.c.0.s8 %v4562
        %v4564 = vlaneseq
        %v4565 = vshrl.u32 %v4564, 7
        %v4566 = vsub.s32 %v4563, %v4565
        %v4567 = vrot.slane %v4560, %v4566
        %v4569 = vshrl.u32 %v4567, 16
        %v4571 = vrot.slane %v4569, 7
        %v4572 = vrot.slane %v4571, 1
        %4573 = vrot.lane.b32.xlu0 %v4572, 64
        %v4574 = vpop.permute.xlu0 %4573
        %v4576 = vld [vmem:[#allocation4 + $0x22] sm:$0x1]
        %v4577 = vsel %vm3035, %v4574, %v4576
        %4578 = vst [vmem:[#allocation4 + $0x22] sm:$0x1] %v4577
        %v4579 = vld [vmem:[#allocation3 + $0x28] sm:$0x4]
        %v4582 = vunpack.c.l.s4 1966171168
        %v4583 = vunpack.c.0.s8 %v4582
        %v4584 = vlaneseq
        %v4585 = vshrl.u32 %v4584, 7
        %v4586 = vsub.s32 %v4583, %v4585
        %v4587 = vrot.slane %v4579, %v4586
        %v4589 = vunpack.c.l.s4 1966171168
        %v4590 = vunpack.c.0.s8 %v4589
        %v4591 = vlaneseq
        %v4592 = vshrl.u32 %v4591, 7
        %v4593 = vsub.s32 %v4590, %v4592
        %v4594 = vrot.slane %v4587, %v4593
        %v4595 = vcombine.high %v4594, %v4594
        %v4597 = vld [vmem:[#allocation4 + $0x23] sm:$0x1]
        %v4598 = vsel %vm1078, %v4595, %v4597
        %4599 = vst [vmem:[#allocation4 + $0x23] sm:$0x1] %v4598
        %v4600 = vld [vmem:[#allocation3 + $0x28] sm:$0x4]
        %v4603 = vunpack.c.l.s4 1966171168
        %v4604 = vunpack.c.0.s8 %v4603
        %v4605 = vlaneseq
        %v4606 = vshrl.u32 %v4605, 7
        %v4607 = vsub.s32 %v4604, %v4606
        %v4608 = vrot.slane %v4600, %v4607
        %v4610 = vunpack.c.l.s4 1966171168
        %v4611 = vunpack.c.0.s8 %v4610
        %v4612 = vlaneseq
        %v4613 = vshrl.u32 %v4612, 7
        %v4614 = vsub.s32 %v4611, %v4613
        %v4615 = vrot.slane %v4608, %v4614
        %v4616 = vcombine.high %v4615, %v4615
        %v4618 = vshrl.u32 %v4616, 16
        %v4620 = vrot.slane %v4618, 7
        %v4621 = vrot.slane %v4620, 1
        %4622 = vrot.lane.b32.xlu0 %v4621, 64
        %v4623 = vpop.permute.xlu0 %4622
        %v4625 = vld [vmem:[#allocation4 + $0x23] sm:$0x1]
        %v4626 = vsel %vm3035, %v4623, %v4625
        %4627 = vst [vmem:[#allocation4 + $0x23] sm:$0x1] %v4626
        %v4628 = vld [vmem:[#allocation3 + $0x2c] sm:$0x1]
        %v4629 = vld [vmem:[#allocation4 + $0x24] sm:$0x1]
        %v4630 = vsel %vm1078, %v4628, %v4629
        %4631 = vst [vmem:[#allocation4 + $0x24] sm:$0x1] %v4630
        %v4632 = vld [vmem:[#allocation3 + $0x2c] sm:$0x1]
        %v4635 = vunpack.c.l.s4 1966171168
        %v4636 = vunpack.c.0.s8 %v4635
        %v4637 = vlaneseq
        %v4638 = vshrl.u32 %v4637, 7
        %v4639 = vsub.s32 %v4636, %v4638
        %v4640 = vrot.slane %v4632, %v4639
        %v4642 = vunpack.c.l.s4 1966171168
        %v4643 = vunpack.c.0.s8 %v4642
        %v4644 = vlaneseq
        %v4645 = vshrl.u32 %v4644, 7
        %v4646 = vsub.s32 %v4643, %v4645
        %v4647 = vrot.slane %v4640, %v4646
        %v4649 = vshrl.u32 %v4647, 16
        %v4651 = vrot.slane %v4649, 7
        %v4652 = vrot.slane %v4651, 1
        %4653 = vrot.lane.b32.xlu0 %v4652, 64
        %v4654 = vpop.permute.xlu0 %4653
        %v4656 = vld [vmem:[#allocation4 + $0x24] sm:$0x1]
        %v4657 = vsel %vm3035, %v4654, %v4656
        %4658 = vst [vmem:[#allocation4 + $0x24] sm:$0x1] %v4657
        %v4659 = vld [vmem:[#allocation3 + $0x2c] sm:$0x2]
        %v4662 = vunpack.c.l.s4 1966171168
        %v4663 = vunpack.c.0.s8 %v4662
        %v4664 = vlaneseq
        %v4665 = vshrl.u32 %v4664, 7
        %v4666 = vsub.s32 %v4663, %v4665
        %v4667 = vrot.slane %v4659, %v4666
        %v4668 = vcombine.high %v4667, %v4667
        %v4670 = vunpack.c.l.s4 1966171168
        %v4671 = vunpack.c.0.s8 %v4670
        %v4672 = vlaneseq
        %v4673 = vshrl.u32 %v4672, 7
        %v4674 = vsub.s32 %v4671, %v4673
        %v4675 = vrot.slane %v4668, %v4674
        %v4677 = vld [vmem:[#allocation4 + $0x25] sm:$0x1]
        %v4678 = vsel %vm1078, %v4675, %v4677
        %4679 = vst [vmem:[#allocation4 + $0x25] sm:$0x1] %v4678
        %v4680 = vld [vmem:[#allocation3 + $0x2c] sm:$0x2]
        %v4683 = vunpack.c.l.s4 1966171168
        %v4684 = vunpack.c.0.s8 %v4683
        %v4685 = vlaneseq
        %v4686 = vshrl.u32 %v4685, 7
        %v4687 = vsub.s32 %v4684, %v4686
        %v4688 = vrot.slane %v4680, %v4687
        %v4689 = vcombine.high %v4688, %v4688
        %v4691 = vunpack.c.l.s4 1966171168
        %v4692 = vunpack.c.0.s8 %v4691
        %v4693 = vlaneseq
        %v4694 = vshrl.u32 %v4693, 7
        %v4695 = vsub.s32 %v4692, %v4694
        %v4696 = vrot.slane %v4689, %v4695
        %v4698 = vshrl.u32 %v4696, 16
        %v4700 = vrot.slane %v4698, 7
        %v4701 = vrot.slane %v4700, 1
        %4702 = vrot.lane.b32.xlu0 %v4701, 64
        %v4703 = vpop.permute.xlu0 %4702
        %v4705 = vld [vmem:[#allocation4 + $0x25] sm:$0x1]
        %v4706 = vsel %vm3035, %v4703, %v4705
        %4707 = vst [vmem:[#allocation4 + $0x25] sm:$0x1] %v4706
        %v4708 = vld [vmem:[#allocation3 + $0x2c] sm:$0x4]
        %v4711 = vunpack.c.l.s4 1966171168
        %v4712 = vunpack.c.0.s8 %v4711
        %v4713 = vlaneseq
        %v4714 = vshrl.u32 %v4713, 7
        %v4715 = vsub.s32 %v4712, %v4714
        %v4716 = vrot.slane %v4708, %v4715
        %v4718 = vunpack.c.l.s4 1966171168
        %v4719 = vunpack.c.0.s8 %v4718
        %v4720 = vlaneseq
        %v4721 = vshrl.u32 %v4720, 7
        %v4722 = vsub.s32 %v4719, %v4721
        %v4723 = vrot.slane %v4716, %v4722
        %v4724 = vcombine.high %v4723, %v4723
        %v4726 = vld [vmem:[#allocation4 + $0x26] sm:$0x1]
        %v4727 = vsel %vm1078, %v4724, %v4726
        %4728 = vst [vmem:[#allocation4 + $0x26] sm:$0x1] %v4727
        %v4729 = vld [vmem:[#allocation3 + $0x2c] sm:$0x4]
        %v4732 = vunpack.c.l.s4 1966171168
        %v4733 = vunpack.c.0.s8 %v4732
        %v4734 = vlaneseq
        %v4735 = vshrl.u32 %v4734, 7
        %v4736 = vsub.s32 %v4733, %v4735
        %v4737 = vrot.slane %v4729, %v4736
        %v4739 = vunpack.c.l.s4 1966171168
        %v4740 = vunpack.c.0.s8 %v4739
        %v4741 = vlaneseq
        %v4742 = vshrl.u32 %v4741, 7
        %v4743 = vsub.s32 %v4740, %v4742
        %v4744 = vrot.slane %v4737, %v4743
        %v4745 = vcombine.high %v4744, %v4744
        %v4747 = vshrl.u32 %v4745, 16
        %v4749 = vrot.slane %v4747, 7
        %v4750 = vrot.slane %v4749, 1
        %4751 = vrot.lane.b32.xlu0 %v4750, 64
        %v4752 = vpop.permute.xlu0 %4751
        %v4754 = vld [vmem:[#allocation4 + $0x26] sm:$0x1]
        %v4755 = vsel %vm3035, %v4752, %v4754
        %4756 = vst [vmem:[#allocation4 + $0x26] sm:$0x1] %v4755
        %v4757 = vld [vmem:[#allocation3 + $0x2c] sm:$0x8]
        %v4760 = vunpack.c.l.s4 1966171168
        %v4761 = vunpack.c.0.s8 %v4760
        %v4762 = vlaneseq
        %v4763 = vshrl.u32 %v4762, 7
        %v4764 = vsub.s32 %v4761, %v4763
        %v4765 = vrot.slane %v4757, %v4764
        %v4766 = vcombine.high %v4765, %v4765
        %v4768 = vunpack.c.l.s4 1966171168
        %v4769 = vunpack.c.0.s8 %v4768
        %v4770 = vlaneseq
        %v4771 = vshrl.u32 %v4770, 7
        %v4772 = vsub.s32 %v4769, %v4771
        %v4773 = vrot.slane %v4766, %v4772
        %v4774 = vcombine.high %v4773, %v4773
        %v4776 = vld [vmem:[#allocation4 + $0x27] sm:$0x1]
        %v4777 = vsel %vm1078, %v4774, %v4776
        %4778 = vst [vmem:[#allocation4 + $0x27] sm:$0x1] %v4777
        %v4779 = vld [vmem:[#allocation3 + $0x2c] sm:$0x8]
        %v4782 = vunpack.c.l.s4 1966171168
        %v4783 = vunpack.c.0.s8 %v4782
        %v4784 = vlaneseq
        %v4785 = vshrl.u32 %v4784, 7
        %v4786 = vsub.s32 %v4783, %v4785
        %v4787 = vrot.slane %v4779, %v4786
        %v4788 = vcombine.high %v4787, %v4787
        %v4790 = vunpack.c.l.s4 1966171168
        %v4791 = vunpack.c.0.s8 %v4790
        %v4792 = vlaneseq
        %v4793 = vshrl.u32 %v4792, 7
        %v4794 = vsub.s32 %v4791, %v4793
        %v4795 = vrot.slane %v4788, %v4794
        %v4796 = vcombine.high %v4795, %v4795
        %v4798 = vshrl.u32 %v4796, 16
        %v4800 = vrot.slane %v4798, 7
        %v4801 = vrot.slane %v4800, 1
        %4802 = vrot.lane.b32.xlu0 %v4801, 64
        %v4803 = vpop.permute.xlu0 %4802
        %v4805 = vld [vmem:[#allocation4 + $0x27] sm:$0x1]
        %v4806 = vsel %vm3035, %v4803, %v4805
        %4807 = vst [vmem:[#allocation4 + $0x27] sm:$0x1] %v4806
        %v4808 = vld [vmem:[#allocation3 + $0x30] sm:$0x1]
        %v4809 = vld [vmem:[#allocation4 + $0x28] sm:$0x1]
        %v4810 = vsel %vm1078, %v4808, %v4809
        %4811 = vst [vmem:[#allocation4 + $0x28] sm:$0x1] %v4810
        %v4812 = vld [vmem:[#allocation4] sm:$0xff]
        %v4813 = vld [vmem:[#allocation4 + $0x8] sm:$0xff]
        %v4814 = vld [vmem:[#allocation4 + $0x10] sm:$0xff]
        %v4815 = vld [vmem:[#allocation4 + $0x18] sm:$0xff]
        %v4816 = vld [vmem:[#allocation4 + $0x20] sm:$0xff]
        %v4817 = vld [vmem:[#allocation4 + $0x28] sm:$0x1]
        %v4818 = vld [vmem:[%s5] sm:$0xf]
        %v4819 = vld [vmem:[%s5 + $0x4] sm:$0xf]
        %v4820 = vld [vmem:[%s5 + $0x8] sm:$0xf]
        %v4821 = vld [vmem:[%s5 + $0xc] sm:$0xf]
        %v4822 = vld [vmem:[%s5 + $0x10] sm:$0xf]
        %v4823 = vld [vmem:[%s5 + $0x14] sm:$0xf]
        %v4824 = vld [vmem:[%s5 + $0x18] sm:$0xf]
        %v4825 = vld [vmem:[%s5 + $0x1c] sm:$0xf]
        %v4826 = vld [vmem:[%s5 + $0x20] sm:$0xf]
        %v4827 = vld [vmem:[%s5 + $0x24] sm:$0xf]
        %v4828 = vld [vmem:[%s5 + $0x28] sm:$0xf]
        %v4829 = vld [vmem:[%s5 + $0x2c] sm:$0xf]
        %v4830 = vld [vmem:[%s5 + $0x30] sm:$0xf]
        %v4831 = vld [vmem:[%s5 + $0x34] sm:$0xf]
        %v4832 = vld [vmem:[%s5 + $0x38] sm:$0xf]
        %v4833 = vld [vmem:[%s5 + $0x3c] sm:$0xf]
        %v4834 = vld [vmem:[%s5 + $0x40] sm:$0xf]
        %v4835 = vld [vmem:[%s5 + $0x44] sm:$0xf]
        %v4836 = vld [vmem:[%s5 + $0x48] sm:$0xf]
        %v4837 = vld [vmem:[%s5 + $0x4c] sm:$0xf]
        %v4838 = vld [vmem:[%s5 + $0x50] sm:$0xf]
        %v4839 = vld [vmem:[%s5 + $0x54] sm:$0xf]
        %v4840 = vld [vmem:[%s5 + $0x58] sm:$0xf]
        %v4841 = vld [vmem:[%s5 + $0x5c] sm:$0xf]
        %v4842 = vld [vmem:[%s5 + $0x60] sm:$0xf]
        %v4843 = vld [vmem:[%s5 + $0x64] sm:$0xf]
        %v4844 = vld [vmem:[%s5 + $0x68] sm:$0xf]
        %v4845 = vld [vmem:[%s5 + $0x6c] sm:$0xf]
        %v4846 = vld [vmem:[%s5 + $0x70] sm:$0xf]
        %v4847 = vld [vmem:[%s5 + $0x74] sm:$0xf]
        %v4848 = vld [vmem:[%s5 + $0x78] sm:$0xf]
        %v4849 = vld [vmem:[%s5 + $0x7c] sm:$0xf]
        %v4850 = vld [vmem:[%s5 + $0x80] sm:$0xf]
        %v4851 = vld [vmem:[%s5 + $0x84] sm:$0xf]
        %v4852 = vld [vmem:[%s5 + $0x88] sm:$0xf]
        %v4853 = vld [vmem:[%s5 + $0x8c] sm:$0xf]
        %v4854 = vld [vmem:[%s5 + $0x90] sm:$0xf]
        %v4855 = vld [vmem:[%s5 + $0x94] sm:$0xf]
        %v4856 = vld [vmem:[%s5 + $0x98] sm:$0xf]
        %v4857 = vld [vmem:[%s5 + $0x9c] sm:$0xf]
        %v4858 = vld [vmem:[%s5 + $0xa0] sm:$0xf]
        %v4859 = vld [vmem:[%s5 + $0xa4] sm:$0xf]
        %v4860 = vld [vmem:[%s5 + $0xa8] sm:$0xf]
        %v4861 = vld [vmem:[%s5 + $0xac] sm:$0xf]
        %v4862 = vld [vmem:[%s5 + $0xb0] sm:$0xf]
        %v4863 = vld [vmem:[%s5 + $0xb4] sm:$0xf]
        %v4864 = vld [vmem:[%s5 + $0xb8] sm:$0xf]
        %v4865 = vld [vmem:[%s5 + $0xbc] sm:$0xf]
        %v4866 = vld [vmem:[%s5 + $0xc0] sm:$0xf]
        %v4867 = vld [vmem:[%s5 + $0xc4] sm:$0xf]
        %v4868 = vld [vmem:[%s5 + $0xc8] sm:$0xf]
        %v4869 = vld [vmem:[%s5 + $0xcc] sm:$0xf]
        %v4870 = vld [vmem:[%s5 + $0xd0] sm:$0xf]
        %v4871 = vld [vmem:[%s5 + $0xd4] sm:$0xf]
        %v4872 = vld [vmem:[%s5 + $0xd8] sm:$0xf]
        %v4873 = vld [vmem:[%s5 + $0xdc] sm:$0xf]
        %v4874 = vld [vmem:[%s5 + $0xe0] sm:$0xf]
        %v4875 = vld [vmem:[%s5 + $0xe4] sm:$0xf]
        %v4876 = vld [vmem:[%s5 + $0xe8] sm:$0xf]
        %v4877 = vld [vmem:[%s5 + $0xec] sm:$0xf]
        %v4878 = vld [vmem:[%s5 + $0xf0] sm:$0xf]
        %v4879 = vld [vmem:[%s5 + $0xf4] sm:$0xf]
        %v4880 = vld [vmem:[%s5 + $0xf8] sm:$0xf]
        %v4881 = vld [vmem:[%s5 + $0xfc] sm:$0xf]
        %v4882 = vld [vmem:[%s5 + $0x100] sm:$0xf]
        %v4883 = vld [vmem:[%s5 + $0x104] sm:$0xf]
        %v4884 = vld [vmem:[%s5 + $0x108] sm:$0xf]
        %v4885 = vld [vmem:[%s5 + $0x10c] sm:$0xf]
        %v4886 = vld [vmem:[%s5 + $0x110] sm:$0xf]
        %v4887 = vld [vmem:[%s5 + $0x114] sm:$0xf]
        %v4888 = vld [vmem:[%s5 + $0x118] sm:$0xf]
        %v4889 = vld [vmem:[%s5 + $0x11c] sm:$0xf]
        %v4890 = vld [vmem:[%s5 + $0x120] sm:$0xf]
        %v4891 = vld [vmem:[%s5 + $0x124] sm:$0xf]
        %v4892 = vld [vmem:[%s5 + $0x128] sm:$0xf]
        %v4893 = vld [vmem:[%s5 + $0x12c] sm:$0xf]
        %v4894 = vld [vmem:[%s5 + $0x130] sm:$0xf]
        %v4895 = vld [vmem:[%s5 + $0x134] sm:$0xf]
        %v4896 = vld [vmem:[%s5 + $0x138] sm:$0xf]
        %v4897 = vld [vmem:[%s5 + $0x13c] sm:$0xf]
        %v4898 = vld [vmem:[%s5 + $0x140] sm:$0xf]
        %v4899 = vld [vmem:[%s5 + $0x144] sm:$0xf]
        %v4900 = vld [vmem:[%s5 + $0x148] sm:$0xf]
        %v4901 = vld [vmem:[%s5 + $0x14c] sm:$0xf]
        %v4902 = vld [vmem:[%s5 + $0x150] sm:$0xf]
        %v4903 = vld [vmem:[%s5 + $0x154] sm:$0xf]
        %v4904 = vld [vmem:[%s5 + $0x158] sm:$0xf]
        %v4905 = vld [vmem:[%s5 + $0x15c] sm:$0xf]
        %v4906 = vld [vmem:[%s5 + $0x160] sm:$0xf]
        %v4907 = vld [vmem:[%s5 + $0x164] sm:$0xf]
        %v4908 = vld [vmem:[%s5 + $0x168] sm:$0xf]
        %v4909 = vld [vmem:[%s5 + $0x16c] sm:$0xf]
        %v4910 = vld [vmem:[%s5 + $0x170] sm:$0xf]
        %v4911 = vld [vmem:[%s5 + $0x174] sm:$0xf]
        %v4912 = vld [vmem:[%s5 + $0x178] sm:$0xf]
        %v4913 = vld [vmem:[%s5 + $0x17c] sm:$0xf]
        %v4914 = vld [vmem:[%s5 + $0x180] sm:$0xf]
        %v4915 = vld [vmem:[%s5 + $0x184] sm:$0xf]
        %v4916 = vld [vmem:[%s5 + $0x188] sm:$0xf]
        %v4917 = vld [vmem:[%s5 + $0x18c] sm:$0xf]
        %v4918 = vld [vmem:[%s5 + $0x190] sm:$0xf]
        %v4919 = vld [vmem:[%s5 + $0x194] sm:$0xf]
        %v4920 = vld [vmem:[%s5 + $0x198] sm:$0xf]
        %v4921 = vld [vmem:[%s5 + $0x19c] sm:$0xf]
        %v4922 = vld [vmem:[%s5 + $0x1a0] sm:$0xf]
        %v4923 = vld [vmem:[%s5 + $0x1a4] sm:$0xf]
        %v4924 = vld [vmem:[%s5 + $0x1a8] sm:$0xf]
        %v4925 = vld [vmem:[%s5 + $0x1ac] sm:$0xf]
        %v4926 = vld [vmem:[%s5 + $0x1b0] sm:$0xf]
        %v4927 = vld [vmem:[%s5 + $0x1b4] sm:$0xf]
        %v4928 = vld [vmem:[%s5 + $0x1b8] sm:$0xf]
        %v4929 = vld [vmem:[%s5 + $0x1bc] sm:$0xf]
        %v4930 = vld [vmem:[%s5 + $0x1c0] sm:$0xf]
        %v4931 = vld [vmem:[%s5 + $0x1c4] sm:$0xf]
        %v4932 = vld [vmem:[%s5 + $0x1c8] sm:$0xf]
        %v4933 = vld [vmem:[%s5 + $0x1cc] sm:$0xf]
        %v4934 = vld [vmem:[%s5 + $0x1d0] sm:$0xf]
        %v4935 = vld [vmem:[%s5 + $0x1d4] sm:$0xf]
        %v4936 = vld [vmem:[%s5 + $0x1d8] sm:$0xf]
        %v4937 = vld [vmem:[%s5 + $0x1dc] sm:$0xf]
        %v4938 = vld [vmem:[%s5 + $0x1e0] sm:$0xf]
        %v4939 = vld [vmem:[%s5 + $0x1e4] sm:$0xf]
        %v4940 = vld [vmem:[%s5 + $0x1e8] sm:$0xf]
        %v4941 = vld [vmem:[%s5 + $0x1ec] sm:$0xf]
        %v4942 = vld [vmem:[%s5 + $0x1f0] sm:$0xf]
        %v4943 = vld [vmem:[%s5 + $0x1f4] sm:$0xf]
        %v4944 = vld [vmem:[%s5 + $0x1f8] sm:$0xf]
        %v4945 = vld [vmem:[%s5 + $0x1fc] sm:$0xf]
        %v4946 = vld [vmem:[%s5 + $0x200] sm:$0xf]
        %v4947 = vld [vmem:[%s5 + $0x204] sm:$0xf]
        %v4948 = vld [vmem:[%s5 + $0x208] sm:$0xf]
        %v4949 = vld [vmem:[%s5 + $0x20c] sm:$0xf]
        %v4950 = vld [vmem:[%s5 + $0x210] sm:$0xf]
        %v4951 = vld [vmem:[%s5 + $0x214] sm:$0xf]
        %v4952 = vld [vmem:[%s5 + $0x218] sm:$0xf]
        %v4953 = vld [vmem:[%s5 + $0x21c] sm:$0xf]
        %v4954 = vld [vmem:[%s5 + $0x220] sm:$0xf]
        %v4955 = vld [vmem:[%s5 + $0x224] sm:$0xf]
        %v4956 = vld [vmem:[%s5 + $0x228] sm:$0xf]
        %v4957 = vld [vmem:[%s5 + $0x22c] sm:$0xf]
        %v4958 = vld [vmem:[%s5 + $0x230] sm:$0xf]
        %v4959 = vld [vmem:[%s5 + $0x234] sm:$0xf]
        %v4960 = vld [vmem:[%s5 + $0x238] sm:$0xf]
        %v4961 = vld [vmem:[%s5 + $0x23c] sm:$0xf]
        %v4962 = vld [vmem:[%s5 + $0x240] sm:$0xf]
        %v4963 = vld [vmem:[%s5 + $0x244] sm:$0xf]
        %v4964 = vld [vmem:[%s5 + $0x248] sm:$0xf]
        %v4965 = vld [vmem:[%s5 + $0x24c] sm:$0xf]
        %v4966 = vld [vmem:[%s5 + $0x250] sm:$0xf]
        %v4967 = vld [vmem:[%s5 + $0x254] sm:$0xf]
        %v4968 = vld [vmem:[%s5 + $0x258] sm:$0xf]
        %v4969 = vld [vmem:[%s5 + $0x25c] sm:$0xf]
        %v4970 = vld [vmem:[%s5 + $0x260] sm:$0xf]
        %v4971 = vld [vmem:[%s5 + $0x264] sm:$0xf]
        %v4972 = vld [vmem:[%s5 + $0x268] sm:$0xf]
        %v4973 = vld [vmem:[%s5 + $0x26c] sm:$0xf]
        %v4974 = vld [vmem:[%s5 + $0x270] sm:$0xf]
        %v4975 = vld [vmem:[%s5 + $0x274] sm:$0xf]
        %v4976 = vld [vmem:[%s5 + $0x278] sm:$0xf]
        %v4977 = vld [vmem:[%s5 + $0x27c] sm:$0xf]
        %v4978 = vld [vmem:[%s5 + $0x280] sm:$0xf]
        %v4979 = vld [vmem:[%s5 + $0x284] sm:$0xf]
        %v4980 = vld [vmem:[%s5 + $0x288] sm:$0xf]
        %v4981 = vld [vmem:[%s5 + $0x28c] sm:$0xf]
        %v4982 = vld [vmem:[%s5 + $0x290] sm:$0xf]
        %v4983 = vld [vmem:[%s5 + $0x294] sm:$0xf]
        %v4984 = vld [vmem:[%s5 + $0x298] sm:$0xf]
        %v4985 = vld [vmem:[%s5 + $0x29c] sm:$0xf]
        %v4986 = vld [vmem:[%s5 + $0x2a0] sm:$0xf]
        %v4987 = vld [vmem:[%s5 + $0x2a4] sm:$0xf]
        %v4988 = vld [vmem:[%s5 + $0x2a8] sm:$0xf]
        %v4989 = vld [vmem:[%s5 + $0x2ac] sm:$0xf]
        %v4990 = vld [vmem:[%s5 + $0x2b0] sm:$0xf]
        %v4991 = vld [vmem:[%s5 + $0x2b4] sm:$0xf]
        %v4992 = vld [vmem:[%s5 + $0x2b8] sm:$0xf]
        %v4993 = vld [vmem:[%s5 + $0x2bc] sm:$0xf]
        %v4994 = vld [vmem:[%s5 + $0x2c0] sm:$0xf]
        %v4995 = vld [vmem:[%s5 + $0x2c4] sm:$0xf]
        %v4996 = vld [vmem:[%s5 + $0x2c8] sm:$0xf]
        %v4997 = vld [vmem:[%s5 + $0x2cc] sm:$0xf]
        %v4998 = vld [vmem:[%s5 + $0x2d0] sm:$0xf]
        %v4999 = vld [vmem:[%s5 + $0x2d4] sm:$0xf]
        %v5000 = vld [vmem:[%s5 + $0x2d8] sm:$0xf]
        %v5001 = vld [vmem:[%s5 + $0x2dc] sm:$0xf]
        %v5002 = vld [vmem:[%s5 + $0x2e0] sm:$0xf]
        %v5003 = vld [vmem:[%s5 + $0x2e4] sm:$0xf]
        %v5004 = vld [vmem:[%s5 + $0x2e8] sm:$0xf]
        %v5005 = vld [vmem:[%s5 + $0x2ec] sm:$0xf]
        %v5006 = vld [vmem:[%s5 + $0x2f0] sm:$0xf]
        %v5007 = vld [vmem:[%s5 + $0x2f4] sm:$0xf]
        %v5008 = vld [vmem:[%s5 + $0x2f8] sm:$0xf]
        %v5009 = vld [vmem:[%s5 + $0x2fc] sm:$0xf]
        %v5010 = vld [vmem:[%s5 + $0x300] sm:$0xf]
        %v5011 = vld [vmem:[%s5 + $0x304] sm:$0xf]
        %v5012 = vld [vmem:[%s5 + $0x308] sm:$0xf]
        %v5013 = vld [vmem:[%s5 + $0x30c] sm:$0xf]
        %v5014 = vld [vmem:[%s5 + $0x310] sm:$0xf]
        %v5015 = vld [vmem:[%s5 + $0x314] sm:$0xf]
        %v5016 = vld [vmem:[%s5 + $0x318] sm:$0xf]
        %v5017 = vld [vmem:[%s5 + $0x31c] sm:$0xf]
        %v5018 = vld [vmem:[%s5 + $0x320] sm:$0xf]
        %v5019 = vld [vmem:[%s5 + $0x324] sm:$0xf]
        %v5020 = vld [vmem:[%s5 + $0x328] sm:$0xf]
        %v5021 = vld [vmem:[%s5 + $0x32c] sm:$0xf]
        %v5022 = vld [vmem:[%s5 + $0x330] sm:$0xf]
        %v5023 = vld [vmem:[%s5 + $0x334] sm:$0xf]
        %v5024 = vld [vmem:[%s5 + $0x338] sm:$0xf]
        %v5025 = vld [vmem:[%s5 + $0x33c] sm:$0xf]
        %v5026 = vld [vmem:[%s5 + $0x340] sm:$0xf]
        %v5027 = vld [vmem:[%s5 + $0x344] sm:$0xf]
        %v5028 = vld [vmem:[%s5 + $0x348] sm:$0xf]
        %v5029 = vld [vmem:[%s5 + $0x34c] sm:$0xf]
        %v5030 = vld [vmem:[%s5 + $0x350] sm:$0xf]
        %v5031 = vld [vmem:[%s5 + $0x354] sm:$0xf]
        %v5032 = vld [vmem:[%s5 + $0x358] sm:$0xf]
        %v5033 = vld [vmem:[%s5 + $0x35c] sm:$0xf]
        %v5034 = vld [vmem:[%s5 + $0x360] sm:$0xf]
        %v5035 = vld [vmem:[%s5 + $0x364] sm:$0xf]
        %v5036 = vld [vmem:[%s5 + $0x368] sm:$0xf]
        %v5037 = vld [vmem:[%s5 + $0x36c] sm:$0xf]
        %v5038 = vld [vmem:[%s5 + $0x370] sm:$0xf]
        %v5039 = vld [vmem:[%s5 + $0x374] sm:$0xf]
        %v5040 = vld [vmem:[%s5 + $0x378] sm:$0xf]
        %v5041 = vld [vmem:[%s5 + $0x37c] sm:$0xf]
        %v5042 = vld [vmem:[%s5 + $0x380] sm:$0xf]
        %v5043 = vld [vmem:[%s5 + $0x384] sm:$0xf]
        %v5044 = vld [vmem:[%s5 + $0x388] sm:$0xf]
        %v5045 = vld [vmem:[%s5 + $0x38c] sm:$0xf]
        %v5046 = vld [vmem:[%s5 + $0x390] sm:$0xf]
        %v5047 = vld [vmem:[%s5 + $0x394] sm:$0xf]
        %v5048 = vld [vmem:[%s5 + $0x398] sm:$0xf]
        %v5049 = vld [vmem:[%s5 + $0x39c] sm:$0xf]
        %v5050 = vld [vmem:[%s5 + $0x3a0] sm:$0xf]
        %v5051 = vld [vmem:[%s5 + $0x3a4] sm:$0xf]
        %v5052 = vld [vmem:[%s5 + $0x3a8] sm:$0xf]
        %v5053 = vld [vmem:[%s5 + $0x3ac] sm:$0xf]
        %v5054 = vld [vmem:[%s5 + $0x3b0] sm:$0xf]
        %v5055 = vld [vmem:[%s5 + $0x3b4] sm:$0xf]
        %v5056 = vld [vmem:[%s5 + $0x3b8] sm:$0xf]
        %v5057 = vld [vmem:[%s5 + $0x3bc] sm:$0xf]
        %v5058 = vld [vmem:[%s5 + $0x3c0] sm:$0xf]
        %v5059 = vld [vmem:[%s5 + $0x3c4] sm:$0xf]
        %v5060 = vld [vmem:[%s5 + $0x3c8] sm:$0xf]
        %v5061 = vld [vmem:[%s5 + $0x3cc] sm:$0xf]
        %v5062 = vld [vmem:[%s5 + $0x3d0] sm:$0xf]
        %v5063 = vld [vmem:[%s5 + $0x3d4] sm:$0xf]
        %v5064 = vld [vmem:[%s5 + $0x3d8] sm:$0xf]
        %v5065 = vld [vmem:[%s5 + $0x3dc] sm:$0xf]
        %v5066 = vld [vmem:[%s5 + $0x3e0] sm:$0xf]
        %v5067 = vld [vmem:[%s5 + $0x3e4] sm:$0xf]
        %v5068 = vld [vmem:[%s5 + $0x3e8] sm:$0xf]
        %v5069 = vld [vmem:[%s5 + $0x3ec] sm:$0xf]
        %v5070 = vld [vmem:[%s5 + $0x3f0] sm:$0xf]
        %v5071 = vld [vmem:[%s5 + $0x3f4] sm:$0xf]
        %v5072 = vld [vmem:[%s5 + $0x3f8] sm:$0xf]
        %v5073 = vld [vmem:[%s5 + $0x3fc] sm:$0xf]
        %v5074 = vld [vmem:[%s5 + $0x400] sm:$0xf]
        %v5075 = vld [vmem:[%s5 + $0x404] sm:$0xf]
        %v5076 = vld [vmem:[%s5 + $0x408] sm:$0xf]
        %v5077 = vld [vmem:[%s5 + $0x40c] sm:$0xf]
        %v5078 = vld [vmem:[%s5 + $0x410] sm:$0xf]
        %v5079 = vld [vmem:[%s5 + $0x414] sm:$0xf]
        %v5080 = vld [vmem:[%s5 + $0x418] sm:$0xf]
        %v5081 = vld [vmem:[%s5 + $0x41c] sm:$0xf]
        %v5082 = vld [vmem:[%s5 + $0x420] sm:$0xf]
        %v5083 = vld [vmem:[%s5 + $0x424] sm:$0xf]
        %v5084 = vld [vmem:[%s5 + $0x428] sm:$0xf]
        %v5085 = vld [vmem:[%s5 + $0x42c] sm:$0xf]
        %v5086 = vld [vmem:[%s5 + $0x430] sm:$0xf]
        %v5087 = vld [vmem:[%s5 + $0x434] sm:$0xf]
        %v5088 = vld [vmem:[%s5 + $0x438] sm:$0xf]
        %v5089 = vld [vmem:[%s5 + $0x43c] sm:$0xf]
        %v5090 = vld [vmem:[%s5 + $0x440] sm:$0xf]
        %v5091 = vld [vmem:[%s5 + $0x444] sm:$0xf]
        %v5092 = vld [vmem:[%s5 + $0x448] sm:$0xf]
        %v5093 = vld [vmem:[%s5 + $0x44c] sm:$0xf]
        %v5094 = vld [vmem:[%s5 + $0x450] sm:$0xf]
        %v5095 = vld [vmem:[%s5 + $0x454] sm:$0xf]
        %v5096 = vld [vmem:[%s5 + $0x458] sm:$0xf]
        %v5097 = vld [vmem:[%s5 + $0x45c] sm:$0xf]
        %v5098 = vld [vmem:[%s5 + $0x460] sm:$0xf]
        %v5099 = vld [vmem:[%s5 + $0x464] sm:$0xf]
        %v5100 = vld [vmem:[%s5 + $0x468] sm:$0xf]
        %v5101 = vld [vmem:[%s5 + $0x46c] sm:$0xf]
        %v5102 = vld [vmem:[%s5 + $0x470] sm:$0xf]
        %v5103 = vld [vmem:[%s5 + $0x474] sm:$0xf]
        %v5104 = vld [vmem:[%s5 + $0x478] sm:$0xf]
        %v5105 = vld [vmem:[%s5 + $0x47c] sm:$0xf]
        %v5106 = vld [vmem:[%s5 + $0x480] sm:$0xf]
        %v5107 = vld [vmem:[%s5 + $0x484] sm:$0xf]
        %v5108 = vld [vmem:[%s5 + $0x488] sm:$0xf]
        %v5109 = vld [vmem:[%s5 + $0x48c] sm:$0xf]
        %v5110 = vld [vmem:[%s5 + $0x490] sm:$0xf]
        %v5111 = vld [vmem:[%s5 + $0x494] sm:$0xf]
        %v5112 = vld [vmem:[%s5 + $0x498] sm:$0xf]
        %v5113 = vld [vmem:[%s5 + $0x49c] sm:$0xf]
        %v5114 = vld [vmem:[%s5 + $0x4a0] sm:$0xf]
        %v5115 = vld [vmem:[%s5 + $0x4a4] sm:$0xf]
        %v5116 = vld [vmem:[%s5 + $0x4a8] sm:$0xf]
        %v5117 = vld [vmem:[%s5 + $0x4ac] sm:$0xf]
        %v5118 = vld [vmem:[%s5 + $0x4b0] sm:$0xf]
        %v5119 = vld [vmem:[%s5 + $0x4b4] sm:$0xf]
        %v5120 = vld [vmem:[%s5 + $0x4b8] sm:$0xf]
        %v5121 = vld [vmem:[%s5 + $0x4bc] sm:$0xf]
        %v5122 = vld [vmem:[%s5 + $0x4c0] sm:$0xf]
        %v5123 = vld [vmem:[%s5 + $0x4c4] sm:$0xf]
        %v5124 = vld [vmem:[%s5 + $0x4c8] sm:$0xf]
        %v5125 = vld [vmem:[%s5 + $0x4cc] sm:$0xf]
        %v5126 = vld [vmem:[%s5 + $0x4d0] sm:$0xf]
        %v5127 = vld [vmem:[%s5 + $0x4d4] sm:$0xf]
        %v5128 = vld [vmem:[%s5 + $0x4d8] sm:$0xf]
        %v5129 = vld [vmem:[%s5 + $0x4dc] sm:$0xf]
        %v5130 = vld [vmem:[%s5 + $0x4e0] sm:$0xf]
        %v5131 = vld [vmem:[%s5 + $0x4e4] sm:$0xf]
        %v5132 = vld [vmem:[%s5 + $0x4e8] sm:$0xf]
        %v5133 = vld [vmem:[%s5 + $0x4ec] sm:$0xf]
        %v5134 = vld [vmem:[%s5 + $0x4f0] sm:$0xf]
        %v5135 = vld [vmem:[%s5 + $0x4f4] sm:$0xf]
        %v5136 = vld [vmem:[%s5 + $0x4f8] sm:$0xf]
        %v5137 = vld [vmem:[%s5 + $0x4fc] sm:$0xf]
        %v5138 = vld [vmem:[%s5 + $0x500] sm:$0xf]
        %v5139 = vld [vmem:[%s5 + $0x504] sm:$0xf]
        %v5140 = vld [vmem:[%s5 + $0x508] sm:$0xf]
        %v5141 = vld [vmem:[%s5 + $0x50c] sm:$0xf]
        %v5142 = vld [vmem:[%s5 + $0x510] sm:$0xf]
        %v5143 = vld [vmem:[%s5 + $0x514] sm:$0xf]
        %v5144 = vld [vmem:[%s5 + $0x518] sm:$0xf]
        %v5145 = vld [vmem:[%s5 + $0x51c] sm:$0xf]
        %v5146 = vld [vmem:[%s5 + $0x520] sm:$0xf]
        %v5147 = vld [vmem:[%s5 + $0x524] sm:$0xf]
        %v5148 = vld [vmem:[%s5 + $0x528] sm:$0xf]
        %v5149 = vld [vmem:[%s5 + $0x52c] sm:$0xf]
        %v5150 = vld [vmem:[%s5 + $0x530] sm:$0xf]
        %v5151 = vld [vmem:[%s5 + $0x534] sm:$0xf]
        %v5152 = vld [vmem:[%s5 + $0x538] sm:$0xf]
        %v5153 = vld [vmem:[%s5 + $0x53c] sm:$0xf]
        %v5154 = vld [vmem:[%s5 + $0x540] sm:$0xf]
        %v5155 = vld [vmem:[%s5 + $0x544] sm:$0xf]
        %v5156 = vld [vmem:[%s5 + $0x548] sm:$0xf]
        %v5157 = vld [vmem:[%s5 + $0x54c] sm:$0xf]
        %v5158 = vld [vmem:[%s5 + $0x550] sm:$0xf]
        %v5159 = vld [vmem:[%s5 + $0x554] sm:$0xf]
        %v5160 = vld [vmem:[%s5 + $0x558] sm:$0xf]
        %v5161 = vld [vmem:[%s5 + $0x55c] sm:$0xf]
        %v5162 = vld [vmem:[%s5 + $0x560] sm:$0xf]
        %v5163 = vld [vmem:[%s5 + $0x564] sm:$0xf]
        %v5164 = vld [vmem:[%s5 + $0x568] sm:$0xf]
        %v5165 = vld [vmem:[%s5 + $0x56c] sm:$0xf]
        %v5166 = vld [vmem:[%s5 + $0x570] sm:$0xf]
        %v5167 = vld [vmem:[%s5 + $0x574] sm:$0xf]
        %v5168 = vld [vmem:[%s5 + $0x578] sm:$0xf]
        %v5169 = vld [vmem:[%s5 + $0x57c] sm:$0xf]
        %v5170 = vld [vmem:[%s5 + $0x580] sm:$0xf]
        %v5171 = vld [vmem:[%s5 + $0x584] sm:$0xf]
        %v5172 = vld [vmem:[%s5 + $0x588] sm:$0xf]
        %v5173 = vld [vmem:[%s5 + $0x58c] sm:$0xf]
        %v5174 = vld [vmem:[%s5 + $0x590] sm:$0xf]
        %v5175 = vld [vmem:[%s5 + $0x594] sm:$0xf]
        %v5176 = vld [vmem:[%s5 + $0x598] sm:$0xf]
        %v5177 = vld [vmem:[%s5 + $0x59c] sm:$0xf]
        %v5178 = vld [vmem:[%s5 + $0x5a0] sm:$0xf]
        %v5179 = vld [vmem:[%s5 + $0x5a4] sm:$0xf]
        %v5180 = vld [vmem:[%s5 + $0x5a8] sm:$0xf]
        %v5181 = vld [vmem:[%s5 + $0x5ac] sm:$0xf]
        %v5182 = vld [vmem:[%s5 + $0x5b0] sm:$0xf]
        %v5183 = vld [vmem:[%s5 + $0x5b4] sm:$0xf]
        %v5184 = vld [vmem:[%s5 + $0x5b8] sm:$0xf]
        %v5185 = vld [vmem:[%s5 + $0x5bc] sm:$0xf]
        %v5186 = vld [vmem:[%s5 + $0x5c0] sm:$0xf]
        %v5187 = vld [vmem:[%s5 + $0x5c4] sm:$0xf]
        %v5188 = vld [vmem:[%s5 + $0x5c8] sm:$0xf]
        %v5189 = vld [vmem:[%s5 + $0x5cc] sm:$0xf]
        %v5190 = vld [vmem:[%s5 + $0x5d0] sm:$0xf]
        %v5191 = vld [vmem:[%s5 + $0x5d4] sm:$0xf]
        %v5192 = vld [vmem:[%s5 + $0x5d8] sm:$0xf]
        %v5193 = vld [vmem:[%s5 + $0x5dc] sm:$0xf]
        %v5194 = vld [vmem:[%s5 + $0x5e0] sm:$0xf]
        %v5195 = vld [vmem:[%s5 + $0x5e4] sm:$0xf]
        %v5196 = vld [vmem:[%s5 + $0x5e8] sm:$0xf]
        %v5197 = vld [vmem:[%s5 + $0x5ec] sm:$0xf]
        %v5198 = vld [vmem:[%s5 + $0x5f0] sm:$0xf]
        %v5199 = vld [vmem:[%s5 + $0x5f4] sm:$0xf]
        %v5200 = vld [vmem:[%s5 + $0x5f8] sm:$0xf]
        %v5201 = vld [vmem:[%s5 + $0x5fc] sm:$0xf]
        %v5202 = vld [vmem:[%s5 + $0x600] sm:$0xf]
        %v5203 = vld [vmem:[%s5 + $0x604] sm:$0xf]
        %v5204 = vld [vmem:[%s5 + $0x608] sm:$0xf]
        %v5205 = vld [vmem:[%s5 + $0x60c] sm:$0xf]
        %v5206 = vld [vmem:[%s5 + $0x610] sm:$0xf]
        %v5207 = vld [vmem:[%s5 + $0x614] sm:$0xf]
        %v5208 = vld [vmem:[%s5 + $0x618] sm:$0xf]
        %v5209 = vld [vmem:[%s5 + $0x61c] sm:$0xf]
        %v5210 = vld [vmem:[%s5 + $0x620] sm:$0xf]
        %v5211 = vld [vmem:[%s5 + $0x624] sm:$0xf]
        %v5212 = vld [vmem:[%s5 + $0x628] sm:$0xf]
        %v5213 = vld [vmem:[%s5 + $0x62c] sm:$0xf]
        %v5214 = vld [vmem:[%s5 + $0x630] sm:$0xf]
        %v5215 = vld [vmem:[%s5 + $0x634] sm:$0xf]
        %v5216 = vld [vmem:[%s5 + $0x638] sm:$0xf]
        %v5217 = vld [vmem:[%s5 + $0x63c] sm:$0xf]
        %v5218 = vld [vmem:[%s5 + $0x640] sm:$0xf]
        %v5219 = vld [vmem:[%s5 + $0x644] sm:$0xf]
        %v5220 = vld [vmem:[%s5 + $0x648] sm:$0xf]
        %v5221 = vld [vmem:[%s5 + $0x64c] sm:$0xf]
        %v5222 = vld [vmem:[%s5 + $0x650] sm:$0xf]
        %v5223 = vld [vmem:[%s5 + $0x654] sm:$0xf]
        %v5224 = vld [vmem:[%s5 + $0x658] sm:$0xf]
        %v5225 = vld [vmem:[%s5 + $0x65c] sm:$0xf]
        %v5226 = vld [vmem:[%s5 + $0x660] sm:$0xf]
        %v5227 = vld [vmem:[%s5 + $0x664] sm:$0xf]
        %v5228 = vld [vmem:[%s5 + $0x668] sm:$0xf]
        %v5229 = vld [vmem:[%s5 + $0x66c] sm:$0xf]
        %v5230 = vld [vmem:[%s5 + $0x670] sm:$0xf]
        %v5231 = vld [vmem:[%s5 + $0x674] sm:$0xf]
        %v5232 = vld [vmem:[%s5 + $0x678] sm:$0xf]
        %v5233 = vld [vmem:[%s5 + $0x67c] sm:$0xf]
        %v5234 = vld [vmem:[%s5 + $0x680] sm:$0xf]
        %v5235 = vld [vmem:[%s5 + $0x684] sm:$0xf]
        %v5236 = vld [vmem:[%s5 + $0x688] sm:$0xf]
        %v5237 = vld [vmem:[%s5 + $0x68c] sm:$0xf]
        %v5238 = vld [vmem:[%s5 + $0x690] sm:$0xf]
        %v5239 = vld [vmem:[%s5 + $0x694] sm:$0xf]
        %v5240 = vld [vmem:[%s5 + $0x698] sm:$0xf]
        %v5241 = vld [vmem:[%s5 + $0x69c] sm:$0xf]
        %v5242 = vld [vmem:[%s5 + $0x6a0] sm:$0xf]
        %v5243 = vld [vmem:[%s5 + $0x6a4] sm:$0xf]
        %v5244 = vld [vmem:[%s5 + $0x6a8] sm:$0xf]
        %v5245 = vld [vmem:[%s5 + $0x6ac] sm:$0xf]
        %v5246 = vld [vmem:[%s5 + $0x6b0] sm:$0xf]
        %v5247 = vld [vmem:[%s5 + $0x6b4] sm:$0xf]
        %v5248 = vld [vmem:[%s5 + $0x6b8] sm:$0xf]
        %v5249 = vld [vmem:[%s5 + $0x6bc] sm:$0xf]
        %v5250 = vld [vmem:[%s5 + $0x6c0] sm:$0xf]
        %v5251 = vld [vmem:[%s5 + $0x6c4] sm:$0xf]
        %v5252 = vld [vmem:[%s5 + $0x6c8] sm:$0xf]
        %v5253 = vld [vmem:[%s5 + $0x6cc] sm:$0xf]
        %v5254 = vld [vmem:[%s5 + $0x6d0] sm:$0xf]
        %v5255 = vld [vmem:[%s5 + $0x6d4] sm:$0xf]
        %v5256 = vld [vmem:[%s5 + $0x6d8] sm:$0xf]
        %v5257 = vld [vmem:[%s5 + $0x6dc] sm:$0xf]
        %v5258 = vld [vmem:[%s5 + $0x6e0] sm:$0xf]
        %v5259 = vld [vmem:[%s5 + $0x6e4] sm:$0xf]
        %v5260 = vld [vmem:[%s5 + $0x6e8] sm:$0xf]
        %v5261 = vld [vmem:[%s5 + $0x6ec] sm:$0xf]
        %v5262 = vld [vmem:[%s5 + $0x6f0] sm:$0xf]
        %v5263 = vld [vmem:[%s5 + $0x6f4] sm:$0xf]
        %v5264 = vld [vmem:[%s5 + $0x6f8] sm:$0xf]
        %v5265 = vld [vmem:[%s5 + $0x6fc] sm:$0xf]
        %v5266 = vld [vmem:[%s5 + $0x700] sm:$0xf]
        %v5267 = vld [vmem:[%s5 + $0x704] sm:$0xf]
        %v5268 = vld [vmem:[%s5 + $0x708] sm:$0xf]
        %v5269 = vld [vmem:[%s5 + $0x70c] sm:$0xf]
        %v5270 = vld [vmem:[%s5 + $0x710] sm:$0xf]
        %v5271 = vld [vmem:[%s5 + $0x714] sm:$0xf]
        %v5272 = vld [vmem:[%s5 + $0x718] sm:$0xf]
        %v5273 = vld [vmem:[%s5 + $0x71c] sm:$0xf]
        %v5274 = vld [vmem:[%s5 + $0x720] sm:$0xf]
        %v5275 = vld [vmem:[%s5 + $0x724] sm:$0xf]
        %v5276 = vld [vmem:[%s5 + $0x728] sm:$0xf]
        %v5277 = vld [vmem:[%s5 + $0x72c] sm:$0xf]
        %v5278 = vld [vmem:[%s5 + $0x730] sm:$0xf]
        %v5279 = vld [vmem:[%s5 + $0x734] sm:$0xf]
        %v5280 = vld [vmem:[%s5 + $0x738] sm:$0xf]
        %v5281 = vld [vmem:[%s5 + $0x73c] sm:$0xf]
        %v5282 = vld [vmem:[%s5 + $0x740] sm:$0xf]
        %v5283 = vld [vmem:[%s5 + $0x744] sm:$0xf]
        %v5284 = vld [vmem:[%s5 + $0x748] sm:$0xf]
        %v5285 = vld [vmem:[%s5 + $0x74c] sm:$0xf]
        %v5286 = vld [vmem:[%s5 + $0x750] sm:$0xf]
        %v5287 = vld [vmem:[%s5 + $0x754] sm:$0xf]
        %v5288 = vld [vmem:[%s5 + $0x758] sm:$0xf]
        %v5289 = vld [vmem:[%s5 + $0x75c] sm:$0xf]
        %v5290 = vld [vmem:[%s5 + $0x760] sm:$0xf]
        %v5291 = vld [vmem:[%s5 + $0x764] sm:$0xf]
        %v5292 = vld [vmem:[%s5 + $0x768] sm:$0xf]
        %v5293 = vld [vmem:[%s5 + $0x76c] sm:$0xf]
        %v5294 = vld [vmem:[%s5 + $0x770] sm:$0xf]
        %v5295 = vld [vmem:[%s5 + $0x774] sm:$0xf]
        %v5296 = vld [vmem:[%s5 + $0x778] sm:$0xf]
        %v5297 = vld [vmem:[%s5 + $0x77c] sm:$0xf]
        %v5298 = vld [vmem:[%s5 + $0x780] sm:$0xf]
        %v5299 = vld [vmem:[%s5 + $0x784] sm:$0xf]
        %v5300 = vld [vmem:[%s5 + $0x788] sm:$0xf]
        %v5301 = vld [vmem:[%s5 + $0x78c] sm:$0xf]
        %v5302 = vld [vmem:[%s5 + $0x790] sm:$0xf]
        %v5303 = vld [vmem:[%s5 + $0x794] sm:$0xf]
        %v5304 = vld [vmem:[%s5 + $0x798] sm:$0xf]
        %v5305 = vld [vmem:[%s5 + $0x79c] sm:$0xf]
        %v5306 = vld [vmem:[%s5 + $0x7a0] sm:$0xf]
        %v5307 = vld [vmem:[%s5 + $0x7a4] sm:$0xf]
        %v5308 = vld [vmem:[%s5 + $0x7a8] sm:$0xf]
        %v5309 = vld [vmem:[%s5 + $0x7ac] sm:$0xf]
        %v5310 = vld [vmem:[%s5 + $0x7b0] sm:$0xf]
        %v5311 = vld [vmem:[%s5 + $0x7b4] sm:$0xf]
        %v5312 = vld [vmem:[%s5 + $0x7b8] sm:$0xf]
        %v5313 = vld [vmem:[%s5 + $0x7bc] sm:$0xf]
        %v5314 = vld [vmem:[%s5 + $0x7c0] sm:$0xf]
        %v5315 = vld [vmem:[%s5 + $0x7c4] sm:$0xf]
        %v5316 = vld [vmem:[%s5 + $0x7c8] sm:$0xf]
        %v5317 = vld [vmem:[%s5 + $0x7cc] sm:$0xf]
        %v5318 = vld [vmem:[%s5 + $0x7d0] sm:$0xf]
        %v5319 = vld [vmem:[%s5 + $0x7d4] sm:$0xf]
        %v5320 = vld [vmem:[%s5 + $0x7d8] sm:$0xf]
        %v5321 = vld [vmem:[%s5 + $0x7dc] sm:$0xf]
        %v5322 = vld [vmem:[%s5 + $0x7e0] sm:$0xf]
        %v5323 = vld [vmem:[%s5 + $0x7e4] sm:$0xf]
        %v5324 = vld [vmem:[%s5 + $0x7e8] sm:$0xf]
        %v5325 = vld [vmem:[%s5 + $0x7ec] sm:$0xf]
        %v5326 = vld [vmem:[%s5 + $0x7f0] sm:$0xf]
        %v5327 = vld [vmem:[%s5 + $0x7f4] sm:$0xf]
        %v5328 = vld [vmem:[%s5 + $0x7f8] sm:$0xf]
        %v5329 = vld [vmem:[%s5 + $0x7fc] sm:$0xf]
        %v5330 = vld [vmem:[%s5 + $0x800] sm:$0xf]
        %v5331 = vld [vmem:[%s5 + $0x804] sm:$0xf]
        %v5332 = vld [vmem:[%s5 + $0x808] sm:$0xf]
        %v5333 = vld [vmem:[%s5 + $0x80c] sm:$0xf]
        %v5334 = vld [vmem:[%s5 + $0x810] sm:$0xf]
        %v5335 = vld [vmem:[%s5 + $0x814] sm:$0xf]
        %v5336 = vld [vmem:[%s5 + $0x818] sm:$0xf]
        %v5337 = vld [vmem:[%s5 + $0x81c] sm:$0xf]
        %v5338 = vld [vmem:[%s5 + $0x820] sm:$0xf]
        %v5339 = vld [vmem:[%s5 + $0x824] sm:$0xf]
        %v5340 = vld [vmem:[%s5 + $0x828] sm:$0xf]
        %v5341 = vld [vmem:[%s5 + $0x82c] sm:$0xf]
        %v5342 = vld [vmem:[%s5 + $0x830] sm:$0xf]
        %v5343 = vld [vmem:[%s5 + $0x834] sm:$0xf]
        %v5344 = vld [vmem:[%s5 + $0x838] sm:$0xf]
        %v5345 = vld [vmem:[%s5 + $0x83c] sm:$0xf]
        %v5346 = vld [vmem:[%s5 + $0x840] sm:$0xf]
        %v5347 = vld [vmem:[%s5 + $0x844] sm:$0xf]
        %v5348 = vld [vmem:[%s5 + $0x848] sm:$0xf]
        %v5349 = vld [vmem:[%s5 + $0x84c] sm:$0xf]
        %v5350 = vld [vmem:[%s5 + $0x850] sm:$0xf]
        %v5351 = vld [vmem:[%s5 + $0x854] sm:$0xf]
        %v5352 = vld [vmem:[%s5 + $0x858] sm:$0xf]
        %v5353 = vld [vmem:[%s5 + $0x85c] sm:$0xf]
        %v5354 = vld [vmem:[%s5 + $0x860] sm:$0xf]
        %v5355 = vld [vmem:[%s5 + $0x864] sm:$0xf]
        %v5356 = vld [vmem:[%s5 + $0x868] sm:$0xf]
        %v5357 = vld [vmem:[%s5 + $0x86c] sm:$0xf]
        %v5358 = vld [vmem:[%s5 + $0x870] sm:$0xf]
        %v5359 = vld [vmem:[%s5 + $0x874] sm:$0xf]
        %v5360 = vld [vmem:[%s5 + $0x878] sm:$0xf]
        %v5361 = vld [vmem:[%s5 + $0x87c] sm:$0xf]
        %v5362 = vld [vmem:[%s5 + $0x880] sm:$0xf]
        %v5363 = vld [vmem:[%s5 + $0x884] sm:$0xf]
        %v5364 = vld [vmem:[%s5 + $0x888] sm:$0xf]
        %v5365 = vld [vmem:[%s5 + $0x88c] sm:$0xf]
        %v5366 = vld [vmem:[%s5 + $0x890] sm:$0xf]
        %v5367 = vld [vmem:[%s5 + $0x894] sm:$0xf]
        %v5368 = vld [vmem:[%s5 + $0x898] sm:$0xf]
        %v5369 = vld [vmem:[%s5 + $0x89c] sm:$0xf]
        %v5370 = vld [vmem:[%s5 + $0x8a0] sm:$0xf]
        %v5371 = vld [vmem:[%s5 + $0x8a4] sm:$0xf]
        %v5372 = vld [vmem:[%s5 + $0x8a8] sm:$0xf]
        %v5373 = vld [vmem:[%s5 + $0x8ac] sm:$0xf]
        %v5374 = vld [vmem:[%s5 + $0x8b0] sm:$0xf]
        %v5375 = vld [vmem:[%s5 + $0x8b4] sm:$0xf]
        %v5376 = vld [vmem:[%s5 + $0x8b8] sm:$0xf]
        %v5377 = vld [vmem:[%s5 + $0x8bc] sm:$0xf]
        %v5378 = vld [vmem:[%s5 + $0x8c0] sm:$0xf]
        %v5379 = vld [vmem:[%s5 + $0x8c4] sm:$0xf]
        %v5380 = vld [vmem:[%s5 + $0x8c8] sm:$0xf]
        %v5381 = vld [vmem:[%s5 + $0x8cc] sm:$0xf]
        %v5382 = vld [vmem:[%s5 + $0x8d0] sm:$0xf]
        %v5383 = vld [vmem:[%s5 + $0x8d4] sm:$0xf]
        %v5384 = vld [vmem:[%s5 + $0x8d8] sm:$0xf]
        %v5385 = vld [vmem:[%s5 + $0x8dc] sm:$0xf]
        %v5386 = vld [vmem:[%s5 + $0x8e0] sm:$0xf]
        %v5387 = vld [vmem:[%s5 + $0x8e4] sm:$0xf]
        %v5388 = vld [vmem:[%s5 + $0x8e8] sm:$0xf]
        %v5389 = vld [vmem:[%s5 + $0x8ec] sm:$0xf]
        %v5390 = vld [vmem:[%s5 + $0x8f0] sm:$0xf]
        %v5391 = vld [vmem:[%s5 + $0x8f4] sm:$0xf]
        %v5392 = vld [vmem:[%s5 + $0x8f8] sm:$0xf]
        %v5393 = vld [vmem:[%s5 + $0x8fc] sm:$0xf]
        %v5394 = vld [vmem:[%s5 + $0x900] sm:$0xf]
        %v5395 = vld [vmem:[%s5 + $0x904] sm:$0xf]
        %v5396 = vld [vmem:[%s5 + $0x908] sm:$0xf]
        %v5397 = vld [vmem:[%s5 + $0x90c] sm:$0xf]
        %v5398 = vld [vmem:[%s5 + $0x910] sm:$0xf]
        %v5399 = vld [vmem:[%s5 + $0x914] sm:$0xf]
        %v5400 = vld [vmem:[%s5 + $0x918] sm:$0xf]
        %v5401 = vld [vmem:[%s5 + $0x91c] sm:$0xf]
        %v5402 = vld [vmem:[%s5 + $0x920] sm:$0xf]
        %v5403 = vld [vmem:[%s5 + $0x924] sm:$0xf]
        %v5404 = vld [vmem:[%s5 + $0x928] sm:$0xf]
        %v5405 = vld [vmem:[%s5 + $0x92c] sm:$0xf]
        %v5406 = vld [vmem:[%s5 + $0x930] sm:$0xf]
        %v5407 = vld [vmem:[%s5 + $0x934] sm:$0xf]
        %v5408 = vld [vmem:[%s5 + $0x938] sm:$0xf]
        %v5409 = vld [vmem:[%s5 + $0x93c] sm:$0xf]
        %v5410 = vld [vmem:[%s5 + $0x940] sm:$0xf]
        %v5411 = vld [vmem:[%s5 + $0x944] sm:$0xf]
        %v5412 = vld [vmem:[%s5 + $0x948] sm:$0xf]
        %v5413 = vld [vmem:[%s5 + $0x94c] sm:$0xf]
        %v5414 = vld [vmem:[%s5 + $0x950] sm:$0xf]
        %v5415 = vld [vmem:[%s5 + $0x954] sm:$0xf]
        %v5416 = vld [vmem:[%s5 + $0x958] sm:$0xf]
        %v5417 = vld [vmem:[%s5 + $0x95c] sm:$0xf]
        %v5418 = vld [vmem:[%s5 + $0x960] sm:$0xf]
        %v5419 = vld [vmem:[%s5 + $0x964] sm:$0xf]
        %v5420 = vld [vmem:[%s5 + $0x968] sm:$0xf]
        %v5421 = vld [vmem:[%s5 + $0x96c] sm:$0xf]
        %v5422 = vld [vmem:[%s5 + $0x970] sm:$0xf]
        %v5423 = vld [vmem:[%s5 + $0x974] sm:$0xf]
        %v5424 = vld [vmem:[%s5 + $0x978] sm:$0xf]
        %v5425 = vld [vmem:[%s5 + $0x97c] sm:$0xf]
        %v5426 = vld [vmem:[%s5 + $0x980] sm:$0xf]
        %v5427 = vld [vmem:[%s5 + $0x984] sm:$0xf]
        %v5428 = vld [vmem:[%s5 + $0x988] sm:$0xf]
        %v5429 = vld [vmem:[%s5 + $0x98c] sm:$0xf]
        %v5430 = vld [vmem:[%s5 + $0x990] sm:$0xf]
        %v5431 = vld [vmem:[%s5 + $0x994] sm:$0xf]
        %v5432 = vld [vmem:[%s5 + $0x998] sm:$0xf]
        %v5433 = vld [vmem:[%s5 + $0x99c] sm:$0xf]
        %v5434 = vld [vmem:[%s5 + $0x9a0] sm:$0xf]
        %v5435 = vld [vmem:[%s5 + $0x9a4] sm:$0xf]
        %v5436 = vld [vmem:[%s5 + $0x9a8] sm:$0xf]
        %v5437 = vld [vmem:[%s5 + $0x9ac] sm:$0xf]
        %v5438 = vld [vmem:[%s5 + $0x9b0] sm:$0xf]
        %v5439 = vld [vmem:[%s5 + $0x9b4] sm:$0xf]
        %v5440 = vld [vmem:[%s5 + $0x9b8] sm:$0xf]
        %v5441 = vld [vmem:[%s5 + $0x9bc] sm:$0xf]
        %v5442 = vld [vmem:[%s5 + $0x9c0] sm:$0xf]
        %v5443 = vld [vmem:[%s5 + $0x9c4] sm:$0xf]
        %v5444 = vld [vmem:[%s5 + $0x9c8] sm:$0xf]
        %v5445 = vld [vmem:[%s5 + $0x9cc] sm:$0xf]
        %v5446 = vld [vmem:[%s5 + $0x9d0] sm:$0xf]
        %v5447 = vld [vmem:[%s5 + $0x9d4] sm:$0xf]
        %v5448 = vld [vmem:[%s5 + $0x9d8] sm:$0xf]
        %v5449 = vld [vmem:[%s5 + $0x9dc] sm:$0xf]
        %v5450 = vld [vmem:[%s5 + $0x9e0] sm:$0xf]
        %v5451 = vld [vmem:[%s5 + $0x9e4] sm:$0xf]
        %v5452 = vld [vmem:[%s5 + $0x9e8] sm:$0xf]
        %v5453 = vld [vmem:[%s5 + $0x9ec] sm:$0xf]
        %v5454 = vld [vmem:[%s5 + $0x9f0] sm:$0xf]
        %v5455 = vld [vmem:[%s5 + $0x9f4] sm:$0xf]
        %v5456 = vld [vmem:[%s5 + $0x9f8] sm:$0xf]
        %v5457 = vld [vmem:[%s5 + $0x9fc] sm:$0xf]
        %v5458 = vld [vmem:[%s5 + $0xa00] sm:$0xf]
        %v5459 = vld [vmem:[%s5 + $0xa04] sm:$0xf]
        %v5460 = vld [vmem:[%s5 + $0xa08] sm:$0xf]
        %v5461 = vld [vmem:[%s5 + $0xa0c] sm:$0xf]
        %v5462 = vld [vmem:[%s5 + $0xa10] sm:$0xf]
        %v5463 = vld [vmem:[%s5 + $0xa14] sm:$0xf]
        %v5464 = vld [vmem:[%s5 + $0xa18] sm:$0xf]
        %v5465 = vld [vmem:[%s5 + $0xa1c] sm:$0xf]
        %v5466 = vld [vmem:[%s6] sm:$0x1]
        %v5473 = vcombine.high %v4812, %v4812
        %v5475 = vunpack.c.l.s4 1966171168
        %v5476 = vunpack.c.0.s8 %v5475
        %v5477 = vlaneseq
        %v5478 = vshrl.u32 %v5477, 7
        %v5479 = vsub.s32 %v5476, %v5478
        %v5480 = vrot.slane %v4812, %v5479
        %v5482 = vunpack.c.l.s4 1966171168
        %v5483 = vunpack.c.0.s8 %v5482
        %v5484 = vlaneseq
        %v5485 = vshrl.u32 %v5484, 7
        %v5486 = vsub.s32 %v5483, %v5485
        %v5487 = vrot.slane %v5473, %v5486
        %v5488 = vcombine.high %v5480, %v5480
        %v5489 = vcombine.high %v5487, %v5487
        %v5491 = vunpack.c.l.s4 1966171168
        %v5492 = vunpack.c.0.s8 %v5491
        %v5493 = vlaneseq
        %v5494 = vshrl.u32 %v5493, 7
        %v5495 = vsub.s32 %v5492, %v5494
        %v5496 = vrot.slane %v5480, %v5495
        %v5498 = vunpack.c.l.s4 1966171168
        %v5499 = vunpack.c.0.s8 %v5498
        %v5500 = vlaneseq
        %v5501 = vshrl.u32 %v5500, 7
        %v5502 = vsub.s32 %v5499, %v5501
        %v5503 = vrot.slane %v5487, %v5502
        %v5505 = vunpack.c.l.s4 1966171168
        %v5506 = vunpack.c.0.s8 %v5505
        %v5507 = vlaneseq
        %v5508 = vshrl.u32 %v5507, 7
        %v5509 = vsub.s32 %v5506, %v5508
        %v5510 = vrot.slane %v5488, %v5509
        %v5512 = vunpack.c.l.s4 1966171168
        %v5513 = vunpack.c.0.s8 %v5512
        %v5514 = vlaneseq
        %v5515 = vshrl.u32 %v5514, 7
        %v5516 = vsub.s32 %v5513, %v5515
        %v5517 = vrot.slane %v5489, %v5516
        %v5518 = vcombine.high %v5496, %v5496
        %v5519 = vcombine.high %v5503, %v5503
        %v5520 = vcombine.high %v5510, %v5510
        %v5521 = vcombine.high %v5517, %v5517
        %v5522 = vcombine.high %v4813, %v4813
        %v5524 = vunpack.c.l.s4 1966171168
        %v5525 = vunpack.c.0.s8 %v5524
        %v5526 = vlaneseq
        %v5527 = vshrl.u32 %v5526, 7
        %v5528 = vsub.s32 %v5525, %v5527
        %v5529 = vrot.slane %v4813, %v5528
        %v5531 = vunpack.c.l.s4 1966171168
        %v5532 = vunpack.c.0.s8 %v5531
        %v5533 = vlaneseq
        %v5534 = vshrl.u32 %v5533, 7
        %v5535 = vsub.s32 %v5532, %v5534
        %v5536 = vrot.slane %v5522, %v5535
        %v5537 = vcombine.high %v5529, %v5529
        %v5538 = vcombine.high %v5536, %v5536
        %v5540 = vunpack.c.l.s4 1966171168
        %v5541 = vunpack.c.0.s8 %v5540
        %v5542 = vlaneseq
        %v5543 = vshrl.u32 %v5542, 7
        %v5544 = vsub.s32 %v5541, %v5543
        %v5545 = vrot.slane %v5529, %v5544
        %v5547 = vunpack.c.l.s4 1966171168
        %v5548 = vunpack.c.0.s8 %v5547
        %v5549 = vlaneseq
        %v5550 = vshrl.u32 %v5549, 7
        %v5551 = vsub.s32 %v5548, %v5550
        %v5552 = vrot.slane %v5536, %v5551
        %v5554 = vunpack.c.l.s4 1966171168
        %v5555 = vunpack.c.0.s8 %v5554
        %v5556 = vlaneseq
        %v5557 = vshrl.u32 %v5556, 7
        %v5558 = vsub.s32 %v5555, %v5557
        %v5559 = vrot.slane %v5537, %v5558
        %v5561 = vunpack.c.l.s4 1966171168
        %v5562 = vunpack.c.0.s8 %v5561
        %v5563 = vlaneseq
        %v5564 = vshrl.u32 %v5563, 7
        %v5565 = vsub.s32 %v5562, %v5564
        %v5566 = vrot.slane %v5538, %v5565
        %v5567 = vcombine.high %v5545, %v5545
        %v5568 = vcombine.high %v5552, %v5552
        %v5569 = vcombine.high %v5559, %v5559
        %v5570 = vcombine.high %v5566, %v5566
        %v5571 = vcombine.high %v4814, %v4814
        %v5573 = vunpack.c.l.s4 1966171168
        %v5574 = vunpack.c.0.s8 %v5573
        %v5575 = vlaneseq
        %v5576 = vshrl.u32 %v5575, 7
        %v5577 = vsub.s32 %v5574, %v5576
        %v5578 = vrot.slane %v4814, %v5577
        %v5580 = vunpack.c.l.s4 1966171168
        %v5581 = vunpack.c.0.s8 %v5580
        %v5582 = vlaneseq
        %v5583 = vshrl.u32 %v5582, 7
        %v5584 = vsub.s32 %v5581, %v5583
        %v5585 = vrot.slane %v5571, %v5584
        %v5586 = vcombine.high %v5578, %v5578
        %v5587 = vcombine.high %v5585, %v5585
        %v5589 = vunpack.c.l.s4 1966171168
        %v5590 = vunpack.c.0.s8 %v5589
        %v5591 = vlaneseq
        %v5592 = vshrl.u32 %v5591, 7
        %v5593 = vsub.s32 %v5590, %v5592
        %v5594 = vrot.slane %v5578, %v5593
        %v5596 = vunpack.c.l.s4 1966171168
        %v5597 = vunpack.c.0.s8 %v5596
        %v5598 = vlaneseq
        %v5599 = vshrl.u32 %v5598, 7
        %v5600 = vsub.s32 %v5597, %v5599
        %v5601 = vrot.slane %v5585, %v5600
        %v5603 = vunpack.c.l.s4 1966171168
        %v5604 = vunpack.c.0.s8 %v5603
        %v5605 = vlaneseq
        %v5606 = vshrl.u32 %v5605, 7
        %v5607 = vsub.s32 %v5604, %v5606
        %v5608 = vrot.slane %v5586, %v5607
        %v5610 = vunpack.c.l.s4 1966171168
        %v5611 = vunpack.c.0.s8 %v5610
        %v5612 = vlaneseq
        %v5613 = vshrl.u32 %v5612, 7
        %v5614 = vsub.s32 %v5611, %v5613
        %v5615 = vrot.slane %v5587, %v5614
        %v5616 = vcombine.high %v5594, %v5594
        %v5617 = vcombine.high %v5601, %v5601
        %v5618 = vcombine.high %v5608, %v5608
        %v5619 = vcombine.high %v5615, %v5615
        %v5620 = vcombine.high %v4815, %v4815
        %v5622 = vunpack.c.l.s4 1966171168
        %v5623 = vunpack.c.0.s8 %v5622
        %v5624 = vlaneseq
        %v5625 = vshrl.u32 %v5624, 7
        %v5626 = vsub.s32 %v5623, %v5625
        %v5627 = vrot.slane %v4815, %v5626
        %v5629 = vunpack.c.l.s4 1966171168
        %v5630 = vunpack.c.0.s8 %v5629
        %v5631 = vlaneseq
        %v5632 = vshrl.u32 %v5631, 7
        %v5633 = vsub.s32 %v5630, %v5632
        %v5634 = vrot.slane %v5620, %v5633
        %v5635 = vcombine.high %v5627, %v5627
        %v5636 = vcombine.high %v5634, %v5634
        %v5638 = vunpack.c.l.s4 1966171168
        %v5639 = vunpack.c.0.s8 %v5638
        %v5640 = vlaneseq
        %v5641 = vshrl.u32 %v5640, 7
        %v5642 = vsub.s32 %v5639, %v5641
        %v5643 = vrot.slane %v5627, %v5642
        %v5645 = vunpack.c.l.s4 1966171168
        %v5646 = vunpack.c.0.s8 %v5645
        %v5647 = vlaneseq
        %v5648 = vshrl.u32 %v5647, 7
        %v5649 = vsub.s32 %v5646, %v5648
        %v5650 = vrot.slane %v5634, %v5649
        %v5652 = vunpack.c.l.s4 1966171168
        %v5653 = vunpack.c.0.s8 %v5652
        %v5654 = vlaneseq
        %v5655 = vshrl.u32 %v5654, 7
        %v5656 = vsub.s32 %v5653, %v5655
        %v5657 = vrot.slane %v5635, %v5656
        %v5659 = vunpack.c.l.s4 1966171168
        %v5660 = vunpack.c.0.s8 %v5659
        %v5661 = vlaneseq
        %v5662 = vshrl.u32 %v5661, 7
        %v5663 = vsub.s32 %v5660, %v5662
        %v5664 = vrot.slane %v5636, %v5663
        %v5665 = vcombine.high %v5643, %v5643
        %v5666 = vcombine.high %v5650, %v5650
        %v5667 = vcombine.high %v5657, %v5657
        %v5668 = vcombine.high %v5664, %v5664
        %v5669 = vcombine.high %v4816, %v4816
        %v5671 = vunpack.c.l.s4 1966171168
        %v5672 = vunpack.c.0.s8 %v5671
        %v5673 = vlaneseq
        %v5674 = vshrl.u32 %v5673, 7
        %v5675 = vsub.s32 %v5672, %v5674
        %v5676 = vrot.slane %v4816, %v5675
        %v5678 = vunpack.c.l.s4 1966171168
        %v5679 = vunpack.c.0.s8 %v5678
        %v5680 = vlaneseq
        %v5681 = vshrl.u32 %v5680, 7
        %v5682 = vsub.s32 %v5679, %v5681
        %v5683 = vrot.slane %v5669, %v5682
        %v5684 = vcombine.high %v5676, %v5676
        %v5685 = vcombine.high %v5683, %v5683
        %v5687 = vunpack.c.l.s4 1966171168
        %v5688 = vunpack.c.0.s8 %v5687
        %v5689 = vlaneseq
        %v5690 = vshrl.u32 %v5689, 7
        %v5691 = vsub.s32 %v5688, %v5690
        %v5692 = vrot.slane %v5676, %v5691
        %v5694 = vunpack.c.l.s4 1966171168
        %v5695 = vunpack.c.0.s8 %v5694
        %v5696 = vlaneseq
        %v5697 = vshrl.u32 %v5696, 7
        %v5698 = vsub.s32 %v5695, %v5697
        %v5699 = vrot.slane %v5683, %v5698
        %v5701 = vunpack.c.l.s4 1966171168
        %v5702 = vunpack.c.0.s8 %v5701
        %v5703 = vlaneseq
        %v5704 = vshrl.u32 %v5703, 7
        %v5705 = vsub.s32 %v5702, %v5704
        %v5706 = vrot.slane %v5684, %v5705
        %v5708 = vunpack.c.l.s4 1966171168
        %v5709 = vunpack.c.0.s8 %v5708
        %v5710 = vlaneseq
        %v5711 = vshrl.u32 %v5710, 7
        %v5712 = vsub.s32 %v5709, %v5711
        %v5713 = vrot.slane %v5685, %v5712
        %v5714 = vcombine.high %v5692, %v5692
        %v5715 = vcombine.high %v5699, %v5699
        %v5716 = vcombine.high %v5706, %v5706
        %v5717 = vcombine.high %v5713, %v5713
        %v5719 = vunpack.c.l.s4 1966171168
        %v5720 = vunpack.c.0.s8 %v5719
        %v5721 = vlaneseq
        %v5722 = vshrl.u32 %v5721, 7
        %v5723 = vsub.s32 %v5720, %v5722
        %v5724 = vrot.slane %v4817, %v5723
        %v5726 = vunpack.c.l.s4 1966171168
        %v5727 = vunpack.c.0.s8 %v5726
        %v5728 = vlaneseq
        %v5729 = vshrl.u32 %v5728, 7
        %v5730 = vsub.s32 %v5727, %v5729
        %v5731 = vrot.slane %v5724, %v5730
        %v6420 = vunpack.c.l.b16 %v4818
        %v6421 = vunpack.c.l.b16 %v4819
        %v6422 = vunpack.c.l.b16 %v4820
        %v6423 = vunpack.c.l.b16 %v4821
        %v6424 = vunpack.c.l.b16 %v4822
        %v6425 = vunpack.c.l.b16 %v4823
        %v6426 = vunpack.c.l.b16 %v4824
        %v6427 = vunpack.c.l.b16 %v4825
        %v6428 = vunpack.c.l.b16 %v4826
        %v6429 = vunpack.c.l.b16 %v4827
        %v6430 = vunpack.c.l.b16 %v4828
        %v6431 = vunpack.c.l.b16 %v4829
        %v6432 = vunpack.c.l.b16 %v4830
        %v6433 = vunpack.c.l.b16 %v4831
        %v6434 = vunpack.c.l.b16 %v4832
        %v6435 = vunpack.c.l.b16 %v4833
        %v6436 = vunpack.c.l.b16 %v4834
        %v6437 = vunpack.c.l.b16 %v4835
        %v6438 = vunpack.c.l.b16 %v4836
        %v6439 = vunpack.c.l.b16 %v4837
        %v6440 = vunpack.c.l.b16 %v4838
        %v6441 = vunpack.c.l.b16 %v4839
        %v6442 = vunpack.c.l.b16 %v4840
        %v6443 = vunpack.c.l.b16 %v4841
        %v6444 = vunpack.c.l.b16 %v4842
        %v6445 = vunpack.c.l.b16 %v4843
        %v6446 = vunpack.c.l.b16 %v4844
        %v6447 = vunpack.c.l.b16 %v4845
        %v6448 = vunpack.c.l.b16 %v4846
        %v6449 = vunpack.c.l.b16 %v4847
        %v6450 = vunpack.c.l.b16 %v4848
        %v6451 = vunpack.c.l.b16 %v4849
        %v6452 = vunpack.c.l.b16 %v4850
        %v6453 = vunpack.c.l.b16 %v4851
        %v6454 = vunpack.c.l.b16 %v4852
        %v6455 = vunpack.c.l.b16 %v4853
        %v6456 = vunpack.c.l.b16 %v4854
        %v6457 = vunpack.c.l.b16 %v4855
        %v6458 = vunpack.c.l.b16 %v4856
        %v6459 = vunpack.c.l.b16 %v4857
        %v6460 = vunpack.c.l.b16 %v4858
        %v6461 = vunpack.c.l.b16 %v4859
        %v6462 = vunpack.c.l.b16 %v4860
        %v6463 = vunpack.c.l.b16 %v4861
        %v6464 = vunpack.c.l.b16 %v4862
        %v6465 = vunpack.c.l.b16 %v4863
        %v6466 = vunpack.c.l.b16 %v4864
        %v6467 = vunpack.c.l.b16 %v4865
        %v6468 = vunpack.c.l.b16 %v4866
        %v6469 = vunpack.c.l.b16 %v4867
        %v6470 = vunpack.c.l.b16 %v4868
        %v6471 = vunpack.c.l.b16 %v4869
        %v6472 = vunpack.c.l.b16 %v4870
        %v6473 = vunpack.c.l.b16 %v4871
        %v6474 = vunpack.c.l.b16 %v4872
        %v6475 = vunpack.c.l.b16 %v4873
        %v6476 = vunpack.c.l.b16 %v4874
        %v6477 = vunpack.c.l.b16 %v4875
        %v6478 = vunpack.c.l.b16 %v4876
        %v6479 = vunpack.c.l.b16 %v4877
        %v6480 = vunpack.c.l.b16 %v4878
        %v6481 = vunpack.c.l.b16 %v4879
        %v6482 = vunpack.c.l.b16 %v4880
        %v6483 = vunpack.c.l.b16 %v4881
        %v6484 = vunpack.c.l.b16 %v4882
        %v6485 = vunpack.c.l.b16 %v4883
        %v6486 = vunpack.c.l.b16 %v4884
        %v6487 = vunpack.c.l.b16 %v4885
        %v6488 = vunpack.c.l.b16 %v4886
        %v6489 = vunpack.c.l.b16 %v4887
        %v6490 = vunpack.c.l.b16 %v4888
        %v6491 = vunpack.c.l.b16 %v4889
        %v6492 = vunpack.c.l.b16 %v4890
        %v6493 = vunpack.c.l.b16 %v4891
        %v6494 = vunpack.c.l.b16 %v4892
        %v6495 = vunpack.c.l.b16 %v4893
        %v6496 = vunpack.c.l.b16 %v4894
        %v6497 = vunpack.c.l.b16 %v4895
        %v6498 = vunpack.c.l.b16 %v4896
        %v6499 = vunpack.c.l.b16 %v4897
        %v6500 = vunpack.c.l.b16 %v4898
        %v6501 = vunpack.c.l.b16 %v4899
        %v6502 = vunpack.c.l.b16 %v4900
        %v6503 = vunpack.c.l.b16 %v4901
        %v6504 = vunpack.c.l.b16 %v4902
        %v6505 = vunpack.c.l.b16 %v4903
        %v6506 = vunpack.c.l.b16 %v4904
        %v6507 = vunpack.c.l.b16 %v4905
        %v6508 = vunpack.c.l.b16 %v4906
        %v6509 = vunpack.c.l.b16 %v4907
        %v6510 = vunpack.c.l.b16 %v4908
        %v6511 = vunpack.c.l.b16 %v4909
        %v6512 = vunpack.c.l.b16 %v4910
        %v6513 = vunpack.c.l.b16 %v4911
        %v6514 = vunpack.c.l.b16 %v4912
        %v6515 = vunpack.c.l.b16 %v4913
        %v6516 = vunpack.c.l.b16 %v4914
        %v6517 = vunpack.c.l.b16 %v4915
        %v6518 = vunpack.c.l.b16 %v4916
        %v6519 = vunpack.c.l.b16 %v4917
        %v6520 = vunpack.c.l.b16 %v4918
        %v6521 = vunpack.c.l.b16 %v4919
        %v6522 = vunpack.c.l.b16 %v4920
        %v6523 = vunpack.c.l.b16 %v4921
        %v6524 = vunpack.c.l.b16 %v4922
        %v6525 = vunpack.c.l.b16 %v4923
        %v6526 = vunpack.c.l.b16 %v4924
        %v6527 = vunpack.c.l.b16 %v4925
        %v6528 = vunpack.c.l.b16 %v4926
        %v6529 = vunpack.c.l.b16 %v4927
        %v6530 = vunpack.c.l.b16 %v4928
        %v6531 = vunpack.c.l.b16 %v4929
        %v6532 = vunpack.c.l.b16 %v4930
        %v6533 = vunpack.c.l.b16 %v4931
        %v6534 = vunpack.c.l.b16 %v4932
        %v6535 = vunpack.c.l.b16 %v4933
        %v6536 = vunpack.c.l.b16 %v4934
        %v6537 = vunpack.c.l.b16 %v4935
        %v6538 = vunpack.c.l.b16 %v4936
        %v6539 = vunpack.c.l.b16 %v4937
        %v6540 = vunpack.c.l.b16 %v4938
        %v6541 = vunpack.c.l.b16 %v4939
        %v6542 = vunpack.c.l.b16 %v4940
        %v6543 = vunpack.c.l.b16 %v4941
        %v6544 = vunpack.c.l.b16 %v4942
        %v6545 = vunpack.c.l.b16 %v4943
        %v6546 = vunpack.c.l.b16 %v4944
        %v6547 = vunpack.c.l.b16 %v4945
        %v6548 = vunpack.c.l.b16 %v4946
        %v6549 = vunpack.c.l.b16 %v4947
        %v6550 = vunpack.c.l.b16 %v4948
        %v6551 = vunpack.c.l.b16 %v4949
        %v6552 = vunpack.c.l.b16 %v4950
        %v6553 = vunpack.c.l.b16 %v4951
        %v6554 = vunpack.c.l.b16 %v4952
        %v6555 = vunpack.c.l.b16 %v4953
        %v6556 = vunpack.c.l.b16 %v4954
        %v6557 = vunpack.c.l.b16 %v4955
        %v6558 = vunpack.c.l.b16 %v4956
        %v6559 = vunpack.c.l.b16 %v4957
        %v6560 = vunpack.c.l.b16 %v4958
        %v6561 = vunpack.c.l.b16 %v4959
        %v6562 = vunpack.c.l.b16 %v4960
        %v6563 = vunpack.c.l.b16 %v4961
        %v6564 = vunpack.c.l.b16 %v4962
        %v6565 = vunpack.c.l.b16 %v4963
        %v6566 = vunpack.c.l.b16 %v4964
        %v6567 = vunpack.c.l.b16 %v4965
        %v6568 = vunpack.c.l.b16 %v4966
        %v6569 = vunpack.c.l.b16 %v4967
        %v6570 = vunpack.c.l.b16 %v4968
        %v6571 = vunpack.c.l.b16 %v4969
        %v6572 = vunpack.c.l.b16 %v4970
        %v6573 = vunpack.c.l.b16 %v4971
        %v6574 = vunpack.c.l.b16 %v4972
        %v6575 = vunpack.c.l.b16 %v4973
        %v6576 = vunpack.c.l.b16 %v4974
        %v6577 = vunpack.c.l.b16 %v4975
        %v6578 = vunpack.c.l.b16 %v4976
        %v6579 = vunpack.c.l.b16 %v4977
        %v6580 = vunpack.c.l.b16 %v4978
        %v6581 = vunpack.c.l.b16 %v4979
        %v6582 = vunpack.c.l.b16 %v4980
        %v6583 = vunpack.c.l.b16 %v4981
        %v6584 = vunpack.c.l.b16 %v4982
        %v6585 = vunpack.c.l.b16 %v4983
        %v6586 = vunpack.c.l.b16 %v4984
        %v6587 = vunpack.c.l.b16 %v4985
        %v6588 = vunpack.c.l.b16 %v4986
        %v6589 = vunpack.c.l.b16 %v4987
        %v6590 = vunpack.c.l.b16 %v4988
        %v6591 = vunpack.c.l.b16 %v4989
        %v6592 = vunpack.c.l.b16 %v4990
        %v6593 = vunpack.c.l.b16 %v4991
        %v6594 = vunpack.c.l.b16 %v4992
        %v6595 = vunpack.c.l.b16 %v4993
        %v6596 = vunpack.c.l.b16 %v4994
        %v6597 = vunpack.c.l.b16 %v4995
        %v6598 = vunpack.c.l.b16 %v4996
        %v6599 = vunpack.c.l.b16 %v4997
        %v6600 = vunpack.c.l.b16 %v4998
        %v6601 = vunpack.c.l.b16 %v4999
        %v6602 = vunpack.c.l.b16 %v5000
        %v6603 = vunpack.c.l.b16 %v5001
        %v6604 = vunpack.c.l.b16 %v5002
        %v6605 = vunpack.c.l.b16 %v5003
        %v6606 = vunpack.c.l.b16 %v5004
        %v6607 = vunpack.c.l.b16 %v5005
        %v6608 = vunpack.c.l.b16 %v5006
        %v6609 = vunpack.c.l.b16 %v5007
        %v6610 = vunpack.c.l.b16 %v5008
        %v6611 = vunpack.c.l.b16 %v5009
        %v6612 = vunpack.c.l.b16 %v5010
        %v6613 = vunpack.c.l.b16 %v5011
        %v6614 = vunpack.c.l.b16 %v5012
        %v6615 = vunpack.c.l.b16 %v5013
        %v6616 = vunpack.c.l.b16 %v5014
        %v6617 = vunpack.c.l.b16 %v5015
        %v6618 = vunpack.c.l.b16 %v5016
        %v6619 = vunpack.c.l.b16 %v5017
        %v6620 = vunpack.c.l.b16 %v5018
        %v6621 = vunpack.c.l.b16 %v5019
        %v6622 = vunpack.c.l.b16 %v5020
        %v6623 = vunpack.c.l.b16 %v5021
        %v6624 = vunpack.c.l.b16 %v5022
        %v6625 = vunpack.c.l.b16 %v5023
        %v6626 = vunpack.c.l.b16 %v5024
        %v6627 = vunpack.c.l.b16 %v5025
        %v6628 = vunpack.c.l.b16 %v5026
        %v6629 = vunpack.c.l.b16 %v5027
        %v6630 = vunpack.c.l.b16 %v5028
        %v6631 = vunpack.c.l.b16 %v5029
        %v6632 = vunpack.c.l.b16 %v5030
        %v6633 = vunpack.c.l.b16 %v5031
        %v6634 = vunpack.c.l.b16 %v5032
        %v6635 = vunpack.c.l.b16 %v5033
        %v6636 = vunpack.c.l.b16 %v5034
        %v6637 = vunpack.c.l.b16 %v5035
        %v6638 = vunpack.c.l.b16 %v5036
        %v6639 = vunpack.c.l.b16 %v5037
        %v6640 = vunpack.c.l.b16 %v5038
        %v6641 = vunpack.c.l.b16 %v5039
        %v6642 = vunpack.c.l.b16 %v5040
        %v6643 = vunpack.c.l.b16 %v5041
        %v6644 = vunpack.c.l.b16 %v5042
        %v6645 = vunpack.c.l.b16 %v5043
        %v6646 = vunpack.c.l.b16 %v5044
        %v6647 = vunpack.c.l.b16 %v5045
        %v6648 = vunpack.c.l.b16 %v5046
        %v6649 = vunpack.c.l.b16 %v5047
        %v6650 = vunpack.c.l.b16 %v5048
        %v6651 = vunpack.c.l.b16 %v5049
        %v6652 = vunpack.c.l.b16 %v5050
        %v6653 = vunpack.c.l.b16 %v5051
        %v6654 = vunpack.c.l.b16 %v5052
        %v6655 = vunpack.c.l.b16 %v5053
        %v6656 = vunpack.c.l.b16 %v5054
        %v6657 = vunpack.c.l.b16 %v5055
        %v6658 = vunpack.c.l.b16 %v5056
        %v6659 = vunpack.c.l.b16 %v5057
        %v6660 = vunpack.c.l.b16 %v5058
        %v6661 = vunpack.c.l.b16 %v5059
        %v6662 = vunpack.c.l.b16 %v5060
        %v6663 = vunpack.c.l.b16 %v5061
        %v6664 = vunpack.c.l.b16 %v5062
        %v6665 = vunpack.c.l.b16 %v5063
        %v6666 = vunpack.c.l.b16 %v5064
        %v6667 = vunpack.c.l.b16 %v5065
        %v6668 = vunpack.c.l.b16 %v5066
        %v6669 = vunpack.c.l.b16 %v5067
        %v6670 = vunpack.c.l.b16 %v5068
        %v6671 = vunpack.c.l.b16 %v5069
        %v6672 = vunpack.c.l.b16 %v5070
        %v6673 = vunpack.c.l.b16 %v5071
        %v6674 = vunpack.c.l.b16 %v5072
        %v6675 = vunpack.c.l.b16 %v5073
        %v6676 = vunpack.c.l.b16 %v5074
        %v6677 = vunpack.c.l.b16 %v5075
        %v6678 = vunpack.c.l.b16 %v5076
        %v6679 = vunpack.c.l.b16 %v5077
        %v6680 = vunpack.c.l.b16 %v5078
        %v6681 = vunpack.c.l.b16 %v5079
        %v6682 = vunpack.c.l.b16 %v5080
        %v6683 = vunpack.c.l.b16 %v5081
        %v6684 = vunpack.c.l.b16 %v5082
        %v6685 = vunpack.c.l.b16 %v5083
        %v6686 = vunpack.c.l.b16 %v5084
        %v6687 = vunpack.c.l.b16 %v5085
        %v6688 = vunpack.c.l.b16 %v5086
        %v6689 = vunpack.c.l.b16 %v5087
        %v6690 = vunpack.c.l.b16 %v5088
        %v6691 = vunpack.c.l.b16 %v5089
        %v6692 = vunpack.c.l.b16 %v5090
        %v6693 = vunpack.c.l.b16 %v5091
        %v6694 = vunpack.c.l.b16 %v5092
        %v6695 = vunpack.c.l.b16 %v5093
        %v6696 = vunpack.c.l.b16 %v5094
        %v6697 = vunpack.c.l.b16 %v5095
        %v6698 = vunpack.c.l.b16 %v5096
        %v6699 = vunpack.c.l.b16 %v5097
        %v6700 = vunpack.c.l.b16 %v5098
        %v6701 = vunpack.c.l.b16 %v5099
        %v6702 = vunpack.c.l.b16 %v5100
        %v6703 = vunpack.c.l.b16 %v5101
        %v6704 = vunpack.c.l.b16 %v5102
        %v6705 = vunpack.c.l.b16 %v5103
        %v6706 = vunpack.c.l.b16 %v5104
        %v6707 = vunpack.c.l.b16 %v5105
        %v6708 = vunpack.c.l.b16 %v5106
        %v6709 = vunpack.c.l.b16 %v5107
        %v6710 = vunpack.c.l.b16 %v5108
        %v6711 = vunpack.c.l.b16 %v5109
        %v6712 = vunpack.c.l.b16 %v5110
        %v6713 = vunpack.c.l.b16 %v5111
        %v6714 = vunpack.c.l.b16 %v5112
        %v6715 = vunpack.c.l.b16 %v5113
        %v6716 = vunpack.c.l.b16 %v5114
        %v6717 = vunpack.c.l.b16 %v5115
        %v6718 = vunpack.c.l.b16 %v5116
        %v6719 = vunpack.c.l.b16 %v5117
        %v6720 = vunpack.c.l.b16 %v5118
        %v6721 = vunpack.c.l.b16 %v5119
        %v6722 = vunpack.c.l.b16 %v5120
        %v6723 = vunpack.c.l.b16 %v5121
        %v6724 = vunpack.c.l.b16 %v5122
        %v6725 = vunpack.c.l.b16 %v5123
        %v6726 = vunpack.c.l.b16 %v5124
        %v6727 = vunpack.c.l.b16 %v5125
        %v6728 = vunpack.c.l.b16 %v5126
        %v6729 = vunpack.c.l.b16 %v5127
        %v6730 = vunpack.c.l.b16 %v5128
        %v6731 = vunpack.c.l.b16 %v5129
        %v6732 = vunpack.c.l.b16 %v5130
        %v6733 = vunpack.c.l.b16 %v5131
        %v6734 = vunpack.c.l.b16 %v5132
        %v6735 = vunpack.c.l.b16 %v5133
        %v6736 = vunpack.c.l.b16 %v5134
        %v6737 = vunpack.c.l.b16 %v5135
        %v6738 = vunpack.c.l.b16 %v5136
        %v6739 = vunpack.c.l.b16 %v5137
        %v6740 = vunpack.c.l.b16 %v5138
        %v6741 = vunpack.c.l.b16 %v5139
        %v6742 = vunpack.c.l.b16 %v5140
        %v6743 = vunpack.c.l.b16 %v5141
        %v6744 = vunpack.c.l.b16 %v5142
        %v6745 = vunpack.c.l.b16 %v5143
        %v6746 = vunpack.c.l.b16 %v5144
        %v6747 = vunpack.c.l.b16 %v5145
        %v6748 = vunpack.c.l.b16 %v5146
        %v6749 = vunpack.c.l.b16 %v5147
        %v6750 = vunpack.c.l.b16 %v5148
        %v6751 = vunpack.c.l.b16 %v5149
        %v6752 = vunpack.c.l.b16 %v5150
        %v6753 = vunpack.c.l.b16 %v5151
        %v6754 = vunpack.c.l.b16 %v5152
        %v6755 = vunpack.c.l.b16 %v5153
        %v6756 = vunpack.c.l.b16 %v5154
        %v6757 = vunpack.c.l.b16 %v5155
        %v6758 = vunpack.c.l.b16 %v5156
        %v6759 = vunpack.c.l.b16 %v5157
        %v6760 = vunpack.c.l.b16 %v5158
        %v6761 = vunpack.c.l.b16 %v5159
        %v6762 = vunpack.c.l.b16 %v5160
        %v6763 = vunpack.c.l.b16 %v5161
        %v6764 = vunpack.c.l.b16 %v5162
        %v6765 = vunpack.c.l.b16 %v5163
        %v6766 = vunpack.c.l.b16 %v5164
        %v6767 = vunpack.c.l.b16 %v5165
        %v6768 = vunpack.c.l.b16 %v5166
        %v6769 = vunpack.c.l.b16 %v5167
        %v6770 = vunpack.c.l.b16 %v5168
        %v6771 = vunpack.c.l.b16 %v5169
        %v6772 = vunpack.c.l.b16 %v5170
        %v6773 = vunpack.c.l.b16 %v5171
        %v6774 = vunpack.c.l.b16 %v5172
        %v6775 = vunpack.c.l.b16 %v5173
        %v6776 = vunpack.c.l.b16 %v5174
        %v6777 = vunpack.c.l.b16 %v5175
        %v6778 = vunpack.c.l.b16 %v5176
        %v6779 = vunpack.c.l.b16 %v5177
        %v6780 = vunpack.c.l.b16 %v5178
        %v6781 = vunpack.c.l.b16 %v5179
        %v6782 = vunpack.c.l.b16 %v5180
        %v6783 = vunpack.c.l.b16 %v5181
        %v6784 = vunpack.c.l.b16 %v5182
        %v6785 = vunpack.c.l.b16 %v5183
        %v6786 = vunpack.c.l.b16 %v5184
        %v6787 = vunpack.c.l.b16 %v5185
        %v6788 = vunpack.c.l.b16 %v5186
        %v6789 = vunpack.c.l.b16 %v5187
        %v6790 = vunpack.c.l.b16 %v5188
        %v6791 = vunpack.c.l.b16 %v5189
        %v6792 = vunpack.c.l.b16 %v5190
        %v6793 = vunpack.c.l.b16 %v5191
        %v6794 = vunpack.c.l.b16 %v5192
        %v6795 = vunpack.c.l.b16 %v5193
        %v6796 = vunpack.c.l.b16 %v5194
        %v6797 = vunpack.c.l.b16 %v5195
        %v6798 = vunpack.c.l.b16 %v5196
        %v6799 = vunpack.c.l.b16 %v5197
        %v6800 = vunpack.c.l.b16 %v5198
        %v6801 = vunpack.c.l.b16 %v5199
        %v6802 = vunpack.c.l.b16 %v5200
        %v6803 = vunpack.c.l.b16 %v5201
        %v6804 = vunpack.c.l.b16 %v5202
        %v6805 = vunpack.c.l.b16 %v5203
        %v6806 = vunpack.c.l.b16 %v5204
        %v6807 = vunpack.c.l.b16 %v5205
        %v6808 = vunpack.c.l.b16 %v5206
        %v6809 = vunpack.c.l.b16 %v5207
        %v6810 = vunpack.c.l.b16 %v5208
        %v6811 = vunpack.c.l.b16 %v5209
        %v6812 = vunpack.c.l.b16 %v5210
        %v6813 = vunpack.c.l.b16 %v5211
        %v6814 = vunpack.c.l.b16 %v5212
        %v6815 = vunpack.c.l.b16 %v5213
        %v6816 = vunpack.c.l.b16 %v5214
        %v6817 = vunpack.c.l.b16 %v5215
        %v6818 = vunpack.c.l.b16 %v5216
        %v6819 = vunpack.c.l.b16 %v5217
        %v6820 = vunpack.c.l.b16 %v5218
        %v6821 = vunpack.c.l.b16 %v5219
        %v6822 = vunpack.c.l.b16 %v5220
        %v6823 = vunpack.c.l.b16 %v5221
        %v6824 = vunpack.c.l.b16 %v5222
        %v6825 = vunpack.c.l.b16 %v5223
        %v6826 = vunpack.c.l.b16 %v5224
        %v6827 = vunpack.c.l.b16 %v5225
        %v6828 = vunpack.c.l.b16 %v5226
        %v6829 = vunpack.c.l.b16 %v5227
        %v6830 = vunpack.c.l.b16 %v5228
        %v6831 = vunpack.c.l.b16 %v5229
        %v6832 = vunpack.c.l.b16 %v5230
        %v6833 = vunpack.c.l.b16 %v5231
        %v6834 = vunpack.c.l.b16 %v5232
        %v6835 = vunpack.c.l.b16 %v5233
        %v6836 = vunpack.c.l.b16 %v5234
        %v6837 = vunpack.c.l.b16 %v5235
        %v6838 = vunpack.c.l.b16 %v5236
        %v6839 = vunpack.c.l.b16 %v5237
        %v6840 = vunpack.c.l.b16 %v5238
        %v6841 = vunpack.c.l.b16 %v5239
        %v6842 = vunpack.c.l.b16 %v5240
        %v6843 = vunpack.c.l.b16 %v5241
        %v6844 = vunpack.c.l.b16 %v5242
        %v6845 = vunpack.c.l.b16 %v5243
        %v6846 = vunpack.c.l.b16 %v5244
        %v6847 = vunpack.c.l.b16 %v5245
        %v6848 = vunpack.c.l.b16 %v5246
        %v6849 = vunpack.c.l.b16 %v5247
        %v6850 = vunpack.c.l.b16 %v5248
        %v6851 = vunpack.c.l.b16 %v5249
        %v6852 = vunpack.c.l.b16 %v5250
        %v6853 = vunpack.c.l.b16 %v5251
        %v6854 = vunpack.c.l.b16 %v5252
        %v6855 = vunpack.c.l.b16 %v5253
        %v6856 = vunpack.c.l.b16 %v5254
        %v6857 = vunpack.c.l.b16 %v5255
        %v6858 = vunpack.c.l.b16 %v5256
        %v6859 = vunpack.c.l.b16 %v5257
        %v6860 = vunpack.c.l.b16 %v5258
        %v6861 = vunpack.c.l.b16 %v5259
        %v6862 = vunpack.c.l.b16 %v5260
        %v6863 = vunpack.c.l.b16 %v5261
        %v6864 = vunpack.c.l.b16 %v5262
        %v6865 = vunpack.c.l.b16 %v5263
        %v6866 = vunpack.c.l.b16 %v5264
        %v6867 = vunpack.c.l.b16 %v5265
        %v6868 = vunpack.c.l.b16 %v5266
        %v6869 = vunpack.c.l.b16 %v5267
        %v6870 = vunpack.c.l.b16 %v5268
        %v6871 = vunpack.c.l.b16 %v5269
        %v6872 = vunpack.c.l.b16 %v5270
        %v6873 = vunpack.c.l.b16 %v5271
        %v6874 = vunpack.c.l.b16 %v5272
        %v6875 = vunpack.c.l.b16 %v5273
        %v6876 = vunpack.c.l.b16 %v5274
        %v6877 = vunpack.c.l.b16 %v5275
        %v6878 = vunpack.c.l.b16 %v5276
        %v6879 = vunpack.c.l.b16 %v5277
        %v6880 = vunpack.c.l.b16 %v5278
        %v6881 = vunpack.c.l.b16 %v5279
        %v6882 = vunpack.c.l.b16 %v5280
        %v6883 = vunpack.c.l.b16 %v5281
        %v6884 = vunpack.c.l.b16 %v5282
        %v6885 = vunpack.c.l.b16 %v5283
        %v6886 = vunpack.c.l.b16 %v5284
        %v6887 = vunpack.c.l.b16 %v5285
        %v6888 = vunpack.c.l.b16 %v5286
        %v6889 = vunpack.c.l.b16 %v5287
        %v6890 = vunpack.c.l.b16 %v5288
        %v6891 = vunpack.c.l.b16 %v5289
        %v6892 = vunpack.c.l.b16 %v5290
        %v6893 = vunpack.c.l.b16 %v5291
        %v6894 = vunpack.c.l.b16 %v5292
        %v6895 = vunpack.c.l.b16 %v5293
        %v6896 = vunpack.c.l.b16 %v5294
        %v6897 = vunpack.c.l.b16 %v5295
        %v6898 = vunpack.c.l.b16 %v5296
        %v6899 = vunpack.c.l.b16 %v5297
        %v6900 = vunpack.c.l.b16 %v5298
        %v6901 = vunpack.c.l.b16 %v5299
        %v6902 = vunpack.c.l.b16 %v5300
        %v6903 = vunpack.c.l.b16 %v5301
        %v6904 = vunpack.c.l.b16 %v5302
        %v6905 = vunpack.c.l.b16 %v5303
        %v6906 = vunpack.c.l.b16 %v5304
        %v6907 = vunpack.c.l.b16 %v5305
        %v6908 = vunpack.c.l.b16 %v5306
        %v6909 = vunpack.c.l.b16 %v5307
        %v6910 = vunpack.c.l.b16 %v5308
        %v6911 = vunpack.c.l.b16 %v5309
        %v6912 = vunpack.c.l.b16 %v5310
        %v6913 = vunpack.c.l.b16 %v5311
        %v6914 = vunpack.c.l.b16 %v5312
        %v6915 = vunpack.c.l.b16 %v5313
        %v6916 = vunpack.c.l.b16 %v5314
        %v6917 = vunpack.c.l.b16 %v5315
        %v6918 = vunpack.c.l.b16 %v5316
        %v6919 = vunpack.c.l.b16 %v5317
        %v6920 = vunpack.c.l.b16 %v5318
        %v6921 = vunpack.c.l.b16 %v5319
        %v6922 = vunpack.c.l.b16 %v5320
        %v6923 = vunpack.c.l.b16 %v5321
        %v6924 = vunpack.c.l.b16 %v5322
        %v6925 = vunpack.c.l.b16 %v5323
        %v6926 = vunpack.c.l.b16 %v5324
        %v6927 = vunpack.c.l.b16 %v5325
        %v6928 = vunpack.c.l.b16 %v5326
        %v6929 = vunpack.c.l.b16 %v5327
        %v6930 = vunpack.c.l.b16 %v5328
        %v6931 = vunpack.c.l.b16 %v5329
        %v6932 = vunpack.c.l.b16 %v5330
        %v6933 = vunpack.c.l.b16 %v5331
        %v6934 = vunpack.c.l.b16 %v5332
        %v6935 = vunpack.c.l.b16 %v5333
        %v6936 = vunpack.c.l.b16 %v5334
        %v6937 = vunpack.c.l.b16 %v5335
        %v6938 = vunpack.c.l.b16 %v5336
        %v6939 = vunpack.c.l.b16 %v5337
        %v6940 = vunpack.c.l.b16 %v5338
        %v6941 = vunpack.c.l.b16 %v5339
        %v6942 = vunpack.c.l.b16 %v5340
        %v6943 = vunpack.c.l.b16 %v5341
        %v6944 = vunpack.c.l.b16 %v5342
        %v6945 = vunpack.c.l.b16 %v5343
        %v6946 = vunpack.c.l.b16 %v5344
        %v6947 = vunpack.c.l.b16 %v5345
        %v6948 = vunpack.c.l.b16 %v5346
        %v6949 = vunpack.c.l.b16 %v5347
        %v6950 = vunpack.c.l.b16 %v5348
        %v6951 = vunpack.c.l.b16 %v5349
        %v6952 = vunpack.c.l.b16 %v5350
        %v6953 = vunpack.c.l.b16 %v5351
        %v6954 = vunpack.c.l.b16 %v5352
        %v6955 = vunpack.c.l.b16 %v5353
        %v6956 = vunpack.c.l.b16 %v5354
        %v6957 = vunpack.c.l.b16 %v5355
        %v6958 = vunpack.c.l.b16 %v5356
        %v6959 = vunpack.c.l.b16 %v5357
        %v6960 = vunpack.c.l.b16 %v5358
        %v6961 = vunpack.c.l.b16 %v5359
        %v6962 = vunpack.c.l.b16 %v5360
        %v6963 = vunpack.c.l.b16 %v5361
        %v6964 = vunpack.c.l.b16 %v5362
        %v6965 = vunpack.c.l.b16 %v5363
        %v6966 = vunpack.c.l.b16 %v5364
        %v6967 = vunpack.c.l.b16 %v5365
        %v6968 = vunpack.c.l.b16 %v5366
        %v6969 = vunpack.c.l.b16 %v5367
        %v6970 = vunpack.c.l.b16 %v5368
        %v6971 = vunpack.c.l.b16 %v5369
        %v6972 = vunpack.c.l.b16 %v5370
        %v6973 = vunpack.c.l.b16 %v5371
        %v6974 = vunpack.c.l.b16 %v5372
        %v6975 = vunpack.c.l.b16 %v5373
        %v6976 = vunpack.c.l.b16 %v5374
        %v6977 = vunpack.c.l.b16 %v5375
        %v6978 = vunpack.c.l.b16 %v5376
        %v6979 = vunpack.c.l.b16 %v5377
        %v6980 = vunpack.c.l.b16 %v5378
        %v6981 = vunpack.c.l.b16 %v5379
        %v6982 = vunpack.c.l.b16 %v5380
        %v6983 = vunpack.c.l.b16 %v5381
        %v6984 = vunpack.c.l.b16 %v5382
        %v6985 = vunpack.c.l.b16 %v5383
        %v6986 = vunpack.c.l.b16 %v5384
        %v6987 = vunpack.c.l.b16 %v5385
        %v6988 = vunpack.c.l.b16 %v5386
        %v6989 = vunpack.c.l.b16 %v5387
        %v6990 = vunpack.c.l.b16 %v5388
        %v6991 = vunpack.c.l.b16 %v5389
        %v6992 = vunpack.c.l.b16 %v5390
        %v6993 = vunpack.c.l.b16 %v5391
        %v6994 = vunpack.c.l.b16 %v5392
        %v6995 = vunpack.c.l.b16 %v5393
        %v6996 = vunpack.c.l.b16 %v5394
        %v6997 = vunpack.c.l.b16 %v5395
        %v6998 = vunpack.c.l.b16 %v5396
        %v6999 = vunpack.c.l.b16 %v5397
        %v7000 = vunpack.c.l.b16 %v5398
        %v7001 = vunpack.c.l.b16 %v5399
        %v7002 = vunpack.c.l.b16 %v5400
        %v7003 = vunpack.c.l.b16 %v5401
        %v7004 = vunpack.c.l.b16 %v5402
        %v7005 = vunpack.c.l.b16 %v5403
        %v7006 = vunpack.c.l.b16 %v5404
        %v7007 = vunpack.c.l.b16 %v5405
        %v7008 = vunpack.c.l.b16 %v5406
        %v7009 = vunpack.c.l.b16 %v5407
        %v7010 = vunpack.c.l.b16 %v5408
        %v7011 = vunpack.c.l.b16 %v5409
        %v7012 = vunpack.c.l.b16 %v5410
        %v7013 = vunpack.c.l.b16 %v5411
        %v7014 = vunpack.c.l.b16 %v5412
        %v7015 = vunpack.c.l.b16 %v5413
        %v7016 = vunpack.c.l.b16 %v5414
        %v7017 = vunpack.c.l.b16 %v5415
        %v7018 = vunpack.c.l.b16 %v5416
        %v7019 = vunpack.c.l.b16 %v5417
        %v7020 = vunpack.c.l.b16 %v5418
        %v7021 = vunpack.c.l.b16 %v5419
        %v7022 = vunpack.c.l.b16 %v5420
        %v7023 = vunpack.c.l.b16 %v5421
        %v7024 = vunpack.c.l.b16 %v5422
        %v7025 = vunpack.c.l.b16 %v5423
        %v7026 = vunpack.c.l.b16 %v5424
        %v7027 = vunpack.c.l.b16 %v5425
        %v7028 = vunpack.c.l.b16 %v5426
        %v7029 = vunpack.c.l.b16 %v5427
        %v7030 = vunpack.c.l.b16 %v5428
        %v7031 = vunpack.c.l.b16 %v5429
        %v7032 = vunpack.c.l.b16 %v5430
        %v7033 = vunpack.c.l.b16 %v5431
        %v7034 = vunpack.c.l.b16 %v5432
        %v7035 = vunpack.c.l.b16 %v5433
        %v7036 = vunpack.c.l.b16 %v5434
        %v7037 = vunpack.c.l.b16 %v5435
        %v7038 = vunpack.c.l.b16 %v5436
        %v7039 = vunpack.c.l.b16 %v5437
        %v7040 = vunpack.c.l.b16 %v5438
        %v7041 = vunpack.c.l.b16 %v5439
        %v7042 = vunpack.c.l.b16 %v5440
        %v7043 = vunpack.c.l.b16 %v5441
        %v7044 = vunpack.c.l.b16 %v5442
        %v7045 = vunpack.c.l.b16 %v5443
        %v7046 = vunpack.c.l.b16 %v5444
        %v7047 = vunpack.c.l.b16 %v5445
        %v7048 = vunpack.c.l.b16 %v5446
        %v7049 = vunpack.c.l.b16 %v5447
        %v7050 = vunpack.c.l.b16 %v5448
        %v7051 = vunpack.c.l.b16 %v5449
        %v7052 = vunpack.c.l.b16 %v5450
        %v7053 = vunpack.c.l.b16 %v5451
        %v7054 = vunpack.c.l.b16 %v5452
        %v7055 = vunpack.c.l.b16 %v5453
        %v7056 = vunpack.c.l.b16 %v5454
        %v7057 = vunpack.c.l.b16 %v5455
        %v7058 = vunpack.c.l.b16 %v5456
        %v7059 = vunpack.c.l.b16 %v5457
        %v7060 = vunpack.c.l.b16 %v5458
        %v7061 = vunpack.c.l.b16 %v5459
        %v7062 = vunpack.c.l.b16 %v5460
        %v7063 = vunpack.c.l.b16 %v5461
        %v7064 = vunpack.c.l.b16 %v5462
        %v7065 = vunpack.c.l.b16 %v5463
        %v7066 = vunpack.c.l.b16 %v5464
        %v7067 = vunpack.c.l.b16 %v5465
        %v7068 = vpack.c.b16 %v6421, %v6420
        %v7069 = vpack.c.b16 %v6423, %v6422
        %v7070 = vpack.c.b16 %v6425, %v6424
        %v7071 = vpack.c.b16 %v6427, %v6426
        %v7072 = vpack.c.b16 %v6429, %v6428
        %v7073 = vpack.c.b16 %v6431, %v6430
        %v7074 = vpack.c.b16 %v6433, %v6432
        %v7075 = vpack.c.b16 %v6435, %v6434
        %v7076 = vpack.c.b16 %v6437, %v6436
        %v7077 = vpack.c.b16 %v6439, %v6438
        %v7078 = vpack.c.b16 %v6441, %v6440
        %v7079 = vpack.c.b16 %v6443, %v6442
        %v7080 = vpack.c.b16 %v6445, %v6444
        %v7081 = vpack.c.b16 %v6447, %v6446
        %v7082 = vpack.c.b16 %v6449, %v6448
        %v7083 = vpack.c.b16 %v6451, %v6450
        %v7084 = vpack.c.b16 %v6453, %v6452
        %v7085 = vpack.c.b16 %v6455, %v6454
        %v7086 = vpack.c.b16 %v6457, %v6456
        %v7087 = vpack.c.b16 %v6459, %v6458
        %v7088 = vpack.c.b16 %v6461, %v6460
        %v7089 = vpack.c.b16 %v6463, %v6462
        %v7090 = vpack.c.b16 %v6465, %v6464
        %v7091 = vpack.c.b16 %v6467, %v6466
        %v7092 = vpack.c.b16 %v6469, %v6468
        %v7093 = vpack.c.b16 %v6471, %v6470
        %v7094 = vpack.c.b16 %v6473, %v6472
        %v7095 = vpack.c.b16 %v6475, %v6474
        %v7096 = vpack.c.b16 %v6477, %v6476
        %v7097 = vpack.c.b16 %v6479, %v6478
        %v7098 = vpack.c.b16 %v6481, %v6480
        %v7099 = vpack.c.b16 %v6483, %v6482
        %v7100 = vpack.c.b16 %v6485, %v6484
        %v7101 = vpack.c.b16 %v6487, %v6486
        %v7102 = vpack.c.b16 %v6489, %v6488
        %v7103 = vpack.c.b16 %v6491, %v6490
        %v7104 = vpack.c.b16 %v6493, %v6492
        %v7105 = vpack.c.b16 %v6495, %v6494
        %v7106 = vpack.c.b16 %v6497, %v6496
        %v7107 = vpack.c.b16 %v6499, %v6498
        %v7108 = vpack.c.b16 %v6501, %v6500
        %v7109 = vpack.c.b16 %v6503, %v6502
        %v7110 = vpack.c.b16 %v6505, %v6504
        %v7111 = vpack.c.b16 %v6507, %v6506
        %v7112 = vpack.c.b16 %v6509, %v6508
        %v7113 = vpack.c.b16 %v6511, %v6510
        %v7114 = vpack.c.b16 %v6513, %v6512
        %v7115 = vpack.c.b16 %v6515, %v6514
        %v7116 = vpack.c.b16 %v6517, %v6516
        %v7117 = vpack.c.b16 %v6519, %v6518
        %v7118 = vpack.c.b16 %v6521, %v6520
        %v7119 = vpack.c.b16 %v6523, %v6522
        %v7120 = vpack.c.b16 %v6525, %v6524
        %v7121 = vpack.c.b16 %v6527, %v6526
        %v7122 = vpack.c.b16 %v6529, %v6528
        %v7123 = vpack.c.b16 %v6531, %v6530
        %v7124 = vpack.c.b16 %v6533, %v6532
        %v7125 = vpack.c.b16 %v6535, %v6534
        %v7126 = vpack.c.b16 %v6537, %v6536
        %v7127 = vpack.c.b16 %v6539, %v6538
        %v7128 = vpack.c.b16 %v6541, %v6540
        %v7129 = vpack.c.b16 %v6543, %v6542
        %v7130 = vpack.c.b16 %v6545, %v6544
        %v7131 = vpack.c.b16 %v6547, %v6546
        %v7132 = vpack.c.b16 %v6549, %v6548
        %v7133 = vpack.c.b16 %v6551, %v6550
        %v7134 = vpack.c.b16 %v6553, %v6552
        %v7135 = vpack.c.b16 %v6555, %v6554
        %v7136 = vpack.c.b16 %v6557, %v6556
        %v7137 = vpack.c.b16 %v6559, %v6558
        %v7138 = vpack.c.b16 %v6561, %v6560
        %v7139 = vpack.c.b16 %v6563, %v6562
        %v7140 = vpack.c.b16 %v6565, %v6564
        %v7141 = vpack.c.b16 %v6567, %v6566
        %v7142 = vpack.c.b16 %v6569, %v6568
        %v7143 = vpack.c.b16 %v6571, %v6570
        %v7144 = vpack.c.b16 %v6573, %v6572
        %v7145 = vpack.c.b16 %v6575, %v6574
        %v7146 = vpack.c.b16 %v6577, %v6576
        %v7147 = vpack.c.b16 %v6579, %v6578
        %v7148 = vpack.c.b16 %v6581, %v6580
        %v7149 = vpack.c.b16 %v6583, %v6582
        %v7150 = vpack.c.b16 %v6585, %v6584
        %v7151 = vpack.c.b16 %v6587, %v6586
        %v7152 = vpack.c.b16 %v6589, %v6588
        %v7153 = vpack.c.b16 %v6591, %v6590
        %v7154 = vpack.c.b16 %v6593, %v6592
        %v7155 = vpack.c.b16 %v6595, %v6594
        %v7156 = vpack.c.b16 %v6597, %v6596
        %v7157 = vpack.c.b16 %v6599, %v6598
        %v7158 = vpack.c.b16 %v6601, %v6600
        %v7159 = vpack.c.b16 %v6603, %v6602
        %v7160 = vpack.c.b16 %v6605, %v6604
        %v7161 = vpack.c.b16 %v6607, %v6606
        %v7162 = vpack.c.b16 %v6609, %v6608
        %v7163 = vpack.c.b16 %v6611, %v6610
        %v7164 = vpack.c.b16 %v6613, %v6612
        %v7165 = vpack.c.b16 %v6615, %v6614
        %v7166 = vpack.c.b16 %v6617, %v6616
        %v7167 = vpack.c.b16 %v6619, %v6618
        %v7168 = vpack.c.b16 %v6621, %v6620
        %v7169 = vpack.c.b16 %v6623, %v6622
        %v7170 = vpack.c.b16 %v6625, %v6624
        %v7171 = vpack.c.b16 %v6627, %v6626
        %v7172 = vpack.c.b16 %v6629, %v6628
        %v7173 = vpack.c.b16 %v6631, %v6630
        %v7174 = vpack.c.b16 %v6633, %v6632
        %v7175 = vpack.c.b16 %v6635, %v6634
        %v7176 = vpack.c.b16 %v6637, %v6636
        %v7177 = vpack.c.b16 %v6639, %v6638
        %v7178 = vpack.c.b16 %v6641, %v6640
        %v7179 = vpack.c.b16 %v6643, %v6642
        %v7180 = vpack.c.b16 %v6645, %v6644
        %v7181 = vpack.c.b16 %v6647, %v6646
        %v7182 = vpack.c.b16 %v6649, %v6648
        %v7183 = vpack.c.b16 %v6651, %v6650
        %v7184 = vpack.c.b16 %v6653, %v6652
        %v7185 = vpack.c.b16 %v6655, %v6654
        %v7186 = vpack.c.b16 %v6657, %v6656
        %v7187 = vpack.c.b16 %v6659, %v6658
        %v7188 = vpack.c.b16 %v6661, %v6660
        %v7189 = vpack.c.b16 %v6663, %v6662
        %v7190 = vpack.c.b16 %v6665, %v6664
        %v7191 = vpack.c.b16 %v6667, %v6666
        %v7192 = vpack.c.b16 %v6669, %v6668
        %v7193 = vpack.c.b16 %v6671, %v6670
        %v7194 = vpack.c.b16 %v6673, %v6672
        %v7195 = vpack.c.b16 %v6675, %v6674
        %v7196 = vpack.c.b16 %v6677, %v6676
        %v7197 = vpack.c.b16 %v6679, %v6678
        %v7198 = vpack.c.b16 %v6681, %v6680
        %v7199 = vpack.c.b16 %v6683, %v6682
        %v7200 = vpack.c.b16 %v6685, %v6684
        %v7201 = vpack.c.b16 %v6687, %v6686
        %v7202 = vpack.c.b16 %v6689, %v6688
        %v7203 = vpack.c.b16 %v6691, %v6690
        %v7204 = vpack.c.b16 %v6693, %v6692
        %v7205 = vpack.c.b16 %v6695, %v6694
        %v7206 = vpack.c.b16 %v6697, %v6696
        %v7207 = vpack.c.b16 %v6699, %v6698
        %v7208 = vpack.c.b16 %v6701, %v6700
        %v7209 = vpack.c.b16 %v6703, %v6702
        %v7210 = vpack.c.b16 %v6705, %v6704
        %v7211 = vpack.c.b16 %v6707, %v6706
        %v7212 = vpack.c.b16 %v6709, %v6708
        %v7213 = vpack.c.b16 %v6711, %v6710
        %v7214 = vpack.c.b16 %v6713, %v6712
        %v7215 = vpack.c.b16 %v6715, %v6714
        %v7216 = vpack.c.b16 %v6717, %v6716
        %v7217 = vpack.c.b16 %v6719, %v6718
        %v7218 = vpack.c.b16 %v6721, %v6720
        %v7219 = vpack.c.b16 %v6723, %v6722
        %v7220 = vpack.c.b16 %v6725, %v6724
        %v7221 = vpack.c.b16 %v6727, %v6726
        %v7222 = vpack.c.b16 %v6729, %v6728
        %v7223 = vpack.c.b16 %v6731, %v6730
        %v7224 = vpack.c.b16 %v6733, %v6732
        %v7225 = vpack.c.b16 %v6735, %v6734
        %v7226 = vpack.c.b16 %v6737, %v6736
        %v7227 = vpack.c.b16 %v6739, %v6738
        %v7228 = vpack.c.b16 %v6741, %v6740
        %v7229 = vpack.c.b16 %v6743, %v6742
        %v7230 = vpack.c.b16 %v6745, %v6744
        %v7231 = vpack.c.b16 %v6747, %v6746
        %v7232 = vpack.c.b16 %v6749, %v6748
        %v7233 = vpack.c.b16 %v6751, %v6750
        %v7234 = vpack.c.b16 %v6753, %v6752
        %v7235 = vpack.c.b16 %v6755, %v6754
        %v7236 = vpack.c.b16 %v6757, %v6756
        %v7237 = vpack.c.b16 %v6759, %v6758
        %v7238 = vpack.c.b16 %v6761, %v6760
        %v7239 = vpack.c.b16 %v6763, %v6762
        %v7240 = vpack.c.b16 %v6765, %v6764
        %v7241 = vpack.c.b16 %v6767, %v6766
        %v7242 = vpack.c.b16 %v6769, %v6768
        %v7243 = vpack.c.b16 %v6771, %v6770
        %v7244 = vpack.c.b16 %v6773, %v6772
        %v7245 = vpack.c.b16 %v6775, %v6774
        %v7246 = vpack.c.b16 %v6777, %v6776
        %v7247 = vpack.c.b16 %v6779, %v6778
        %v7248 = vpack.c.b16 %v6781, %v6780
        %v7249 = vpack.c.b16 %v6783, %v6782
        %v7250 = vpack.c.b16 %v6785, %v6784
        %v7251 = vpack.c.b16 %v6787, %v6786
        %v7252 = vpack.c.b16 %v6789, %v6788
        %v7253 = vpack.c.b16 %v6791, %v6790
        %v7254 = vpack.c.b16 %v6793, %v6792
        %v7255 = vpack.c.b16 %v6795, %v6794
        %v7256 = vpack.c.b16 %v6797, %v6796
        %v7257 = vpack.c.b16 %v6799, %v6798
        %v7258 = vpack.c.b16 %v6801, %v6800
        %v7259 = vpack.c.b16 %v6803, %v6802
        %v7260 = vpack.c.b16 %v6805, %v6804
        %v7261 = vpack.c.b16 %v6807, %v6806
        %v7262 = vpack.c.b16 %v6809, %v6808
        %v7263 = vpack.c.b16 %v6811, %v6810
        %v7264 = vpack.c.b16 %v6813, %v6812
        %v7265 = vpack.c.b16 %v6815, %v6814
        %v7266 = vpack.c.b16 %v6817, %v6816
        %v7267 = vpack.c.b16 %v6819, %v6818
        %v7268 = vpack.c.b16 %v6821, %v6820
        %v7269 = vpack.c.b16 %v6823, %v6822
        %v7270 = vpack.c.b16 %v6825, %v6824
        %v7271 = vpack.c.b16 %v6827, %v6826
        %v7272 = vpack.c.b16 %v6829, %v6828
        %v7273 = vpack.c.b16 %v6831, %v6830
        %v7274 = vpack.c.b16 %v6833, %v6832
        %v7275 = vpack.c.b16 %v6835, %v6834
        %v7276 = vpack.c.b16 %v6837, %v6836
        %v7277 = vpack.c.b16 %v6839, %v6838
        %v7278 = vpack.c.b16 %v6841, %v6840
        %v7279 = vpack.c.b16 %v6843, %v6842
        %v7280 = vpack.c.b16 %v6845, %v6844
        %v7281 = vpack.c.b16 %v6847, %v6846
        %v7282 = vpack.c.b16 %v6849, %v6848
        %v7283 = vpack.c.b16 %v6851, %v6850
        %v7284 = vpack.c.b16 %v6853, %v6852
        %v7285 = vpack.c.b16 %v6855, %v6854
        %v7286 = vpack.c.b16 %v6857, %v6856
        %v7287 = vpack.c.b16 %v6859, %v6858
        %v7288 = vpack.c.b16 %v6861, %v6860
        %v7289 = vpack.c.b16 %v6863, %v6862
        %v7290 = vpack.c.b16 %v6865, %v6864
        %v7291 = vpack.c.b16 %v6867, %v6866
        %v7292 = vpack.c.b16 %v6869, %v6868
        %v7293 = vpack.c.b16 %v6871, %v6870
        %v7294 = vpack.c.b16 %v6873, %v6872
        %v7295 = vpack.c.b16 %v6875, %v6874
        %v7296 = vpack.c.b16 %v6877, %v6876
        %v7297 = vpack.c.b16 %v6879, %v6878
        %v7298 = vpack.c.b16 %v6881, %v6880
        %v7299 = vpack.c.b16 %v6883, %v6882
        %v7300 = vpack.c.b16 %v6885, %v6884
        %v7301 = vpack.c.b16 %v6887, %v6886
        %v7302 = vpack.c.b16 %v6889, %v6888
        %v7303 = vpack.c.b16 %v6891, %v6890
        %v7304 = vpack.c.b16 %v6893, %v6892
        %v7305 = vpack.c.b16 %v6895, %v6894
        %v7306 = vpack.c.b16 %v6897, %v6896
        %v7307 = vpack.c.b16 %v6899, %v6898
        %v7308 = vpack.c.b16 %v6901, %v6900
        %v7309 = vpack.c.b16 %v6903, %v6902
        %v7310 = vpack.c.b16 %v6905, %v6904
        %v7311 = vpack.c.b16 %v6907, %v6906
        %v7312 = vpack.c.b16 %v6909, %v6908
        %v7313 = vpack.c.b16 %v6911, %v6910
        %v7314 = vpack.c.b16 %v6913, %v6912
        %v7315 = vpack.c.b16 %v6915, %v6914
        %v7316 = vpack.c.b16 %v6917, %v6916
        %v7317 = vpack.c.b16 %v6919, %v6918
        %v7318 = vpack.c.b16 %v6921, %v6920
        %v7319 = vpack.c.b16 %v6923, %v6922
        %v7320 = vpack.c.b16 %v6925, %v6924
        %v7321 = vpack.c.b16 %v6927, %v6926
        %v7322 = vpack.c.b16 %v6929, %v6928
        %v7323 = vpack.c.b16 %v6931, %v6930
        %v7324 = vpack.c.b16 %v6933, %v6932
        %v7325 = vpack.c.b16 %v6935, %v6934
        %v7326 = vpack.c.b16 %v6937, %v6936
        %v7327 = vpack.c.b16 %v6939, %v6938
        %v7328 = vpack.c.b16 %v6941, %v6940
        %v7329 = vpack.c.b16 %v6943, %v6942
        %v7330 = vpack.c.b16 %v6945, %v6944
        %v7331 = vpack.c.b16 %v6947, %v6946
        %v7332 = vpack.c.b16 %v6949, %v6948
        %v7333 = vpack.c.b16 %v6951, %v6950
        %v7334 = vpack.c.b16 %v6953, %v6952
        %v7335 = vpack.c.b16 %v6955, %v6954
        %v7336 = vpack.c.b16 %v6957, %v6956
        %v7337 = vpack.c.b16 %v6959, %v6958
        %v7338 = vpack.c.b16 %v6961, %v6960
        %v7339 = vpack.c.b16 %v6963, %v6962
        %v7340 = vpack.c.b16 %v6965, %v6964
        %v7341 = vpack.c.b16 %v6967, %v6966
        %v7342 = vpack.c.b16 %v6969, %v6968
        %v7343 = vpack.c.b16 %v6971, %v6970
        %v7344 = vpack.c.b16 %v6973, %v6972
        %v7345 = vpack.c.b16 %v6975, %v6974
        %v7346 = vpack.c.b16 %v6977, %v6976
        %v7347 = vpack.c.b16 %v6979, %v6978
        %v7348 = vpack.c.b16 %v6981, %v6980
        %v7349 = vpack.c.b16 %v6983, %v6982
        %v7350 = vpack.c.b16 %v6985, %v6984
        %v7351 = vpack.c.b16 %v6987, %v6986
        %v7352 = vpack.c.b16 %v6989, %v6988
        %v7353 = vpack.c.b16 %v6991, %v6990
        %v7354 = vpack.c.b16 %v6993, %v6992
        %v7355 = vpack.c.b16 %v6995, %v6994
        %v7356 = vpack.c.b16 %v6997, %v6996
        %v7357 = vpack.c.b16 %v6999, %v6998
        %v7358 = vpack.c.b16 %v7001, %v7000
        %v7359 = vpack.c.b16 %v7003, %v7002
        %v7360 = vpack.c.b16 %v7005, %v7004
        %v7361 = vpack.c.b16 %v7007, %v7006
        %v7362 = vpack.c.b16 %v7009, %v7008
        %v7363 = vpack.c.b16 %v7011, %v7010
        %v7364 = vpack.c.b16 %v7013, %v7012
        %v7365 = vpack.c.b16 %v7015, %v7014
        %v7366 = vpack.c.b16 %v7017, %v7016
        %v7367 = vpack.c.b16 %v7019, %v7018
        %v7368 = vpack.c.b16 %v7021, %v7020
        %v7369 = vpack.c.b16 %v7023, %v7022
        %v7370 = vpack.c.b16 %v7025, %v7024
        %v7371 = vpack.c.b16 %v7027, %v7026
        %v7372 = vpack.c.b16 %v7029, %v7028
        %v7373 = vpack.c.b16 %v7031, %v7030
        %v7374 = vpack.c.b16 %v7033, %v7032
        %v7375 = vpack.c.b16 %v7035, %v7034
        %v7376 = vpack.c.b16 %v7037, %v7036
        %v7377 = vpack.c.b16 %v7039, %v7038
        %v7378 = vpack.c.b16 %v7041, %v7040
        %v7379 = vpack.c.b16 %v7043, %v7042
        %v7380 = vpack.c.b16 %v7045, %v7044
        %v7381 = vpack.c.b16 %v7047, %v7046
        %v7382 = vpack.c.b16 %v7049, %v7048
        %v7383 = vpack.c.b16 %v7051, %v7050
        %v7384 = vpack.c.b16 %v7053, %v7052
        %v7385 = vpack.c.b16 %v7055, %v7054
        %v7386 = vpack.c.b16 %v7057, %v7056
        %v7387 = vpack.c.b16 %v7059, %v7058
        %v7388 = vpack.c.b16 %v7061, %v7060
        %v7389 = vpack.c.b16 %v7063, %v7062
        %v7390 = vpack.c.b16 %v7065, %v7064
        %v7391 = vpack.c.b16 %v7067, %v7066
        %v7717 = vsel %vm1224, %v5731, 0
        %7719 = vmatprep.subr.bf16.mxu0 0
        %7720 = vmatpush1.bf16.msra.mxu0 %v7075
        %7721 = vmatprep.subr.bf16.mxu0 0
        %7722 = vmatpush1.bf16.msra.mxu0 %v7074
        %7723 = vmatprep.subr.bf16.mxu0 0
        %7724 = vmatpush1.bf16.msra.mxu0 %v7073
        %7725 = vmatprep.subr.bf16.mxu0 0
        %7726 = vmatpush1.bf16.msra.mxu0 %v7072
        %7727 = vmatprep.subr.bf16.mxu0 0
        %7728 = vmatpush1.bf16.msra.mxu0 %v7071
        %7729 = vmatprep.subr.bf16.mxu0 0
        %7730 = vmatpush1.bf16.msra.mxu0 %v7070
        %7731 = vmatprep.subr.bf16.mxu0 0
        %7732 = vmatpush1.bf16.msra.mxu0 %v7069
        %7733 = vmatprep.subr.bf16.mxu0 0
        %7734 = vmatpush1.bf16.msra.mxu0 %v7068
        %7735 = vmatprep.subr.bf16.mxu0 0
        %7736 = vmatpush2.bf16.msra.mxu0 %v7083
        %7737 = vmatprep.subr.bf16.mxu0 0
        %7738 = vmatpush2.bf16.msra.mxu0 %v7082
        %7739 = vmatprep.subr.bf16.mxu0 0
        %7740 = vmatpush2.bf16.msra.mxu0 %v7081
        %7741 = vmatprep.subr.bf16.mxu0 0
        %7742 = vmatpush2.bf16.msra.mxu0 %v7080
        %7743 = vmatprep.subr.bf16.mxu0 0
        %7744 = vmatpush2.bf16.msra.mxu0 %v7079
        %7745 = vmatprep.subr.bf16.mxu0 0
        %7746 = vmatpush2.bf16.msra.mxu0 %v7078
        %7747 = vmatprep.subr.bf16.mxu0 0
        %7748 = vmatpush2.bf16.msra.mxu0 %v7077
        %7749 = vmatprep.subr.bf16.mxu0 0
        %7750 = vmatpush2.bf16.msra.mxu0 %v7076
        %7751 = vmatprep.mubr.bf16.mxu0 %v5510
        %7752 = vmatmul.mubr.bf16.gmra.mxu0 %v5496
        %v7753 = vpop.f32.mrf.mxu0
        %v7754 = vadd.f32 %v5466, %v7753
        %v7755 = vpop.f32.mrf.mxu0
        %v7756 = vpop.f32.mrf.mxu0
        %v7757 = vpop.f32.mrf.mxu0
        %7758 = vdwg.mxu0
        %7759 = vmatprep.subr.bf16.mxu0 0
        %7760 = vmatpush1.bf16.msra.mxu0 %v7091
        %7761 = vmatprep.subr.bf16.mxu0 0
        %7762 = vmatpush1.bf16.msra.mxu0 %v7090
        %7763 = vmatprep.subr.bf16.mxu0 0
        %7764 = vmatpush1.bf16.msra.mxu0 %v7089
        %7765 = vmatprep.subr.bf16.mxu0 0
        %7766 = vmatpush1.bf16.msra.mxu0 %v7088
        %7767 = vmatprep.subr.bf16.mxu0 0
        %7768 = vmatpush1.bf16.msra.mxu0 %v7087
        %7769 = vmatprep.subr.bf16.mxu0 0
        %7770 = vmatpush1.bf16.msra.mxu0 %v7086
        %7771 = vmatprep.subr.bf16.mxu0 0
        %7772 = vmatpush1.bf16.msra.mxu0 %v7085
        %7773 = vmatprep.subr.bf16.mxu0 0
        %7774 = vmatpush1.bf16.msra.mxu0 %v7084
        %7775 = vmatprep.subr.bf16.mxu0 0
        %7776 = vmatpush2.bf16.msra.mxu0 %v7099
        %7777 = vmatprep.subr.bf16.mxu0 0
        %7778 = vmatpush2.bf16.msra.mxu0 %v7098
        %7779 = vmatprep.subr.bf16.mxu0 0
        %7780 = vmatpush2.bf16.msra.mxu0 %v7097
        %7781 = vmatprep.subr.bf16.mxu0 0
        %7782 = vmatpush2.bf16.msra.mxu0 %v7096
        %7783 = vmatprep.subr.bf16.mxu0 0
        %7784 = vmatpush2.bf16.msra.mxu0 %v7095
        %7785 = vmatprep.subr.bf16.mxu0 0
        %7786 = vmatpush2.bf16.msra.mxu0 %v7094
        %7787 = vmatprep.subr.bf16.mxu0 0
        %7788 = vmatpush2.bf16.msra.mxu0 %v7093
        %7789 = vmatprep.subr.bf16.mxu0 0
        %7790 = vmatpush2.bf16.msra.mxu0 %v7092
        %7791 = vmatprep.mubr.bf16.mxu0 %v5520
        %7792 = vmatmul.mubr.bf16.gmra.mxu0 %v5518
        %v7793 = vpop.f32.mrf.mxu0
        %v7794 = vadd.f32 %v7754, %v7793
        %v7795 = vpop.f32.mrf.mxu0
        %v7796 = vpop.f32.mrf.mxu0
        %v7797 = vpop.f32.mrf.mxu0
        %7798 = vdwg.mxu0
        %7799 = vmatprep.subr.bf16.mxu0 0
        %7800 = vmatpush1.bf16.msra.mxu0 %v7107
        %7801 = vmatprep.subr.bf16.mxu0 0
        %7802 = vmatpush1.bf16.msra.mxu0 %v7106
        %7803 = vmatprep.subr.bf16.mxu0 0
        %7804 = vmatpush1.bf16.msra.mxu0 %v7105
        %7805 = vmatprep.subr.bf16.mxu0 0
        %7806 = vmatpush1.bf16.msra.mxu0 %v7104
        %7807 = vmatprep.subr.bf16.mxu0 0
        %7808 = vmatpush1.bf16.msra.mxu0 %v7103
        %7809 = vmatprep.subr.bf16.mxu0 0
        %7810 = vmatpush1.bf16.msra.mxu0 %v7102
        %7811 = vmatprep.subr.bf16.mxu0 0
        %7812 = vmatpush1.bf16.msra.mxu0 %v7101
        %7813 = vmatprep.subr.bf16.mxu0 0
        %7814 = vmatpush1.bf16.msra.mxu0 %v7100
        %7815 = vmatprep.subr.bf16.mxu0 0
        %7816 = vmatpush2.bf16.msra.mxu0 %v7115
        %7817 = vmatprep.subr.bf16.mxu0 0
        %7818 = vmatpush2.bf16.msra.mxu0 %v7114
        %7819 = vmatprep.subr.bf16.mxu0 0
        %7820 = vmatpush2.bf16.msra.mxu0 %v7113
        %7821 = vmatprep.subr.bf16.mxu0 0
        %7822 = vmatpush2.bf16.msra.mxu0 %v7112
        %7823 = vmatprep.subr.bf16.mxu0 0
        %7824 = vmatpush2.bf16.msra.mxu0 %v7111
        %7825 = vmatprep.subr.bf16.mxu0 0
        %7826 = vmatpush2.bf16.msra.mxu0 %v7110
        %7827 = vmatprep.subr.bf16.mxu0 0
        %7828 = vmatpush2.bf16.msra.mxu0 %v7109
        %7829 = vmatprep.subr.bf16.mxu0 0
        %7830 = vmatpush2.bf16.msra.mxu0 %v7108
        %7831 = vmatprep.mubr.bf16.mxu0 %v5517
        %7832 = vmatmul.mubr.bf16.gmra.mxu0 %v5503
        %v7833 = vpop.f32.mrf.mxu0
        %v7834 = vadd.f32 %v7794, %v7833
        %v7835 = vpop.f32.mrf.mxu0
        %v7836 = vpop.f32.mrf.mxu0
        %v7837 = vpop.f32.mrf.mxu0
        %7838 = vdwg.mxu0
        %7839 = vmatprep.subr.bf16.mxu0 0
        %7840 = vmatpush1.bf16.msra.mxu0 %v7123
        %7841 = vmatprep.subr.bf16.mxu0 0
        %7842 = vmatpush1.bf16.msra.mxu0 %v7122
        %7843 = vmatprep.subr.bf16.mxu0 0
        %7844 = vmatpush1.bf16.msra.mxu0 %v7121
        %7845 = vmatprep.subr.bf16.mxu0 0
        %7846 = vmatpush1.bf16.msra.mxu0 %v7120
        %7847 = vmatprep.subr.bf16.mxu0 0
        %7848 = vmatpush1.bf16.msra.mxu0 %v7119
        %7849 = vmatprep.subr.bf16.mxu0 0
        %7850 = vmatpush1.bf16.msra.mxu0 %v7118
        %7851 = vmatprep.subr.bf16.mxu0 0
        %7852 = vmatpush1.bf16.msra.mxu0 %v7117
        %7853 = vmatprep.subr.bf16.mxu0 0
        %7854 = vmatpush1.bf16.msra.mxu0 %v7116
        %7855 = vmatprep.subr.bf16.mxu0 0
        %7856 = vmatpush2.bf16.msra.mxu0 %v7131
        %7857 = vmatprep.subr.bf16.mxu0 0
        %7858 = vmatpush2.bf16.msra.mxu0 %v7130
        %7859 = vmatprep.subr.bf16.mxu0 0
        %7860 = vmatpush2.bf16.msra.mxu0 %v7129
        %7861 = vmatprep.subr.bf16.mxu0 0
        %7862 = vmatpush2.bf16.msra.mxu0 %v7128
        %7863 = vmatprep.subr.bf16.mxu0 0
        %7864 = vmatpush2.bf16.msra.mxu0 %v7127
        %7865 = vmatprep.subr.bf16.mxu0 0
        %7866 = vmatpush2.bf16.msra.mxu0 %v7126
        %7867 = vmatprep.subr.bf16.mxu0 0
        %7868 = vmatpush2.bf16.msra.mxu0 %v7125
        %7869 = vmatprep.subr.bf16.mxu0 0
        %7870 = vmatpush2.bf16.msra.mxu0 %v7124
        %7871 = vmatprep.mubr.bf16.mxu0 %v5521
        %7872 = vmatmul.mubr.bf16.gmra.mxu0 %v5519
        %v7873 = vpop.f32.mrf.mxu0
        %v7874 = vadd.f32 %v7834, %v7873
        %v7875 = vpop.f32.mrf.mxu0
        %v7876 = vpop.f32.mrf.mxu0
        %v7877 = vpop.f32.mrf.mxu0
        %7878 = vdwg.mxu0
        %7879 = vmatprep.subr.bf16.mxu0 0
        %7880 = vmatpush1.bf16.msra.mxu0 %v7139
        %7881 = vmatprep.subr.bf16.mxu0 0
        %7882 = vmatpush1.bf16.msra.mxu0 %v7138
        %7883 = vmatprep.subr.bf16.mxu0 0
        %7884 = vmatpush1.bf16.msra.mxu0 %v7137
        %7885 = vmatprep.subr.bf16.mxu0 0
        %7886 = vmatpush1.bf16.msra.mxu0 %v7136
        %7887 = vmatprep.subr.bf16.mxu0 0
        %7888 = vmatpush1.bf16.msra.mxu0 %v7135
        %7889 = vmatprep.subr.bf16.mxu0 0
        %7890 = vmatpush1.bf16.msra.mxu0 %v7134
        %7891 = vmatprep.subr.bf16.mxu0 0
        %7892 = vmatpush1.bf16.msra.mxu0 %v7133
        %7893 = vmatprep.subr.bf16.mxu0 0
        %7894 = vmatpush1.bf16.msra.mxu0 %v7132
        %7895 = vmatprep.subr.bf16.mxu0 0
        %7896 = vmatpush2.bf16.msra.mxu0 %v7147
        %7897 = vmatprep.subr.bf16.mxu0 0
        %7898 = vmatpush2.bf16.msra.mxu0 %v7146
        %7899 = vmatprep.subr.bf16.mxu0 0
        %7900 = vmatpush2.bf16.msra.mxu0 %v7145
        %7901 = vmatprep.subr.bf16.mxu0 0
        %7902 = vmatpush2.bf16.msra.mxu0 %v7144
        %7903 = vmatprep.subr.bf16.mxu0 0
        %7904 = vmatpush2.bf16.msra.mxu0 %v7143
        %7905 = vmatprep.subr.bf16.mxu0 0
        %7906 = vmatpush2.bf16.msra.mxu0 %v7142
        %7907 = vmatprep.subr.bf16.mxu0 0
        %7908 = vmatpush2.bf16.msra.mxu0 %v7141
        %7909 = vmatprep.subr.bf16.mxu0 0
        %7910 = vmatpush2.bf16.msra.mxu0 %v7140
        %7911 = vmatprep.mubr.bf16.mxu0 %v5559
        %7912 = vmatmul.mubr.bf16.gmra.mxu0 %v5545
        %v7913 = vpop.f32.mrf.mxu0
        %v7914 = vadd.f32 %v7874, %v7913
        %v7915 = vpop.f32.mrf.mxu0
        %v7916 = vpop.f32.mrf.mxu0
        %v7917 = vpop.f32.mrf.mxu0
        %7918 = vdwg.mxu0
        %7919 = vmatprep.subr.bf16.mxu0 0
        %7920 = vmatpush1.bf16.msra.mxu0 %v7155
        %7921 = vmatprep.subr.bf16.mxu0 0
        %7922 = vmatpush1.bf16.msra.mxu0 %v7154
        %7923 = vmatprep.subr.bf16.mxu0 0
        %7924 = vmatpush1.bf16.msra.mxu0 %v7153
        %7925 = vmatprep.subr.bf16.mxu0 0
        %7926 = vmatpush1.bf16.msra.mxu0 %v7152
        %7927 = vmatprep.subr.bf16.mxu0 0
        %7928 = vmatpush1.bf16.msra.mxu0 %v7151
        %7929 = vmatprep.subr.bf16.mxu0 0
        %7930 = vmatpush1.bf16.msra.mxu0 %v7150
        %7931 = vmatprep.subr.bf16.mxu0 0
        %7932 = vmatpush1.bf16.msra.mxu0 %v7149
        %7933 = vmatprep.subr.bf16.mxu0 0
        %7934 = vmatpush1.bf16.msra.mxu0 %v7148
        %7935 = vmatprep.subr.bf16.mxu0 0
        %7936 = vmatpush2.bf16.msra.mxu0 %v7163
        %7937 = vmatprep.subr.bf16.mxu0 0
        %7938 = vmatpush2.bf16.msra.mxu0 %v7162
        %7939 = vmatprep.subr.bf16.mxu0 0
        %7940 = vmatpush2.bf16.msra.mxu0 %v7161
        %7941 = vmatprep.subr.bf16.mxu0 0
        %7942 = vmatpush2.bf16.msra.mxu0 %v7160
        %7943 = vmatprep.subr.bf16.mxu0 0
        %7944 = vmatpush2.bf16.msra.mxu0 %v7159
        %7945 = vmatprep.subr.bf16.mxu0 0
        %7946 = vmatpush2.bf16.msra.mxu0 %v7158
        %7947 = vmatprep.subr.bf16.mxu0 0
        %7948 = vmatpush2.bf16.msra.mxu0 %v7157
        %7949 = vmatprep.subr.bf16.mxu0 0
        %7950 = vmatpush2.bf16.msra.mxu0 %v7156
        %7951 = vmatprep.mubr.bf16.mxu0 %v5569
        %7952 = vmatmul.mubr.bf16.gmra.mxu0 %v5567
        %v7953 = vpop.f32.mrf.mxu0
        %v7954 = vadd.f32 %v7914, %v7953
        %v7955 = vpop.f32.mrf.mxu0
        %v7956 = vpop.f32.mrf.mxu0
        %v7957 = vpop.f32.mrf.mxu0
        %7958 = vdwg.mxu0
        %7959 = vmatprep.subr.bf16.mxu0 0
        %7960 = vmatpush1.bf16.msra.mxu0 %v7171
        %7961 = vmatprep.subr.bf16.mxu0 0
        %7962 = vmatpush1.bf16.msra.mxu0 %v7170
        %7963 = vmatprep.subr.bf16.mxu0 0
        %7964 = vmatpush1.bf16.msra.mxu0 %v7169
        %7965 = vmatprep.subr.bf16.mxu0 0
        %7966 = vmatpush1.bf16.msra.mxu0 %v7168
        %7967 = vmatprep.subr.bf16.mxu0 0
        %7968 = vmatpush1.bf16.msra.mxu0 %v7167
        %7969 = vmatprep.subr.bf16.mxu0 0
        %7970 = vmatpush1.bf16.msra.mxu0 %v7166
        %7971 = vmatprep.subr.bf16.mxu0 0
        %7972 = vmatpush1.bf16.msra.mxu0 %v7165
        %7973 = vmatprep.subr.bf16.mxu0 0
        %7974 = vmatpush1.bf16.msra.mxu0 %v7164
        %7975 = vmatprep.subr.bf16.mxu0 0
        %7976 = vmatpush2.bf16.msra.mxu0 %v7179
        %7977 = vmatprep.subr.bf16.mxu0 0
        %7978 = vmatpush2.bf16.msra.mxu0 %v7178
        %7979 = vmatprep.subr.bf16.mxu0 0
        %7980 = vmatpush2.bf16.msra.mxu0 %v7177
        %7981 = vmatprep.subr.bf16.mxu0 0
        %7982 = vmatpush2.bf16.msra.mxu0 %v7176
        %7983 = vmatprep.subr.bf16.mxu0 0
        %7984 = vmatpush2.bf16.msra.mxu0 %v7175
        %7985 = vmatprep.subr.bf16.mxu0 0
        %7986 = vmatpush2.bf16.msra.mxu0 %v7174
        %7987 = vmatprep.subr.bf16.mxu0 0
        %7988 = vmatpush2.bf16.msra.mxu0 %v7173
        %7989 = vmatprep.subr.bf16.mxu0 0
        %7990 = vmatpush2.bf16.msra.mxu0 %v7172
        %7991 = vmatprep.mubr.bf16.mxu0 %v5566
        %7992 = vmatmul.mubr.bf16.gmra.mxu0 %v5552
        %v7993 = vpop.f32.mrf.mxu0
        %v7994 = vadd.f32 %v7954, %v7993
        %v7995 = vpop.f32.mrf.mxu0
        %v7996 = vpop.f32.mrf.mxu0
        %v7997 = vpop.f32.mrf.mxu0
        %7998 = vdwg.mxu0
        %7999 = vmatprep.subr.bf16.mxu0 0
        %8000 = vmatpush1.bf16.msra.mxu0 %v7187
        %8001 = vmatprep.subr.bf16.mxu0 0
        %8002 = vmatpush1.bf16.msra.mxu0 %v7186
        %8003 = vmatprep.subr.bf16.mxu0 0
        %8004 = vmatpush1.bf16.msra.mxu0 %v7185
        %8005 = vmatprep.subr.bf16.mxu0 0
        %8006 = vmatpush1.bf16.msra.mxu0 %v7184
        %8007 = vmatprep.subr.bf16.mxu0 0
        %8008 = vmatpush1.bf16.msra.mxu0 %v7183
        %8009 = vmatprep.subr.bf16.mxu0 0
        %8010 = vmatpush1.bf16.msra.mxu0 %v7182
        %8011 = vmatprep.subr.bf16.mxu0 0
        %8012 = vmatpush1.bf16.msra.mxu0 %v7181
        %8013 = vmatprep.subr.bf16.mxu0 0
        %8014 = vmatpush1.bf16.msra.mxu0 %v7180
        %8015 = vmatprep.subr.bf16.mxu0 0
        %8016 = vmatpush2.bf16.msra.mxu0 %v7195
        %8017 = vmatprep.subr.bf16.mxu0 0
        %8018 = vmatpush2.bf16.msra.mxu0 %v7194
        %8019 = vmatprep.subr.bf16.mxu0 0
        %8020 = vmatpush2.bf16.msra.mxu0 %v7193
        %8021 = vmatprep.subr.bf16.mxu0 0
        %8022 = vmatpush2.bf16.msra.mxu0 %v7192
        %8023 = vmatprep.subr.bf16.mxu0 0
        %8024 = vmatpush2.bf16.msra.mxu0 %v7191
        %8025 = vmatprep.subr.bf16.mxu0 0
        %8026 = vmatpush2.bf16.msra.mxu0 %v7190
        %8027 = vmatprep.subr.bf16.mxu0 0
        %8028 = vmatpush2.bf16.msra.mxu0 %v7189
        %8029 = vmatprep.subr.bf16.mxu0 0
        %8030 = vmatpush2.bf16.msra.mxu0 %v7188
        %8031 = vmatprep.mubr.bf16.mxu0 %v5570
        %8032 = vmatmul.mubr.bf16.gmra.mxu0 %v5568
        %v8033 = vpop.f32.mrf.mxu0
        %v8034 = vadd.f32 %v7994, %v8033
        %v8035 = vpop.f32.mrf.mxu0
        %v8036 = vpop.f32.mrf.mxu0
        %v8037 = vpop.f32.mrf.mxu0
        %8038 = vdwg.mxu0
        %8039 = vmatprep.subr.bf16.mxu0 0
        %8040 = vmatpush1.bf16.msra.mxu0 %v7203
        %8041 = vmatprep.subr.bf16.mxu0 0
        %8042 = vmatpush1.bf16.msra.mxu0 %v7202
        %8043 = vmatprep.subr.bf16.mxu0 0
        %8044 = vmatpush1.bf16.msra.mxu0 %v7201
        %8045 = vmatprep.subr.bf16.mxu0 0
        %8046 = vmatpush1.bf16.msra.mxu0 %v7200
        %8047 = vmatprep.subr.bf16.mxu0 0
        %8048 = vmatpush1.bf16.msra.mxu0 %v7199
        %8049 = vmatprep.subr.bf16.mxu0 0
        %8050 = vmatpush1.bf16.msra.mxu0 %v7198
        %8051 = vmatprep.subr.bf16.mxu0 0
        %8052 = vmatpush1.bf16.msra.mxu0 %v7197
        %8053 = vmatprep.subr.bf16.mxu0 0
        %8054 = vmatpush1.bf16.msra.mxu0 %v7196
        %8055 = vmatprep.subr.bf16.mxu0 0
        %8056 = vmatpush2.bf16.msra.mxu0 %v7211
        %8057 = vmatprep.subr.bf16.mxu0 0
        %8058 = vmatpush2.bf16.msra.mxu0 %v7210
        %8059 = vmatprep.subr.bf16.mxu0 0
        %8060 = vmatpush2.bf16.msra.mxu0 %v7209
        %8061 = vmatprep.subr.bf16.mxu0 0
        %8062 = vmatpush2.bf16.msra.mxu0 %v7208
        %8063 = vmatprep.subr.bf16.mxu0 0
        %8064 = vmatpush2.bf16.msra.mxu0 %v7207
        %8065 = vmatprep.subr.bf16.mxu0 0
        %8066 = vmatpush2.bf16.msra.mxu0 %v7206
        %8067 = vmatprep.subr.bf16.mxu0 0
        %8068 = vmatpush2.bf16.msra.mxu0 %v7205
        %8069 = vmatprep.subr.bf16.mxu0 0
        %8070 = vmatpush2.bf16.msra.mxu0 %v7204
        %8071 = vmatprep.mubr.bf16.mxu0 %v5608
        %8072 = vmatmul.mubr.bf16.gmra.mxu0 %v5594
        %v8073 = vpop.f32.mrf.mxu0
        %v8074 = vadd.f32 %v8034, %v8073
        %v8075 = vpop.f32.mrf.mxu0
        %v8076 = vpop.f32.mrf.mxu0
        %v8077 = vpop.f32.mrf.mxu0
        %8078 = vdwg.mxu0
        %8079 = vmatprep.subr.bf16.mxu0 0
        %8080 = vmatpush1.bf16.msra.mxu0 %v7219
        %8081 = vmatprep.subr.bf16.mxu0 0
        %8082 = vmatpush1.bf16.msra.mxu0 %v7218
        %8083 = vmatprep.subr.bf16.mxu0 0
        %8084 = vmatpush1.bf16.msra.mxu0 %v7217
        %8085 = vmatprep.subr.bf16.mxu0 0
        %8086 = vmatpush1.bf16.msra.mxu0 %v7216
        %8087 = vmatprep.subr.bf16.mxu0 0
        %8088 = vmatpush1.bf16.msra.mxu0 %v7215
        %8089 = vmatprep.subr.bf16.mxu0 0
        %8090 = vmatpush1.bf16.msra.mxu0 %v7214
        %8091 = vmatprep.subr.bf16.mxu0 0
        %8092 = vmatpush1.bf16.msra.mxu0 %v7213
        %8093 = vmatprep.subr.bf16.mxu0 0
        %8094 = vmatpush1.bf16.msra.mxu0 %v7212
        %8095 = vmatprep.subr.bf16.mxu0 0
        %8096 = vmatpush2.bf16.msra.mxu0 %v7227
        %8097 = vmatprep.subr.bf16.mxu0 0
        %8098 = vmatpush2.bf16.msra.mxu0 %v7226
        %8099 = vmatprep.subr.bf16.mxu0 0
        %8100 = vmatpush2.bf16.msra.mxu0 %v7225
        %8101 = vmatprep.subr.bf16.mxu0 0
        %8102 = vmatpush2.bf16.msra.mxu0 %v7224
        %8103 = vmatprep.subr.bf16.mxu0 0
        %8104 = vmatpush2.bf16.msra.mxu0 %v7223
        %8105 = vmatprep.subr.bf16.mxu0 0
        %8106 = vmatpush2.bf16.msra.mxu0 %v7222
        %8107 = vmatprep.subr.bf16.mxu0 0
        %8108 = vmatpush2.bf16.msra.mxu0 %v7221
        %8109 = vmatprep.subr.bf16.mxu0 0
        %8110 = vmatpush2.bf16.msra.mxu0 %v7220
        %8111 = vmatprep.mubr.bf16.mxu0 %v5618
        %8112 = vmatmul.mubr.bf16.gmra.mxu0 %v5616
        %v8113 = vpop.f32.mrf.mxu0
        %v8114 = vadd.f32 %v8074, %v8113
        %v8115 = vpop.f32.mrf.mxu0
        %v8116 = vpop.f32.mrf.mxu0
        %v8117 = vpop.f32.mrf.mxu0
        %8118 = vdwg.mxu0
        %8119 = vmatprep.subr.bf16.mxu0 0
        %8120 = vmatpush1.bf16.msra.mxu0 %v7235
        %8121 = vmatprep.subr.bf16.mxu0 0
        %8122 = vmatpush1.bf16.msra.mxu0 %v7234
        %8123 = vmatprep.subr.bf16.mxu0 0
        %8124 = vmatpush1.bf16.msra.mxu0 %v7233
        %8125 = vmatprep.subr.bf16.mxu0 0
        %8126 = vmatpush1.bf16.msra.mxu0 %v7232
        %8127 = vmatprep.subr.bf16.mxu0 0
        %8128 = vmatpush1.bf16.msra.mxu0 %v7231
        %8129 = vmatprep.subr.bf16.mxu0 0
        %8130 = vmatpush1.bf16.msra.mxu0 %v7230
        %8131 = vmatprep.subr.bf16.mxu0 0
        %8132 = vmatpush1.bf16.msra.mxu0 %v7229
        %8133 = vmatprep.subr.bf16.mxu0 0
        %8134 = vmatpush1.bf16.msra.mxu0 %v7228
        %8135 = vmatprep.subr.bf16.mxu0 0
        %8136 = vmatpush2.bf16.msra.mxu0 %v7243
        %8137 = vmatprep.subr.bf16.mxu0 0
        %8138 = vmatpush2.bf16.msra.mxu0 %v7242
        %8139 = vmatprep.subr.bf16.mxu0 0
        %8140 = vmatpush2.bf16.msra.mxu0 %v7241
        %8141 = vmatprep.subr.bf16.mxu0 0
        %8142 = vmatpush2.bf16.msra.mxu0 %v7240
        %8143 = vmatprep.subr.bf16.mxu0 0
        %8144 = vmatpush2.bf16.msra.mxu0 %v7239
        %8145 = vmatprep.subr.bf16.mxu0 0
        %8146 = vmatpush2.bf16.msra.mxu0 %v7238
        %8147 = vmatprep.subr.bf16.mxu0 0
        %8148 = vmatpush2.bf16.msra.mxu0 %v7237
        %8149 = vmatprep.subr.bf16.mxu0 0
        %8150 = vmatpush2.bf16.msra.mxu0 %v7236
        %8151 = vmatprep.mubr.bf16.mxu0 %v5615
        %8152 = vmatmul.mubr.bf16.gmra.mxu0 %v5601
        %v8153 = vpop.f32.mrf.mxu0
        %v8154 = vadd.f32 %v8114, %v8153
        %v8155 = vpop.f32.mrf.mxu0
        %v8156 = vpop.f32.mrf.mxu0
        %v8157 = vpop.f32.mrf.mxu0
        %8158 = vdwg.mxu0
        %8159 = vmatprep.subr.bf16.mxu0 0
        %8160 = vmatpush1.bf16.msra.mxu0 %v7251
        %8161 = vmatprep.subr.bf16.mxu0 0
        %8162 = vmatpush1.bf16.msra.mxu0 %v7250
        %8163 = vmatprep.subr.bf16.mxu0 0
        %8164 = vmatpush1.bf16.msra.mxu0 %v7249
        %8165 = vmatprep.subr.bf16.mxu0 0
        %8166 = vmatpush1.bf16.msra.mxu0 %v7248
        %8167 = vmatprep.subr.bf16.mxu0 0
        %8168 = vmatpush1.bf16.msra.mxu0 %v7247
        %8169 = vmatprep.subr.bf16.mxu0 0
        %8170 = vmatpush1.bf16.msra.mxu0 %v7246
        %8171 = vmatprep.subr.bf16.mxu0 0
        %8172 = vmatpush1.bf16.msra.mxu0 %v7245
        %8173 = vmatprep.subr.bf16.mxu0 0
        %8174 = vmatpush1.bf16.msra.mxu0 %v7244
        %8175 = vmatprep.subr.bf16.mxu0 0
        %8176 = vmatpush2.bf16.msra.mxu0 %v7259
        %8177 = vmatprep.subr.bf16.mxu0 0
        %8178 = vmatpush2.bf16.msra.mxu0 %v7258
        %8179 = vmatprep.subr.bf16.mxu0 0
        %8180 = vmatpush2.bf16.msra.mxu0 %v7257
        %8181 = vmatprep.subr.bf16.mxu0 0
        %8182 = vmatpush2.bf16.msra.mxu0 %v7256
        %8183 = vmatprep.subr.bf16.mxu0 0
        %8184 = vmatpush2.bf16.msra.mxu0 %v7255
        %8185 = vmatprep.subr.bf16.mxu0 0
        %8186 = vmatpush2.bf16.msra.mxu0 %v7254
        %8187 = vmatprep.subr.bf16.mxu0 0
        %8188 = vmatpush2.bf16.msra.mxu0 %v7253
        %8189 = vmatprep.subr.bf16.mxu0 0
        %8190 = vmatpush2.bf16.msra.mxu0 %v7252
        %8191 = vmatprep.mubr.bf16.mxu0 %v5619
        %8192 = vmatmul.mubr.bf16.gmra.mxu0 %v5617
        %v8193 = vpop.f32.mrf.mxu0
        %v8194 = vadd.f32 %v8154, %v8193
        %v8195 = vpop.f32.mrf.mxu0
        %v8196 = vpop.f32.mrf.mxu0
        %v8197 = vpop.f32.mrf.mxu0
        %8198 = vdwg.mxu0
        %8199 = vmatprep.subr.bf16.mxu0 0
        %8200 = vmatpush1.bf16.msra.mxu0 %v7267
        %8201 = vmatprep.subr.bf16.mxu0 0
        %8202 = vmatpush1.bf16.msra.mxu0 %v7266
        %8203 = vmatprep.subr.bf16.mxu0 0
        %8204 = vmatpush1.bf16.msra.mxu0 %v7265
        %8205 = vmatprep.subr.bf16.mxu0 0
        %8206 = vmatpush1.bf16.msra.mxu0 %v7264
        %8207 = vmatprep.subr.bf16.mxu0 0
        %8208 = vmatpush1.bf16.msra.mxu0 %v7263
        %8209 = vmatprep.subr.bf16.mxu0 0
        %8210 = vmatpush1.bf16.msra.mxu0 %v7262
        %8211 = vmatprep.subr.bf16.mxu0 0
        %8212 = vmatpush1.bf16.msra.mxu0 %v7261
        %8213 = vmatprep.subr.bf16.mxu0 0
        %8214 = vmatpush1.bf16.msra.mxu0 %v7260
        %8215 = vmatprep.subr.bf16.mxu0 0
        %8216 = vmatpush2.bf16.msra.mxu0 %v7275
        %8217 = vmatprep.subr.bf16.mxu0 0
        %8218 = vmatpush2.bf16.msra.mxu0 %v7274
        %8219 = vmatprep.subr.bf16.mxu0 0
        %8220 = vmatpush2.bf16.msra.mxu0 %v7273
        %8221 = vmatprep.subr.bf16.mxu0 0
        %8222 = vmatpush2.bf16.msra.mxu0 %v7272
        %8223 = vmatprep.subr.bf16.mxu0 0
        %8224 = vmatpush2.bf16.msra.mxu0 %v7271
        %8225 = vmatprep.subr.bf16.mxu0 0
        %8226 = vmatpush2.bf16.msra.mxu0 %v7270
        %8227 = vmatprep.subr.bf16.mxu0 0
        %8228 = vmatpush2.bf16.msra.mxu0 %v7269
        %8229 = vmatprep.subr.bf16.mxu0 0
        %8230 = vmatpush2.bf16.msra.mxu0 %v7268
        %8231 = vmatprep.mubr.bf16.mxu0 %v5657
        %8232 = vmatmul.mubr.bf16.gmra.mxu0 %v5643
        %v8233 = vpop.f32.mrf.mxu0
        %v8234 = vadd.f32 %v8194, %v8233
        %v8235 = vpop.f32.mrf.mxu0
        %v8236 = vpop.f32.mrf.mxu0
        %v8237 = vpop.f32.mrf.mxu0
        %8238 = vdwg.mxu0
        %8239 = vmatprep.subr.bf16.mxu0 0
        %8240 = vmatpush1.bf16.msra.mxu0 %v7283
        %8241 = vmatprep.subr.bf16.mxu0 0
        %8242 = vmatpush1.bf16.msra.mxu0 %v7282
        %8243 = vmatprep.subr.bf16.mxu0 0
        %8244 = vmatpush1.bf16.msra.mxu0 %v7281
        %8245 = vmatprep.subr.bf16.mxu0 0
        %8246 = vmatpush1.bf16.msra.mxu0 %v7280
        %8247 = vmatprep.subr.bf16.mxu0 0
        %8248 = vmatpush1.bf16.msra.mxu0 %v7279
        %8249 = vmatprep.subr.bf16.mxu0 0
        %8250 = vmatpush1.bf16.msra.mxu0 %v7278
        %8251 = vmatprep.subr.bf16.mxu0 0
        %8252 = vmatpush1.bf16.msra.mxu0 %v7277
        %8253 = vmatprep.subr.bf16.mxu0 0
        %8254 = vmatpush1.bf16.msra.mxu0 %v7276
        %8255 = vmatprep.subr.bf16.mxu0 0
        %8256 = vmatpush2.bf16.msra.mxu0 %v7291
        %8257 = vmatprep.subr.bf16.mxu0 0
        %8258 = vmatpush2.bf16.msra.mxu0 %v7290
        %8259 = vmatprep.subr.bf16.mxu0 0
        %8260 = vmatpush2.bf16.msra.mxu0 %v7289
        %8261 = vmatprep.subr.bf16.mxu0 0
        %8262 = vmatpush2.bf16.msra.mxu0 %v7288
        %8263 = vmatprep.subr.bf16.mxu0 0
        %8264 = vmatpush2.bf16.msra.mxu0 %v7287
        %8265 = vmatprep.subr.bf16.mxu0 0
        %8266 = vmatpush2.bf16.msra.mxu0 %v7286
        %8267 = vmatprep.subr.bf16.mxu0 0
        %8268 = vmatpush2.bf16.msra.mxu0 %v7285
        %8269 = vmatprep.subr.bf16.mxu0 0
        %8270 = vmatpush2.bf16.msra.mxu0 %v7284
        %8271 = vmatprep.mubr.bf16.mxu0 %v5667
        %8272 = vmatmul.mubr.bf16.gmra.mxu0 %v5665
        %v8273 = vpop.f32.mrf.mxu0
        %v8274 = vadd.f32 %v8234, %v8273
        %v8275 = vpop.f32.mrf.mxu0
        %v8276 = vpop.f32.mrf.mxu0
        %v8277 = vpop.f32.mrf.mxu0
        %8278 = vdwg.mxu0
        %8279 = vmatprep.subr.bf16.mxu0 0
        %8280 = vmatpush1.bf16.msra.mxu0 %v7299
        %8281 = vmatprep.subr.bf16.mxu0 0
        %8282 = vmatpush1.bf16.msra.mxu0 %v7298
        %8283 = vmatprep.subr.bf16.mxu0 0
        %8284 = vmatpush1.bf16.msra.mxu0 %v7297
        %8285 = vmatprep.subr.bf16.mxu0 0
        %8286 = vmatpush1.bf16.msra.mxu0 %v7296
        %8287 = vmatprep.subr.bf16.mxu0 0
        %8288 = vmatpush1.bf16.msra.mxu0 %v7295
        %8289 = vmatprep.subr.bf16.mxu0 0
        %8290 = vmatpush1.bf16.msra.mxu0 %v7294
        %8291 = vmatprep.subr.bf16.mxu0 0
        %8292 = vmatpush1.bf16.msra.mxu0 %v7293
        %8293 = vmatprep.subr.bf16.mxu0 0
        %8294 = vmatpush1.bf16.msra.mxu0 %v7292
        %8295 = vmatprep.subr.bf16.mxu0 0
        %8296 = vmatpush2.bf16.msra.mxu0 %v7307
        %8297 = vmatprep.subr.bf16.mxu0 0
        %8298 = vmatpush2.bf16.msra.mxu0 %v7306
        %8299 = vmatprep.subr.bf16.mxu0 0
        %8300 = vmatpush2.bf16.msra.mxu0 %v7305
        %8301 = vmatprep.subr.bf16.mxu0 0
        %8302 = vmatpush2.bf16.msra.mxu0 %v7304
        %8303 = vmatprep.subr.bf16.mxu0 0
        %8304 = vmatpush2.bf16.msra.mxu0 %v7303
        %8305 = vmatprep.subr.bf16.mxu0 0
        %8306 = vmatpush2.bf16.msra.mxu0 %v7302
        %8307 = vmatprep.subr.bf16.mxu0 0
        %8308 = vmatpush2.bf16.msra.mxu0 %v7301
        %8309 = vmatprep.subr.bf16.mxu0 0
        %8310 = vmatpush2.bf16.msra.mxu0 %v7300
        %8311 = vmatprep.mubr.bf16.mxu0 %v5664
        %8312 = vmatmul.mubr.bf16.gmra.mxu0 %v5650
        %v8313 = vpop.f32.mrf.mxu0
        %v8314 = vadd.f32 %v8274, %v8313
        %v8315 = vpop.f32.mrf.mxu0
        %v8316 = vpop.f32.mrf.mxu0
        %v8317 = vpop.f32.mrf.mxu0
        %8318 = vdwg.mxu0
        %8319 = vmatprep.subr.bf16.mxu0 0
        %8320 = vmatpush1.bf16.msra.mxu0 %v7315
        %8321 = vmatprep.subr.bf16.mxu0 0
        %8322 = vmatpush1.bf16.msra.mxu0 %v7314
        %8323 = vmatprep.subr.bf16.mxu0 0
        %8324 = vmatpush1.bf16.msra.mxu0 %v7313
        %8325 = vmatprep.subr.bf16.mxu0 0
        %8326 = vmatpush1.bf16.msra.mxu0 %v7312
        %8327 = vmatprep.subr.bf16.mxu0 0
        %8328 = vmatpush1.bf16.msra.mxu0 %v7311
        %8329 = vmatprep.subr.bf16.mxu0 0
        %8330 = vmatpush1.bf16.msra.mxu0 %v7310
        %8331 = vmatprep.subr.bf16.mxu0 0
        %8332 = vmatpush1.bf16.msra.mxu0 %v7309
        %8333 = vmatprep.subr.bf16.mxu0 0
        %8334 = vmatpush1.bf16.msra.mxu0 %v7308
        %8335 = vmatprep.subr.bf16.mxu0 0
        %8336 = vmatpush2.bf16.msra.mxu0 %v7323
        %8337 = vmatprep.subr.bf16.mxu0 0
        %8338 = vmatpush2.bf16.msra.mxu0 %v7322
        %8339 = vmatprep.subr.bf16.mxu0 0
        %8340 = vmatpush2.bf16.msra.mxu0 %v7321
        %8341 = vmatprep.subr.bf16.mxu0 0
        %8342 = vmatpush2.bf16.msra.mxu0 %v7320
        %8343 = vmatprep.subr.bf16.mxu0 0
        %8344 = vmatpush2.bf16.msra.mxu0 %v7319
        %8345 = vmatprep.subr.bf16.mxu0 0
        %8346 = vmatpush2.bf16.msra.mxu0 %v7318
        %8347 = vmatprep.subr.bf16.mxu0 0
        %8348 = vmatpush2.bf16.msra.mxu0 %v7317
        %8349 = vmatprep.subr.bf16.mxu0 0
        %8350 = vmatpush2.bf16.msra.mxu0 %v7316
        %8351 = vmatprep.mubr.bf16.mxu0 %v5668
        %8352 = vmatmul.mubr.bf16.gmra.mxu0 %v5666
        %v8353 = vpop.f32.mrf.mxu0
        %v8354 = vadd.f32 %v8314, %v8353
        %v8355 = vpop.f32.mrf.mxu0
        %v8356 = vpop.f32.mrf.mxu0
        %v8357 = vpop.f32.mrf.mxu0
        %8358 = vdwg.mxu0
        %8359 = vmatprep.subr.bf16.mxu0 0
        %8360 = vmatpush1.bf16.msra.mxu0 %v7331
        %8361 = vmatprep.subr.bf16.mxu0 0
        %8362 = vmatpush1.bf16.msra.mxu0 %v7330
        %8363 = vmatprep.subr.bf16.mxu0 0
        %8364 = vmatpush1.bf16.msra.mxu0 %v7329
        %8365 = vmatprep.subr.bf16.mxu0 0
        %8366 = vmatpush1.bf16.msra.mxu0 %v7328
        %8367 = vmatprep.subr.bf16.mxu0 0
        %8368 = vmatpush1.bf16.msra.mxu0 %v7327
        %8369 = vmatprep.subr.bf16.mxu0 0
        %8370 = vmatpush1.bf16.msra.mxu0 %v7326
        %8371 = vmatprep.subr.bf16.mxu0 0
        %8372 = vmatpush1.bf16.msra.mxu0 %v7325
        %8373 = vmatprep.subr.bf16.mxu0 0
        %8374 = vmatpush1.bf16.msra.mxu0 %v7324
        %8375 = vmatprep.subr.bf16.mxu0 0
        %8376 = vmatpush2.bf16.msra.mxu0 %v7339
        %8377 = vmatprep.subr.bf16.mxu0 0
        %8378 = vmatpush2.bf16.msra.mxu0 %v7338
        %8379 = vmatprep.subr.bf16.mxu0 0
        %8380 = vmatpush2.bf16.msra.mxu0 %v7337
        %8381 = vmatprep.subr.bf16.mxu0 0
        %8382 = vmatpush2.bf16.msra.mxu0 %v7336
        %8383 = vmatprep.subr.bf16.mxu0 0
        %8384 = vmatpush2.bf16.msra.mxu0 %v7335
        %8385 = vmatprep.subr.bf16.mxu0 0
        %8386 = vmatpush2.bf16.msra.mxu0 %v7334
        %8387 = vmatprep.subr.bf16.mxu0 0
        %8388 = vmatpush2.bf16.msra.mxu0 %v7333
        %8389 = vmatprep.subr.bf16.mxu0 0
        %8390 = vmatpush2.bf16.msra.mxu0 %v7332
        %8391 = vmatprep.mubr.bf16.mxu0 %v5706
        %8392 = vmatmul.mubr.bf16.gmra.mxu0 %v5692
        %v8393 = vpop.f32.mrf.mxu0
        %v8394 = vadd.f32 %v8354, %v8393
        %v8395 = vpop.f32.mrf.mxu0
        %v8396 = vpop.f32.mrf.mxu0
        %v8397 = vpop.f32.mrf.mxu0
        %8398 = vdwg.mxu0
        %8399 = vmatprep.subr.bf16.mxu0 0
        %8400 = vmatpush1.bf16.msra.mxu0 %v7347
        %8401 = vmatprep.subr.bf16.mxu0 0
        %8402 = vmatpush1.bf16.msra.mxu0 %v7346
        %8403 = vmatprep.subr.bf16.mxu0 0
        %8404 = vmatpush1.bf16.msra.mxu0 %v7345
        %8405 = vmatprep.subr.bf16.mxu0 0
        %8406 = vmatpush1.bf16.msra.mxu0 %v7344
        %8407 = vmatprep.subr.bf16.mxu0 0
        %8408 = vmatpush1.bf16.msra.mxu0 %v7343
        %8409 = vmatprep.subr.bf16.mxu0 0
        %8410 = vmatpush1.bf16.msra.mxu0 %v7342
        %8411 = vmatprep.subr.bf16.mxu0 0
        %8412 = vmatpush1.bf16.msra.mxu0 %v7341
        %8413 = vmatprep.subr.bf16.mxu0 0
        %8414 = vmatpush1.bf16.msra.mxu0 %v7340
        %8415 = vmatprep.subr.bf16.mxu0 0
        %8416 = vmatpush2.bf16.msra.mxu0 %v7355
        %8417 = vmatprep.subr.bf16.mxu0 0
        %8418 = vmatpush2.bf16.msra.mxu0 %v7354
        %8419 = vmatprep.subr.bf16.mxu0 0
        %8420 = vmatpush2.bf16.msra.mxu0 %v7353
        %8421 = vmatprep.subr.bf16.mxu0 0
        %8422 = vmatpush2.bf16.msra.mxu0 %v7352
        %8423 = vmatprep.subr.bf16.mxu0 0
        %8424 = vmatpush2.bf16.msra.mxu0 %v7351
        %8425 = vmatprep.subr.bf16.mxu0 0
        %8426 = vmatpush2.bf16.msra.mxu0 %v7350
        %8427 = vmatprep.subr.bf16.mxu0 0
        %8428 = vmatpush2.bf16.msra.mxu0 %v7349
        %8429 = vmatprep.subr.bf16.mxu0 0
        %8430 = vmatpush2.bf16.msra.mxu0 %v7348
        %8431 = vmatprep.mubr.bf16.mxu0 %v5716
        %8432 = vmatmul.mubr.bf16.gmra.mxu0 %v5714
        %v8433 = vpop.f32.mrf.mxu0
        %v8434 = vadd.f32 %v8394, %v8433
        %v8435 = vpop.f32.mrf.mxu0
        %v8436 = vpop.f32.mrf.mxu0
        %v8437 = vpop.f32.mrf.mxu0
        %8438 = vdwg.mxu0
        %8439 = vmatprep.subr.bf16.mxu0 0
        %8440 = vmatpush1.bf16.msra.mxu0 %v7363
        %8441 = vmatprep.subr.bf16.mxu0 0
        %8442 = vmatpush1.bf16.msra.mxu0 %v7362
        %8443 = vmatprep.subr.bf16.mxu0 0
        %8444 = vmatpush1.bf16.msra.mxu0 %v7361
        %8445 = vmatprep.subr.bf16.mxu0 0
        %8446 = vmatpush1.bf16.msra.mxu0 %v7360
        %8447 = vmatprep.subr.bf16.mxu0 0
        %8448 = vmatpush1.bf16.msra.mxu0 %v7359
        %8449 = vmatprep.subr.bf16.mxu0 0
        %8450 = vmatpush1.bf16.msra.mxu0 %v7358
        %8451 = vmatprep.subr.bf16.mxu0 0
        %8452 = vmatpush1.bf16.msra.mxu0 %v7357
        %8453 = vmatprep.subr.bf16.mxu0 0
        %8454 = vmatpush1.bf16.msra.mxu0 %v7356
        %8455 = vmatprep.subr.bf16.mxu0 0
        %8456 = vmatpush2.bf16.msra.mxu0 %v7371
        %8457 = vmatprep.subr.bf16.mxu0 0
        %8458 = vmatpush2.bf16.msra.mxu0 %v7370
        %8459 = vmatprep.subr.bf16.mxu0 0
        %8460 = vmatpush2.bf16.msra.mxu0 %v7369
        %8461 = vmatprep.subr.bf16.mxu0 0
        %8462 = vmatpush2.bf16.msra.mxu0 %v7368
        %8463 = vmatprep.subr.bf16.mxu0 0
        %8464 = vmatpush2.bf16.msra.mxu0 %v7367
        %8465 = vmatprep.subr.bf16.mxu0 0
        %8466 = vmatpush2.bf16.msra.mxu0 %v7366
        %8467 = vmatprep.subr.bf16.mxu0 0
        %8468 = vmatpush2.bf16.msra.mxu0 %v7365
        %8469 = vmatprep.subr.bf16.mxu0 0
        %8470 = vmatpush2.bf16.msra.mxu0 %v7364
        %8471 = vmatprep.mubr.bf16.mxu0 %v5713
        %8472 = vmatmul.mubr.bf16.gmra.mxu0 %v5699
        %v8473 = vpop.f32.mrf.mxu0
        %v8474 = vadd.f32 %v8434, %v8473
        %v8475 = vpop.f32.mrf.mxu0
        %v8476 = vpop.f32.mrf.mxu0
        %v8477 = vpop.f32.mrf.mxu0
        %8478 = vdwg.mxu0
        %8479 = vmatprep.subr.bf16.mxu0 0
        %8480 = vmatpush1.bf16.msra.mxu0 %v7379
        %8481 = vmatprep.subr.bf16.mxu0 0
        %8482 = vmatpush1.bf16.msra.mxu0 %v7378
        %8483 = vmatprep.subr.bf16.mxu0 0
        %8484 = vmatpush1.bf16.msra.mxu0 %v7377
        %8485 = vmatprep.subr.bf16.mxu0 0
        %8486 = vmatpush1.bf16.msra.mxu0 %v7376
        %8487 = vmatprep.subr.bf16.mxu0 0
        %8488 = vmatpush1.bf16.msra.mxu0 %v7375
        %8489 = vmatprep.subr.bf16.mxu0 0
        %8490 = vmatpush1.bf16.msra.mxu0 %v7374
        %8491 = vmatprep.subr.bf16.mxu0 0
        %8492 = vmatpush1.bf16.msra.mxu0 %v7373
        %8493 = vmatprep.subr.bf16.mxu0 0
        %8494 = vmatpush1.bf16.msra.mxu0 %v7372
        %8495 = vmatprep.subr.bf16.mxu0 0
        %8496 = vmatpush2.bf16.msra.mxu0 %v7387
        %8497 = vmatprep.subr.bf16.mxu0 0
        %8498 = vmatpush2.bf16.msra.mxu0 %v7386
        %8499 = vmatprep.subr.bf16.mxu0 0
        %8500 = vmatpush2.bf16.msra.mxu0 %v7385
        %8501 = vmatprep.subr.bf16.mxu0 0
        %8502 = vmatpush2.bf16.msra.mxu0 %v7384
        %8503 = vmatprep.subr.bf16.mxu0 0
        %8504 = vmatpush2.bf16.msra.mxu0 %v7383
        %8505 = vmatprep.subr.bf16.mxu0 0
        %8506 = vmatpush2.bf16.msra.mxu0 %v7382
        %8507 = vmatprep.subr.bf16.mxu0 0
        %8508 = vmatpush2.bf16.msra.mxu0 %v7381
        %8509 = vmatprep.subr.bf16.mxu0 0
        %8510 = vmatpush2.bf16.msra.mxu0 %v7380
        %8511 = vmatprep.mubr.bf16.mxu0 %v5717
        %8512 = vmatmul.mubr.bf16.gmra.mxu0 %v5715
        %v8513 = vpop.f32.mrf.mxu0
        %v8514 = vadd.f32 %v8474, %v8513
        %v8515 = vpop.f32.mrf.mxu0
        %v8516 = vpop.f32.mrf.mxu0
        %v8517 = vpop.f32.mrf.mxu0
        %8518 = vdwg.mxu0
        %8519 = vmatprep.subr.bf16.mxu0 0
        %8520 = vmatpush1.bf16.msra.mxu0 0
        %8521 = vmatprep.subr.bf16.mxu0 0
        %8522 = vmatpush1.bf16.msra.mxu0 0
        %8523 = vmatprep.subr.bf16.mxu0 0
        %8524 = vmatpush1.bf16.msra.mxu0 0
        %8525 = vmatprep.subr.bf16.mxu0 0
        %8526 = vmatpush1.bf16.msra.mxu0 0
        %8527 = vmatprep.subr.bf16.mxu0 0
        %8528 = vmatpush1.bf16.msra.mxu0 %v7391
        %8529 = vmatprep.subr.bf16.mxu0 0
        %8530 = vmatpush1.bf16.msra.mxu0 %v7390
        %8531 = vmatprep.subr.bf16.mxu0 0
        %8532 = vmatpush1.bf16.msra.mxu0 %v7389
        %8533 = vmatprep.subr.bf16.mxu0 0
        %8534 = vmatpush1.bf16.msra.mxu0 %v7388
        %8535 = vmatprep.subr.bf16.mxu0 0
        %8536 = vmatpush2.bf16.msra.mxu0 0
        %8537 = vmatprep.subr.bf16.mxu0 0
        %8538 = vmatpush2.bf16.msra.mxu0 0
        %8539 = vmatprep.subr.bf16.mxu0 0
        %8540 = vmatpush2.bf16.msra.mxu0 0
        %8541 = vmatprep.subr.bf16.mxu0 0
        %8542 = vmatpush2.bf16.msra.mxu0 0
        %8543 = vmatprep.subr.bf16.mxu0 0
        %8544 = vmatpush2.bf16.msra.mxu0 0
        %8545 = vmatprep.subr.bf16.mxu0 0
        %8546 = vmatpush2.bf16.msra.mxu0 0
        %8547 = vmatprep.subr.bf16.mxu0 0
        %8548 = vmatpush2.bf16.msra.mxu0 0
        %8549 = vmatprep.subr.bf16.mxu0 0
        %8550 = vmatpush2.bf16.msra.mxu0 0
        %8551 = vmatprep.mubr.bf16.mxu0 0
        %8552 = vmatmul.mubr.bf16.gmra.mxu0 %v7717
        %v8553 = vpop.f32.mrf.mxu0
        %v8554 = vadd.f32 %v8514, %v8553
        %v8555 = vpop.f32.mrf.mxu0
        %v8556 = vpop.f32.mrf.mxu0
        %v8557 = vpop.f32.mrf.mxu0
        %8558 = vdwg.mxu0
        %v8559 = vmax.f32 %v8554, 0.0
        %v8560 = vpack.c.bf16 %v8559, %v8559
        %v8561 = vld [vmem:[%s7] sm:$0xf]
        %v8562 = vld [vmem:[%s7 + $0x4] sm:$0xf]
        %v8563 = vld [vmem:[%s7 + $0x8] sm:$0xf]
        %v8564 = vld [vmem:[%s7 + $0xc] sm:$0xf]
        %v8565 = vld [vmem:[%s7 + $0x10] sm:$0xf]
        %v8566 = vld [vmem:[%s7 + $0x14] sm:$0xf]
        %v8567 = vld [vmem:[%s7 + $0x18] sm:$0xf]
        %v8568 = vld [vmem:[%s7 + $0x1c] sm:$0xf]
        %v8569 = vld [vmem:[%s7 + $0x20] sm:$0xf]
        %v8570 = vld [vmem:[%s7 + $0x24] sm:$0xf]
        %v8571 = vld [vmem:[%s7 + $0x28] sm:$0xf]
        %v8572 = vld [vmem:[%s7 + $0x2c] sm:$0xf]
        %v8573 = vld [vmem:[%s7 + $0x30] sm:$0xf]
        %v8574 = vld [vmem:[%s7 + $0x34] sm:$0xf]
        %v8575 = vld [vmem:[%s7 + $0x38] sm:$0xf]
        %v8576 = vld [vmem:[%s7 + $0x3c] sm:$0xf]
        %v8577 = vld [vmem:[%s8] sm:$0x1]
        %v8594 = vunpack.c.l.b16 %v8561
        %v8595 = vunpack.c.l.b16 %v8562
        %v8596 = vunpack.c.l.b16 %v8563
        %v8597 = vunpack.c.l.b16 %v8564
        %v8598 = vunpack.c.l.b16 %v8565
        %v8599 = vunpack.c.l.b16 %v8566
        %v8600 = vunpack.c.l.b16 %v8567
        %v8601 = vunpack.c.l.b16 %v8568
        %v8602 = vunpack.c.l.b16 %v8569
        %v8603 = vunpack.c.l.b16 %v8570
        %v8604 = vunpack.c.l.b16 %v8571
        %v8605 = vunpack.c.l.b16 %v8572
        %v8606 = vunpack.c.l.b16 %v8573
        %v8607 = vunpack.c.l.b16 %v8574
        %v8608 = vunpack.c.l.b16 %v8575
        %v8609 = vunpack.c.l.b16 %v8576
        %v8610 = vpack.c.b16 %v8595, %v8594
        %v8611 = vpack.c.b16 %v8597, %v8596
        %v8612 = vpack.c.b16 %v8599, %v8598
        %v8613 = vpack.c.b16 %v8601, %v8600
        %v8614 = vpack.c.b16 %v8603, %v8602
        %v8615 = vpack.c.b16 %v8605, %v8604
        %v8616 = vpack.c.b16 %v8607, %v8606
        %v8617 = vpack.c.b16 %v8609, %v8608
        %8626 = vmatprep.subr.bf16.mxu0 0
        %8627 = vmatpush1.bf16.msra.mxu0 %v8617
        %8628 = vmatprep.subr.bf16.mxu0 0
        %8629 = vmatpush1.bf16.msra.mxu0 %v8616
        %8630 = vmatprep.subr.bf16.mxu0 0
        %8631 = vmatpush1.bf16.msra.mxu0 %v8615
        %8632 = vmatprep.subr.bf16.mxu0 0
        %8633 = vmatpush1.bf16.msra.mxu0 %v8614
        %8634 = vmatprep.subr.bf16.mxu0 0
        %8635 = vmatpush1.bf16.msra.mxu0 %v8613
        %8636 = vmatprep.subr.bf16.mxu0 0
        %8637 = vmatpush1.bf16.msra.mxu0 %v8612
        %8638 = vmatprep.subr.bf16.mxu0 0
        %8639 = vmatpush1.bf16.msra.mxu0 %v8611
        %8640 = vmatprep.subr.bf16.mxu0 0
        %8641 = vmatpush1.bf16.msra.mxu0 %v8610
        %8642 = vmatprep.subr.bf16.mxu0 0
        %8643 = vmatpush2.bf16.msra.mxu0 0
        %8644 = vmatprep.subr.bf16.mxu0 0
        %8645 = vmatpush2.bf16.msra.mxu0 0
        %8646 = vmatprep.subr.bf16.mxu0 0
        %8647 = vmatpush2.bf16.msra.mxu0 0
        %8648 = vmatprep.subr.bf16.mxu0 0
        %8649 = vmatpush2.bf16.msra.mxu0 0
        %8650 = vmatprep.subr.bf16.mxu0 0
        %8651 = vmatpush2.bf16.msra.mxu0 0
        %8652 = vmatprep.subr.bf16.mxu0 0
        %8653 = vmatpush2.bf16.msra.mxu0 0
        %8654 = vmatprep.subr.bf16.mxu0 0
        %8655 = vmatpush2.bf16.msra.mxu0 0
        %8656 = vmatprep.subr.bf16.mxu0 0
        %8657 = vmatpush2.bf16.msra.mxu0 0
        %8658 = vmatprep.mubr.bf16.mxu0 0
        %8659 = vmatmul.mubr.bf16.gmra.mxu0 %v8560
        %v8660 = vpop.f32.mrf.mxu0
        %v8661 = vadd.f32 %v8577, %v8660
        %v8662 = vpop.f32.mrf.mxu0
        %v8663 = vpop.f32.mrf.mxu0
        %v8664 = vpop.f32.mrf.mxu0
        %8665 = vdwg.mxu0
        %vm8666 = vcmask 16384
        %8667 = vst.msk [vmem:[%s324] sm:$0x1] %vm8666, %v8661
        %s8668 = sand.u32 %s225, 1
        %s8669 = scalar_lea.sflag [#allocation6], %s8668
        %s8670 = sand.u32 %s225, 1
        %s8671 = scalar_lea.vmem [#allocation5], %s8670
        // Predicated region
        $region57: #{dqn_forward.3} parent=55 // pred_check
          %p8672 = pneg %p235
        $region58: #{dqn_forward.3} parent=55 // pred_check_branch
          %8674 = sbr.rel (%p8672) target = $region60
        $region59: #{dqn_forward.3} parent=55 // pred_region
          %s8676 = ssub.s32 16, 16
          %8677 = vsyncadd %s8669, %s8676
          %s8678 = smul.addr %s23, 16
          %s8679 = scalar_lea.hbm %s9, %s8678
          %s8681 = sshll.u32 %s8671, 4
          %s8682 = int_to_ptr.vmem [resolvable:$true] %s8681
          %8684 = dma.vmem_to_hbm [thread:$0]  %s8682, 16, %s8679, %s8669
        $region60: #{dqn_forward.3} parent=55 // pred_fallthru
          _
      $region56: #{dqn_forward.3} parent=5 // pred_fallthru
        _
      %p8685 = scmp.le.s32.totalorder 2, %s18
      // Predicated region
      $region61: #{dqn_forward.3} parent=5 // pred_check
        %p8686 = pneg %p8685
      $region62: #{dqn_forward.3} parent=5 // pred_check_branch
        %8688 = sbr.rel (%p8686) target = $region64
      $region63: #{dqn_forward.3} parent=5 // pred_region
        %s8689 = ssub.s32 %s18, 2
        // Predicated region
        $region65: #{dqn_forward.3} parent=63 // pred_check
          %p8690 = pneg %p241
        $region66: #{dqn_forward.3} parent=63 // pred_check_branch
          %8692 = sbr.rel (%p8690) target = $region68
        $region67: #{dqn_forward.3} parent=63 // pred_region
          %s8693 = sand.u32 %s226, 1
          %s8694 = scalar_lea.sflag [#allocation6], %s8693
          %s8695 = sand.u32 %s226, 1
          %s8696 = scalar_lea.vmem [#allocation5], %s8695
          %8697 = dma.done %s8694, 16
        $region68: #{dqn_forward.3} parent=63 // pred_fallthru
          _
      $region64: #{dqn_forward.3} parent=5 // pred_fallthru
        _
    $region6: #{dqn_forward.3} parent=1 // loop_footer
      %s22 = sadd.s32 1, %s18
    $region7: #{dqn_forward.3} parent=1 // loop_footer_branch
      %17 = sbr.rel target = $region3
    $region8: #{dqn_forward.3} parent=1 // loop_exit
      _
    %8698 = vsyncpa [#allocation6], 1
    %s8699 = scalar_lea.sflag [#allocation6], 1
    %8700 = vsyncpa %s8699, 1

</llo_original>
